<compile_context>
chip_gen: v7x
topology: tpu7x:2x2x1
jax: 0.10.0
libtpu: 0.0.40
codegen_flags: <defaults>
</compile_context>

<pallas_src>
import functools

import jax
import jax.numpy as jnp
from jax.experimental import pallas as pl
from jax.experimental.pallas import tpu as pltpu


def _round_up(x, m):
    return ((x + m - 1) // m) * m


def _pick_tile(dim, cap):
    """Largest multiple-of-8 divisor of `dim` (a multiple of 8) that is <= cap."""
    cap = max(8, min(int(cap), dim))
    cap -= cap % 8
    for t in range(cap, 7, -8):
        if dim % t == 0:
            return t
    return 8


def _bbox_head_ava_kernel(x_ref, w_ref, b_ref, o_ref, *, T, HW, c_tile):
    """One (n, c) grid step of fused avg-T / max-HW pooling + fc_cls.

    x_ref: (n_tile, c_tile, T*HW)  lane-dense feature block (any float dtype)
    w_ref: (C, nc_pad)             full fc_cls weight (transposed, padded), resident
    b_ref: (1, nc_pad)             fc_cls bias (padded), resident
    o_ref: (n_tile, nc_pad)        f32 logits block; accumulator across the C axis
    """
    c_step = pl.program_id(1)

    # Upcast before any arithmetic (mandatory on v5e; harmless elsewhere).
    x = x_ref[...].astype(jnp.float32)              # (n_tile, c_tile, T*HW)

    # Temporal avg pool via static lane slices (keeps the lane-dense layout).
    t_sum = x[..., 0:HW]
    for t in range(1, T):
        t_sum = t_sum + x[..., t * HW:(t + 1) * HW]
    pooled = jnp.max(t_sum * (1.0 / T), axis=-1)    # spatial max -> (n_tile, c_tile)

    # Slice this grid step's C rows out of the VMEM-resident weight.
    c0 = pl.multiple_of(c_step * c_tile, c_tile)
    w = w_ref[pl.ds(c0, c_tile), :]                 # (c_tile, nc_pad) f32
    partial = jnp.dot(pooled, w, preferred_element_type=jnp.float32)

    # Output block index ignores c -> it stays VMEM-resident across the C sweep.
    @pl.when(c_step == 0)
    def _init():
        o_ref[...] = jnp.broadcast_to(b_ref[...], o_ref.shape)

    o_ref[...] += partial


def bbox_head_ava_forward(x_ncthw, weight, bias, *,
                          n_tile_cap=16,
                          x_block_budget_bytes=8 * 1024 * 1024):
    """BBoxHeadAVA.forward: NCTHW ROI features -> (N, num_classes) logits.

    weight: PyTorch fc_cls weight, shape (num_classes, C).
    bias:   PyTorch fc_cls bias,   shape (num_classes,).
    """
    N, C, T, H, W = x_ncthw.shape
    num_classes = weight.shape[0]
    HW = H * W
    THW = T * HW

    # Free reshape (merges contiguous trailing dims): no full-tensor transpose,
    # x moves through HBM exactly once (read by the kernel DMA).
    x = x_ncthw.reshape(N, C, THW)

    # --- N tiling: pad ragged ROI counts up to a multiple of the 8-aligned n_tile
    # (keeps aligned output stores and a real parallel axis for megacore).
    n_tile = max(8, min((n_tile_cap // 8) * 8, _round_up(N, 8)))
    n_pad = _round_up(N, n_tile)
    if n_pad != N:
        x = jnp.pad(x, ((0, n_pad - N), (0, 0), (0, 0)))

    # --- C tiling: largest 8-multiple divisor of C whose double-buffered x block
    # fits the byte budget.  Collapses the C grid entirely when C is small.
    itemsize = jnp.dtype(x.dtype).itemsize
    c_cap = max(8, x_block_budget_bytes // (2 * n_tile * THW * itemsize))
    if C % 8 == 0:
        c_tile = _pick_tile(C, c_cap)
    else:
        c_tile = C   # full-extent block is always layout-legal

    # Pad classes to 128 lanes: dense (unmasked) output stores + full MXU width.
    nc_pad = max(128, _round_up(num_classes, 128))
    w_t = jnp.zeros((C, nc_pad), jnp.float32).at[:, :num_classes].set(
        weight.T.astype(jnp.float32))
    b_p = jnp.zeros((1, nc_pad), jnp.float32).at[:, :num_classes].set(
        bias.astype(jnp.float32))

    grid = (n_pad // n_tile, C // c_tile)
    kernel = functools.partial(_bbox_head_ava_kernel, T=T, HW=HW, c_tile=c_tile)

    out = pl.pallas_call(
        kernel,
        out_shape=jax.ShapeDtypeStruct((n_pad, nc_pad), jnp.float32),
        grid_spec=pltpu.PrefetchScalarGridSpec(
            num_scalar_prefetch=0,
            grid=grid,
            in_specs=[
                # Lane-dense feature block, streamed (double-buffered) over (n, c).
                pl.BlockSpec((n_tile, c_tile, THW), lambda n, c: (n, c, 0)),
                # Full weight / bias: constant index map -> DMA'd once, VMEM-resident.
                pl.BlockSpec((C, nc_pad), lambda n, c: (0, 0)),
                pl.BlockSpec((1, nc_pad), lambda n, c: (0, 0)),
            ],
            out_specs=pl.BlockSpec((n_tile, nc_pad), lambda n, c: (n, 0)),
        ),
        compiler_params=pltpu.CompilerParams(
            # N (ROIs) parallel -> sharded across both TensorCores on v7x;
            # C is the reduction / accumulation axis -> "arbitrary" and last.
            dimension_semantics=("parallel", "arbitrary"),
        ),
    )(x, w_t, b_p)

    # Slice off padded ROIs and padded classes.
    return out[:N, :num_classes]

    # TODO(synk): dropout_ratio>0 and mlp_head=True variants are not implemented
    # (module defaults: dropout_ratio=0, mlp_head=False).


if __name__ == "__main__":
    # Small shapes consistent with the module's forward:
    # N ROIs, in_channels C (stand-in for 2048), T frames, HxW ROI-aligned grid.
    N, C, T, H, W = 32, 256, 4, 8, 8
    num_classes = 81

    key = jax.random.PRNGKey(0)
    kx, kw = jax.random.split(key)

    # ROI features in PyTorch NCTHW layout; passed through in f32 (no extra cast
    # pass). The kernel also accepts bf16 if the upstream producer emits it.
    x = jax.random.normal(kx, (N, C, T, H, W), dtype=jnp.float32)

    # fc_cls parameters (xavier_normal_ weight, zero bias), PyTorch layout.
    xavier_std = (2.0 / (C + num_classes)) ** 0.5
    weight = xavier_std * jax.random.normal(kw, (num_classes, C), dtype=jnp.float32)
    bias = jnp.zeros((num_classes,), dtype=jnp.float32)

    logits = bbox_head_ava_forward(x, weight, bias)
    logits = jax.block_until_ready(logits)

    # Pure-JAX f32 reference.
    pooled_ref = jnp.max(jnp.mean(x, axis=2), axis=(2, 3))          # (N, C)
    ref = pooled_ref @ weight.T + bias[None, :]                     # (N, num_classes)

    assert logits.shape == (N, num_classes)
    assert jnp.allclose(logits, ref, atol=2e-3, rtol=2e-3), "mismatch vs reference"

    print("KERNEL_OK")
</pallas_src>

<mosaic_0001>
module attributes {stable_mosaic.version = 11 : i64} {
  func.func @_bbox_head_ava_kernel(%arg0: i32, %arg1: i32, %arg2: memref<16x256x256xf32, #tpu.memory_space<vmem>>, %arg3: memref<256x128xf32, #tpu.memory_space<vmem>>, %arg4: memref<1x128xf32, #tpu.memory_space<vmem>>, %arg5: memref<16x128xf32, #tpu.memory_space<vmem>>) attributes {dimension_semantics = [#tpu.dimension_semantics<parallel>, #tpu.dimension_semantics<arbitrary>], iteration_bounds = array<i64: 2, 1>, scalar_prefetch = 0 : i64, scratch_operands = 0 : i64, tpu.core_type = #tpu.core_type<tc>, window_params = [{transform_indices = @transform_0, window_bounds = array<i64: 16, 256, 256>}, {pipeline_mode = #tpu.pipeline_mode<synchronous>, transform_indices = @transform_1, window_bounds = array<i64: 256, 128>}, {pipeline_mode = #tpu.pipeline_mode<synchronous>, transform_indices = @transform_2, window_bounds = array<i64: 1, 128>}, {transform_indices = @transform_3, window_bounds = array<i64: 16, 128>}]} {
    %c0 = arith.constant 0 : index
    %c0_0 = arith.constant 0 : index
    %c0_1 = arith.constant 0 : index
    %0 = vector.load %arg2[%c0, %c0_0, %c0_1] : memref<16x256x256xf32, #tpu.memory_space<vmem>>, vector<16x256x256xf32>
    %1 = vector.extract_strided_slice %0 {offsets = [0, 0, 0], sizes = [16, 256, 64], strides = [1, 1, 1]} : vector<16x256x256xf32> to vector<16x256x64xf32>
    %2 = vector.extract_strided_slice %0 {offsets = [0, 0, 64], sizes = [16, 256, 64], strides = [1, 1, 1]} : vector<16x256x256xf32> to vector<16x256x64xf32>
    %3 = arith.addf %1, %2 : vector<16x256x64xf32>
    %4 = vector.extract_strided_slice %0 {offsets = [0, 0, 128], sizes = [16, 256, 64], strides = [1, 1, 1]} : vector<16x256x256xf32> to vector<16x256x64xf32>
    %5 = arith.addf %3, %4 : vector<16x256x64xf32>
    %6 = vector.extract_strided_slice %0 {offsets = [0, 0, 192], sizes = [16, 256, 64], strides = [1, 1, 1]} : vector<16x256x256xf32> to vector<16x256x64xf32>
    %7 = arith.addf %5, %6 : vector<16x256x64xf32>
    %cst = arith.constant 2.500000e-01 : f32
    %8 = vector.broadcast %cst : f32 to vector<16x256x64xf32>
    %9 = arith.mulf %7, %8 : vector<16x256x64xf32>
    %cst_2 = arith.constant dense<0xFF800000> : vector<16x256xf32>
    %10 = vector.multi_reduction <maximumf>, %9, %cst_2 [2] : vector<16x256x64xf32> to vector<16x256xf32>
    %c256_i32 = arith.constant 256 : i32
    %11 = arith.muli %arg1, %c256_i32 : i32
    %12 = tpu.assume_multiple %11, 256 : i32
    %13 = arith.index_cast %12 : i32 to index
    %c0_3 = arith.constant 0 : index
    %14 = vector.load %arg3[%13, %c0_3] : memref<256x128xf32, #tpu.memory_space<vmem>>, vector<256x128xf32>
    %cst_4 = arith.constant dense<0.000000e+00> : vector<16x128xf32>
    %15 = tpu.matmul %10, %14, %cst_4 {dimension_numbers = #tpu.dot_dimension_numbers<[1], [0], [0], [1], [0, 0, 1, 1], [], []>} : vector<16x256xf32>, vector<256x128xf32>, vector<16x128xf32> -> vector<16x128xf32>
    %c0_i32 = arith.constant 0 : i32
    %16 = arith.cmpi eq, %arg1, %c0_i32 : i32
    %17 = arith.extui %16 : i1 to i32
    %c0_i32_5 = arith.constant 0 : i32
    %18 = arith.cmpi ne, %17, %c0_i32_5 : i32
    scf.if %18 {
      %c0_10 = arith.constant 0 : index
      %c0_11 = arith.constant 0 : index
      %22 = vector.load %arg4[%c0_10, %c0_11] : memref<1x128xf32, #tpu.memory_space<vmem>>, vector<1x128xf32>
      %23 = vector.shape_cast %22 : vector<1x128xf32> to vector<1x128xf32>
      %24 = vector.broadcast %23 : vector<1x128xf32> to vector<16x128xf32>
      %c0_12 = arith.constant 0 : index
      %c0_13 = arith.constant 0 : index
      %25 = vector.load %arg5[%c0_12, %c0_13] : memref<16x128xf32, #tpu.memory_space<vmem>>, vector<16x128xf32>
      tpu.vector_store %arg5[%c0_12, %c0_13], %24 {strides = array<i32>} : memref<16x128xf32, #tpu.memory_space<vmem>>, vector<16x128xf32>,
    } else {
    }
    %c0_6 = arith.constant 0 : index
    %c0_7 = arith.constant 0 : index
    %19 = vector.load %arg5[%c0_6, %c0_7] : memref<16x128xf32, #tpu.memory_space<vmem>>, vector<16x128xf32>
    %20 = arith.addf %19, %15 : vector<16x128xf32>
    %c0_8 = arith.constant 0 : index
    %c0_9 = arith.constant 0 : index
    %21 = vector.load %arg5[%c0_8, %c0_9] : memref<16x128xf32, #tpu.memory_space<vmem>>, vector<16x128xf32>
    tpu.vector_store %arg5[%c0_8, %c0_9], %20 {strides = array<i32>} : memref<16x128xf32, #tpu.memory_space<vmem>>, vector<16x128xf32>,
    return
  }
  func.func @transform_0(%arg0: i32, %arg1: i32) -> (i32, i32, i32) {
    %c0_i32 = arith.constant 0 : i32
    %c0_i32_0 = arith.constant 0 : i32
    return %arg0, %arg1, %c0_i32 : i32, i32, i32
  }
  func.func @transform_1(%arg0: i32, %arg1: i32) -> (i32, i32) {
    %c0_i32 = arith.constant 0 : i32
    %c0_i32_0 = arith.constant 0 : i32
    %c0_i32_1 = arith.constant 0 : i32
    return %c0_i32, %c0_i32_0 : i32, i32
  }
  func.func @transform_2(%arg0: i32, %arg1: i32) -> (i32, i32) {
    %c0_i32 = arith.constant 0 : i32
    %c0_i32_0 = arith.constant 0 : i32
    %c0_i32_1 = arith.constant 0 : i32
    return %c0_i32, %c0_i32_0 : i32, i32
  }
  func.func @transform_3(%arg0: i32, %arg1: i32) -> (i32, i32) {
    %c0_i32 = arith.constant 0 : i32
    %c0_i32_0 = arith.constant 0 : i32
    return %arg0, %c0_i32 : i32, i32
  }
}

</mosaic_0001>

<llo_original>
// kernel: tpu_custom_call.1
$region0: #{tpu_custom_call.1}
  #allocation0 [shape = 'u32[]', space=smem, size = 0x4, offset = 0x4, fixed_abs, tag = 'smem constant byte address 0x4 - core index']
  #allocation1 [shape = 'u32[144,128]{1,0:T(1,128)}', space=vmem, size = 0x12000, scoped, tag = 'internal scratch']
  %s0 = inlined_call_operand.hbm [shape: f32[32,256,256], index: 0, kind: input, shape index: {}]
  %s1 = inlined_call_operand.hbm [shape: f32[256,128], index: 1, kind: input, shape index: {}]
  %s2 = inlined_call_operand.hbm [shape: f32[1,128], index: 2, kind: input, shape index: {}]
  %s3 = inlined_call_operand.hbm [shape: f32[32,128], index: 3, kind: output, shape index: {}]
  %s4 = sld [smem:[#allocation0]]
  $region61: #{tpu_custom_call.1} parent=0
    _
  %s6 = ssub.s32 1, %s4
  %s7 = scalar_select 0, %s6, %s4
  $region1: #{tpu_custom_call.1} parent=0
    #allocation2 [shape = 'u8[8388608]{0}', space=vmem, size = 0x800000, scoped, tag = 'input window, operand 0']
    #allocation3 [shape = 's32[2]{0}', space=sflag, size = 0x8, scoped, tag = 'scoped memory for tpu_custom_call.1']
    #allocation4 [shape = 's32[2]{0}', space=sflag, size = 0x8, scoped, tag = 'scoped memory for tpu_custom_call.1']
    #allocation5 [shape = 'u8[131072]{0}', space=vmem, size = 0x20000, scoped, tag = 'input window, operand 1, single buffered']
    #allocation6 [shape = 's32[1]{0}', space=sflag, size = 0x4, scoped, tag = 'scoped memory for tpu_custom_call.1']
    #allocation7 [shape = 'u8[512]{0}', space=vmem, size = 0x400, scoped, tag = 'input window, operand 2, single buffered']
    #allocation8 [shape = 'u8[16384]{0}', space=vmem, size = 0x4000, scoped, tag = 'output window, operand 0']
    %8 = vsyncpa [#allocation3], 0
    %s9 = scalar_lea.sflag [#allocation3], 1
    %10 = vsyncpa %s9, 0
    %11 = vsyncpa [#allocation6], 0
    %12 = vsyncpa [#allocation4], 0
    %s13 = scalar_lea.sflag [#allocation4], 1
    %14 = vsyncpa %s13, 0
    loop: start=0, step=1, limit=4
    $region2: #{tpu_custom_call.1} parent=1 // loop_pre_header
      _
    $region3: #{tpu_custom_call.1} parent=1 // loop_header
      %s16 = sphi 0, %s20
      %p17 = scmp.ge.s32.totalorder %s16, 4
      %s23 = sphi 0, %s35
      %s24 = sphi 0, %s31
      %s25 = sphi 0, %s23
      %s26 = sphi 0, %s24
      %s27 = sphi 0, %s25
      %s28 = sphi 0, %s26
      %s40 = sphi 0, %s42
      %s43 = sphi 0, %s40
      %s44 = sphi 0, %s43
      %s60 = sphi 0, %s44
      %s64 = sphi 0, %s64
      %s66 = sphi 0, %s64
      %s67 = sphi 0, %s66
      %s81 = sphi 0, %s67
      %s85 = sphi 0, %s85
      %s87 = sphi 0, %s85
      %s88 = sphi 0, %s87
      %s102 = sphi 0, %s88
      %s108 = sphi 0, %s110
      %s111 = sphi 0, %s108
      %s112 = sphi 0, %s111
      %s128 = sphi 0, %s112
    $region4: #{tpu_custom_call.1} parent=1 // loop_header_branch
      %19 = sbr.rel (%p17) target = $region8
    $region5: #{tpu_custom_call.1} parent=1 // loop_body
      %s21 = ssub.s32 %s16, 1
      %s22 = ssub.s32 %s16, 2
      %s29 = sadd.s32 1, %s24
      %p30 = scmp.ge.s32.totalorder %s29, 1
      %s31 = scalar_select %p30, 0, %s29
      %s32 = sadd.s32 1, %s23
      %s33 = scalar_select %p30, %s32, %s23
      %p34 = scmp.ge.s32.totalorder %s33, 2
      %s35 = scalar_select %p34, 0, %s33
      %s36 = ssub.s32 %s23, %s35
      %s37 = ssub.s32 %s24, %s31
      %s38 = sor.u32 %s36, %s37
      %p39 = scmp.eq.s32.totalorder %s38, 0
      %s41 = sadd.s32 %s40, 1
      %s42 = scalar_select %p39, %s40, %s41
      %p45 = pneg %p39
      %p46 = scmp.eq.s32.totalorder %s16, 1
      %p47 = por %p45, %p46
      %p48 = scmp.ne.s32.totalorder %s40, %s43
      %p49 = scmp.eq.s32.totalorder %s16, 0
      %p50 = por %p48, %p49
      %p51 = scmp.ne.s32.totalorder %s40, %s43
      %p52 = scmp.eq.s32.totalorder %s21, 1
      %p53 = por %p51, %p52
      %p54 = scmp.ne.s32.totalorder %s43, %s44
      %p55 = scmp.eq.s32.totalorder %s21, 0
      %p56 = por %p54, %p55
      %p57 = scmp.ne.s32.totalorder %s43, %s44
      %p58 = scmp.eq.s32.totalorder %s22, 1
      %p59 = por %p57, %p58
      %p61 = scmp.ne.s32.totalorder %s44, %s60
      %p62 = scmp.eq.s32.totalorder %s22, 0
      %p63 = por %p61, %p62
      %s65 = sadd.s32 %s64, 1
      %p68 = scmp.eq.s32.totalorder %s16, 1
      %p69 = scmp.ne.s32.totalorder %s64, %s66
      %p70 = scmp.eq.s32.totalorder %s16, 0
      %p71 = por %p69, %p70
      %p72 = scmp.ne.s32.totalorder %s64, %s66
      %p73 = scmp.eq.s32.totalorder %s21, 1
      %p74 = por %p72, %p73
      %p75 = scmp.ne.s32.totalorder %s66, %s67
      %p76 = scmp.eq.s32.totalorder %s21, 0
      %p77 = por %p75, %p76
      %p78 = scmp.ne.s32.totalorder %s66, %s67
      %p79 = scmp.eq.s32.totalorder %s22, 1
      %p80 = por %p78, %p79
      %p82 = scmp.ne.s32.totalorder %s67, %s81
      %p83 = scmp.eq.s32.totalorder %s22, 0
      %p84 = por %p82, %p83
      %s86 = sadd.s32 %s85, 1
      %p89 = scmp.eq.s32.totalorder %s16, 1
      %p90 = scmp.ne.s32.totalorder %s85, %s87
      %p91 = scmp.eq.s32.totalorder %s16, 0
      %p92 = por %p90, %p91
      %p93 = scmp.ne.s32.totalorder %s85, %s87
      %p94 = scmp.eq.s32.totalorder %s21, 1
      %p95 = por %p93, %p94
      %p96 = scmp.ne.s32.totalorder %s87, %s88
      %p97 = scmp.eq.s32.totalorder %s21, 0
      %p98 = por %p96, %p97
      %p99 = scmp.ne.s32.totalorder %s87, %s88
      %p100 = scmp.eq.s32.totalorder %s22, 1
      %p101 = por %p99, %p100
      %p103 = scmp.ne.s32.totalorder %s88, %s102
      %p104 = scmp.eq.s32.totalorder %s22, 0
      %p105 = por %p103, %p104
      %s106 = ssub.s32 %s23, %s35
      %p107 = scmp.eq.s32.totalorder %s106, 0
      %s109 = sadd.s32 %s108, 1
      %s110 = scalar_select %p107, %s108, %s109
      %p113 = pneg %p107
      %p114 = scmp.eq.s32.totalorder %s16, 1
      %p115 = por %p113, %p114
      %p116 = scmp.ne.s32.totalorder %s108, %s111
      %p117 = scmp.eq.s32.totalorder %s16, 0
      %p118 = por %p116, %p117
      %p119 = scmp.ne.s32.totalorder %s108, %s111
      %p120 = scmp.eq.s32.totalorder %s21, 1
      %p121 = por %p119, %p120
      %p122 = scmp.ne.s32.totalorder %s111, %s112
      %p123 = scmp.eq.s32.totalorder %s21, 0
      %p124 = por %p122, %p123
      %p125 = scmp.ne.s32.totalorder %s111, %s112
      %p126 = scmp.eq.s32.totalorder %s22, 1
      %p127 = por %p125, %p126
      %p129 = scmp.ne.s32.totalorder %s112, %s128
      %p130 = scmp.eq.s32.totalorder %s22, 0
      %p131 = por %p129, %p130
      %p132 = scmp.le.s32.totalorder 1, %s16
      %p133 = scmp.lt.s32.totalorder %s16, 3
      %p134 = pnand %p132, %p133
      %p135 = pneg %p134
      // Predicated region
      $region9: #{tpu_custom_call.1} parent=5 // pred_check
        _
      $region10: #{tpu_custom_call.1} parent=5 // pred_check_branch
        %137 = sbr.rel (%p134) target = $region12
      $region11: #{tpu_custom_call.1} parent=5 // pred_region
        %s138 = ssub.s32 %s16, 1
        // Predicated region
        $region13: #{tpu_custom_call.1} parent=11 // pred_check
          %p139 = pneg %p77
        $region14: #{tpu_custom_call.1} parent=11 // pred_check_branch
          %141 = sbr.rel (%p139) target = $region16
        $region15: #{tpu_custom_call.1} parent=11 // pred_region
          %s143 = ssub.s32 4096, 4096
          %144 = vsyncadd [#allocation6], %s143
          %s145 = sshll.u32 [#allocation5], 4
          %s146 = int_to_ptr.vmem [resolvable:$true] %s145
          %151 = dma.hbm_to_vmem [thread:$0]  %s1, 4096, %s146, [#allocation6], 128, 128, 8
        $region16: #{tpu_custom_call.1} parent=11 // pred_fallthru
          _
        // Predicated region
        $region17: #{tpu_custom_call.1} parent=11 // pred_check
          %p152 = pneg %p98
        $region18: #{tpu_custom_call.1} parent=11 // pred_check_branch
          %154 = sbr.rel (%p152) target = $region20
        $region19: #{tpu_custom_call.1} parent=11 // pred_region
          %s156 = ssub.s32 16, 16
          %157 = vsyncadd [#allocation6], %s156
          %s159 = sshll.u32 [#allocation7], 4
          %s160 = int_to_ptr.vmem [resolvable:$true] %s159
          %162 = dma.hbm_to_vmem [thread:$0]  %s2, 16, %s160, [#allocation6]
        $region20: #{tpu_custom_call.1} parent=11 // pred_fallthru
          _
      $region12: #{tpu_custom_call.1} parent=5 // pred_fallthru
        _
      %p163 = scmp.lt.s32.totalorder %s16, 2
      // Predicated region
      $region21: #{tpu_custom_call.1} parent=5 // pred_check
        %p164 = pneg %p163
      $region22: #{tpu_custom_call.1} parent=5 // pred_check_branch
        %166 = sbr.rel (%p164) target = $region24
      $region23: #{tpu_custom_call.1} parent=5 // pred_region
        // Predicated region
        $region25: #{tpu_custom_call.1} parent=23 // pred_check
          %p167 = pneg %p50
        $region26: #{tpu_custom_call.1} parent=23 // pred_check_branch
          %169 = sbr.rel (%p167) target = $region28
        $region27: #{tpu_custom_call.1} parent=23 // pred_region
          %s170 = sand.u32 %s40, 1
          %s171 = scalar_lea.sflag [#allocation3], %s170
          %s172 = sand.u32 %s40, 1
          %s173 = smul.addr %s172, 8192
          %s174 = scalar_lea.vmem [#allocation2], %s173
          %s175 = smul.u32 16, %s23
          %s176 = smul.u32 32, %s24
          %s178 = ssub.s32 131072, 131072
          %179 = vsyncadd %s171, %s178
          %s180 = smul.addr %s176, 2
          %s181 = smul.addr %s175, 64
          %s182 = sadd.s32 %s180, %s181
          %s183 = smul.addr %s182, 128
          %s184 = scalar_lea.hbm %s0, %s183
          %s185 = sshll.u32 %s174, 4
          %s186 = int_to_ptr.vmem [resolvable:$true] %s185
          %191 = dma.hbm_to_vmem [thread:$0]  %s184, 131072, %s186, %s171, 256, 256, 16
        $region28: #{tpu_custom_call.1} parent=23 // pred_fallthru
          _
      $region24: #{tpu_custom_call.1} parent=5 // pred_fallthru
        _
      %p192 = scmp.le.s32.totalorder 1, %s16
      %p193 = scmp.lt.s32.totalorder %s16, 3
      %p194 = pnand %p192, %p193
      %p195 = pneg %p194
      // Predicated region
      $region29: #{tpu_custom_call.1} parent=5 // pred_check
        _
      $region30: #{tpu_custom_call.1} parent=5 // pred_check_branch
        %197 = sbr.rel (%p194) target = $region32
      $region31: #{tpu_custom_call.1} parent=5 // pred_region
        %s198 = ssub.s32 %s16, 1
        %s199 = sand.u32 %s43, 1
        %s200 = scalar_lea.sflag [#allocation3], %s199
        %s201 = sand.u32 %s43, 1
        %s202 = smul.addr %s201, 8192
        %s203 = scalar_lea.vmem [#allocation2], %s202
        // Predicated region
        $region33: #{tpu_custom_call.1} parent=31 // pred_check
          %p204 = pneg %p56
        $region34: #{tpu_custom_call.1} parent=31 // pred_check_branch
          %206 = sbr.rel (%p204) target = $region36
        $region35: #{tpu_custom_call.1} parent=31 // pred_region
          %207 = dma.done %s200, 131072
        $region36: #{tpu_custom_call.1} parent=31 // pred_fallthru
          _
        // Predicated region
        $region37: #{tpu_custom_call.1} parent=31 // pred_check
          %p208 = pneg %p77
        $region38: #{tpu_custom_call.1} parent=31 // pred_check_branch
          %210 = sbr.rel (%p208) target = $region40
        $region39: #{tpu_custom_call.1} parent=31 // pred_region
          %211 = dma.done [#allocation6], 4096
        $region40: #{tpu_custom_call.1} parent=31 // pred_fallthru
          _
        // Predicated region
        $region41: #{tpu_custom_call.1} parent=31 // pred_check
          %p212 = pneg %p98
        $region42: #{tpu_custom_call.1} parent=31 // pred_check_branch
          %214 = sbr.rel (%p212) target = $region44
        $region43: #{tpu_custom_call.1} parent=31 // pred_region
          %215 = dma.done [#allocation6], 16
        $region44: #{tpu_custom_call.1} parent=31 // pred_fallthru
          _
        %s216 = sand.u32 %s43, 1
        %s217 = scalar_lea.sflag [#allocation3], %s216
        %s218 = sand.u32 %s43, 1
        %s219 = smul.addr %s218, 8192
        %s220 = scalar_lea.vmem [#allocation2], %s219
        %p221 = pneg %p56
        %p222 = pneg %p53
        %p223 = pneg %p77
        %p224 = pneg %p74
        %p225 = pneg %p98
        %p226 = pneg %p95
        %p227 = pneg %p124
        %p228 = pneg %p121
        %s229 = sand.u32 %s111, 1
        %s230 = scalar_lea.sflag [#allocation4], %s229
        %s231 = sand.u32 %s111, 1
        %s232 = smul.addr %s231, 16
        %s233 = scalar_lea.vmem [#allocation8], %s232
        %s234 = smul.u32 16, %s25
        %s235 = smul.u32 32, %s26
        %s236 = smul.u32 2, %s25
        %v237 = vld [vmem:[%s203] sm:$0xff]
        %v238 = vld [vmem:[%s203 + $0x8] sm:$0xff]
        %v239 = vld [vmem:[%s203 + $0x10] sm:$0xff]
        %v240 = vld [vmem:[%s203 + $0x18] sm:$0xff]
        %v241 = vld [vmem:[%s203 + $0x20] sm:$0xff]
        %v242 = vld [vmem:[%s203 + $0x28] sm:$0xff]
        %v243 = vld [vmem:[%s203 + $0x30] sm:$0xff]
        %v244 = vld [vmem:[%s203 + $0x38] sm:$0xff]
        %v245 = vld [vmem:[%s203 + $0x40] sm:$0xff]
        %v246 = vld [vmem:[%s203 + $0x48] sm:$0xff]
        %v247 = vld [vmem:[%s203 + $0x50] sm:$0xff]
        %v248 = vld [vmem:[%s203 + $0x58] sm:$0xff]
        %v249 = vld [vmem:[%s203 + $0x60] sm:$0xff]
        %v250 = vld [vmem:[%s203 + $0x68] sm:$0xff]
        %v251 = vld [vmem:[%s203 + $0x70] sm:$0xff]
        %v252 = vld [vmem:[%s203 + $0x78] sm:$0xff]
        %v253 = vld [vmem:[%s203 + $0x80] sm:$0xff]
        %v254 = vld [vmem:[%s203 + $0x88] sm:$0xff]
        %v255 = vld [vmem:[%s203 + $0x90] sm:$0xff]
        %v256 = vld [vmem:[%s203 + $0x98] sm:$0xff]
        %v257 = vld [vmem:[%s203 + $0xa0] sm:$0xff]
        %v258 = vld [vmem:[%s203 + $0xa8] sm:$0xff]
        %v259 = vld [vmem:[%s203 + $0xb0] sm:$0xff]
        %v260 = vld [vmem:[%s203 + $0xb8] sm:$0xff]
        %v261 = vld [vmem:[%s203 + $0xc0] sm:$0xff]
        %v262 = vld [vmem:[%s203 + $0xc8] sm:$0xff]
        %v263 = vld [vmem:[%s203 + $0xd0] sm:$0xff]
        %v264 = vld [vmem:[%s203 + $0xd8] sm:$0xff]
        %v265 = vld [vmem:[%s203 + $0xe0] sm:$0xff]
        %v266 = vld [vmem:[%s203 + $0xe8] sm:$0xff]
        %v267 = vld [vmem:[%s203 + $0xf0] sm:$0xff]
        %v268 = vld [vmem:[%s203 + $0xf8] sm:$0xff]
        %v269 = vld [vmem:[%s203 + $0x100] sm:$0xff]
        %v270 = vld [vmem:[%s203 + $0x108] sm:$0xff]
        %v271 = vld [vmem:[%s203 + $0x110] sm:$0xff]
        %v272 = vld [vmem:[%s203 + $0x118] sm:$0xff]
        %v273 = vld [vmem:[%s203 + $0x120] sm:$0xff]
        %v274 = vld [vmem:[%s203 + $0x128] sm:$0xff]
        %v275 = vld [vmem:[%s203 + $0x130] sm:$0xff]
        %v276 = vld [vmem:[%s203 + $0x138] sm:$0xff]
        %v277 = vld [vmem:[%s203 + $0x140] sm:$0xff]
        %v278 = vld [vmem:[%s203 + $0x148] sm:$0xff]
        %v279 = vld [vmem:[%s203 + $0x150] sm:$0xff]
        %v280 = vld [vmem:[%s203 + $0x158] sm:$0xff]
        %v281 = vld [vmem:[%s203 + $0x160] sm:$0xff]
        %v282 = vld [vmem:[%s203 + $0x168] sm:$0xff]
        %v283 = vld [vmem:[%s203 + $0x170] sm:$0xff]
        %v284 = vld [vmem:[%s203 + $0x178] sm:$0xff]
        %v285 = vld [vmem:[%s203 + $0x180] sm:$0xff]
        %v286 = vld [vmem:[%s203 + $0x188] sm:$0xff]
        %v287 = vld [vmem:[%s203 + $0x190] sm:$0xff]
        %v288 = vld [vmem:[%s203 + $0x198] sm:$0xff]
        %v289 = vld [vmem:[%s203 + $0x1a0] sm:$0xff]
        %v290 = vld [vmem:[%s203 + $0x1a8] sm:$0xff]
        %v291 = vld [vmem:[%s203 + $0x1b0] sm:$0xff]
        %v292 = vld [vmem:[%s203 + $0x1b8] sm:$0xff]
        %v293 = vld [vmem:[%s203 + $0x1c0] sm:$0xff]
        %v294 = vld [vmem:[%s203 + $0x1c8] sm:$0xff]
        %v295 = vld [vmem:[%s203 + $0x1d0] sm:$0xff]
        %v296 = vld [vmem:[%s203 + $0x1d8] sm:$0xff]
        %v297 = vld [vmem:[%s203 + $0x1e0] sm:$0xff]
        %v298 = vld [vmem:[%s203 + $0x1e8] sm:$0xff]
        %v299 = vld [vmem:[%s203 + $0x1f0] sm:$0xff]
        %v300 = vld [vmem:[%s203 + $0x1f8] sm:$0xff]
        %v301 = vld [vmem:[%s203 + $0x200] sm:$0xff]
        %v302 = vld [vmem:[%s203 + $0x208] sm:$0xff]
        %v303 = vld [vmem:[%s203 + $0x210] sm:$0xff]
        %v304 = vld [vmem:[%s203 + $0x218] sm:$0xff]
        %v305 = vld [vmem:[%s203 + $0x220] sm:$0xff]
        %v306 = vld [vmem:[%s203 + $0x228] sm:$0xff]
        %v307 = vld [vmem:[%s203 + $0x230] sm:$0xff]
        %v308 = vld [vmem:[%s203 + $0x238] sm:$0xff]
        %v309 = vld [vmem:[%s203 + $0x240] sm:$0xff]
        %v310 = vld [vmem:[%s203 + $0x248] sm:$0xff]
        %v311 = vld [vmem:[%s203 + $0x250] sm:$0xff]
        %v312 = vld [vmem:[%s203 + $0x258] sm:$0xff]
        %v313 = vld [vmem:[%s203 + $0x260] sm:$0xff]
        %v314 = vld [vmem:[%s203 + $0x268] sm:$0xff]
        %v315 = vld [vmem:[%s203 + $0x270] sm:$0xff]
        %v316 = vld [vmem:[%s203 + $0x278] sm:$0xff]
        %v317 = vld [vmem:[%s203 + $0x280] sm:$0xff]
        %v318 = vld [vmem:[%s203 + $0x288] sm:$0xff]
        %v319 = vld [vmem:[%s203 + $0x290] sm:$0xff]
        %v320 = vld [vmem:[%s203 + $0x298] sm:$0xff]
        %v321 = vld [vmem:[%s203 + $0x2a0] sm:$0xff]
        %v322 = vld [vmem:[%s203 + $0x2a8] sm:$0xff]
        %v323 = vld [vmem:[%s203 + $0x2b0] sm:$0xff]
        %v324 = vld [vmem:[%s203 + $0x2b8] sm:$0xff]
        %v325 = vld [vmem:[%s203 + $0x2c0] sm:$0xff]
        %v326 = vld [vmem:[%s203 + $0x2c8] sm:$0xff]
        %v327 = vld [vmem:[%s203 + $0x2d0] sm:$0xff]
        %v328 = vld [vmem:[%s203 + $0x2d8] sm:$0xff]
        %v329 = vld [vmem:[%s203 + $0x2e0] sm:$0xff]
        %v330 = vld [vmem:[%s203 + $0x2e8] sm:$0xff]
        %v331 = vld [vmem:[%s203 + $0x2f0] sm:$0xff]
        %v332 = vld [vmem:[%s203 + $0x2f8] sm:$0xff]
        %v333 = vld [vmem:[%s203 + $0x300] sm:$0xff]
        %v334 = vld [vmem:[%s203 + $0x308] sm:$0xff]
        %v335 = vld [vmem:[%s203 + $0x310] sm:$0xff]
        %v336 = vld [vmem:[%s203 + $0x318] sm:$0xff]
        %v337 = vld [vmem:[%s203 + $0x320] sm:$0xff]
        %v338 = vld [vmem:[%s203 + $0x328] sm:$0xff]
        %v339 = vld [vmem:[%s203 + $0x330] sm:$0xff]
        %v340 = vld [vmem:[%s203 + $0x338] sm:$0xff]
        %v341 = vld [vmem:[%s203 + $0x340] sm:$0xff]
        %v342 = vld [vmem:[%s203 + $0x348] sm:$0xff]
        %v343 = vld [vmem:[%s203 + $0x350] sm:$0xff]
        %v344 = vld [vmem:[%s203 + $0x358] sm:$0xff]
        %v345 = vld [vmem:[%s203 + $0x360] sm:$0xff]
        %v346 = vld [vmem:[%s203 + $0x368] sm:$0xff]
        %v347 = vld [vmem:[%s203 + $0x370] sm:$0xff]
        %v348 = vld [vmem:[%s203 + $0x378] sm:$0xff]
        %v349 = vld [vmem:[%s203 + $0x380] sm:$0xff]
        %v350 = vld [vmem:[%s203 + $0x388] sm:$0xff]
        %v351 = vld [vmem:[%s203 + $0x390] sm:$0xff]
        %v352 = vld [vmem:[%s203 + $0x398] sm:$0xff]
        %v353 = vld [vmem:[%s203 + $0x3a0] sm:$0xff]
        %v354 = vld [vmem:[%s203 + $0x3a8] sm:$0xff]
        %v355 = vld [vmem:[%s203 + $0x3b0] sm:$0xff]
        %v356 = vld [vmem:[%s203 + $0x3b8] sm:$0xff]
        %v357 = vld [vmem:[%s203 + $0x3c0] sm:$0xff]
        %v358 = vld [vmem:[%s203 + $0x3c8] sm:$0xff]
        %v359 = vld [vmem:[%s203 + $0x3d0] sm:$0xff]
        %v360 = vld [vmem:[%s203 + $0x3d8] sm:$0xff]
        %v361 = vld [vmem:[%s203 + $0x3e0] sm:$0xff]
        %v362 = vld [vmem:[%s203 + $0x3e8] sm:$0xff]
        %v363 = vld [vmem:[%s203 + $0x3f0] sm:$0xff]
        %v364 = vld [vmem:[%s203 + $0x3f8] sm:$0xff]
        %v365 = vld [vmem:[%s203 + $0x400] sm:$0xff]
        %v366 = vld [vmem:[%s203 + $0x408] sm:$0xff]
        %v367 = vld [vmem:[%s203 + $0x410] sm:$0xff]
        %v368 = vld [vmem:[%s203 + $0x418] sm:$0xff]
        %v369 = vld [vmem:[%s203 + $0x420] sm:$0xff]
        %v370 = vld [vmem:[%s203 + $0x428] sm:$0xff]
        %v371 = vld [vmem:[%s203 + $0x430] sm:$0xff]
        %v372 = vld [vmem:[%s203 + $0x438] sm:$0xff]
        %v373 = vld [vmem:[%s203 + $0x440] sm:$0xff]
        %v374 = vld [vmem:[%s203 + $0x448] sm:$0xff]
        %v375 = vld [vmem:[%s203 + $0x450] sm:$0xff]
        %v376 = vld [vmem:[%s203 + $0x458] sm:$0xff]
        %v377 = vld [vmem:[%s203 + $0x460] sm:$0xff]
        %v378 = vld [vmem:[%s203 + $0x468] sm:$0xff]
        %v379 = vld [vmem:[%s203 + $0x470] sm:$0xff]
        %v380 = vld [vmem:[%s203 + $0x478] sm:$0xff]
        %v381 = vld [vmem:[%s203 + $0x480] sm:$0xff]
        %v382 = vld [vmem:[%s203 + $0x488] sm:$0xff]
        %v383 = vld [vmem:[%s203 + $0x490] sm:$0xff]
        %v384 = vld [vmem:[%s203 + $0x498] sm:$0xff]
        %v385 = vld [vmem:[%s203 + $0x4a0] sm:$0xff]
        %v386 = vld [vmem:[%s203 + $0x4a8] sm:$0xff]
        %v387 = vld [vmem:[%s203 + $0x4b0] sm:$0xff]
        %v388 = vld [vmem:[%s203 + $0x4b8] sm:$0xff]
        %v389 = vld [vmem:[%s203 + $0x4c0] sm:$0xff]
        %v390 = vld [vmem:[%s203 + $0x4c8] sm:$0xff]
        %v391 = vld [vmem:[%s203 + $0x4d0] sm:$0xff]
        %v392 = vld [vmem:[%s203 + $0x4d8] sm:$0xff]
        %v393 = vld [vmem:[%s203 + $0x4e0] sm:$0xff]
        %v394 = vld [vmem:[%s203 + $0x4e8] sm:$0xff]
        %v395 = vld [vmem:[%s203 + $0x4f0] sm:$0xff]
        %v396 = vld [vmem:[%s203 + $0x4f8] sm:$0xff]
        %v397 = vld [vmem:[%s203 + $0x500] sm:$0xff]
        %v398 = vld [vmem:[%s203 + $0x508] sm:$0xff]
        %v399 = vld [vmem:[%s203 + $0x510] sm:$0xff]
        %v400 = vld [vmem:[%s203 + $0x518] sm:$0xff]
        %v401 = vld [vmem:[%s203 + $0x520] sm:$0xff]
        %v402 = vld [vmem:[%s203 + $0x528] sm:$0xff]
        %v403 = vld [vmem:[%s203 + $0x530] sm:$0xff]
        %v404 = vld [vmem:[%s203 + $0x538] sm:$0xff]
        %v405 = vld [vmem:[%s203 + $0x540] sm:$0xff]
        %v406 = vld [vmem:[%s203 + $0x548] sm:$0xff]
        %v407 = vld [vmem:[%s203 + $0x550] sm:$0xff]
        %v408 = vld [vmem:[%s203 + $0x558] sm:$0xff]
        %v409 = vld [vmem:[%s203 + $0x560] sm:$0xff]
        %v410 = vld [vmem:[%s203 + $0x568] sm:$0xff]
        %v411 = vld [vmem:[%s203 + $0x570] sm:$0xff]
        %v412 = vld [vmem:[%s203 + $0x578] sm:$0xff]
        %v413 = vld [vmem:[%s203 + $0x580] sm:$0xff]
        %v414 = vld [vmem:[%s203 + $0x588] sm:$0xff]
        %v415 = vld [vmem:[%s203 + $0x590] sm:$0xff]
        %v416 = vld [vmem:[%s203 + $0x598] sm:$0xff]
        %v417 = vld [vmem:[%s203 + $0x5a0] sm:$0xff]
        %v418 = vld [vmem:[%s203 + $0x5a8] sm:$0xff]
        %v419 = vld [vmem:[%s203 + $0x5b0] sm:$0xff]
        %v420 = vld [vmem:[%s203 + $0x5b8] sm:$0xff]
        %v421 = vld [vmem:[%s203 + $0x5c0] sm:$0xff]
        %v422 = vld [vmem:[%s203 + $0x5c8] sm:$0xff]
        %v423 = vld [vmem:[%s203 + $0x5d0] sm:$0xff]
        %v424 = vld [vmem:[%s203 + $0x5d8] sm:$0xff]
        %v425 = vld [vmem:[%s203 + $0x5e0] sm:$0xff]
        %v426 = vld [vmem:[%s203 + $0x5e8] sm:$0xff]
        %v427 = vld [vmem:[%s203 + $0x5f0] sm:$0xff]
        %v428 = vld [vmem:[%s203 + $0x5f8] sm:$0xff]
        %v429 = vld [vmem:[%s203 + $0x600] sm:$0xff]
        %v430 = vld [vmem:[%s203 + $0x608] sm:$0xff]
        %v431 = vld [vmem:[%s203 + $0x610] sm:$0xff]
        %v432 = vld [vmem:[%s203 + $0x618] sm:$0xff]
        %v433 = vld [vmem:[%s203 + $0x620] sm:$0xff]
        %v434 = vld [vmem:[%s203 + $0x628] sm:$0xff]
        %v435 = vld [vmem:[%s203 + $0x630] sm:$0xff]
        %v436 = vld [vmem:[%s203 + $0x638] sm:$0xff]
        %v437 = vld [vmem:[%s203 + $0x640] sm:$0xff]
        %v438 = vld [vmem:[%s203 + $0x648] sm:$0xff]
        %v439 = vld [vmem:[%s203 + $0x650] sm:$0xff]
        %v440 = vld [vmem:[%s203 + $0x658] sm:$0xff]
        %v441 = vld [vmem:[%s203 + $0x660] sm:$0xff]
        %v442 = vld [vmem:[%s203 + $0x668] sm:$0xff]
        %v443 = vld [vmem:[%s203 + $0x670] sm:$0xff]
        %v444 = vld [vmem:[%s203 + $0x678] sm:$0xff]
        %v445 = vld [vmem:[%s203 + $0x680] sm:$0xff]
        %v446 = vld [vmem:[%s203 + $0x688] sm:$0xff]
        %v447 = vld [vmem:[%s203 + $0x690] sm:$0xff]
        %v448 = vld [vmem:[%s203 + $0x698] sm:$0xff]
        %v449 = vld [vmem:[%s203 + $0x6a0] sm:$0xff]
        %v450 = vld [vmem:[%s203 + $0x6a8] sm:$0xff]
        %v451 = vld [vmem:[%s203 + $0x6b0] sm:$0xff]
        %v452 = vld [vmem:[%s203 + $0x6b8] sm:$0xff]
        %v453 = vld [vmem:[%s203 + $0x6c0] sm:$0xff]
        %v454 = vld [vmem:[%s203 + $0x6c8] sm:$0xff]
        %v455 = vld [vmem:[%s203 + $0x6d0] sm:$0xff]
        %v456 = vld [vmem:[%s203 + $0x6d8] sm:$0xff]
        %v457 = vld [vmem:[%s203 + $0x6e0] sm:$0xff]
        %v458 = vld [vmem:[%s203 + $0x6e8] sm:$0xff]
        %v459 = vld [vmem:[%s203 + $0x6f0] sm:$0xff]
        %v460 = vld [vmem:[%s203 + $0x6f8] sm:$0xff]
        %v461 = vld [vmem:[%s203 + $0x700] sm:$0xff]
        %v462 = vld [vmem:[%s203 + $0x708] sm:$0xff]
        %v463 = vld [vmem:[%s203 + $0x710] sm:$0xff]
        %v464 = vld [vmem:[%s203 + $0x718] sm:$0xff]
        %v465 = vld [vmem:[%s203 + $0x720] sm:$0xff]
        %v466 = vld [vmem:[%s203 + $0x728] sm:$0xff]
        %v467 = vld [vmem:[%s203 + $0x730] sm:$0xff]
        %v468 = vld [vmem:[%s203 + $0x738] sm:$0xff]
        %v469 = vld [vmem:[%s203 + $0x740] sm:$0xff]
        %v470 = vld [vmem:[%s203 + $0x748] sm:$0xff]
        %v471 = vld [vmem:[%s203 + $0x750] sm:$0xff]
        %v472 = vld [vmem:[%s203 + $0x758] sm:$0xff]
        %v473 = vld [vmem:[%s203 + $0x760] sm:$0xff]
        %v474 = vld [vmem:[%s203 + $0x768] sm:$0xff]
        %v475 = vld [vmem:[%s203 + $0x770] sm:$0xff]
        %v476 = vld [vmem:[%s203 + $0x778] sm:$0xff]
        %v477 = vld [vmem:[%s203 + $0x780] sm:$0xff]
        %v478 = vld [vmem:[%s203 + $0x788] sm:$0xff]
        %v479 = vld [vmem:[%s203 + $0x790] sm:$0xff]
        %v480 = vld [vmem:[%s203 + $0x798] sm:$0xff]
        %v481 = vld [vmem:[%s203 + $0x7a0] sm:$0xff]
        %v482 = vld [vmem:[%s203 + $0x7a8] sm:$0xff]
        %v483 = vld [vmem:[%s203 + $0x7b0] sm:$0xff]
        %v484 = vld [vmem:[%s203 + $0x7b8] sm:$0xff]
        %v485 = vld [vmem:[%s203 + $0x7c0] sm:$0xff]
        %v486 = vld [vmem:[%s203 + $0x7c8] sm:$0xff]
        %v487 = vld [vmem:[%s203 + $0x7d0] sm:$0xff]
        %v488 = vld [vmem:[%s203 + $0x7d8] sm:$0xff]
        %v489 = vld [vmem:[%s203 + $0x7e0] sm:$0xff]
        %v490 = vld [vmem:[%s203 + $0x7e8] sm:$0xff]
        %v491 = vld [vmem:[%s203 + $0x7f0] sm:$0xff]
        %v492 = vld [vmem:[%s203 + $0x7f8] sm:$0xff]
        %v493 = vld [vmem:[%s203 + $0x800] sm:$0xff]
        %v494 = vld [vmem:[%s203 + $0x808] sm:$0xff]
        %v495 = vld [vmem:[%s203 + $0x810] sm:$0xff]
        %v496 = vld [vmem:[%s203 + $0x818] sm:$0xff]
        %v497 = vld [vmem:[%s203 + $0x820] sm:$0xff]
        %v498 = vld [vmem:[%s203 + $0x828] sm:$0xff]
        %v499 = vld [vmem:[%s203 + $0x830] sm:$0xff]
        %v500 = vld [vmem:[%s203 + $0x838] sm:$0xff]
        %v501 = vld [vmem:[%s203 + $0x840] sm:$0xff]
        %v502 = vld [vmem:[%s203 + $0x848] sm:$0xff]
        %v503 = vld [vmem:[%s203 + $0x850] sm:$0xff]
        %v504 = vld [vmem:[%s203 + $0x858] sm:$0xff]
        %v505 = vld [vmem:[%s203 + $0x860] sm:$0xff]
        %v506 = vld [vmem:[%s203 + $0x868] sm:$0xff]
        %v507 = vld [vmem:[%s203 + $0x870] sm:$0xff]
        %v508 = vld [vmem:[%s203 + $0x878] sm:$0xff]
        %v509 = vld [vmem:[%s203 + $0x880] sm:$0xff]
        %v510 = vld [vmem:[%s203 + $0x888] sm:$0xff]
        %v511 = vld [vmem:[%s203 + $0x890] sm:$0xff]
        %v512 = vld [vmem:[%s203 + $0x898] sm:$0xff]
        %v513 = vld [vmem:[%s203 + $0x8a0] sm:$0xff]
        %v514 = vld [vmem:[%s203 + $0x8a8] sm:$0xff]
        %v515 = vld [vmem:[%s203 + $0x8b0] sm:$0xff]
        %v516 = vld [vmem:[%s203 + $0x8b8] sm:$0xff]
        %v517 = vld [vmem:[%s203 + $0x8c0] sm:$0xff]
        %v518 = vld [vmem:[%s203 + $0x8c8] sm:$0xff]
        %v519 = vld [vmem:[%s203 + $0x8d0] sm:$0xff]
        %v520 = vld [vmem:[%s203 + $0x8d8] sm:$0xff]
        %v521 = vld [vmem:[%s203 + $0x8e0] sm:$0xff]
        %v522 = vld [vmem:[%s203 + $0x8e8] sm:$0xff]
        %v523 = vld [vmem:[%s203 + $0x8f0] sm:$0xff]
        %v524 = vld [vmem:[%s203 + $0x8f8] sm:$0xff]
        %v525 = vld [vmem:[%s203 + $0x900] sm:$0xff]
        %v526 = vld [vmem:[%s203 + $0x908] sm:$0xff]
        %v527 = vld [vmem:[%s203 + $0x910] sm:$0xff]
        %v528 = vld [vmem:[%s203 + $0x918] sm:$0xff]
        %v529 = vld [vmem:[%s203 + $0x920] sm:$0xff]
        %v530 = vld [vmem:[%s203 + $0x928] sm:$0xff]
        %v531 = vld [vmem:[%s203 + $0x930] sm:$0xff]
        %v532 = vld [vmem:[%s203 + $0x938] sm:$0xff]
        %v533 = vld [vmem:[%s203 + $0x940] sm:$0xff]
        %v534 = vld [vmem:[%s203 + $0x948] sm:$0xff]
        %v535 = vld [vmem:[%s203 + $0x950] sm:$0xff]
        %v536 = vld [vmem:[%s203 + $0x958] sm:$0xff]
        %v537 = vld [vmem:[%s203 + $0x960] sm:$0xff]
        %v538 = vld [vmem:[%s203 + $0x968] sm:$0xff]
        %v539 = vld [vmem:[%s203 + $0x970] sm:$0xff]
        %v540 = vld [vmem:[%s203 + $0x978] sm:$0xff]
        %v541 = vld [vmem:[%s203 + $0x980] sm:$0xff]
        %v542 = vld [vmem:[%s203 + $0x988] sm:$0xff]
        %v543 = vld [vmem:[%s203 + $0x990] sm:$0xff]
        %v544 = vld [vmem:[%s203 + $0x998] sm:$0xff]
        %v545 = vld [vmem:[%s203 + $0x9a0] sm:$0xff]
        %v546 = vld [vmem:[%s203 + $0x9a8] sm:$0xff]
        %v547 = vld [vmem:[%s203 + $0x9b0] sm:$0xff]
        %v548 = vld [vmem:[%s203 + $0x9b8] sm:$0xff]
        %v549 = vld [vmem:[%s203 + $0x9c0] sm:$0xff]
        %v550 = vld [vmem:[%s203 + $0x9c8] sm:$0xff]
        %v551 = vld [vmem:[%s203 + $0x9d0] sm:$0xff]
        %v552 = vld [vmem:[%s203 + $0x9d8] sm:$0xff]
        %v553 = vld [vmem:[%s203 + $0x9e0] sm:$0xff]
        %v554 = vld [vmem:[%s203 + $0x9e8] sm:$0xff]
        %v555 = vld [vmem:[%s203 + $0x9f0] sm:$0xff]
        %v556 = vld [vmem:[%s203 + $0x9f8] sm:$0xff]
        %v557 = vld [vmem:[%s203 + $0xa00] sm:$0xff]
        %v558 = vld [vmem:[%s203 + $0xa08] sm:$0xff]
        %v559 = vld [vmem:[%s203 + $0xa10] sm:$0xff]
        %v560 = vld [vmem:[%s203 + $0xa18] sm:$0xff]
        %v561 = vld [vmem:[%s203 + $0xa20] sm:$0xff]
        %v562 = vld [vmem:[%s203 + $0xa28] sm:$0xff]
        %v563 = vld [vmem:[%s203 + $0xa30] sm:$0xff]
        %v564 = vld [vmem:[%s203 + $0xa38] sm:$0xff]
        %v565 = vld [vmem:[%s203 + $0xa40] sm:$0xff]
        %v566 = vld [vmem:[%s203 + $0xa48] sm:$0xff]
        %v567 = vld [vmem:[%s203 + $0xa50] sm:$0xff]
        %v568 = vld [vmem:[%s203 + $0xa58] sm:$0xff]
        %v569 = vld [vmem:[%s203 + $0xa60] sm:$0xff]
        %v570 = vld [vmem:[%s203 + $0xa68] sm:$0xff]
        %v571 = vld [vmem:[%s203 + $0xa70] sm:$0xff]
        %v572 = vld [vmem:[%s203 + $0xa78] sm:$0xff]
        %v573 = vld [vmem:[%s203 + $0xa80] sm:$0xff]
        %v574 = vld [vmem:[%s203 + $0xa88] sm:$0xff]
        %v575 = vld [vmem:[%s203 + $0xa90] sm:$0xff]
        %v576 = vld [vmem:[%s203 + $0xa98] sm:$0xff]
        %v577 = vld [vmem:[%s203 + $0xaa0] sm:$0xff]
        %v578 = vld [vmem:[%s203 + $0xaa8] sm:$0xff]
        %v579 = vld [vmem:[%s203 + $0xab0] sm:$0xff]
        %v580 = vld [vmem:[%s203 + $0xab8] sm:$0xff]
        %v581 = vld [vmem:[%s203 + $0xac0] sm:$0xff]
        %v582 = vld [vmem:[%s203 + $0xac8] sm:$0xff]
        %v583 = vld [vmem:[%s203 + $0xad0] sm:$0xff]
        %v584 = vld [vmem:[%s203 + $0xad8] sm:$0xff]
        %v585 = vld [vmem:[%s203 + $0xae0] sm:$0xff]
        %v586 = vld [vmem:[%s203 + $0xae8] sm:$0xff]
        %v587 = vld [vmem:[%s203 + $0xaf0] sm:$0xff]
        %v588 = vld [vmem:[%s203 + $0xaf8] sm:$0xff]
        %v589 = vld [vmem:[%s203 + $0xb00] sm:$0xff]
        %v590 = vld [vmem:[%s203 + $0xb08] sm:$0xff]
        %v591 = vld [vmem:[%s203 + $0xb10] sm:$0xff]
        %v592 = vld [vmem:[%s203 + $0xb18] sm:$0xff]
        %v593 = vld [vmem:[%s203 + $0xb20] sm:$0xff]
        %v594 = vld [vmem:[%s203 + $0xb28] sm:$0xff]
        %v595 = vld [vmem:[%s203 + $0xb30] sm:$0xff]
        %v596 = vld [vmem:[%s203 + $0xb38] sm:$0xff]
        %v597 = vld [vmem:[%s203 + $0xb40] sm:$0xff]
        %v598 = vld [vmem:[%s203 + $0xb48] sm:$0xff]
        %v599 = vld [vmem:[%s203 + $0xb50] sm:$0xff]
        %v600 = vld [vmem:[%s203 + $0xb58] sm:$0xff]
        %v601 = vld [vmem:[%s203 + $0xb60] sm:$0xff]
        %v602 = vld [vmem:[%s203 + $0xb68] sm:$0xff]
        %v603 = vld [vmem:[%s203 + $0xb70] sm:$0xff]
        %v604 = vld [vmem:[%s203 + $0xb78] sm:$0xff]
        %v605 = vld [vmem:[%s203 + $0xb80] sm:$0xff]
        %v606 = vld [vmem:[%s203 + $0xb88] sm:$0xff]
        %v607 = vld [vmem:[%s203 + $0xb90] sm:$0xff]
        %v608 = vld [vmem:[%s203 + $0xb98] sm:$0xff]
        %v609 = vld [vmem:[%s203 + $0xba0] sm:$0xff]
        %v610 = vld [vmem:[%s203 + $0xba8] sm:$0xff]
        %v611 = vld [vmem:[%s203 + $0xbb0] sm:$0xff]
        %v612 = vld [vmem:[%s203 + $0xbb8] sm:$0xff]
        %v613 = vld [vmem:[%s203 + $0xbc0] sm:$0xff]
        %v614 = vld [vmem:[%s203 + $0xbc8] sm:$0xff]
        %v615 = vld [vmem:[%s203 + $0xbd0] sm:$0xff]
        %v616 = vld [vmem:[%s203 + $0xbd8] sm:$0xff]
        %v617 = vld [vmem:[%s203 + $0xbe0] sm:$0xff]
        %v618 = vld [vmem:[%s203 + $0xbe8] sm:$0xff]
        %v619 = vld [vmem:[%s203 + $0xbf0] sm:$0xff]
        %v620 = vld [vmem:[%s203 + $0xbf8] sm:$0xff]
        %v621 = vld [vmem:[%s203 + $0xc00] sm:$0xff]
        %v622 = vld [vmem:[%s203 + $0xc08] sm:$0xff]
        %v623 = vld [vmem:[%s203 + $0xc10] sm:$0xff]
        %v624 = vld [vmem:[%s203 + $0xc18] sm:$0xff]
        %v625 = vld [vmem:[%s203 + $0xc20] sm:$0xff]
        %v626 = vld [vmem:[%s203 + $0xc28] sm:$0xff]
        %v627 = vld [vmem:[%s203 + $0xc30] sm:$0xff]
        %v628 = vld [vmem:[%s203 + $0xc38] sm:$0xff]
        %v629 = vld [vmem:[%s203 + $0xc40] sm:$0xff]
        %v630 = vld [vmem:[%s203 + $0xc48] sm:$0xff]
        %v631 = vld [vmem:[%s203 + $0xc50] sm:$0xff]
        %v632 = vld [vmem:[%s203 + $0xc58] sm:$0xff]
        %v633 = vld [vmem:[%s203 + $0xc60] sm:$0xff]
        %v634 = vld [vmem:[%s203 + $0xc68] sm:$0xff]
        %v635 = vld [vmem:[%s203 + $0xc70] sm:$0xff]
        %v636 = vld [vmem:[%s203 + $0xc78] sm:$0xff]
        %v637 = vld [vmem:[%s203 + $0xc80] sm:$0xff]
        %v638 = vld [vmem:[%s203 + $0xc88] sm:$0xff]
        %v639 = vld [vmem:[%s203 + $0xc90] sm:$0xff]
        %v640 = vld [vmem:[%s203 + $0xc98] sm:$0xff]
        %v641 = vld [vmem:[%s203 + $0xca0] sm:$0xff]
        %v642 = vld [vmem:[%s203 + $0xca8] sm:$0xff]
        %v643 = vld [vmem:[%s203 + $0xcb0] sm:$0xff]
        %v644 = vld [vmem:[%s203 + $0xcb8] sm:$0xff]
        %v645 = vld [vmem:[%s203 + $0xcc0] sm:$0xff]
        %v646 = vld [vmem:[%s203 + $0xcc8] sm:$0xff]
        %v647 = vld [vmem:[%s203 + $0xcd0] sm:$0xff]
        %v648 = vld [vmem:[%s203 + $0xcd8] sm:$0xff]
        %v649 = vld [vmem:[%s203 + $0xce0] sm:$0xff]
        %v650 = vld [vmem:[%s203 + $0xce8] sm:$0xff]
        %v651 = vld [vmem:[%s203 + $0xcf0] sm:$0xff]
        %v652 = vld [vmem:[%s203 + $0xcf8] sm:$0xff]
        %v653 = vld [vmem:[%s203 + $0xd00] sm:$0xff]
        %v654 = vld [vmem:[%s203 + $0xd08] sm:$0xff]
        %v655 = vld [vmem:[%s203 + $0xd10] sm:$0xff]
        %v656 = vld [vmem:[%s203 + $0xd18] sm:$0xff]
        %v657 = vld [vmem:[%s203 + $0xd20] sm:$0xff]
        %v658 = vld [vmem:[%s203 + $0xd28] sm:$0xff]
        %v659 = vld [vmem:[%s203 + $0xd30] sm:$0xff]
        %v660 = vld [vmem:[%s203 + $0xd38] sm:$0xff]
        %v661 = vld [vmem:[%s203 + $0xd40] sm:$0xff]
        %v662 = vld [vmem:[%s203 + $0xd48] sm:$0xff]
        %v663 = vld [vmem:[%s203 + $0xd50] sm:$0xff]
        %v664 = vld [vmem:[%s203 + $0xd58] sm:$0xff]
        %v665 = vld [vmem:[%s203 + $0xd60] sm:$0xff]
        %v666 = vld [vmem:[%s203 + $0xd68] sm:$0xff]
        %v667 = vld [vmem:[%s203 + $0xd70] sm:$0xff]
        %v668 = vld [vmem:[%s203 + $0xd78] sm:$0xff]
        %v669 = vld [vmem:[%s203 + $0xd80] sm:$0xff]
        %v670 = vld [vmem:[%s203 + $0xd88] sm:$0xff]
        %v671 = vld [vmem:[%s203 + $0xd90] sm:$0xff]
        %v672 = vld [vmem:[%s203 + $0xd98] sm:$0xff]
        %v673 = vld [vmem:[%s203 + $0xda0] sm:$0xff]
        %v674 = vld [vmem:[%s203 + $0xda8] sm:$0xff]
        %v675 = vld [vmem:[%s203 + $0xdb0] sm:$0xff]
        %v676 = vld [vmem:[%s203 + $0xdb8] sm:$0xff]
        %v677 = vld [vmem:[%s203 + $0xdc0] sm:$0xff]
        %v678 = vld [vmem:[%s203 + $0xdc8] sm:$0xff]
        %v679 = vld [vmem:[%s203 + $0xdd0] sm:$0xff]
        %v680 = vld [vmem:[%s203 + $0xdd8] sm:$0xff]
        %v681 = vld [vmem:[%s203 + $0xde0] sm:$0xff]
        %v682 = vld [vmem:[%s203 + $0xde8] sm:$0xff]
        %v683 = vld [vmem:[%s203 + $0xdf0] sm:$0xff]
        %v684 = vld [vmem:[%s203 + $0xdf8] sm:$0xff]
        %v685 = vld [vmem:[%s203 + $0xe00] sm:$0xff]
        %v686 = vld [vmem:[%s203 + $0xe08] sm:$0xff]
        %v687 = vld [vmem:[%s203 + $0xe10] sm:$0xff]
        %v688 = vld [vmem:[%s203 + $0xe18] sm:$0xff]
        %v689 = vld [vmem:[%s203 + $0xe20] sm:$0xff]
        %v690 = vld [vmem:[%s203 + $0xe28] sm:$0xff]
        %v691 = vld [vmem:[%s203 + $0xe30] sm:$0xff]
        %v692 = vld [vmem:[%s203 + $0xe38] sm:$0xff]
        %v693 = vld [vmem:[%s203 + $0xe40] sm:$0xff]
        %v694 = vld [vmem:[%s203 + $0xe48] sm:$0xff]
        %v695 = vld [vmem:[%s203 + $0xe50] sm:$0xff]
        %v696 = vld [vmem:[%s203 + $0xe58] sm:$0xff]
        %v697 = vld [vmem:[%s203 + $0xe60] sm:$0xff]
        %v698 = vld [vmem:[%s203 + $0xe68] sm:$0xff]
        %v699 = vld [vmem:[%s203 + $0xe70] sm:$0xff]
        %v700 = vld [vmem:[%s203 + $0xe78] sm:$0xff]
        %v701 = vld [vmem:[%s203 + $0xe80] sm:$0xff]
        %v702 = vld [vmem:[%s203 + $0xe88] sm:$0xff]
        %v703 = vld [vmem:[%s203 + $0xe90] sm:$0xff]
        %v704 = vld [vmem:[%s203 + $0xe98] sm:$0xff]
        %v705 = vld [vmem:[%s203 + $0xea0] sm:$0xff]
        %v706 = vld [vmem:[%s203 + $0xea8] sm:$0xff]
        %v707 = vld [vmem:[%s203 + $0xeb0] sm:$0xff]
        %v708 = vld [vmem:[%s203 + $0xeb8] sm:$0xff]
        %v709 = vld [vmem:[%s203 + $0xec0] sm:$0xff]
        %v710 = vld [vmem:[%s203 + $0xec8] sm:$0xff]
        %v711 = vld [vmem:[%s203 + $0xed0] sm:$0xff]
        %v712 = vld [vmem:[%s203 + $0xed8] sm:$0xff]
        %v713 = vld [vmem:[%s203 + $0xee0] sm:$0xff]
        %v714 = vld [vmem:[%s203 + $0xee8] sm:$0xff]
        %v715 = vld [vmem:[%s203 + $0xef0] sm:$0xff]
        %v716 = vld [vmem:[%s203 + $0xef8] sm:$0xff]
        %v717 = vld [vmem:[%s203 + $0xf00] sm:$0xff]
        %v718 = vld [vmem:[%s203 + $0xf08] sm:$0xff]
        %v719 = vld [vmem:[%s203 + $0xf10] sm:$0xff]
        %v720 = vld [vmem:[%s203 + $0xf18] sm:$0xff]
        %v721 = vld [vmem:[%s203 + $0xf20] sm:$0xff]
        %v722 = vld [vmem:[%s203 + $0xf28] sm:$0xff]
        %v723 = vld [vmem:[%s203 + $0xf30] sm:$0xff]
        %v724 = vld [vmem:[%s203 + $0xf38] sm:$0xff]
        %v725 = vld [vmem:[%s203 + $0xf40] sm:$0xff]
        %v726 = vld [vmem:[%s203 + $0xf48] sm:$0xff]
        %v727 = vld [vmem:[%s203 + $0xf50] sm:$0xff]
        %v728 = vld [vmem:[%s203 + $0xf58] sm:$0xff]
        %v729 = vld [vmem:[%s203 + $0xf60] sm:$0xff]
        %v730 = vld [vmem:[%s203 + $0xf68] sm:$0xff]
        %v731 = vld [vmem:[%s203 + $0xf70] sm:$0xff]
        %v732 = vld [vmem:[%s203 + $0xf78] sm:$0xff]
        %v733 = vld [vmem:[%s203 + $0xf80] sm:$0xff]
        %v734 = vld [vmem:[%s203 + $0xf88] sm:$0xff]
        %v735 = vld [vmem:[%s203 + $0xf90] sm:$0xff]
        %v736 = vld [vmem:[%s203 + $0xf98] sm:$0xff]
        %v737 = vld [vmem:[%s203 + $0xfa0] sm:$0xff]
        %v738 = vld [vmem:[%s203 + $0xfa8] sm:$0xff]
        %v739 = vld [vmem:[%s203 + $0xfb0] sm:$0xff]
        %v740 = vld [vmem:[%s203 + $0xfb8] sm:$0xff]
        %v741 = vld [vmem:[%s203 + $0xfc0] sm:$0xff]
        %v742 = vld [vmem:[%s203 + $0xfc8] sm:$0xff]
        %v743 = vld [vmem:[%s203 + $0xfd0] sm:$0xff]
        %v744 = vld [vmem:[%s203 + $0xfd8] sm:$0xff]
        %v745 = vld [vmem:[%s203 + $0xfe0] sm:$0xff]
        %v746 = vld [vmem:[%s203 + $0xfe8] sm:$0xff]
        %v747 = vld [vmem:[%s203 + $0xff0] sm:$0xff]
        %v748 = vld [vmem:[%s203 + $0xff8] sm:$0xff]
        %v749 = vld [vmem:[%s203 + $0x1000] sm:$0xff]
        %v750 = vld [vmem:[%s203 + $0x1008] sm:$0xff]
        %v751 = vld [vmem:[%s203 + $0x1010] sm:$0xff]
        %v752 = vld [vmem:[%s203 + $0x1018] sm:$0xff]
        %v753 = vld [vmem:[%s203 + $0x1020] sm:$0xff]
        %v754 = vld [vmem:[%s203 + $0x1028] sm:$0xff]
        %v755 = vld [vmem:[%s203 + $0x1030] sm:$0xff]
        %v756 = vld [vmem:[%s203 + $0x1038] sm:$0xff]
        %v757 = vld [vmem:[%s203 + $0x1040] sm:$0xff]
        %v758 = vld [vmem:[%s203 + $0x1048] sm:$0xff]
        %v759 = vld [vmem:[%s203 + $0x1050] sm:$0xff]
        %v760 = vld [vmem:[%s203 + $0x1058] sm:$0xff]
        %v761 = vld [vmem:[%s203 + $0x1060] sm:$0xff]
        %v762 = vld [vmem:[%s203 + $0x1068] sm:$0xff]
        %v763 = vld [vmem:[%s203 + $0x1070] sm:$0xff]
        %v764 = vld [vmem:[%s203 + $0x1078] sm:$0xff]
        %v765 = vld [vmem:[%s203 + $0x1080] sm:$0xff]
        %v766 = vld [vmem:[%s203 + $0x1088] sm:$0xff]
        %v767 = vld [vmem:[%s203 + $0x1090] sm:$0xff]
        %v768 = vld [vmem:[%s203 + $0x1098] sm:$0xff]
        %v769 = vld [vmem:[%s203 + $0x10a0] sm:$0xff]
        %v770 = vld [vmem:[%s203 + $0x10a8] sm:$0xff]
        %v771 = vld [vmem:[%s203 + $0x10b0] sm:$0xff]
        %v772 = vld [vmem:[%s203 + $0x10b8] sm:$0xff]
        %v773 = vld [vmem:[%s203 + $0x10c0] sm:$0xff]
        %v774 = vld [vmem:[%s203 + $0x10c8] sm:$0xff]
        %v775 = vld [vmem:[%s203 + $0x10d0] sm:$0xff]
        %v776 = vld [vmem:[%s203 + $0x10d8] sm:$0xff]
        %v777 = vld [vmem:[%s203 + $0x10e0] sm:$0xff]
        %v778 = vld [vmem:[%s203 + $0x10e8] sm:$0xff]
        %v779 = vld [vmem:[%s203 + $0x10f0] sm:$0xff]
        %v780 = vld [vmem:[%s203 + $0x10f8] sm:$0xff]
        %v781 = vld [vmem:[%s203 + $0x1100] sm:$0xff]
        %v782 = vld [vmem:[%s203 + $0x1108] sm:$0xff]
        %v783 = vld [vmem:[%s203 + $0x1110] sm:$0xff]
        %v784 = vld [vmem:[%s203 + $0x1118] sm:$0xff]
        %v785 = vld [vmem:[%s203 + $0x1120] sm:$0xff]
        %v786 = vld [vmem:[%s203 + $0x1128] sm:$0xff]
        %v787 = vld [vmem:[%s203 + $0x1130] sm:$0xff]
        %v788 = vld [vmem:[%s203 + $0x1138] sm:$0xff]
        %v789 = vld [vmem:[%s203 + $0x1140] sm:$0xff]
        %v790 = vld [vmem:[%s203 + $0x1148] sm:$0xff]
        %v791 = vld [vmem:[%s203 + $0x1150] sm:$0xff]
        %v792 = vld [vmem:[%s203 + $0x1158] sm:$0xff]
        %v793 = vld [vmem:[%s203 + $0x1160] sm:$0xff]
        %v794 = vld [vmem:[%s203 + $0x1168] sm:$0xff]
        %v795 = vld [vmem:[%s203 + $0x1170] sm:$0xff]
        %v796 = vld [vmem:[%s203 + $0x1178] sm:$0xff]
        %v797 = vld [vmem:[%s203 + $0x1180] sm:$0xff]
        %v798 = vld [vmem:[%s203 + $0x1188] sm:$0xff]
        %v799 = vld [vmem:[%s203 + $0x1190] sm:$0xff]
        %v800 = vld [vmem:[%s203 + $0x1198] sm:$0xff]
        %v801 = vld [vmem:[%s203 + $0x11a0] sm:$0xff]
        %v802 = vld [vmem:[%s203 + $0x11a8] sm:$0xff]
        %v803 = vld [vmem:[%s203 + $0x11b0] sm:$0xff]
        %v804 = vld [vmem:[%s203 + $0x11b8] sm:$0xff]
        %v805 = vld [vmem:[%s203 + $0x11c0] sm:$0xff]
        %v806 = vld [vmem:[%s203 + $0x11c8] sm:$0xff]
        %v807 = vld [vmem:[%s203 + $0x11d0] sm:$0xff]
        %v808 = vld [vmem:[%s203 + $0x11d8] sm:$0xff]
        %v809 = vld [vmem:[%s203 + $0x11e0] sm:$0xff]
        %v810 = vld [vmem:[%s203 + $0x11e8] sm:$0xff]
        %v811 = vld [vmem:[%s203 + $0x11f0] sm:$0xff]
        %v812 = vld [vmem:[%s203 + $0x11f8] sm:$0xff]
        %v813 = vld [vmem:[%s203 + $0x1200] sm:$0xff]
        %v814 = vld [vmem:[%s203 + $0x1208] sm:$0xff]
        %v815 = vld [vmem:[%s203 + $0x1210] sm:$0xff]
        %v816 = vld [vmem:[%s203 + $0x1218] sm:$0xff]
        %v817 = vld [vmem:[%s203 + $0x1220] sm:$0xff]
        %v818 = vld [vmem:[%s203 + $0x1228] sm:$0xff]
        %v819 = vld [vmem:[%s203 + $0x1230] sm:$0xff]
        %v820 = vld [vmem:[%s203 + $0x1238] sm:$0xff]
        %v821 = vld [vmem:[%s203 + $0x1240] sm:$0xff]
        %v822 = vld [vmem:[%s203 + $0x1248] sm:$0xff]
        %v823 = vld [vmem:[%s203 + $0x1250] sm:$0xff]
        %v824 = vld [vmem:[%s203 + $0x1258] sm:$0xff]
        %v825 = vld [vmem:[%s203 + $0x1260] sm:$0xff]
        %v826 = vld [vmem:[%s203 + $0x1268] sm:$0xff]
        %v827 = vld [vmem:[%s203 + $0x1270] sm:$0xff]
        %v828 = vld [vmem:[%s203 + $0x1278] sm:$0xff]
        %v829 = vld [vmem:[%s203 + $0x1280] sm:$0xff]
        %v830 = vld [vmem:[%s203 + $0x1288] sm:$0xff]
        %v831 = vld [vmem:[%s203 + $0x1290] sm:$0xff]
        %v832 = vld [vmem:[%s203 + $0x1298] sm:$0xff]
        %v833 = vld [vmem:[%s203 + $0x12a0] sm:$0xff]
        %v834 = vld [vmem:[%s203 + $0x12a8] sm:$0xff]
        %v835 = vld [vmem:[%s203 + $0x12b0] sm:$0xff]
        %v836 = vld [vmem:[%s203 + $0x12b8] sm:$0xff]
        %v837 = vld [vmem:[%s203 + $0x12c0] sm:$0xff]
        %v838 = vld [vmem:[%s203 + $0x12c8] sm:$0xff]
        %v839 = vld [vmem:[%s203 + $0x12d0] sm:$0xff]
        %v840 = vld [vmem:[%s203 + $0x12d8] sm:$0xff]
        %v841 = vld [vmem:[%s203 + $0x12e0] sm:$0xff]
        %v842 = vld [vmem:[%s203 + $0x12e8] sm:$0xff]
        %v843 = vld [vmem:[%s203 + $0x12f0] sm:$0xff]
        %v844 = vld [vmem:[%s203 + $0x12f8] sm:$0xff]
        %v845 = vld [vmem:[%s203 + $0x1300] sm:$0xff]
        %v846 = vld [vmem:[%s203 + $0x1308] sm:$0xff]
        %v847 = vld [vmem:[%s203 + $0x1310] sm:$0xff]
        %v848 = vld [vmem:[%s203 + $0x1318] sm:$0xff]
        %v849 = vld [vmem:[%s203 + $0x1320] sm:$0xff]
        %v850 = vld [vmem:[%s203 + $0x1328] sm:$0xff]
        %v851 = vld [vmem:[%s203 + $0x1330] sm:$0xff]
        %v852 = vld [vmem:[%s203 + $0x1338] sm:$0xff]
        %v853 = vld [vmem:[%s203 + $0x1340] sm:$0xff]
        %v854 = vld [vmem:[%s203 + $0x1348] sm:$0xff]
        %v855 = vld [vmem:[%s203 + $0x1350] sm:$0xff]
        %v856 = vld [vmem:[%s203 + $0x1358] sm:$0xff]
        %v857 = vld [vmem:[%s203 + $0x1360] sm:$0xff]
        %v858 = vld [vmem:[%s203 + $0x1368] sm:$0xff]
        %v859 = vld [vmem:[%s203 + $0x1370] sm:$0xff]
        %v860 = vld [vmem:[%s203 + $0x1378] sm:$0xff]
        %v861 = vld [vmem:[%s203 + $0x1380] sm:$0xff]
        %v862 = vld [vmem:[%s203 + $0x1388] sm:$0xff]
        %v863 = vld [vmem:[%s203 + $0x1390] sm:$0xff]
        %v864 = vld [vmem:[%s203 + $0x1398] sm:$0xff]
        %v865 = vld [vmem:[%s203 + $0x13a0] sm:$0xff]
        %v866 = vld [vmem:[%s203 + $0x13a8] sm:$0xff]
        %v867 = vld [vmem:[%s203 + $0x13b0] sm:$0xff]
        %v868 = vld [vmem:[%s203 + $0x13b8] sm:$0xff]
        %v869 = vld [vmem:[%s203 + $0x13c0] sm:$0xff]
        %v870 = vld [vmem:[%s203 + $0x13c8] sm:$0xff]
        %v871 = vld [vmem:[%s203 + $0x13d0] sm:$0xff]
        %v872 = vld [vmem:[%s203 + $0x13d8] sm:$0xff]
        %v873 = vld [vmem:[%s203 + $0x13e0] sm:$0xff]
        %v874 = vld [vmem:[%s203 + $0x13e8] sm:$0xff]
        %v875 = vld [vmem:[%s203 + $0x13f0] sm:$0xff]
        %v876 = vld [vmem:[%s203 + $0x13f8] sm:$0xff]
        %v877 = vld [vmem:[%s203 + $0x1400] sm:$0xff]
        %v878 = vld [vmem:[%s203 + $0x1408] sm:$0xff]
        %v879 = vld [vmem:[%s203 + $0x1410] sm:$0xff]
        %v880 = vld [vmem:[%s203 + $0x1418] sm:$0xff]
        %v881 = vld [vmem:[%s203 + $0x1420] sm:$0xff]
        %v882 = vld [vmem:[%s203 + $0x1428] sm:$0xff]
        %v883 = vld [vmem:[%s203 + $0x1430] sm:$0xff]
        %v884 = vld [vmem:[%s203 + $0x1438] sm:$0xff]
        %v885 = vld [vmem:[%s203 + $0x1440] sm:$0xff]
        %v886 = vld [vmem:[%s203 + $0x1448] sm:$0xff]
        %v887 = vld [vmem:[%s203 + $0x1450] sm:$0xff]
        %v888 = vld [vmem:[%s203 + $0x1458] sm:$0xff]
        %v889 = vld [vmem:[%s203 + $0x1460] sm:$0xff]
        %v890 = vld [vmem:[%s203 + $0x1468] sm:$0xff]
        %v891 = vld [vmem:[%s203 + $0x1470] sm:$0xff]
        %v892 = vld [vmem:[%s203 + $0x1478] sm:$0xff]
        %v893 = vld [vmem:[%s203 + $0x1480] sm:$0xff]
        %v894 = vld [vmem:[%s203 + $0x1488] sm:$0xff]
        %v895 = vld [vmem:[%s203 + $0x1490] sm:$0xff]
        %v896 = vld [vmem:[%s203 + $0x1498] sm:$0xff]
        %v897 = vld [vmem:[%s203 + $0x14a0] sm:$0xff]
        %v898 = vld [vmem:[%s203 + $0x14a8] sm:$0xff]
        %v899 = vld [vmem:[%s203 + $0x14b0] sm:$0xff]
        %v900 = vld [vmem:[%s203 + $0x14b8] sm:$0xff]
        %v901 = vld [vmem:[%s203 + $0x14c0] sm:$0xff]
        %v902 = vld [vmem:[%s203 + $0x14c8] sm:$0xff]
        %v903 = vld [vmem:[%s203 + $0x14d0] sm:$0xff]
        %v904 = vld [vmem:[%s203 + $0x14d8] sm:$0xff]
        %v905 = vld [vmem:[%s203 + $0x14e0] sm:$0xff]
        %v906 = vld [vmem:[%s203 + $0x14e8] sm:$0xff]
        %v907 = vld [vmem:[%s203 + $0x14f0] sm:$0xff]
        %v908 = vld [vmem:[%s203 + $0x14f8] sm:$0xff]
        %v909 = vld [vmem:[%s203 + $0x1500] sm:$0xff]
        %v910 = vld [vmem:[%s203 + $0x1508] sm:$0xff]
        %v911 = vld [vmem:[%s203 + $0x1510] sm:$0xff]
        %v912 = vld [vmem:[%s203 + $0x1518] sm:$0xff]
        %v913 = vld [vmem:[%s203 + $0x1520] sm:$0xff]
        %v914 = vld [vmem:[%s203 + $0x1528] sm:$0xff]
        %v915 = vld [vmem:[%s203 + $0x1530] sm:$0xff]
        %v916 = vld [vmem:[%s203 + $0x1538] sm:$0xff]
        %v917 = vld [vmem:[%s203 + $0x1540] sm:$0xff]
        %v918 = vld [vmem:[%s203 + $0x1548] sm:$0xff]
        %v919 = vld [vmem:[%s203 + $0x1550] sm:$0xff]
        %v920 = vld [vmem:[%s203 + $0x1558] sm:$0xff]
        %v921 = vld [vmem:[%s203 + $0x1560] sm:$0xff]
        %v922 = vld [vmem:[%s203 + $0x1568] sm:$0xff]
        %v923 = vld [vmem:[%s203 + $0x1570] sm:$0xff]
        %v924 = vld [vmem:[%s203 + $0x1578] sm:$0xff]
        %v925 = vld [vmem:[%s203 + $0x1580] sm:$0xff]
        %v926 = vld [vmem:[%s203 + $0x1588] sm:$0xff]
        %v927 = vld [vmem:[%s203 + $0x1590] sm:$0xff]
        %v928 = vld [vmem:[%s203 + $0x1598] sm:$0xff]
        %v929 = vld [vmem:[%s203 + $0x15a0] sm:$0xff]
        %v930 = vld [vmem:[%s203 + $0x15a8] sm:$0xff]
        %v931 = vld [vmem:[%s203 + $0x15b0] sm:$0xff]
        %v932 = vld [vmem:[%s203 + $0x15b8] sm:$0xff]
        %v933 = vld [vmem:[%s203 + $0x15c0] sm:$0xff]
        %v934 = vld [vmem:[%s203 + $0x15c8] sm:$0xff]
        %v935 = vld [vmem:[%s203 + $0x15d0] sm:$0xff]
        %v936 = vld [vmem:[%s203 + $0x15d8] sm:$0xff]
        %v937 = vld [vmem:[%s203 + $0x15e0] sm:$0xff]
        %v938 = vld [vmem:[%s203 + $0x15e8] sm:$0xff]
        %v939 = vld [vmem:[%s203 + $0x15f0] sm:$0xff]
        %v940 = vld [vmem:[%s203 + $0x15f8] sm:$0xff]
        %v941 = vld [vmem:[%s203 + $0x1600] sm:$0xff]
        %v942 = vld [vmem:[%s203 + $0x1608] sm:$0xff]
        %v943 = vld [vmem:[%s203 + $0x1610] sm:$0xff]
        %v944 = vld [vmem:[%s203 + $0x1618] sm:$0xff]
        %v945 = vld [vmem:[%s203 + $0x1620] sm:$0xff]
        %v946 = vld [vmem:[%s203 + $0x1628] sm:$0xff]
        %v947 = vld [vmem:[%s203 + $0x1630] sm:$0xff]
        %v948 = vld [vmem:[%s203 + $0x1638] sm:$0xff]
        %v949 = vld [vmem:[%s203 + $0x1640] sm:$0xff]
        %v950 = vld [vmem:[%s203 + $0x1648] sm:$0xff]
        %v951 = vld [vmem:[%s203 + $0x1650] sm:$0xff]
        %v952 = vld [vmem:[%s203 + $0x1658] sm:$0xff]
        %v953 = vld [vmem:[%s203 + $0x1660] sm:$0xff]
        %v954 = vld [vmem:[%s203 + $0x1668] sm:$0xff]
        %v955 = vld [vmem:[%s203 + $0x1670] sm:$0xff]
        %v956 = vld [vmem:[%s203 + $0x1678] sm:$0xff]
        %v957 = vld [vmem:[%s203 + $0x1680] sm:$0xff]
        %v958 = vld [vmem:[%s203 + $0x1688] sm:$0xff]
        %v959 = vld [vmem:[%s203 + $0x1690] sm:$0xff]
        %v960 = vld [vmem:[%s203 + $0x1698] sm:$0xff]
        %v961 = vld [vmem:[%s203 + $0x16a0] sm:$0xff]
        %v962 = vld [vmem:[%s203 + $0x16a8] sm:$0xff]
        %v963 = vld [vmem:[%s203 + $0x16b0] sm:$0xff]
        %v964 = vld [vmem:[%s203 + $0x16b8] sm:$0xff]
        %v965 = vld [vmem:[%s203 + $0x16c0] sm:$0xff]
        %v966 = vld [vmem:[%s203 + $0x16c8] sm:$0xff]
        %v967 = vld [vmem:[%s203 + $0x16d0] sm:$0xff]
        %v968 = vld [vmem:[%s203 + $0x16d8] sm:$0xff]
        %v969 = vld [vmem:[%s203 + $0x16e0] sm:$0xff]
        %v970 = vld [vmem:[%s203 + $0x16e8] sm:$0xff]
        %v971 = vld [vmem:[%s203 + $0x16f0] sm:$0xff]
        %v972 = vld [vmem:[%s203 + $0x16f8] sm:$0xff]
        %v973 = vld [vmem:[%s203 + $0x1700] sm:$0xff]
        %v974 = vld [vmem:[%s203 + $0x1708] sm:$0xff]
        %v975 = vld [vmem:[%s203 + $0x1710] sm:$0xff]
        %v976 = vld [vmem:[%s203 + $0x1718] sm:$0xff]
        %v977 = vld [vmem:[%s203 + $0x1720] sm:$0xff]
        %v978 = vld [vmem:[%s203 + $0x1728] sm:$0xff]
        %v979 = vld [vmem:[%s203 + $0x1730] sm:$0xff]
        %v980 = vld [vmem:[%s203 + $0x1738] sm:$0xff]
        %v981 = vld [vmem:[%s203 + $0x1740] sm:$0xff]
        %v982 = vld [vmem:[%s203 + $0x1748] sm:$0xff]
        %v983 = vld [vmem:[%s203 + $0x1750] sm:$0xff]
        %v984 = vld [vmem:[%s203 + $0x1758] sm:$0xff]
        %v985 = vld [vmem:[%s203 + $0x1760] sm:$0xff]
        %v986 = vld [vmem:[%s203 + $0x1768] sm:$0xff]
        %v987 = vld [vmem:[%s203 + $0x1770] sm:$0xff]
        %v988 = vld [vmem:[%s203 + $0x1778] sm:$0xff]
        %v989 = vld [vmem:[%s203 + $0x1780] sm:$0xff]
        %v990 = vld [vmem:[%s203 + $0x1788] sm:$0xff]
        %v991 = vld [vmem:[%s203 + $0x1790] sm:$0xff]
        %v992 = vld [vmem:[%s203 + $0x1798] sm:$0xff]
        %v993 = vld [vmem:[%s203 + $0x17a0] sm:$0xff]
        %v994 = vld [vmem:[%s203 + $0x17a8] sm:$0xff]
        %v995 = vld [vmem:[%s203 + $0x17b0] sm:$0xff]
        %v996 = vld [vmem:[%s203 + $0x17b8] sm:$0xff]
        %v997 = vld [vmem:[%s203 + $0x17c0] sm:$0xff]
        %v998 = vld [vmem:[%s203 + $0x17c8] sm:$0xff]
        %v999 = vld [vmem:[%s203 + $0x17d0] sm:$0xff]
        %v1000 = vld [vmem:[%s203 + $0x17d8] sm:$0xff]
        %v1001 = vld [vmem:[%s203 + $0x17e0] sm:$0xff]
        %v1002 = vld [vmem:[%s203 + $0x17e8] sm:$0xff]
        %v1003 = vld [vmem:[%s203 + $0x17f0] sm:$0xff]
        %v1004 = vld [vmem:[%s203 + $0x17f8] sm:$0xff]
        %v1005 = vld [vmem:[%s203 + $0x1800] sm:$0xff]
        %v1006 = vld [vmem:[%s203 + $0x1808] sm:$0xff]
        %v1007 = vld [vmem:[%s203 + $0x1810] sm:$0xff]
        %v1008 = vld [vmem:[%s203 + $0x1818] sm:$0xff]
        %v1009 = vld [vmem:[%s203 + $0x1820] sm:$0xff]
        %v1010 = vld [vmem:[%s203 + $0x1828] sm:$0xff]
        %v1011 = vld [vmem:[%s203 + $0x1830] sm:$0xff]
        %v1012 = vld [vmem:[%s203 + $0x1838] sm:$0xff]
        %v1013 = vld [vmem:[%s203 + $0x1840] sm:$0xff]
        %v1014 = vld [vmem:[%s203 + $0x1848] sm:$0xff]
        %v1015 = vld [vmem:[%s203 + $0x1850] sm:$0xff]
        %v1016 = vld [vmem:[%s203 + $0x1858] sm:$0xff]
        %v1017 = vld [vmem:[%s203 + $0x1860] sm:$0xff]
        %v1018 = vld [vmem:[%s203 + $0x1868] sm:$0xff]
        %v1019 = vld [vmem:[%s203 + $0x1870] sm:$0xff]
        %v1020 = vld [vmem:[%s203 + $0x1878] sm:$0xff]
        %v1021 = vld [vmem:[%s203 + $0x1880] sm:$0xff]
        %v1022 = vld [vmem:[%s203 + $0x1888] sm:$0xff]
        %v1023 = vld [vmem:[%s203 + $0x1890] sm:$0xff]
        %v1024 = vld [vmem:[%s203 + $0x1898] sm:$0xff]
        %v1025 = vld [vmem:[%s203 + $0x18a0] sm:$0xff]
        %v1026 = vld [vmem:[%s203 + $0x18a8] sm:$0xff]
        %v1027 = vld [vmem:[%s203 + $0x18b0] sm:$0xff]
        %v1028 = vld [vmem:[%s203 + $0x18b8] sm:$0xff]
        %v1029 = vld [vmem:[%s203 + $0x18c0] sm:$0xff]
        %v1030 = vld [vmem:[%s203 + $0x18c8] sm:$0xff]
        %v1031 = vld [vmem:[%s203 + $0x18d0] sm:$0xff]
        %v1032 = vld [vmem:[%s203 + $0x18d8] sm:$0xff]
        %v1033 = vld [vmem:[%s203 + $0x18e0] sm:$0xff]
        %v1034 = vld [vmem:[%s203 + $0x18e8] sm:$0xff]
        %v1035 = vld [vmem:[%s203 + $0x18f0] sm:$0xff]
        %v1036 = vld [vmem:[%s203 + $0x18f8] sm:$0xff]
        %v1037 = vld [vmem:[%s203 + $0x1900] sm:$0xff]
        %v1038 = vld [vmem:[%s203 + $0x1908] sm:$0xff]
        %v1039 = vld [vmem:[%s203 + $0x1910] sm:$0xff]
        %v1040 = vld [vmem:[%s203 + $0x1918] sm:$0xff]
        %v1041 = vld [vmem:[%s203 + $0x1920] sm:$0xff]
        %v1042 = vld [vmem:[%s203 + $0x1928] sm:$0xff]
        %v1043 = vld [vmem:[%s203 + $0x1930] sm:$0xff]
        %v1044 = vld [vmem:[%s203 + $0x1938] sm:$0xff]
        %v1045 = vld [vmem:[%s203 + $0x1940] sm:$0xff]
        %v1046 = vld [vmem:[%s203 + $0x1948] sm:$0xff]
        %v1047 = vld [vmem:[%s203 + $0x1950] sm:$0xff]
        %v1048 = vld [vmem:[%s203 + $0x1958] sm:$0xff]
        %v1049 = vld [vmem:[%s203 + $0x1960] sm:$0xff]
        %v1050 = vld [vmem:[%s203 + $0x1968] sm:$0xff]
        %v1051 = vld [vmem:[%s203 + $0x1970] sm:$0xff]
        %v1052 = vld [vmem:[%s203 + $0x1978] sm:$0xff]
        %v1053 = vld [vmem:[%s203 + $0x1980] sm:$0xff]
        %v1054 = vld [vmem:[%s203 + $0x1988] sm:$0xff]
        %v1055 = vld [vmem:[%s203 + $0x1990] sm:$0xff]
        %v1056 = vld [vmem:[%s203 + $0x1998] sm:$0xff]
        %v1057 = vld [vmem:[%s203 + $0x19a0] sm:$0xff]
        %v1058 = vld [vmem:[%s203 + $0x19a8] sm:$0xff]
        %v1059 = vld [vmem:[%s203 + $0x19b0] sm:$0xff]
        %v1060 = vld [vmem:[%s203 + $0x19b8] sm:$0xff]
        %v1061 = vld [vmem:[%s203 + $0x19c0] sm:$0xff]
        %v1062 = vld [vmem:[%s203 + $0x19c8] sm:$0xff]
        %v1063 = vld [vmem:[%s203 + $0x19d0] sm:$0xff]
        %v1064 = vld [vmem:[%s203 + $0x19d8] sm:$0xff]
        %v1065 = vld [vmem:[%s203 + $0x19e0] sm:$0xff]
        %v1066 = vld [vmem:[%s203 + $0x19e8] sm:$0xff]
        %v1067 = vld [vmem:[%s203 + $0x19f0] sm:$0xff]
        %v1068 = vld [vmem:[%s203 + $0x19f8] sm:$0xff]
        %v1069 = vld [vmem:[%s203 + $0x1a00] sm:$0xff]
        %v1070 = vld [vmem:[%s203 + $0x1a08] sm:$0xff]
        %v1071 = vld [vmem:[%s203 + $0x1a10] sm:$0xff]
        %v1072 = vld [vmem:[%s203 + $0x1a18] sm:$0xff]
        %v1073 = vld [vmem:[%s203 + $0x1a20] sm:$0xff]
        %v1074 = vld [vmem:[%s203 + $0x1a28] sm:$0xff]
        %v1075 = vld [vmem:[%s203 + $0x1a30] sm:$0xff]
        %v1076 = vld [vmem:[%s203 + $0x1a38] sm:$0xff]
        %v1077 = vld [vmem:[%s203 + $0x1a40] sm:$0xff]
        %v1078 = vld [vmem:[%s203 + $0x1a48] sm:$0xff]
        %v1079 = vld [vmem:[%s203 + $0x1a50] sm:$0xff]
        %v1080 = vld [vmem:[%s203 + $0x1a58] sm:$0xff]
        %v1081 = vld [vmem:[%s203 + $0x1a60] sm:$0xff]
        %v1082 = vld [vmem:[%s203 + $0x1a68] sm:$0xff]
        %v1083 = vld [vmem:[%s203 + $0x1a70] sm:$0xff]
        %v1084 = vld [vmem:[%s203 + $0x1a78] sm:$0xff]
        %v1085 = vld [vmem:[%s203 + $0x1a80] sm:$0xff]
        %v1086 = vld [vmem:[%s203 + $0x1a88] sm:$0xff]
        %v1087 = vld [vmem:[%s203 + $0x1a90] sm:$0xff]
        %v1088 = vld [vmem:[%s203 + $0x1a98] sm:$0xff]
        %v1089 = vld [vmem:[%s203 + $0x1aa0] sm:$0xff]
        %v1090 = vld [vmem:[%s203 + $0x1aa8] sm:$0xff]
        %v1091 = vld [vmem:[%s203 + $0x1ab0] sm:$0xff]
        %v1092 = vld [vmem:[%s203 + $0x1ab8] sm:$0xff]
        %v1093 = vld [vmem:[%s203 + $0x1ac0] sm:$0xff]
        %v1094 = vld [vmem:[%s203 + $0x1ac8] sm:$0xff]
        %v1095 = vld [vmem:[%s203 + $0x1ad0] sm:$0xff]
        %v1096 = vld [vmem:[%s203 + $0x1ad8] sm:$0xff]
        %v1097 = vld [vmem:[%s203 + $0x1ae0] sm:$0xff]
        %v1098 = vld [vmem:[%s203 + $0x1ae8] sm:$0xff]
        %v1099 = vld [vmem:[%s203 + $0x1af0] sm:$0xff]
        %v1100 = vld [vmem:[%s203 + $0x1af8] sm:$0xff]
        %v1101 = vld [vmem:[%s203 + $0x1b00] sm:$0xff]
        %v1102 = vld [vmem:[%s203 + $0x1b08] sm:$0xff]
        %v1103 = vld [vmem:[%s203 + $0x1b10] sm:$0xff]
        %v1104 = vld [vmem:[%s203 + $0x1b18] sm:$0xff]
        %v1105 = vld [vmem:[%s203 + $0x1b20] sm:$0xff]
        %v1106 = vld [vmem:[%s203 + $0x1b28] sm:$0xff]
        %v1107 = vld [vmem:[%s203 + $0x1b30] sm:$0xff]
        %v1108 = vld [vmem:[%s203 + $0x1b38] sm:$0xff]
        %v1109 = vld [vmem:[%s203 + $0x1b40] sm:$0xff]
        %v1110 = vld [vmem:[%s203 + $0x1b48] sm:$0xff]
        %v1111 = vld [vmem:[%s203 + $0x1b50] sm:$0xff]
        %v1112 = vld [vmem:[%s203 + $0x1b58] sm:$0xff]
        %v1113 = vld [vmem:[%s203 + $0x1b60] sm:$0xff]
        %v1114 = vld [vmem:[%s203 + $0x1b68] sm:$0xff]
        %v1115 = vld [vmem:[%s203 + $0x1b70] sm:$0xff]
        %v1116 = vld [vmem:[%s203 + $0x1b78] sm:$0xff]
        %v1117 = vld [vmem:[%s203 + $0x1b80] sm:$0xff]
        %v1118 = vld [vmem:[%s203 + $0x1b88] sm:$0xff]
        %v1119 = vld [vmem:[%s203 + $0x1b90] sm:$0xff]
        %v1120 = vld [vmem:[%s203 + $0x1b98] sm:$0xff]
        %v1121 = vld [vmem:[%s203 + $0x1ba0] sm:$0xff]
        %v1122 = vld [vmem:[%s203 + $0x1ba8] sm:$0xff]
        %v1123 = vld [vmem:[%s203 + $0x1bb0] sm:$0xff]
        %v1124 = vld [vmem:[%s203 + $0x1bb8] sm:$0xff]
        %v1125 = vld [vmem:[%s203 + $0x1bc0] sm:$0xff]
        %v1126 = vld [vmem:[%s203 + $0x1bc8] sm:$0xff]
        %v1127 = vld [vmem:[%s203 + $0x1bd0] sm:$0xff]
        %v1128 = vld [vmem:[%s203 + $0x1bd8] sm:$0xff]
        %v1129 = vld [vmem:[%s203 + $0x1be0] sm:$0xff]
        %v1130 = vld [vmem:[%s203 + $0x1be8] sm:$0xff]
        %v1131 = vld [vmem:[%s203 + $0x1bf0] sm:$0xff]
        %v1132 = vld [vmem:[%s203 + $0x1bf8] sm:$0xff]
        %v1133 = vld [vmem:[%s203 + $0x1c00] sm:$0xff]
        %v1134 = vld [vmem:[%s203 + $0x1c08] sm:$0xff]
        %v1135 = vld [vmem:[%s203 + $0x1c10] sm:$0xff]
        %v1136 = vld [vmem:[%s203 + $0x1c18] sm:$0xff]
        %v1137 = vld [vmem:[%s203 + $0x1c20] sm:$0xff]
        %v1138 = vld [vmem:[%s203 + $0x1c28] sm:$0xff]
        %v1139 = vld [vmem:[%s203 + $0x1c30] sm:$0xff]
        %v1140 = vld [vmem:[%s203 + $0x1c38] sm:$0xff]
        %v1141 = vld [vmem:[%s203 + $0x1c40] sm:$0xff]
        %v1142 = vld [vmem:[%s203 + $0x1c48] sm:$0xff]
        %v1143 = vld [vmem:[%s203 + $0x1c50] sm:$0xff]
        %v1144 = vld [vmem:[%s203 + $0x1c58] sm:$0xff]
        %v1145 = vld [vmem:[%s203 + $0x1c60] sm:$0xff]
        %v1146 = vld [vmem:[%s203 + $0x1c68] sm:$0xff]
        %v1147 = vld [vmem:[%s203 + $0x1c70] sm:$0xff]
        %v1148 = vld [vmem:[%s203 + $0x1c78] sm:$0xff]
        %v1149 = vld [vmem:[%s203 + $0x1c80] sm:$0xff]
        %v1150 = vld [vmem:[%s203 + $0x1c88] sm:$0xff]
        %v1151 = vld [vmem:[%s203 + $0x1c90] sm:$0xff]
        %v1152 = vld [vmem:[%s203 + $0x1c98] sm:$0xff]
        %v1153 = vld [vmem:[%s203 + $0x1ca0] sm:$0xff]
        %v1154 = vld [vmem:[%s203 + $0x1ca8] sm:$0xff]
        %v1155 = vld [vmem:[%s203 + $0x1cb0] sm:$0xff]
        %v1156 = vld [vmem:[%s203 + $0x1cb8] sm:$0xff]
        %v1157 = vld [vmem:[%s203 + $0x1cc0] sm:$0xff]
        %v1158 = vld [vmem:[%s203 + $0x1cc8] sm:$0xff]
        %v1159 = vld [vmem:[%s203 + $0x1cd0] sm:$0xff]
        %v1160 = vld [vmem:[%s203 + $0x1cd8] sm:$0xff]
        %v1161 = vld [vmem:[%s203 + $0x1ce0] sm:$0xff]
        %v1162 = vld [vmem:[%s203 + $0x1ce8] sm:$0xff]
        %v1163 = vld [vmem:[%s203 + $0x1cf0] sm:$0xff]
        %v1164 = vld [vmem:[%s203 + $0x1cf8] sm:$0xff]
        %v1165 = vld [vmem:[%s203 + $0x1d00] sm:$0xff]
        %v1166 = vld [vmem:[%s203 + $0x1d08] sm:$0xff]
        %v1167 = vld [vmem:[%s203 + $0x1d10] sm:$0xff]
        %v1168 = vld [vmem:[%s203 + $0x1d18] sm:$0xff]
        %v1169 = vld [vmem:[%s203 + $0x1d20] sm:$0xff]
        %v1170 = vld [vmem:[%s203 + $0x1d28] sm:$0xff]
        %v1171 = vld [vmem:[%s203 + $0x1d30] sm:$0xff]
        %v1172 = vld [vmem:[%s203 + $0x1d38] sm:$0xff]
        %v1173 = vld [vmem:[%s203 + $0x1d40] sm:$0xff]
        %v1174 = vld [vmem:[%s203 + $0x1d48] sm:$0xff]
        %v1175 = vld [vmem:[%s203 + $0x1d50] sm:$0xff]
        %v1176 = vld [vmem:[%s203 + $0x1d58] sm:$0xff]
        %v1177 = vld [vmem:[%s203 + $0x1d60] sm:$0xff]
        %v1178 = vld [vmem:[%s203 + $0x1d68] sm:$0xff]
        %v1179 = vld [vmem:[%s203 + $0x1d70] sm:$0xff]
        %v1180 = vld [vmem:[%s203 + $0x1d78] sm:$0xff]
        %v1181 = vld [vmem:[%s203 + $0x1d80] sm:$0xff]
        %v1182 = vld [vmem:[%s203 + $0x1d88] sm:$0xff]
        %v1183 = vld [vmem:[%s203 + $0x1d90] sm:$0xff]
        %v1184 = vld [vmem:[%s203 + $0x1d98] sm:$0xff]
        %v1185 = vld [vmem:[%s203 + $0x1da0] sm:$0xff]
        %v1186 = vld [vmem:[%s203 + $0x1da8] sm:$0xff]
        %v1187 = vld [vmem:[%s203 + $0x1db0] sm:$0xff]
        %v1188 = vld [vmem:[%s203 + $0x1db8] sm:$0xff]
        %v1189 = vld [vmem:[%s203 + $0x1dc0] sm:$0xff]
        %v1190 = vld [vmem:[%s203 + $0x1dc8] sm:$0xff]
        %v1191 = vld [vmem:[%s203 + $0x1dd0] sm:$0xff]
        %v1192 = vld [vmem:[%s203 + $0x1dd8] sm:$0xff]
        %v1193 = vld [vmem:[%s203 + $0x1de0] sm:$0xff]
        %v1194 = vld [vmem:[%s203 + $0x1de8] sm:$0xff]
        %v1195 = vld [vmem:[%s203 + $0x1df0] sm:$0xff]
        %v1196 = vld [vmem:[%s203 + $0x1df8] sm:$0xff]
        %v1197 = vld [vmem:[%s203 + $0x1e00] sm:$0xff]
        %v1198 = vld [vmem:[%s203 + $0x1e08] sm:$0xff]
        %v1199 = vld [vmem:[%s203 + $0x1e10] sm:$0xff]
        %v1200 = vld [vmem:[%s203 + $0x1e18] sm:$0xff]
        %v1201 = vld [vmem:[%s203 + $0x1e20] sm:$0xff]
        %v1202 = vld [vmem:[%s203 + $0x1e28] sm:$0xff]
        %v1203 = vld [vmem:[%s203 + $0x1e30] sm:$0xff]
        %v1204 = vld [vmem:[%s203 + $0x1e38] sm:$0xff]
        %v1205 = vld [vmem:[%s203 + $0x1e40] sm:$0xff]
        %v1206 = vld [vmem:[%s203 + $0x1e48] sm:$0xff]
        %v1207 = vld [vmem:[%s203 + $0x1e50] sm:$0xff]
        %v1208 = vld [vmem:[%s203 + $0x1e58] sm:$0xff]
        %v1209 = vld [vmem:[%s203 + $0x1e60] sm:$0xff]
        %v1210 = vld [vmem:[%s203 + $0x1e68] sm:$0xff]
        %v1211 = vld [vmem:[%s203 + $0x1e70] sm:$0xff]
        %v1212 = vld [vmem:[%s203 + $0x1e78] sm:$0xff]
        %v1213 = vld [vmem:[%s203 + $0x1e80] sm:$0xff]
        %v1214 = vld [vmem:[%s203 + $0x1e88] sm:$0xff]
        %v1215 = vld [vmem:[%s203 + $0x1e90] sm:$0xff]
        %v1216 = vld [vmem:[%s203 + $0x1e98] sm:$0xff]
        %v1217 = vld [vmem:[%s203 + $0x1ea0] sm:$0xff]
        %v1218 = vld [vmem:[%s203 + $0x1ea8] sm:$0xff]
        %v1219 = vld [vmem:[%s203 + $0x1eb0] sm:$0xff]
        %v1220 = vld [vmem:[%s203 + $0x1eb8] sm:$0xff]
        %v1221 = vld [vmem:[%s203 + $0x1ec0] sm:$0xff]
        %v1222 = vld [vmem:[%s203 + $0x1ec8] sm:$0xff]
        %v1223 = vld [vmem:[%s203 + $0x1ed0] sm:$0xff]
        %v1224 = vld [vmem:[%s203 + $0x1ed8] sm:$0xff]
        %v1225 = vld [vmem:[%s203 + $0x1ee0] sm:$0xff]
        %v1226 = vld [vmem:[%s203 + $0x1ee8] sm:$0xff]
        %v1227 = vld [vmem:[%s203 + $0x1ef0] sm:$0xff]
        %v1228 = vld [vmem:[%s203 + $0x1ef8] sm:$0xff]
        %v1229 = vld [vmem:[%s203 + $0x1f00] sm:$0xff]
        %v1230 = vld [vmem:[%s203 + $0x1f08] sm:$0xff]
        %v1231 = vld [vmem:[%s203 + $0x1f10] sm:$0xff]
        %v1232 = vld [vmem:[%s203 + $0x1f18] sm:$0xff]
        %v1233 = vld [vmem:[%s203 + $0x1f20] sm:$0xff]
        %v1234 = vld [vmem:[%s203 + $0x1f28] sm:$0xff]
        %v1235 = vld [vmem:[%s203 + $0x1f30] sm:$0xff]
        %v1236 = vld [vmem:[%s203 + $0x1f38] sm:$0xff]
        %v1237 = vld [vmem:[%s203 + $0x1f40] sm:$0xff]
        %v1238 = vld [vmem:[%s203 + $0x1f48] sm:$0xff]
        %v1239 = vld [vmem:[%s203 + $0x1f50] sm:$0xff]
        %v1240 = vld [vmem:[%s203 + $0x1f58] sm:$0xff]
        %v1241 = vld [vmem:[%s203 + $0x1f60] sm:$0xff]
        %v1242 = vld [vmem:[%s203 + $0x1f68] sm:$0xff]
        %v1243 = vld [vmem:[%s203 + $0x1f70] sm:$0xff]
        %v1244 = vld [vmem:[%s203 + $0x1f78] sm:$0xff]
        %v1245 = vld [vmem:[%s203 + $0x1f80] sm:$0xff]
        %v1246 = vld [vmem:[%s203 + $0x1f88] sm:$0xff]
        %v1247 = vld [vmem:[%s203 + $0x1f90] sm:$0xff]
        %v1248 = vld [vmem:[%s203 + $0x1f98] sm:$0xff]
        %v1249 = vld [vmem:[%s203 + $0x1fa0] sm:$0xff]
        %v1250 = vld [vmem:[%s203 + $0x1fa8] sm:$0xff]
        %v1251 = vld [vmem:[%s203 + $0x1fb0] sm:$0xff]
        %v1252 = vld [vmem:[%s203 + $0x1fb8] sm:$0xff]
        %v1253 = vld [vmem:[%s203 + $0x1fc0] sm:$0xff]
        %v1254 = vld [vmem:[%s203 + $0x1fc8] sm:$0xff]
        %v1255 = vld [vmem:[%s203 + $0x1fd0] sm:$0xff]
        %v1256 = vld [vmem:[%s203 + $0x1fd8] sm:$0xff]
        %v1257 = vld [vmem:[%s203 + $0x1fe0] sm:$0xff]
        %v1258 = vld [vmem:[%s203 + $0x1fe8] sm:$0xff]
        %v1259 = vld [vmem:[%s203 + $0x1ff0] sm:$0xff]
        %v1260 = vld [vmem:[%s203 + $0x1ff8] sm:$0xff]
        %1773 = vrot.lane.b32.xlu0 %v237, 64
        %v1774 = vpop.permute.xlu0 %1773
        %1775 = vrot.lane.b32.xlu0 %v239, 64
        %v1776 = vpop.permute.xlu0 %1775
        %1777 = vrot.lane.b32.xlu0 %v241, 64
        %v1778 = vpop.permute.xlu0 %1777
        %1779 = vrot.lane.b32.xlu0 %v243, 64
        %v1780 = vpop.permute.xlu0 %1779
        %1781 = vrot.lane.b32.xlu0 %v245, 64
        %v1782 = vpop.permute.xlu0 %1781
        %1783 = vrot.lane.b32.xlu0 %v247, 64
        %v1784 = vpop.permute.xlu0 %1783
        %1785 = vrot.lane.b32.xlu0 %v249, 64
        %v1786 = vpop.permute.xlu0 %1785
        %1787 = vrot.lane.b32.xlu0 %v251, 64
        %v1788 = vpop.permute.xlu0 %1787
        %1789 = vrot.lane.b32.xlu0 %v253, 64
        %v1790 = vpop.permute.xlu0 %1789
        %1791 = vrot.lane.b32.xlu0 %v255, 64
        %v1792 = vpop.permute.xlu0 %1791
        %1793 = vrot.lane.b32.xlu0 %v257, 64
        %v1794 = vpop.permute.xlu0 %1793
        %1795 = vrot.lane.b32.xlu0 %v259, 64
        %v1796 = vpop.permute.xlu0 %1795
        %1797 = vrot.lane.b32.xlu0 %v261, 64
        %v1798 = vpop.permute.xlu0 %1797
        %1799 = vrot.lane.b32.xlu0 %v263, 64
        %v1800 = vpop.permute.xlu0 %1799
        %1801 = vrot.lane.b32.xlu0 %v265, 64
        %v1802 = vpop.permute.xlu0 %1801
        %1803 = vrot.lane.b32.xlu0 %v267, 64
        %v1804 = vpop.permute.xlu0 %1803
        %1805 = vrot.lane.b32.xlu0 %v269, 64
        %v1806 = vpop.permute.xlu0 %1805
        %1807 = vrot.lane.b32.xlu0 %v271, 64
        %v1808 = vpop.permute.xlu0 %1807
        %1809 = vrot.lane.b32.xlu0 %v273, 64
        %v1810 = vpop.permute.xlu0 %1809
        %1811 = vrot.lane.b32.xlu0 %v275, 64
        %v1812 = vpop.permute.xlu0 %1811
        %1813 = vrot.lane.b32.xlu0 %v277, 64
        %v1814 = vpop.permute.xlu0 %1813
        %1815 = vrot.lane.b32.xlu0 %v279, 64
        %v1816 = vpop.permute.xlu0 %1815
        %1817 = vrot.lane.b32.xlu0 %v281, 64
        %v1818 = vpop.permute.xlu0 %1817
        %1819 = vrot.lane.b32.xlu0 %v283, 64
        %v1820 = vpop.permute.xlu0 %1819
        %1821 = vrot.lane.b32.xlu0 %v285, 64
        %v1822 = vpop.permute.xlu0 %1821
        %1823 = vrot.lane.b32.xlu0 %v287, 64
        %v1824 = vpop.permute.xlu0 %1823
        %1825 = vrot.lane.b32.xlu0 %v289, 64
        %v1826 = vpop.permute.xlu0 %1825
        %1827 = vrot.lane.b32.xlu0 %v291, 64
        %v1828 = vpop.permute.xlu0 %1827
        %1829 = vrot.lane.b32.xlu0 %v293, 64
        %v1830 = vpop.permute.xlu0 %1829
        %1831 = vrot.lane.b32.xlu0 %v295, 64
        %v1832 = vpop.permute.xlu0 %1831
        %1833 = vrot.lane.b32.xlu0 %v297, 64
        %v1834 = vpop.permute.xlu0 %1833
        %1835 = vrot.lane.b32.xlu0 %v299, 64
        %v1836 = vpop.permute.xlu0 %1835
        %1837 = vrot.lane.b32.xlu0 %v301, 64
        %v1838 = vpop.permute.xlu0 %1837
        %1839 = vrot.lane.b32.xlu0 %v303, 64
        %v1840 = vpop.permute.xlu0 %1839
        %1841 = vrot.lane.b32.xlu0 %v305, 64
        %v1842 = vpop.permute.xlu0 %1841
        %1843 = vrot.lane.b32.xlu0 %v307, 64
        %v1844 = vpop.permute.xlu0 %1843
        %1845 = vrot.lane.b32.xlu0 %v309, 64
        %v1846 = vpop.permute.xlu0 %1845
        %1847 = vrot.lane.b32.xlu0 %v311, 64
        %v1848 = vpop.permute.xlu0 %1847
        %1849 = vrot.lane.b32.xlu0 %v313, 64
        %v1850 = vpop.permute.xlu0 %1849
        %1851 = vrot.lane.b32.xlu0 %v315, 64
        %v1852 = vpop.permute.xlu0 %1851
        %1853 = vrot.lane.b32.xlu0 %v317, 64
        %v1854 = vpop.permute.xlu0 %1853
        %1855 = vrot.lane.b32.xlu0 %v319, 64
        %v1856 = vpop.permute.xlu0 %1855
        %1857 = vrot.lane.b32.xlu0 %v321, 64
        %v1858 = vpop.permute.xlu0 %1857
        %1859 = vrot.lane.b32.xlu0 %v323, 64
        %v1860 = vpop.permute.xlu0 %1859
        %1861 = vrot.lane.b32.xlu0 %v325, 64
        %v1862 = vpop.permute.xlu0 %1861
        %1863 = vrot.lane.b32.xlu0 %v327, 64
        %v1864 = vpop.permute.xlu0 %1863
        %1865 = vrot.lane.b32.xlu0 %v329, 64
        %v1866 = vpop.permute.xlu0 %1865
        %1867 = vrot.lane.b32.xlu0 %v331, 64
        %v1868 = vpop.permute.xlu0 %1867
        %1869 = vrot.lane.b32.xlu0 %v333, 64
        %v1870 = vpop.permute.xlu0 %1869
        %1871 = vrot.lane.b32.xlu0 %v335, 64
        %v1872 = vpop.permute.xlu0 %1871
        %1873 = vrot.lane.b32.xlu0 %v337, 64
        %v1874 = vpop.permute.xlu0 %1873
        %1875 = vrot.lane.b32.xlu0 %v339, 64
        %v1876 = vpop.permute.xlu0 %1875
        %1877 = vrot.lane.b32.xlu0 %v341, 64
        %v1878 = vpop.permute.xlu0 %1877
        %1879 = vrot.lane.b32.xlu0 %v343, 64
        %v1880 = vpop.permute.xlu0 %1879
        %1881 = vrot.lane.b32.xlu0 %v345, 64
        %v1882 = vpop.permute.xlu0 %1881
        %1883 = vrot.lane.b32.xlu0 %v347, 64
        %v1884 = vpop.permute.xlu0 %1883
        %1885 = vrot.lane.b32.xlu0 %v349, 64
        %v1886 = vpop.permute.xlu0 %1885
        %1887 = vrot.lane.b32.xlu0 %v351, 64
        %v1888 = vpop.permute.xlu0 %1887
        %1889 = vrot.lane.b32.xlu0 %v353, 64
        %v1890 = vpop.permute.xlu0 %1889
        %1891 = vrot.lane.b32.xlu0 %v355, 64
        %v1892 = vpop.permute.xlu0 %1891
        %1893 = vrot.lane.b32.xlu0 %v357, 64
        %v1894 = vpop.permute.xlu0 %1893
        %1895 = vrot.lane.b32.xlu0 %v359, 64
        %v1896 = vpop.permute.xlu0 %1895
        %1897 = vrot.lane.b32.xlu0 %v361, 64
        %v1898 = vpop.permute.xlu0 %1897
        %1899 = vrot.lane.b32.xlu0 %v363, 64
        %v1900 = vpop.permute.xlu0 %1899
        %1901 = vrot.lane.b32.xlu0 %v365, 64
        %v1902 = vpop.permute.xlu0 %1901
        %1903 = vrot.lane.b32.xlu0 %v367, 64
        %v1904 = vpop.permute.xlu0 %1903
        %1905 = vrot.lane.b32.xlu0 %v369, 64
        %v1906 = vpop.permute.xlu0 %1905
        %1907 = vrot.lane.b32.xlu0 %v371, 64
        %v1908 = vpop.permute.xlu0 %1907
        %1909 = vrot.lane.b32.xlu0 %v373, 64
        %v1910 = vpop.permute.xlu0 %1909
        %1911 = vrot.lane.b32.xlu0 %v375, 64
        %v1912 = vpop.permute.xlu0 %1911
        %1913 = vrot.lane.b32.xlu0 %v377, 64
        %v1914 = vpop.permute.xlu0 %1913
        %1915 = vrot.lane.b32.xlu0 %v379, 64
        %v1916 = vpop.permute.xlu0 %1915
        %1917 = vrot.lane.b32.xlu0 %v381, 64
        %v1918 = vpop.permute.xlu0 %1917
        %1919 = vrot.lane.b32.xlu0 %v383, 64
        %v1920 = vpop.permute.xlu0 %1919
        %1921 = vrot.lane.b32.xlu0 %v385, 64
        %v1922 = vpop.permute.xlu0 %1921
        %1923 = vrot.lane.b32.xlu0 %v387, 64
        %v1924 = vpop.permute.xlu0 %1923
        %1925 = vrot.lane.b32.xlu0 %v389, 64
        %v1926 = vpop.permute.xlu0 %1925
        %1927 = vrot.lane.b32.xlu0 %v391, 64
        %v1928 = vpop.permute.xlu0 %1927
        %1929 = vrot.lane.b32.xlu0 %v393, 64
        %v1930 = vpop.permute.xlu0 %1929
        %1931 = vrot.lane.b32.xlu0 %v395, 64
        %v1932 = vpop.permute.xlu0 %1931
        %1933 = vrot.lane.b32.xlu0 %v397, 64
        %v1934 = vpop.permute.xlu0 %1933
        %1935 = vrot.lane.b32.xlu0 %v399, 64
        %v1936 = vpop.permute.xlu0 %1935
        %1937 = vrot.lane.b32.xlu0 %v401, 64
        %v1938 = vpop.permute.xlu0 %1937
        %1939 = vrot.lane.b32.xlu0 %v403, 64
        %v1940 = vpop.permute.xlu0 %1939
        %1941 = vrot.lane.b32.xlu0 %v405, 64
        %v1942 = vpop.permute.xlu0 %1941
        %1943 = vrot.lane.b32.xlu0 %v407, 64
        %v1944 = vpop.permute.xlu0 %1943
        %1945 = vrot.lane.b32.xlu0 %v409, 64
        %v1946 = vpop.permute.xlu0 %1945
        %1947 = vrot.lane.b32.xlu0 %v411, 64
        %v1948 = vpop.permute.xlu0 %1947
        %1949 = vrot.lane.b32.xlu0 %v413, 64
        %v1950 = vpop.permute.xlu0 %1949
        %1951 = vrot.lane.b32.xlu0 %v415, 64
        %v1952 = vpop.permute.xlu0 %1951
        %1953 = vrot.lane.b32.xlu0 %v417, 64
        %v1954 = vpop.permute.xlu0 %1953
        %1955 = vrot.lane.b32.xlu0 %v419, 64
        %v1956 = vpop.permute.xlu0 %1955
        %1957 = vrot.lane.b32.xlu0 %v421, 64
        %v1958 = vpop.permute.xlu0 %1957
        %1959 = vrot.lane.b32.xlu0 %v423, 64
        %v1960 = vpop.permute.xlu0 %1959
        %1961 = vrot.lane.b32.xlu0 %v425, 64
        %v1962 = vpop.permute.xlu0 %1961
        %1963 = vrot.lane.b32.xlu0 %v427, 64
        %v1964 = vpop.permute.xlu0 %1963
        %1965 = vrot.lane.b32.xlu0 %v429, 64
        %v1966 = vpop.permute.xlu0 %1965
        %1967 = vrot.lane.b32.xlu0 %v431, 64
        %v1968 = vpop.permute.xlu0 %1967
        %1969 = vrot.lane.b32.xlu0 %v433, 64
        %v1970 = vpop.permute.xlu0 %1969
        %1971 = vrot.lane.b32.xlu0 %v435, 64
        %v1972 = vpop.permute.xlu0 %1971
        %1973 = vrot.lane.b32.xlu0 %v437, 64
        %v1974 = vpop.permute.xlu0 %1973
        %1975 = vrot.lane.b32.xlu0 %v439, 64
        %v1976 = vpop.permute.xlu0 %1975
        %1977 = vrot.lane.b32.xlu0 %v441, 64
        %v1978 = vpop.permute.xlu0 %1977
        %1979 = vrot.lane.b32.xlu0 %v443, 64
        %v1980 = vpop.permute.xlu0 %1979
        %1981 = vrot.lane.b32.xlu0 %v445, 64
        %v1982 = vpop.permute.xlu0 %1981
        %1983 = vrot.lane.b32.xlu0 %v447, 64
        %v1984 = vpop.permute.xlu0 %1983
        %1985 = vrot.lane.b32.xlu0 %v449, 64
        %v1986 = vpop.permute.xlu0 %1985
        %1987 = vrot.lane.b32.xlu0 %v451, 64
        %v1988 = vpop.permute.xlu0 %1987
        %1989 = vrot.lane.b32.xlu0 %v453, 64
        %v1990 = vpop.permute.xlu0 %1989
        %1991 = vrot.lane.b32.xlu0 %v455, 64
        %v1992 = vpop.permute.xlu0 %1991
        %1993 = vrot.lane.b32.xlu0 %v457, 64
        %v1994 = vpop.permute.xlu0 %1993
        %1995 = vrot.lane.b32.xlu0 %v459, 64
        %v1996 = vpop.permute.xlu0 %1995
        %1997 = vrot.lane.b32.xlu0 %v461, 64
        %v1998 = vpop.permute.xlu0 %1997
        %1999 = vrot.lane.b32.xlu0 %v463, 64
        %v2000 = vpop.permute.xlu0 %1999
        %2001 = vrot.lane.b32.xlu0 %v465, 64
        %v2002 = vpop.permute.xlu0 %2001
        %2003 = vrot.lane.b32.xlu0 %v467, 64
        %v2004 = vpop.permute.xlu0 %2003
        %2005 = vrot.lane.b32.xlu0 %v469, 64
        %v2006 = vpop.permute.xlu0 %2005
        %2007 = vrot.lane.b32.xlu0 %v471, 64
        %v2008 = vpop.permute.xlu0 %2007
        %2009 = vrot.lane.b32.xlu0 %v473, 64
        %v2010 = vpop.permute.xlu0 %2009
        %2011 = vrot.lane.b32.xlu0 %v475, 64
        %v2012 = vpop.permute.xlu0 %2011
        %2013 = vrot.lane.b32.xlu0 %v477, 64
        %v2014 = vpop.permute.xlu0 %2013
        %2015 = vrot.lane.b32.xlu0 %v479, 64
        %v2016 = vpop.permute.xlu0 %2015
        %2017 = vrot.lane.b32.xlu0 %v481, 64
        %v2018 = vpop.permute.xlu0 %2017
        %2019 = vrot.lane.b32.xlu0 %v483, 64
        %v2020 = vpop.permute.xlu0 %2019
        %2021 = vrot.lane.b32.xlu0 %v485, 64
        %v2022 = vpop.permute.xlu0 %2021
        %2023 = vrot.lane.b32.xlu0 %v487, 64
        %v2024 = vpop.permute.xlu0 %2023
        %2025 = vrot.lane.b32.xlu0 %v489, 64
        %v2026 = vpop.permute.xlu0 %2025
        %2027 = vrot.lane.b32.xlu0 %v491, 64
        %v2028 = vpop.permute.xlu0 %2027
        %2029 = vrot.lane.b32.xlu0 %v493, 64
        %v2030 = vpop.permute.xlu0 %2029
        %2031 = vrot.lane.b32.xlu0 %v495, 64
        %v2032 = vpop.permute.xlu0 %2031
        %2033 = vrot.lane.b32.xlu0 %v497, 64
        %v2034 = vpop.permute.xlu0 %2033
        %2035 = vrot.lane.b32.xlu0 %v499, 64
        %v2036 = vpop.permute.xlu0 %2035
        %2037 = vrot.lane.b32.xlu0 %v501, 64
        %v2038 = vpop.permute.xlu0 %2037
        %2039 = vrot.lane.b32.xlu0 %v503, 64
        %v2040 = vpop.permute.xlu0 %2039
        %2041 = vrot.lane.b32.xlu0 %v505, 64
        %v2042 = vpop.permute.xlu0 %2041
        %2043 = vrot.lane.b32.xlu0 %v507, 64
        %v2044 = vpop.permute.xlu0 %2043
        %2045 = vrot.lane.b32.xlu0 %v509, 64
        %v2046 = vpop.permute.xlu0 %2045
        %2047 = vrot.lane.b32.xlu0 %v511, 64
        %v2048 = vpop.permute.xlu0 %2047
        %2049 = vrot.lane.b32.xlu0 %v513, 64
        %v2050 = vpop.permute.xlu0 %2049
        %2051 = vrot.lane.b32.xlu0 %v515, 64
        %v2052 = vpop.permute.xlu0 %2051
        %2053 = vrot.lane.b32.xlu0 %v517, 64
        %v2054 = vpop.permute.xlu0 %2053
        %2055 = vrot.lane.b32.xlu0 %v519, 64
        %v2056 = vpop.permute.xlu0 %2055
        %2057 = vrot.lane.b32.xlu0 %v521, 64
        %v2058 = vpop.permute.xlu0 %2057
        %2059 = vrot.lane.b32.xlu0 %v523, 64
        %v2060 = vpop.permute.xlu0 %2059
        %2061 = vrot.lane.b32.xlu0 %v525, 64
        %v2062 = vpop.permute.xlu0 %2061
        %2063 = vrot.lane.b32.xlu0 %v527, 64
        %v2064 = vpop.permute.xlu0 %2063
        %2065 = vrot.lane.b32.xlu0 %v529, 64
        %v2066 = vpop.permute.xlu0 %2065
        %2067 = vrot.lane.b32.xlu0 %v531, 64
        %v2068 = vpop.permute.xlu0 %2067
        %2069 = vrot.lane.b32.xlu0 %v533, 64
        %v2070 = vpop.permute.xlu0 %2069
        %2071 = vrot.lane.b32.xlu0 %v535, 64
        %v2072 = vpop.permute.xlu0 %2071
        %2073 = vrot.lane.b32.xlu0 %v537, 64
        %v2074 = vpop.permute.xlu0 %2073
        %2075 = vrot.lane.b32.xlu0 %v539, 64
        %v2076 = vpop.permute.xlu0 %2075
        %2077 = vrot.lane.b32.xlu0 %v541, 64
        %v2078 = vpop.permute.xlu0 %2077
        %2079 = vrot.lane.b32.xlu0 %v543, 64
        %v2080 = vpop.permute.xlu0 %2079
        %2081 = vrot.lane.b32.xlu0 %v545, 64
        %v2082 = vpop.permute.xlu0 %2081
        %2083 = vrot.lane.b32.xlu0 %v547, 64
        %v2084 = vpop.permute.xlu0 %2083
        %2085 = vrot.lane.b32.xlu0 %v549, 64
        %v2086 = vpop.permute.xlu0 %2085
        %2087 = vrot.lane.b32.xlu0 %v551, 64
        %v2088 = vpop.permute.xlu0 %2087
        %2089 = vrot.lane.b32.xlu0 %v553, 64
        %v2090 = vpop.permute.xlu0 %2089
        %2091 = vrot.lane.b32.xlu0 %v555, 64
        %v2092 = vpop.permute.xlu0 %2091
        %2093 = vrot.lane.b32.xlu0 %v557, 64
        %v2094 = vpop.permute.xlu0 %2093
        %2095 = vrot.lane.b32.xlu0 %v559, 64
        %v2096 = vpop.permute.xlu0 %2095
        %2097 = vrot.lane.b32.xlu0 %v561, 64
        %v2098 = vpop.permute.xlu0 %2097
        %2099 = vrot.lane.b32.xlu0 %v563, 64
        %v2100 = vpop.permute.xlu0 %2099
        %2101 = vrot.lane.b32.xlu0 %v565, 64
        %v2102 = vpop.permute.xlu0 %2101
        %2103 = vrot.lane.b32.xlu0 %v567, 64
        %v2104 = vpop.permute.xlu0 %2103
        %2105 = vrot.lane.b32.xlu0 %v569, 64
        %v2106 = vpop.permute.xlu0 %2105
        %2107 = vrot.lane.b32.xlu0 %v571, 64
        %v2108 = vpop.permute.xlu0 %2107
        %2109 = vrot.lane.b32.xlu0 %v573, 64
        %v2110 = vpop.permute.xlu0 %2109
        %2111 = vrot.lane.b32.xlu0 %v575, 64
        %v2112 = vpop.permute.xlu0 %2111
        %2113 = vrot.lane.b32.xlu0 %v577, 64
        %v2114 = vpop.permute.xlu0 %2113
        %2115 = vrot.lane.b32.xlu0 %v579, 64
        %v2116 = vpop.permute.xlu0 %2115
        %2117 = vrot.lane.b32.xlu0 %v581, 64
        %v2118 = vpop.permute.xlu0 %2117
        %2119 = vrot.lane.b32.xlu0 %v583, 64
        %v2120 = vpop.permute.xlu0 %2119
        %2121 = vrot.lane.b32.xlu0 %v585, 64
        %v2122 = vpop.permute.xlu0 %2121
        %2123 = vrot.lane.b32.xlu0 %v587, 64
        %v2124 = vpop.permute.xlu0 %2123
        %2125 = vrot.lane.b32.xlu0 %v589, 64
        %v2126 = vpop.permute.xlu0 %2125
        %2127 = vrot.lane.b32.xlu0 %v591, 64
        %v2128 = vpop.permute.xlu0 %2127
        %2129 = vrot.lane.b32.xlu0 %v593, 64
        %v2130 = vpop.permute.xlu0 %2129
        %2131 = vrot.lane.b32.xlu0 %v595, 64
        %v2132 = vpop.permute.xlu0 %2131
        %2133 = vrot.lane.b32.xlu0 %v597, 64
        %v2134 = vpop.permute.xlu0 %2133
        %2135 = vrot.lane.b32.xlu0 %v599, 64
        %v2136 = vpop.permute.xlu0 %2135
        %2137 = vrot.lane.b32.xlu0 %v601, 64
        %v2138 = vpop.permute.xlu0 %2137
        %2139 = vrot.lane.b32.xlu0 %v603, 64
        %v2140 = vpop.permute.xlu0 %2139
        %2141 = vrot.lane.b32.xlu0 %v605, 64
        %v2142 = vpop.permute.xlu0 %2141
        %2143 = vrot.lane.b32.xlu0 %v607, 64
        %v2144 = vpop.permute.xlu0 %2143
        %2145 = vrot.lane.b32.xlu0 %v609, 64
        %v2146 = vpop.permute.xlu0 %2145
        %2147 = vrot.lane.b32.xlu0 %v611, 64
        %v2148 = vpop.permute.xlu0 %2147
        %2149 = vrot.lane.b32.xlu0 %v613, 64
        %v2150 = vpop.permute.xlu0 %2149
        %2151 = vrot.lane.b32.xlu0 %v615, 64
        %v2152 = vpop.permute.xlu0 %2151
        %2153 = vrot.lane.b32.xlu0 %v617, 64
        %v2154 = vpop.permute.xlu0 %2153
        %2155 = vrot.lane.b32.xlu0 %v619, 64
        %v2156 = vpop.permute.xlu0 %2155
        %2157 = vrot.lane.b32.xlu0 %v621, 64
        %v2158 = vpop.permute.xlu0 %2157
        %2159 = vrot.lane.b32.xlu0 %v623, 64
        %v2160 = vpop.permute.xlu0 %2159
        %2161 = vrot.lane.b32.xlu0 %v625, 64
        %v2162 = vpop.permute.xlu0 %2161
        %2163 = vrot.lane.b32.xlu0 %v627, 64
        %v2164 = vpop.permute.xlu0 %2163
        %2165 = vrot.lane.b32.xlu0 %v629, 64
        %v2166 = vpop.permute.xlu0 %2165
        %2167 = vrot.lane.b32.xlu0 %v631, 64
        %v2168 = vpop.permute.xlu0 %2167
        %2169 = vrot.lane.b32.xlu0 %v633, 64
        %v2170 = vpop.permute.xlu0 %2169
        %2171 = vrot.lane.b32.xlu0 %v635, 64
        %v2172 = vpop.permute.xlu0 %2171
        %2173 = vrot.lane.b32.xlu0 %v637, 64
        %v2174 = vpop.permute.xlu0 %2173
        %2175 = vrot.lane.b32.xlu0 %v639, 64
        %v2176 = vpop.permute.xlu0 %2175
        %2177 = vrot.lane.b32.xlu0 %v641, 64
        %v2178 = vpop.permute.xlu0 %2177
        %2179 = vrot.lane.b32.xlu0 %v643, 64
        %v2180 = vpop.permute.xlu0 %2179
        %2181 = vrot.lane.b32.xlu0 %v645, 64
        %v2182 = vpop.permute.xlu0 %2181
        %2183 = vrot.lane.b32.xlu0 %v647, 64
        %v2184 = vpop.permute.xlu0 %2183
        %2185 = vrot.lane.b32.xlu0 %v649, 64
        %v2186 = vpop.permute.xlu0 %2185
        %2187 = vrot.lane.b32.xlu0 %v651, 64
        %v2188 = vpop.permute.xlu0 %2187
        %2189 = vrot.lane.b32.xlu0 %v653, 64
        %v2190 = vpop.permute.xlu0 %2189
        %2191 = vrot.lane.b32.xlu0 %v655, 64
        %v2192 = vpop.permute.xlu0 %2191
        %2193 = vrot.lane.b32.xlu0 %v657, 64
        %v2194 = vpop.permute.xlu0 %2193
        %2195 = vrot.lane.b32.xlu0 %v659, 64
        %v2196 = vpop.permute.xlu0 %2195
        %2197 = vrot.lane.b32.xlu0 %v661, 64
        %v2198 = vpop.permute.xlu0 %2197
        %2199 = vrot.lane.b32.xlu0 %v663, 64
        %v2200 = vpop.permute.xlu0 %2199
        %2201 = vrot.lane.b32.xlu0 %v665, 64
        %v2202 = vpop.permute.xlu0 %2201
        %2203 = vrot.lane.b32.xlu0 %v667, 64
        %v2204 = vpop.permute.xlu0 %2203
        %2205 = vrot.lane.b32.xlu0 %v669, 64
        %v2206 = vpop.permute.xlu0 %2205
        %2207 = vrot.lane.b32.xlu0 %v671, 64
        %v2208 = vpop.permute.xlu0 %2207
        %2209 = vrot.lane.b32.xlu0 %v673, 64
        %v2210 = vpop.permute.xlu0 %2209
        %2211 = vrot.lane.b32.xlu0 %v675, 64
        %v2212 = vpop.permute.xlu0 %2211
        %2213 = vrot.lane.b32.xlu0 %v677, 64
        %v2214 = vpop.permute.xlu0 %2213
        %2215 = vrot.lane.b32.xlu0 %v679, 64
        %v2216 = vpop.permute.xlu0 %2215
        %2217 = vrot.lane.b32.xlu0 %v681, 64
        %v2218 = vpop.permute.xlu0 %2217
        %2219 = vrot.lane.b32.xlu0 %v683, 64
        %v2220 = vpop.permute.xlu0 %2219
        %2221 = vrot.lane.b32.xlu0 %v685, 64
        %v2222 = vpop.permute.xlu0 %2221
        %2223 = vrot.lane.b32.xlu0 %v687, 64
        %v2224 = vpop.permute.xlu0 %2223
        %2225 = vrot.lane.b32.xlu0 %v689, 64
        %v2226 = vpop.permute.xlu0 %2225
        %2227 = vrot.lane.b32.xlu0 %v691, 64
        %v2228 = vpop.permute.xlu0 %2227
        %2229 = vrot.lane.b32.xlu0 %v693, 64
        %v2230 = vpop.permute.xlu0 %2229
        %2231 = vrot.lane.b32.xlu0 %v695, 64
        %v2232 = vpop.permute.xlu0 %2231
        %2233 = vrot.lane.b32.xlu0 %v697, 64
        %v2234 = vpop.permute.xlu0 %2233
        %2235 = vrot.lane.b32.xlu0 %v699, 64
        %v2236 = vpop.permute.xlu0 %2235
        %2237 = vrot.lane.b32.xlu0 %v701, 64
        %v2238 = vpop.permute.xlu0 %2237
        %2239 = vrot.lane.b32.xlu0 %v703, 64
        %v2240 = vpop.permute.xlu0 %2239
        %2241 = vrot.lane.b32.xlu0 %v705, 64
        %v2242 = vpop.permute.xlu0 %2241
        %2243 = vrot.lane.b32.xlu0 %v707, 64
        %v2244 = vpop.permute.xlu0 %2243
        %2245 = vrot.lane.b32.xlu0 %v709, 64
        %v2246 = vpop.permute.xlu0 %2245
        %2247 = vrot.lane.b32.xlu0 %v711, 64
        %v2248 = vpop.permute.xlu0 %2247
        %2249 = vrot.lane.b32.xlu0 %v713, 64
        %v2250 = vpop.permute.xlu0 %2249
        %2251 = vrot.lane.b32.xlu0 %v715, 64
        %v2252 = vpop.permute.xlu0 %2251
        %2253 = vrot.lane.b32.xlu0 %v717, 64
        %v2254 = vpop.permute.xlu0 %2253
        %2255 = vrot.lane.b32.xlu0 %v719, 64
        %v2256 = vpop.permute.xlu0 %2255
        %2257 = vrot.lane.b32.xlu0 %v721, 64
        %v2258 = vpop.permute.xlu0 %2257
        %2259 = vrot.lane.b32.xlu0 %v723, 64
        %v2260 = vpop.permute.xlu0 %2259
        %2261 = vrot.lane.b32.xlu0 %v725, 64
        %v2262 = vpop.permute.xlu0 %2261
        %2263 = vrot.lane.b32.xlu0 %v727, 64
        %v2264 = vpop.permute.xlu0 %2263
        %2265 = vrot.lane.b32.xlu0 %v729, 64
        %v2266 = vpop.permute.xlu0 %2265
        %2267 = vrot.lane.b32.xlu0 %v731, 64
        %v2268 = vpop.permute.xlu0 %2267
        %2269 = vrot.lane.b32.xlu0 %v733, 64
        %v2270 = vpop.permute.xlu0 %2269
        %2271 = vrot.lane.b32.xlu0 %v735, 64
        %v2272 = vpop.permute.xlu0 %2271
        %2273 = vrot.lane.b32.xlu0 %v737, 64
        %v2274 = vpop.permute.xlu0 %2273
        %2275 = vrot.lane.b32.xlu0 %v739, 64
        %v2276 = vpop.permute.xlu0 %2275
        %2277 = vrot.lane.b32.xlu0 %v741, 64
        %v2278 = vpop.permute.xlu0 %2277
        %2279 = vrot.lane.b32.xlu0 %v743, 64
        %v2280 = vpop.permute.xlu0 %2279
        %2281 = vrot.lane.b32.xlu0 %v745, 64
        %v2282 = vpop.permute.xlu0 %2281
        %2283 = vrot.lane.b32.xlu0 %v747, 64
        %v2284 = vpop.permute.xlu0 %2283
        %2285 = vrot.lane.b32.xlu0 %v749, 64
        %v2286 = vpop.permute.xlu0 %2285
        %2287 = vrot.lane.b32.xlu0 %v751, 64
        %v2288 = vpop.permute.xlu0 %2287
        %2289 = vrot.lane.b32.xlu0 %v753, 64
        %v2290 = vpop.permute.xlu0 %2289
        %2291 = vrot.lane.b32.xlu0 %v755, 64
        %v2292 = vpop.permute.xlu0 %2291
        %2293 = vrot.lane.b32.xlu0 %v757, 64
        %v2294 = vpop.permute.xlu0 %2293
        %2295 = vrot.lane.b32.xlu0 %v759, 64
        %v2296 = vpop.permute.xlu0 %2295
        %2297 = vrot.lane.b32.xlu0 %v761, 64
        %v2298 = vpop.permute.xlu0 %2297
        %2299 = vrot.lane.b32.xlu0 %v763, 64
        %v2300 = vpop.permute.xlu0 %2299
        %2301 = vrot.lane.b32.xlu0 %v765, 64
        %v2302 = vpop.permute.xlu0 %2301
        %2303 = vrot.lane.b32.xlu0 %v767, 64
        %v2304 = vpop.permute.xlu0 %2303
        %2305 = vrot.lane.b32.xlu0 %v769, 64
        %v2306 = vpop.permute.xlu0 %2305
        %2307 = vrot.lane.b32.xlu0 %v771, 64
        %v2308 = vpop.permute.xlu0 %2307
        %2309 = vrot.lane.b32.xlu0 %v773, 64
        %v2310 = vpop.permute.xlu0 %2309
        %2311 = vrot.lane.b32.xlu0 %v775, 64
        %v2312 = vpop.permute.xlu0 %2311
        %2313 = vrot.lane.b32.xlu0 %v777, 64
        %v2314 = vpop.permute.xlu0 %2313
        %2315 = vrot.lane.b32.xlu0 %v779, 64
        %v2316 = vpop.permute.xlu0 %2315
        %2317 = vrot.lane.b32.xlu0 %v781, 64
        %v2318 = vpop.permute.xlu0 %2317
        %2319 = vrot.lane.b32.xlu0 %v783, 64
        %v2320 = vpop.permute.xlu0 %2319
        %2321 = vrot.lane.b32.xlu0 %v785, 64
        %v2322 = vpop.permute.xlu0 %2321
        %2323 = vrot.lane.b32.xlu0 %v787, 64
        %v2324 = vpop.permute.xlu0 %2323
        %2325 = vrot.lane.b32.xlu0 %v789, 64
        %v2326 = vpop.permute.xlu0 %2325
        %2327 = vrot.lane.b32.xlu0 %v791, 64
        %v2328 = vpop.permute.xlu0 %2327
        %2329 = vrot.lane.b32.xlu0 %v793, 64
        %v2330 = vpop.permute.xlu0 %2329
        %2331 = vrot.lane.b32.xlu0 %v795, 64
        %v2332 = vpop.permute.xlu0 %2331
        %2333 = vrot.lane.b32.xlu0 %v797, 64
        %v2334 = vpop.permute.xlu0 %2333
        %2335 = vrot.lane.b32.xlu0 %v799, 64
        %v2336 = vpop.permute.xlu0 %2335
        %2337 = vrot.lane.b32.xlu0 %v801, 64
        %v2338 = vpop.permute.xlu0 %2337
        %2339 = vrot.lane.b32.xlu0 %v803, 64
        %v2340 = vpop.permute.xlu0 %2339
        %2341 = vrot.lane.b32.xlu0 %v805, 64
        %v2342 = vpop.permute.xlu0 %2341
        %2343 = vrot.lane.b32.xlu0 %v807, 64
        %v2344 = vpop.permute.xlu0 %2343
        %2345 = vrot.lane.b32.xlu0 %v809, 64
        %v2346 = vpop.permute.xlu0 %2345
        %2347 = vrot.lane.b32.xlu0 %v811, 64
        %v2348 = vpop.permute.xlu0 %2347
        %2349 = vrot.lane.b32.xlu0 %v813, 64
        %v2350 = vpop.permute.xlu0 %2349
        %2351 = vrot.lane.b32.xlu0 %v815, 64
        %v2352 = vpop.permute.xlu0 %2351
        %2353 = vrot.lane.b32.xlu0 %v817, 64
        %v2354 = vpop.permute.xlu0 %2353
        %2355 = vrot.lane.b32.xlu0 %v819, 64
        %v2356 = vpop.permute.xlu0 %2355
        %2357 = vrot.lane.b32.xlu0 %v821, 64
        %v2358 = vpop.permute.xlu0 %2357
        %2359 = vrot.lane.b32.xlu0 %v823, 64
        %v2360 = vpop.permute.xlu0 %2359
        %2361 = vrot.lane.b32.xlu0 %v825, 64
        %v2362 = vpop.permute.xlu0 %2361
        %2363 = vrot.lane.b32.xlu0 %v827, 64
        %v2364 = vpop.permute.xlu0 %2363
        %2365 = vrot.lane.b32.xlu0 %v829, 64
        %v2366 = vpop.permute.xlu0 %2365
        %2367 = vrot.lane.b32.xlu0 %v831, 64
        %v2368 = vpop.permute.xlu0 %2367
        %2369 = vrot.lane.b32.xlu0 %v833, 64
        %v2370 = vpop.permute.xlu0 %2369
        %2371 = vrot.lane.b32.xlu0 %v835, 64
        %v2372 = vpop.permute.xlu0 %2371
        %2373 = vrot.lane.b32.xlu0 %v837, 64
        %v2374 = vpop.permute.xlu0 %2373
        %2375 = vrot.lane.b32.xlu0 %v839, 64
        %v2376 = vpop.permute.xlu0 %2375
        %2377 = vrot.lane.b32.xlu0 %v841, 64
        %v2378 = vpop.permute.xlu0 %2377
        %2379 = vrot.lane.b32.xlu0 %v843, 64
        %v2380 = vpop.permute.xlu0 %2379
        %2381 = vrot.lane.b32.xlu0 %v845, 64
        %v2382 = vpop.permute.xlu0 %2381
        %2383 = vrot.lane.b32.xlu0 %v847, 64
        %v2384 = vpop.permute.xlu0 %2383
        %2385 = vrot.lane.b32.xlu0 %v849, 64
        %v2386 = vpop.permute.xlu0 %2385
        %2387 = vrot.lane.b32.xlu0 %v851, 64
        %v2388 = vpop.permute.xlu0 %2387
        %2389 = vrot.lane.b32.xlu0 %v853, 64
        %v2390 = vpop.permute.xlu0 %2389
        %2391 = vrot.lane.b32.xlu0 %v855, 64
        %v2392 = vpop.permute.xlu0 %2391
        %2393 = vrot.lane.b32.xlu0 %v857, 64
        %v2394 = vpop.permute.xlu0 %2393
        %2395 = vrot.lane.b32.xlu0 %v859, 64
        %v2396 = vpop.permute.xlu0 %2395
        %2397 = vrot.lane.b32.xlu0 %v861, 64
        %v2398 = vpop.permute.xlu0 %2397
        %2399 = vrot.lane.b32.xlu0 %v863, 64
        %v2400 = vpop.permute.xlu0 %2399
        %2401 = vrot.lane.b32.xlu0 %v865, 64
        %v2402 = vpop.permute.xlu0 %2401
        %2403 = vrot.lane.b32.xlu0 %v867, 64
        %v2404 = vpop.permute.xlu0 %2403
        %2405 = vrot.lane.b32.xlu0 %v869, 64
        %v2406 = vpop.permute.xlu0 %2405
        %2407 = vrot.lane.b32.xlu0 %v871, 64
        %v2408 = vpop.permute.xlu0 %2407
        %2409 = vrot.lane.b32.xlu0 %v873, 64
        %v2410 = vpop.permute.xlu0 %2409
        %2411 = vrot.lane.b32.xlu0 %v875, 64
        %v2412 = vpop.permute.xlu0 %2411
        %2413 = vrot.lane.b32.xlu0 %v877, 64
        %v2414 = vpop.permute.xlu0 %2413
        %2415 = vrot.lane.b32.xlu0 %v879, 64
        %v2416 = vpop.permute.xlu0 %2415
        %2417 = vrot.lane.b32.xlu0 %v881, 64
        %v2418 = vpop.permute.xlu0 %2417
        %2419 = vrot.lane.b32.xlu0 %v883, 64
        %v2420 = vpop.permute.xlu0 %2419
        %2421 = vrot.lane.b32.xlu0 %v885, 64
        %v2422 = vpop.permute.xlu0 %2421
        %2423 = vrot.lane.b32.xlu0 %v887, 64
        %v2424 = vpop.permute.xlu0 %2423
        %2425 = vrot.lane.b32.xlu0 %v889, 64
        %v2426 = vpop.permute.xlu0 %2425
        %2427 = vrot.lane.b32.xlu0 %v891, 64
        %v2428 = vpop.permute.xlu0 %2427
        %2429 = vrot.lane.b32.xlu0 %v893, 64
        %v2430 = vpop.permute.xlu0 %2429
        %2431 = vrot.lane.b32.xlu0 %v895, 64
        %v2432 = vpop.permute.xlu0 %2431
        %2433 = vrot.lane.b32.xlu0 %v897, 64
        %v2434 = vpop.permute.xlu0 %2433
        %2435 = vrot.lane.b32.xlu0 %v899, 64
        %v2436 = vpop.permute.xlu0 %2435
        %2437 = vrot.lane.b32.xlu0 %v901, 64
        %v2438 = vpop.permute.xlu0 %2437
        %2439 = vrot.lane.b32.xlu0 %v903, 64
        %v2440 = vpop.permute.xlu0 %2439
        %2441 = vrot.lane.b32.xlu0 %v905, 64
        %v2442 = vpop.permute.xlu0 %2441
        %2443 = vrot.lane.b32.xlu0 %v907, 64
        %v2444 = vpop.permute.xlu0 %2443
        %2445 = vrot.lane.b32.xlu0 %v909, 64
        %v2446 = vpop.permute.xlu0 %2445
        %2447 = vrot.lane.b32.xlu0 %v911, 64
        %v2448 = vpop.permute.xlu0 %2447
        %2449 = vrot.lane.b32.xlu0 %v913, 64
        %v2450 = vpop.permute.xlu0 %2449
        %2451 = vrot.lane.b32.xlu0 %v915, 64
        %v2452 = vpop.permute.xlu0 %2451
        %2453 = vrot.lane.b32.xlu0 %v917, 64
        %v2454 = vpop.permute.xlu0 %2453
        %2455 = vrot.lane.b32.xlu0 %v919, 64
        %v2456 = vpop.permute.xlu0 %2455
        %2457 = vrot.lane.b32.xlu0 %v921, 64
        %v2458 = vpop.permute.xlu0 %2457
        %2459 = vrot.lane.b32.xlu0 %v923, 64
        %v2460 = vpop.permute.xlu0 %2459
        %2461 = vrot.lane.b32.xlu0 %v925, 64
        %v2462 = vpop.permute.xlu0 %2461
        %2463 = vrot.lane.b32.xlu0 %v927, 64
        %v2464 = vpop.permute.xlu0 %2463
        %2465 = vrot.lane.b32.xlu0 %v929, 64
        %v2466 = vpop.permute.xlu0 %2465
        %2467 = vrot.lane.b32.xlu0 %v931, 64
        %v2468 = vpop.permute.xlu0 %2467
        %2469 = vrot.lane.b32.xlu0 %v933, 64
        %v2470 = vpop.permute.xlu0 %2469
        %2471 = vrot.lane.b32.xlu0 %v935, 64
        %v2472 = vpop.permute.xlu0 %2471
        %2473 = vrot.lane.b32.xlu0 %v937, 64
        %v2474 = vpop.permute.xlu0 %2473
        %2475 = vrot.lane.b32.xlu0 %v939, 64
        %v2476 = vpop.permute.xlu0 %2475
        %2477 = vrot.lane.b32.xlu0 %v941, 64
        %v2478 = vpop.permute.xlu0 %2477
        %2479 = vrot.lane.b32.xlu0 %v943, 64
        %v2480 = vpop.permute.xlu0 %2479
        %2481 = vrot.lane.b32.xlu0 %v945, 64
        %v2482 = vpop.permute.xlu0 %2481
        %2483 = vrot.lane.b32.xlu0 %v947, 64
        %v2484 = vpop.permute.xlu0 %2483
        %2485 = vrot.lane.b32.xlu0 %v949, 64
        %v2486 = vpop.permute.xlu0 %2485
        %2487 = vrot.lane.b32.xlu0 %v951, 64
        %v2488 = vpop.permute.xlu0 %2487
        %2489 = vrot.lane.b32.xlu0 %v953, 64
        %v2490 = vpop.permute.xlu0 %2489
        %2491 = vrot.lane.b32.xlu0 %v955, 64
        %v2492 = vpop.permute.xlu0 %2491
        %2493 = vrot.lane.b32.xlu0 %v957, 64
        %v2494 = vpop.permute.xlu0 %2493
        %2495 = vrot.lane.b32.xlu0 %v959, 64
        %v2496 = vpop.permute.xlu0 %2495
        %2497 = vrot.lane.b32.xlu0 %v961, 64
        %v2498 = vpop.permute.xlu0 %2497
        %2499 = vrot.lane.b32.xlu0 %v963, 64
        %v2500 = vpop.permute.xlu0 %2499
        %2501 = vrot.lane.b32.xlu0 %v965, 64
        %v2502 = vpop.permute.xlu0 %2501
        %2503 = vrot.lane.b32.xlu0 %v967, 64
        %v2504 = vpop.permute.xlu0 %2503
        %2505 = vrot.lane.b32.xlu0 %v969, 64
        %v2506 = vpop.permute.xlu0 %2505
        %2507 = vrot.lane.b32.xlu0 %v971, 64
        %v2508 = vpop.permute.xlu0 %2507
        %2509 = vrot.lane.b32.xlu0 %v973, 64
        %v2510 = vpop.permute.xlu0 %2509
        %2511 = vrot.lane.b32.xlu0 %v975, 64
        %v2512 = vpop.permute.xlu0 %2511
        %2513 = vrot.lane.b32.xlu0 %v977, 64
        %v2514 = vpop.permute.xlu0 %2513
        %2515 = vrot.lane.b32.xlu0 %v979, 64
        %v2516 = vpop.permute.xlu0 %2515
        %2517 = vrot.lane.b32.xlu0 %v981, 64
        %v2518 = vpop.permute.xlu0 %2517
        %2519 = vrot.lane.b32.xlu0 %v983, 64
        %v2520 = vpop.permute.xlu0 %2519
        %2521 = vrot.lane.b32.xlu0 %v985, 64
        %v2522 = vpop.permute.xlu0 %2521
        %2523 = vrot.lane.b32.xlu0 %v987, 64
        %v2524 = vpop.permute.xlu0 %2523
        %2525 = vrot.lane.b32.xlu0 %v989, 64
        %v2526 = vpop.permute.xlu0 %2525
        %2527 = vrot.lane.b32.xlu0 %v991, 64
        %v2528 = vpop.permute.xlu0 %2527
        %2529 = vrot.lane.b32.xlu0 %v993, 64
        %v2530 = vpop.permute.xlu0 %2529
        %2531 = vrot.lane.b32.xlu0 %v995, 64
        %v2532 = vpop.permute.xlu0 %2531
        %2533 = vrot.lane.b32.xlu0 %v997, 64
        %v2534 = vpop.permute.xlu0 %2533
        %2535 = vrot.lane.b32.xlu0 %v999, 64
        %v2536 = vpop.permute.xlu0 %2535
        %2537 = vrot.lane.b32.xlu0 %v1001, 64
        %v2538 = vpop.permute.xlu0 %2537
        %2539 = vrot.lane.b32.xlu0 %v1003, 64
        %v2540 = vpop.permute.xlu0 %2539
        %2541 = vrot.lane.b32.xlu0 %v1005, 64
        %v2542 = vpop.permute.xlu0 %2541
        %2543 = vrot.lane.b32.xlu0 %v1007, 64
        %v2544 = vpop.permute.xlu0 %2543
        %2545 = vrot.lane.b32.xlu0 %v1009, 64
        %v2546 = vpop.permute.xlu0 %2545
        %2547 = vrot.lane.b32.xlu0 %v1011, 64
        %v2548 = vpop.permute.xlu0 %2547
        %2549 = vrot.lane.b32.xlu0 %v1013, 64
        %v2550 = vpop.permute.xlu0 %2549
        %2551 = vrot.lane.b32.xlu0 %v1015, 64
        %v2552 = vpop.permute.xlu0 %2551
        %2553 = vrot.lane.b32.xlu0 %v1017, 64
        %v2554 = vpop.permute.xlu0 %2553
        %2555 = vrot.lane.b32.xlu0 %v1019, 64
        %v2556 = vpop.permute.xlu0 %2555
        %2557 = vrot.lane.b32.xlu0 %v1021, 64
        %v2558 = vpop.permute.xlu0 %2557
        %2559 = vrot.lane.b32.xlu0 %v1023, 64
        %v2560 = vpop.permute.xlu0 %2559
        %2561 = vrot.lane.b32.xlu0 %v1025, 64
        %v2562 = vpop.permute.xlu0 %2561
        %2563 = vrot.lane.b32.xlu0 %v1027, 64
        %v2564 = vpop.permute.xlu0 %2563
        %2565 = vrot.lane.b32.xlu0 %v1029, 64
        %v2566 = vpop.permute.xlu0 %2565
        %2567 = vrot.lane.b32.xlu0 %v1031, 64
        %v2568 = vpop.permute.xlu0 %2567
        %2569 = vrot.lane.b32.xlu0 %v1033, 64
        %v2570 = vpop.permute.xlu0 %2569
        %2571 = vrot.lane.b32.xlu0 %v1035, 64
        %v2572 = vpop.permute.xlu0 %2571
        %2573 = vrot.lane.b32.xlu0 %v1037, 64
        %v2574 = vpop.permute.xlu0 %2573
        %2575 = vrot.lane.b32.xlu0 %v1039, 64
        %v2576 = vpop.permute.xlu0 %2575
        %2577 = vrot.lane.b32.xlu0 %v1041, 64
        %v2578 = vpop.permute.xlu0 %2577
        %2579 = vrot.lane.b32.xlu0 %v1043, 64
        %v2580 = vpop.permute.xlu0 %2579
        %2581 = vrot.lane.b32.xlu0 %v1045, 64
        %v2582 = vpop.permute.xlu0 %2581
        %2583 = vrot.lane.b32.xlu0 %v1047, 64
        %v2584 = vpop.permute.xlu0 %2583
        %2585 = vrot.lane.b32.xlu0 %v1049, 64
        %v2586 = vpop.permute.xlu0 %2585
        %2587 = vrot.lane.b32.xlu0 %v1051, 64
        %v2588 = vpop.permute.xlu0 %2587
        %2589 = vrot.lane.b32.xlu0 %v1053, 64
        %v2590 = vpop.permute.xlu0 %2589
        %2591 = vrot.lane.b32.xlu0 %v1055, 64
        %v2592 = vpop.permute.xlu0 %2591
        %2593 = vrot.lane.b32.xlu0 %v1057, 64
        %v2594 = vpop.permute.xlu0 %2593
        %2595 = vrot.lane.b32.xlu0 %v1059, 64
        %v2596 = vpop.permute.xlu0 %2595
        %2597 = vrot.lane.b32.xlu0 %v1061, 64
        %v2598 = vpop.permute.xlu0 %2597
        %2599 = vrot.lane.b32.xlu0 %v1063, 64
        %v2600 = vpop.permute.xlu0 %2599
        %2601 = vrot.lane.b32.xlu0 %v1065, 64
        %v2602 = vpop.permute.xlu0 %2601
        %2603 = vrot.lane.b32.xlu0 %v1067, 64
        %v2604 = vpop.permute.xlu0 %2603
        %2605 = vrot.lane.b32.xlu0 %v1069, 64
        %v2606 = vpop.permute.xlu0 %2605
        %2607 = vrot.lane.b32.xlu0 %v1071, 64
        %v2608 = vpop.permute.xlu0 %2607
        %2609 = vrot.lane.b32.xlu0 %v1073, 64
        %v2610 = vpop.permute.xlu0 %2609
        %2611 = vrot.lane.b32.xlu0 %v1075, 64
        %v2612 = vpop.permute.xlu0 %2611
        %2613 = vrot.lane.b32.xlu0 %v1077, 64
        %v2614 = vpop.permute.xlu0 %2613
        %2615 = vrot.lane.b32.xlu0 %v1079, 64
        %v2616 = vpop.permute.xlu0 %2615
        %2617 = vrot.lane.b32.xlu0 %v1081, 64
        %v2618 = vpop.permute.xlu0 %2617
        %2619 = vrot.lane.b32.xlu0 %v1083, 64
        %v2620 = vpop.permute.xlu0 %2619
        %2621 = vrot.lane.b32.xlu0 %v1085, 64
        %v2622 = vpop.permute.xlu0 %2621
        %2623 = vrot.lane.b32.xlu0 %v1087, 64
        %v2624 = vpop.permute.xlu0 %2623
        %2625 = vrot.lane.b32.xlu0 %v1089, 64
        %v2626 = vpop.permute.xlu0 %2625
        %2627 = vrot.lane.b32.xlu0 %v1091, 64
        %v2628 = vpop.permute.xlu0 %2627
        %2629 = vrot.lane.b32.xlu0 %v1093, 64
        %v2630 = vpop.permute.xlu0 %2629
        %2631 = vrot.lane.b32.xlu0 %v1095, 64
        %v2632 = vpop.permute.xlu0 %2631
        %2633 = vrot.lane.b32.xlu0 %v1097, 64
        %v2634 = vpop.permute.xlu0 %2633
        %2635 = vrot.lane.b32.xlu0 %v1099, 64
        %v2636 = vpop.permute.xlu0 %2635
        %2637 = vrot.lane.b32.xlu0 %v1101, 64
        %v2638 = vpop.permute.xlu0 %2637
        %2639 = vrot.lane.b32.xlu0 %v1103, 64
        %v2640 = vpop.permute.xlu0 %2639
        %2641 = vrot.lane.b32.xlu0 %v1105, 64
        %v2642 = vpop.permute.xlu0 %2641
        %2643 = vrot.lane.b32.xlu0 %v1107, 64
        %v2644 = vpop.permute.xlu0 %2643
        %2645 = vrot.lane.b32.xlu0 %v1109, 64
        %v2646 = vpop.permute.xlu0 %2645
        %2647 = vrot.lane.b32.xlu0 %v1111, 64
        %v2648 = vpop.permute.xlu0 %2647
        %2649 = vrot.lane.b32.xlu0 %v1113, 64
        %v2650 = vpop.permute.xlu0 %2649
        %2651 = vrot.lane.b32.xlu0 %v1115, 64
        %v2652 = vpop.permute.xlu0 %2651
        %2653 = vrot.lane.b32.xlu0 %v1117, 64
        %v2654 = vpop.permute.xlu0 %2653
        %2655 = vrot.lane.b32.xlu0 %v1119, 64
        %v2656 = vpop.permute.xlu0 %2655
        %2657 = vrot.lane.b32.xlu0 %v1121, 64
        %v2658 = vpop.permute.xlu0 %2657
        %2659 = vrot.lane.b32.xlu0 %v1123, 64
        %v2660 = vpop.permute.xlu0 %2659
        %2661 = vrot.lane.b32.xlu0 %v1125, 64
        %v2662 = vpop.permute.xlu0 %2661
        %2663 = vrot.lane.b32.xlu0 %v1127, 64
        %v2664 = vpop.permute.xlu0 %2663
        %2665 = vrot.lane.b32.xlu0 %v1129, 64
        %v2666 = vpop.permute.xlu0 %2665
        %2667 = vrot.lane.b32.xlu0 %v1131, 64
        %v2668 = vpop.permute.xlu0 %2667
        %2669 = vrot.lane.b32.xlu0 %v1133, 64
        %v2670 = vpop.permute.xlu0 %2669
        %2671 = vrot.lane.b32.xlu0 %v1135, 64
        %v2672 = vpop.permute.xlu0 %2671
        %2673 = vrot.lane.b32.xlu0 %v1137, 64
        %v2674 = vpop.permute.xlu0 %2673
        %2675 = vrot.lane.b32.xlu0 %v1139, 64
        %v2676 = vpop.permute.xlu0 %2675
        %2677 = vrot.lane.b32.xlu0 %v1141, 64
        %v2678 = vpop.permute.xlu0 %2677
        %2679 = vrot.lane.b32.xlu0 %v1143, 64
        %v2680 = vpop.permute.xlu0 %2679
        %2681 = vrot.lane.b32.xlu0 %v1145, 64
        %v2682 = vpop.permute.xlu0 %2681
        %2683 = vrot.lane.b32.xlu0 %v1147, 64
        %v2684 = vpop.permute.xlu0 %2683
        %2685 = vrot.lane.b32.xlu0 %v1149, 64
        %v2686 = vpop.permute.xlu0 %2685
        %2687 = vrot.lane.b32.xlu0 %v1151, 64
        %v2688 = vpop.permute.xlu0 %2687
        %2689 = vrot.lane.b32.xlu0 %v1153, 64
        %v2690 = vpop.permute.xlu0 %2689
        %2691 = vrot.lane.b32.xlu0 %v1155, 64
        %v2692 = vpop.permute.xlu0 %2691
        %2693 = vrot.lane.b32.xlu0 %v1157, 64
        %v2694 = vpop.permute.xlu0 %2693
        %2695 = vrot.lane.b32.xlu0 %v1159, 64
        %v2696 = vpop.permute.xlu0 %2695
        %2697 = vrot.lane.b32.xlu0 %v1161, 64
        %v2698 = vpop.permute.xlu0 %2697
        %2699 = vrot.lane.b32.xlu0 %v1163, 64
        %v2700 = vpop.permute.xlu0 %2699
        %2701 = vrot.lane.b32.xlu0 %v1165, 64
        %v2702 = vpop.permute.xlu0 %2701
        %2703 = vrot.lane.b32.xlu0 %v1167, 64
        %v2704 = vpop.permute.xlu0 %2703
        %2705 = vrot.lane.b32.xlu0 %v1169, 64
        %v2706 = vpop.permute.xlu0 %2705
        %2707 = vrot.lane.b32.xlu0 %v1171, 64
        %v2708 = vpop.permute.xlu0 %2707
        %2709 = vrot.lane.b32.xlu0 %v1173, 64
        %v2710 = vpop.permute.xlu0 %2709
        %2711 = vrot.lane.b32.xlu0 %v1175, 64
        %v2712 = vpop.permute.xlu0 %2711
        %2713 = vrot.lane.b32.xlu0 %v1177, 64
        %v2714 = vpop.permute.xlu0 %2713
        %2715 = vrot.lane.b32.xlu0 %v1179, 64
        %v2716 = vpop.permute.xlu0 %2715
        %2717 = vrot.lane.b32.xlu0 %v1181, 64
        %v2718 = vpop.permute.xlu0 %2717
        %2719 = vrot.lane.b32.xlu0 %v1183, 64
        %v2720 = vpop.permute.xlu0 %2719
        %2721 = vrot.lane.b32.xlu0 %v1185, 64
        %v2722 = vpop.permute.xlu0 %2721
        %2723 = vrot.lane.b32.xlu0 %v1187, 64
        %v2724 = vpop.permute.xlu0 %2723
        %2725 = vrot.lane.b32.xlu0 %v1189, 64
        %v2726 = vpop.permute.xlu0 %2725
        %2727 = vrot.lane.b32.xlu0 %v1191, 64
        %v2728 = vpop.permute.xlu0 %2727
        %2729 = vrot.lane.b32.xlu0 %v1193, 64
        %v2730 = vpop.permute.xlu0 %2729
        %2731 = vrot.lane.b32.xlu0 %v1195, 64
        %v2732 = vpop.permute.xlu0 %2731
        %2733 = vrot.lane.b32.xlu0 %v1197, 64
        %v2734 = vpop.permute.xlu0 %2733
        %2735 = vrot.lane.b32.xlu0 %v1199, 64
        %v2736 = vpop.permute.xlu0 %2735
        %2737 = vrot.lane.b32.xlu0 %v1201, 64
        %v2738 = vpop.permute.xlu0 %2737
        %2739 = vrot.lane.b32.xlu0 %v1203, 64
        %v2740 = vpop.permute.xlu0 %2739
        %2741 = vrot.lane.b32.xlu0 %v1205, 64
        %v2742 = vpop.permute.xlu0 %2741
        %2743 = vrot.lane.b32.xlu0 %v1207, 64
        %v2744 = vpop.permute.xlu0 %2743
        %2745 = vrot.lane.b32.xlu0 %v1209, 64
        %v2746 = vpop.permute.xlu0 %2745
        %2747 = vrot.lane.b32.xlu0 %v1211, 64
        %v2748 = vpop.permute.xlu0 %2747
        %2749 = vrot.lane.b32.xlu0 %v1213, 64
        %v2750 = vpop.permute.xlu0 %2749
        %2751 = vrot.lane.b32.xlu0 %v1215, 64
        %v2752 = vpop.permute.xlu0 %2751
        %2753 = vrot.lane.b32.xlu0 %v1217, 64
        %v2754 = vpop.permute.xlu0 %2753
        %2755 = vrot.lane.b32.xlu0 %v1219, 64
        %v2756 = vpop.permute.xlu0 %2755
        %2757 = vrot.lane.b32.xlu0 %v1221, 64
        %v2758 = vpop.permute.xlu0 %2757
        %2759 = vrot.lane.b32.xlu0 %v1223, 64
        %v2760 = vpop.permute.xlu0 %2759
        %2761 = vrot.lane.b32.xlu0 %v1225, 64
        %v2762 = vpop.permute.xlu0 %2761
        %2763 = vrot.lane.b32.xlu0 %v1227, 64
        %v2764 = vpop.permute.xlu0 %2763
        %2765 = vrot.lane.b32.xlu0 %v1229, 64
        %v2766 = vpop.permute.xlu0 %2765
        %2767 = vrot.lane.b32.xlu0 %v1231, 64
        %v2768 = vpop.permute.xlu0 %2767
        %2769 = vrot.lane.b32.xlu0 %v1233, 64
        %v2770 = vpop.permute.xlu0 %2769
        %2771 = vrot.lane.b32.xlu0 %v1235, 64
        %v2772 = vpop.permute.xlu0 %2771
        %2773 = vrot.lane.b32.xlu0 %v1237, 64
        %v2774 = vpop.permute.xlu0 %2773
        %2775 = vrot.lane.b32.xlu0 %v1239, 64
        %v2776 = vpop.permute.xlu0 %2775
        %2777 = vrot.lane.b32.xlu0 %v1241, 64
        %v2778 = vpop.permute.xlu0 %2777
        %2779 = vrot.lane.b32.xlu0 %v1243, 64
        %v2780 = vpop.permute.xlu0 %2779
        %2781 = vrot.lane.b32.xlu0 %v1245, 64
        %v2782 = vpop.permute.xlu0 %2781
        %2783 = vrot.lane.b32.xlu0 %v1247, 64
        %v2784 = vpop.permute.xlu0 %2783
        %2785 = vrot.lane.b32.xlu0 %v1249, 64
        %v2786 = vpop.permute.xlu0 %2785
        %2787 = vrot.lane.b32.xlu0 %v1251, 64
        %v2788 = vpop.permute.xlu0 %2787
        %2789 = vrot.lane.b32.xlu0 %v1253, 64
        %v2790 = vpop.permute.xlu0 %2789
        %2791 = vrot.lane.b32.xlu0 %v1255, 64
        %v2792 = vpop.permute.xlu0 %2791
        %2793 = vrot.lane.b32.xlu0 %v1257, 64
        %v2794 = vpop.permute.xlu0 %2793
        %2795 = vrot.lane.b32.xlu0 %v1259, 64
        %v2796 = vpop.permute.xlu0 %2795
        %v3309 = vadd.f32 %v237, %v1774
        %v3310 = vadd.f32 %v239, %v1776
        %v3311 = vadd.f32 %v241, %v1778
        %v3312 = vadd.f32 %v243, %v1780
        %v3313 = vadd.f32 %v245, %v1782
        %v3314 = vadd.f32 %v247, %v1784
        %v3315 = vadd.f32 %v249, %v1786
        %v3316 = vadd.f32 %v251, %v1788
        %v3317 = vadd.f32 %v253, %v1790
        %v3318 = vadd.f32 %v255, %v1792
        %v3319 = vadd.f32 %v257, %v1794
        %v3320 = vadd.f32 %v259, %v1796
        %v3321 = vadd.f32 %v261, %v1798
        %v3322 = vadd.f32 %v263, %v1800
        %v3323 = vadd.f32 %v265, %v1802
        %v3324 = vadd.f32 %v267, %v1804
        %v3325 = vadd.f32 %v269, %v1806
        %v3326 = vadd.f32 %v271, %v1808
        %v3327 = vadd.f32 %v273, %v1810
        %v3328 = vadd.f32 %v275, %v1812
        %v3329 = vadd.f32 %v277, %v1814
        %v3330 = vadd.f32 %v279, %v1816
        %v3331 = vadd.f32 %v281, %v1818
        %v3332 = vadd.f32 %v283, %v1820
        %v3333 = vadd.f32 %v285, %v1822
        %v3334 = vadd.f32 %v287, %v1824
        %v3335 = vadd.f32 %v289, %v1826
        %v3336 = vadd.f32 %v291, %v1828
        %v3337 = vadd.f32 %v293, %v1830
        %v3338 = vadd.f32 %v295, %v1832
        %v3339 = vadd.f32 %v297, %v1834
        %v3340 = vadd.f32 %v299, %v1836
        %v3341 = vadd.f32 %v301, %v1838
        %v3342 = vadd.f32 %v303, %v1840
        %v3343 = vadd.f32 %v305, %v1842
        %v3344 = vadd.f32 %v307, %v1844
        %v3345 = vadd.f32 %v309, %v1846
        %v3346 = vadd.f32 %v311, %v1848
        %v3347 = vadd.f32 %v313, %v1850
        %v3348 = vadd.f32 %v315, %v1852
        %v3349 = vadd.f32 %v317, %v1854
        %v3350 = vadd.f32 %v319, %v1856
        %v3351 = vadd.f32 %v321, %v1858
        %v3352 = vadd.f32 %v323, %v1860
        %v3353 = vadd.f32 %v325, %v1862
        %v3354 = vadd.f32 %v327, %v1864
        %v3355 = vadd.f32 %v329, %v1866
        %v3356 = vadd.f32 %v331, %v1868
        %v3357 = vadd.f32 %v333, %v1870
        %v3358 = vadd.f32 %v335, %v1872
        %v3359 = vadd.f32 %v337, %v1874
        %v3360 = vadd.f32 %v339, %v1876
        %v3361 = vadd.f32 %v341, %v1878
        %v3362 = vadd.f32 %v343, %v1880
        %v3363 = vadd.f32 %v345, %v1882
        %v3364 = vadd.f32 %v347, %v1884
        %v3365 = vadd.f32 %v349, %v1886
        %v3366 = vadd.f32 %v351, %v1888
        %v3367 = vadd.f32 %v353, %v1890
        %v3368 = vadd.f32 %v355, %v1892
        %v3369 = vadd.f32 %v357, %v1894
        %v3370 = vadd.f32 %v359, %v1896
        %v3371 = vadd.f32 %v361, %v1898
        %v3372 = vadd.f32 %v363, %v1900
        %v3373 = vadd.f32 %v365, %v1902
        %v3374 = vadd.f32 %v367, %v1904
        %v3375 = vadd.f32 %v369, %v1906
        %v3376 = vadd.f32 %v371, %v1908
        %v3377 = vadd.f32 %v373, %v1910
        %v3378 = vadd.f32 %v375, %v1912
        %v3379 = vadd.f32 %v377, %v1914
        %v3380 = vadd.f32 %v379, %v1916
        %v3381 = vadd.f32 %v381, %v1918
        %v3382 = vadd.f32 %v383, %v1920
        %v3383 = vadd.f32 %v385, %v1922
        %v3384 = vadd.f32 %v387, %v1924
        %v3385 = vadd.f32 %v389, %v1926
        %v3386 = vadd.f32 %v391, %v1928
        %v3387 = vadd.f32 %v393, %v1930
        %v3388 = vadd.f32 %v395, %v1932
        %v3389 = vadd.f32 %v397, %v1934
        %v3390 = vadd.f32 %v399, %v1936
        %v3391 = vadd.f32 %v401, %v1938
        %v3392 = vadd.f32 %v403, %v1940
        %v3393 = vadd.f32 %v405, %v1942
        %v3394 = vadd.f32 %v407, %v1944
        %v3395 = vadd.f32 %v409, %v1946
        %v3396 = vadd.f32 %v411, %v1948
        %v3397 = vadd.f32 %v413, %v1950
        %v3398 = vadd.f32 %v415, %v1952
        %v3399 = vadd.f32 %v417, %v1954
        %v3400 = vadd.f32 %v419, %v1956
        %v3401 = vadd.f32 %v421, %v1958
        %v3402 = vadd.f32 %v423, %v1960
        %v3403 = vadd.f32 %v425, %v1962
        %v3404 = vadd.f32 %v427, %v1964
        %v3405 = vadd.f32 %v429, %v1966
        %v3406 = vadd.f32 %v431, %v1968
        %v3407 = vadd.f32 %v433, %v1970
        %v3408 = vadd.f32 %v435, %v1972
        %v3409 = vadd.f32 %v437, %v1974
        %v3410 = vadd.f32 %v439, %v1976
        %v3411 = vadd.f32 %v441, %v1978
        %v3412 = vadd.f32 %v443, %v1980
        %v3413 = vadd.f32 %v445, %v1982
        %v3414 = vadd.f32 %v447, %v1984
        %v3415 = vadd.f32 %v449, %v1986
        %v3416 = vadd.f32 %v451, %v1988
        %v3417 = vadd.f32 %v453, %v1990
        %v3418 = vadd.f32 %v455, %v1992
        %v3419 = vadd.f32 %v457, %v1994
        %v3420 = vadd.f32 %v459, %v1996
        %v3421 = vadd.f32 %v461, %v1998
        %v3422 = vadd.f32 %v463, %v2000
        %v3423 = vadd.f32 %v465, %v2002
        %v3424 = vadd.f32 %v467, %v2004
        %v3425 = vadd.f32 %v469, %v2006
        %v3426 = vadd.f32 %v471, %v2008
        %v3427 = vadd.f32 %v473, %v2010
        %v3428 = vadd.f32 %v475, %v2012
        %v3429 = vadd.f32 %v477, %v2014
        %v3430 = vadd.f32 %v479, %v2016
        %v3431 = vadd.f32 %v481, %v2018
        %v3432 = vadd.f32 %v483, %v2020
        %v3433 = vadd.f32 %v485, %v2022
        %v3434 = vadd.f32 %v487, %v2024
        %v3435 = vadd.f32 %v489, %v2026
        %v3436 = vadd.f32 %v491, %v2028
        %v3437 = vadd.f32 %v493, %v2030
        %v3438 = vadd.f32 %v495, %v2032
        %v3439 = vadd.f32 %v497, %v2034
        %v3440 = vadd.f32 %v499, %v2036
        %v3441 = vadd.f32 %v501, %v2038
        %v3442 = vadd.f32 %v503, %v2040
        %v3443 = vadd.f32 %v505, %v2042
        %v3444 = vadd.f32 %v507, %v2044
        %v3445 = vadd.f32 %v509, %v2046
        %v3446 = vadd.f32 %v511, %v2048
        %v3447 = vadd.f32 %v513, %v2050
        %v3448 = vadd.f32 %v515, %v2052
        %v3449 = vadd.f32 %v517, %v2054
        %v3450 = vadd.f32 %v519, %v2056
        %v3451 = vadd.f32 %v521, %v2058
        %v3452 = vadd.f32 %v523, %v2060
        %v3453 = vadd.f32 %v525, %v2062
        %v3454 = vadd.f32 %v527, %v2064
        %v3455 = vadd.f32 %v529, %v2066
        %v3456 = vadd.f32 %v531, %v2068
        %v3457 = vadd.f32 %v533, %v2070
        %v3458 = vadd.f32 %v535, %v2072
        %v3459 = vadd.f32 %v537, %v2074
        %v3460 = vadd.f32 %v539, %v2076
        %v3461 = vadd.f32 %v541, %v2078
        %v3462 = vadd.f32 %v543, %v2080
        %v3463 = vadd.f32 %v545, %v2082
        %v3464 = vadd.f32 %v547, %v2084
        %v3465 = vadd.f32 %v549, %v2086
        %v3466 = vadd.f32 %v551, %v2088
        %v3467 = vadd.f32 %v553, %v2090
        %v3468 = vadd.f32 %v555, %v2092
        %v3469 = vadd.f32 %v557, %v2094
        %v3470 = vadd.f32 %v559, %v2096
        %v3471 = vadd.f32 %v561, %v2098
        %v3472 = vadd.f32 %v563, %v2100
        %v3473 = vadd.f32 %v565, %v2102
        %v3474 = vadd.f32 %v567, %v2104
        %v3475 = vadd.f32 %v569, %v2106
        %v3476 = vadd.f32 %v571, %v2108
        %v3477 = vadd.f32 %v573, %v2110
        %v3478 = vadd.f32 %v575, %v2112
        %v3479 = vadd.f32 %v577, %v2114
        %v3480 = vadd.f32 %v579, %v2116
        %v3481 = vadd.f32 %v581, %v2118
        %v3482 = vadd.f32 %v583, %v2120
        %v3483 = vadd.f32 %v585, %v2122
        %v3484 = vadd.f32 %v587, %v2124
        %v3485 = vadd.f32 %v589, %v2126
        %v3486 = vadd.f32 %v591, %v2128
        %v3487 = vadd.f32 %v593, %v2130
        %v3488 = vadd.f32 %v595, %v2132
        %v3489 = vadd.f32 %v597, %v2134
        %v3490 = vadd.f32 %v599, %v2136
        %v3491 = vadd.f32 %v601, %v2138
        %v3492 = vadd.f32 %v603, %v2140
        %v3493 = vadd.f32 %v605, %v2142
        %v3494 = vadd.f32 %v607, %v2144
        %v3495 = vadd.f32 %v609, %v2146
        %v3496 = vadd.f32 %v611, %v2148
        %v3497 = vadd.f32 %v613, %v2150
        %v3498 = vadd.f32 %v615, %v2152
        %v3499 = vadd.f32 %v617, %v2154
        %v3500 = vadd.f32 %v619, %v2156
        %v3501 = vadd.f32 %v621, %v2158
        %v3502 = vadd.f32 %v623, %v2160
        %v3503 = vadd.f32 %v625, %v2162
        %v3504 = vadd.f32 %v627, %v2164
        %v3505 = vadd.f32 %v629, %v2166
        %v3506 = vadd.f32 %v631, %v2168
        %v3507 = vadd.f32 %v633, %v2170
        %v3508 = vadd.f32 %v635, %v2172
        %v3509 = vadd.f32 %v637, %v2174
        %v3510 = vadd.f32 %v639, %v2176
        %v3511 = vadd.f32 %v641, %v2178
        %v3512 = vadd.f32 %v643, %v2180
        %v3513 = vadd.f32 %v645, %v2182
        %v3514 = vadd.f32 %v647, %v2184
        %v3515 = vadd.f32 %v649, %v2186
        %v3516 = vadd.f32 %v651, %v2188
        %v3517 = vadd.f32 %v653, %v2190
        %v3518 = vadd.f32 %v655, %v2192
        %v3519 = vadd.f32 %v657, %v2194
        %v3520 = vadd.f32 %v659, %v2196
        %v3521 = vadd.f32 %v661, %v2198
        %v3522 = vadd.f32 %v663, %v2200
        %v3523 = vadd.f32 %v665, %v2202
        %v3524 = vadd.f32 %v667, %v2204
        %v3525 = vadd.f32 %v669, %v2206
        %v3526 = vadd.f32 %v671, %v2208
        %v3527 = vadd.f32 %v673, %v2210
        %v3528 = vadd.f32 %v675, %v2212
        %v3529 = vadd.f32 %v677, %v2214
        %v3530 = vadd.f32 %v679, %v2216
        %v3531 = vadd.f32 %v681, %v2218
        %v3532 = vadd.f32 %v683, %v2220
        %v3533 = vadd.f32 %v685, %v2222
        %v3534 = vadd.f32 %v687, %v2224
        %v3535 = vadd.f32 %v689, %v2226
        %v3536 = vadd.f32 %v691, %v2228
        %v3537 = vadd.f32 %v693, %v2230
        %v3538 = vadd.f32 %v695, %v2232
        %v3539 = vadd.f32 %v697, %v2234
        %v3540 = vadd.f32 %v699, %v2236
        %v3541 = vadd.f32 %v701, %v2238
        %v3542 = vadd.f32 %v703, %v2240
        %v3543 = vadd.f32 %v705, %v2242
        %v3544 = vadd.f32 %v707, %v2244
        %v3545 = vadd.f32 %v709, %v2246
        %v3546 = vadd.f32 %v711, %v2248
        %v3547 = vadd.f32 %v713, %v2250
        %v3548 = vadd.f32 %v715, %v2252
        %v3549 = vadd.f32 %v717, %v2254
        %v3550 = vadd.f32 %v719, %v2256
        %v3551 = vadd.f32 %v721, %v2258
        %v3552 = vadd.f32 %v723, %v2260
        %v3553 = vadd.f32 %v725, %v2262
        %v3554 = vadd.f32 %v727, %v2264
        %v3555 = vadd.f32 %v729, %v2266
        %v3556 = vadd.f32 %v731, %v2268
        %v3557 = vadd.f32 %v733, %v2270
        %v3558 = vadd.f32 %v735, %v2272
        %v3559 = vadd.f32 %v737, %v2274
        %v3560 = vadd.f32 %v739, %v2276
        %v3561 = vadd.f32 %v741, %v2278
        %v3562 = vadd.f32 %v743, %v2280
        %v3563 = vadd.f32 %v745, %v2282
        %v3564 = vadd.f32 %v747, %v2284
        %v3565 = vadd.f32 %v749, %v2286
        %v3566 = vadd.f32 %v751, %v2288
        %v3567 = vadd.f32 %v753, %v2290
        %v3568 = vadd.f32 %v755, %v2292
        %v3569 = vadd.f32 %v757, %v2294
        %v3570 = vadd.f32 %v759, %v2296
        %v3571 = vadd.f32 %v761, %v2298
        %v3572 = vadd.f32 %v763, %v2300
        %v3573 = vadd.f32 %v765, %v2302
        %v3574 = vadd.f32 %v767, %v2304
        %v3575 = vadd.f32 %v769, %v2306
        %v3576 = vadd.f32 %v771, %v2308
        %v3577 = vadd.f32 %v773, %v2310
        %v3578 = vadd.f32 %v775, %v2312
        %v3579 = vadd.f32 %v777, %v2314
        %v3580 = vadd.f32 %v779, %v2316
        %v3581 = vadd.f32 %v781, %v2318
        %v3582 = vadd.f32 %v783, %v2320
        %v3583 = vadd.f32 %v785, %v2322
        %v3584 = vadd.f32 %v787, %v2324
        %v3585 = vadd.f32 %v789, %v2326
        %v3586 = vadd.f32 %v791, %v2328
        %v3587 = vadd.f32 %v793, %v2330
        %v3588 = vadd.f32 %v795, %v2332
        %v3589 = vadd.f32 %v797, %v2334
        %v3590 = vadd.f32 %v799, %v2336
        %v3591 = vadd.f32 %v801, %v2338
        %v3592 = vadd.f32 %v803, %v2340
        %v3593 = vadd.f32 %v805, %v2342
        %v3594 = vadd.f32 %v807, %v2344
        %v3595 = vadd.f32 %v809, %v2346
        %v3596 = vadd.f32 %v811, %v2348
        %v3597 = vadd.f32 %v813, %v2350
        %v3598 = vadd.f32 %v815, %v2352
        %v3599 = vadd.f32 %v817, %v2354
        %v3600 = vadd.f32 %v819, %v2356
        %v3601 = vadd.f32 %v821, %v2358
        %v3602 = vadd.f32 %v823, %v2360
        %v3603 = vadd.f32 %v825, %v2362
        %v3604 = vadd.f32 %v827, %v2364
        %v3605 = vadd.f32 %v829, %v2366
        %v3606 = vadd.f32 %v831, %v2368
        %v3607 = vadd.f32 %v833, %v2370
        %v3608 = vadd.f32 %v835, %v2372
        %v3609 = vadd.f32 %v837, %v2374
        %v3610 = vadd.f32 %v839, %v2376
        %v3611 = vadd.f32 %v841, %v2378
        %v3612 = vadd.f32 %v843, %v2380
        %v3613 = vadd.f32 %v845, %v2382
        %v3614 = vadd.f32 %v847, %v2384
        %v3615 = vadd.f32 %v849, %v2386
        %v3616 = vadd.f32 %v851, %v2388
        %v3617 = vadd.f32 %v853, %v2390
        %v3618 = vadd.f32 %v855, %v2392
        %v3619 = vadd.f32 %v857, %v2394
        %v3620 = vadd.f32 %v859, %v2396
        %v3621 = vadd.f32 %v861, %v2398
        %v3622 = vadd.f32 %v863, %v2400
        %v3623 = vadd.f32 %v865, %v2402
        %v3624 = vadd.f32 %v867, %v2404
        %v3625 = vadd.f32 %v869, %v2406
        %v3626 = vadd.f32 %v871, %v2408
        %v3627 = vadd.f32 %v873, %v2410
        %v3628 = vadd.f32 %v875, %v2412
        %v3629 = vadd.f32 %v877, %v2414
        %v3630 = vadd.f32 %v879, %v2416
        %v3631 = vadd.f32 %v881, %v2418
        %v3632 = vadd.f32 %v883, %v2420
        %v3633 = vadd.f32 %v885, %v2422
        %v3634 = vadd.f32 %v887, %v2424
        %v3635 = vadd.f32 %v889, %v2426
        %v3636 = vadd.f32 %v891, %v2428
        %v3637 = vadd.f32 %v893, %v2430
        %v3638 = vadd.f32 %v895, %v2432
        %v3639 = vadd.f32 %v897, %v2434
        %v3640 = vadd.f32 %v899, %v2436
        %v3641 = vadd.f32 %v901, %v2438
        %v3642 = vadd.f32 %v903, %v2440
        %v3643 = vadd.f32 %v905, %v2442
        %v3644 = vadd.f32 %v907, %v2444
        %v3645 = vadd.f32 %v909, %v2446
        %v3646 = vadd.f32 %v911, %v2448
        %v3647 = vadd.f32 %v913, %v2450
        %v3648 = vadd.f32 %v915, %v2452
        %v3649 = vadd.f32 %v917, %v2454
        %v3650 = vadd.f32 %v919, %v2456
        %v3651 = vadd.f32 %v921, %v2458
        %v3652 = vadd.f32 %v923, %v2460
        %v3653 = vadd.f32 %v925, %v2462
        %v3654 = vadd.f32 %v927, %v2464
        %v3655 = vadd.f32 %v929, %v2466
        %v3656 = vadd.f32 %v931, %v2468
        %v3657 = vadd.f32 %v933, %v2470
        %v3658 = vadd.f32 %v935, %v2472
        %v3659 = vadd.f32 %v937, %v2474
        %v3660 = vadd.f32 %v939, %v2476
        %v3661 = vadd.f32 %v941, %v2478
        %v3662 = vadd.f32 %v943, %v2480
        %v3663 = vadd.f32 %v945, %v2482
        %v3664 = vadd.f32 %v947, %v2484
        %v3665 = vadd.f32 %v949, %v2486
        %v3666 = vadd.f32 %v951, %v2488
        %v3667 = vadd.f32 %v953, %v2490
        %v3668 = vadd.f32 %v955, %v2492
        %v3669 = vadd.f32 %v957, %v2494
        %v3670 = vadd.f32 %v959, %v2496
        %v3671 = vadd.f32 %v961, %v2498
        %v3672 = vadd.f32 %v963, %v2500
        %v3673 = vadd.f32 %v965, %v2502
        %v3674 = vadd.f32 %v967, %v2504
        %v3675 = vadd.f32 %v969, %v2506
        %v3676 = vadd.f32 %v971, %v2508
        %v3677 = vadd.f32 %v973, %v2510
        %v3678 = vadd.f32 %v975, %v2512
        %v3679 = vadd.f32 %v977, %v2514
        %v3680 = vadd.f32 %v979, %v2516
        %v3681 = vadd.f32 %v981, %v2518
        %v3682 = vadd.f32 %v983, %v2520
        %v3683 = vadd.f32 %v985, %v2522
        %v3684 = vadd.f32 %v987, %v2524
        %v3685 = vadd.f32 %v989, %v2526
        %v3686 = vadd.f32 %v991, %v2528
        %v3687 = vadd.f32 %v993, %v2530
        %v3688 = vadd.f32 %v995, %v2532
        %v3689 = vadd.f32 %v997, %v2534
        %v3690 = vadd.f32 %v999, %v2536
        %v3691 = vadd.f32 %v1001, %v2538
        %v3692 = vadd.f32 %v1003, %v2540
        %v3693 = vadd.f32 %v1005, %v2542
        %v3694 = vadd.f32 %v1007, %v2544
        %v3695 = vadd.f32 %v1009, %v2546
        %v3696 = vadd.f32 %v1011, %v2548
        %v3697 = vadd.f32 %v1013, %v2550
        %v3698 = vadd.f32 %v1015, %v2552
        %v3699 = vadd.f32 %v1017, %v2554
        %v3700 = vadd.f32 %v1019, %v2556
        %v3701 = vadd.f32 %v1021, %v2558
        %v3702 = vadd.f32 %v1023, %v2560
        %v3703 = vadd.f32 %v1025, %v2562
        %v3704 = vadd.f32 %v1027, %v2564
        %v3705 = vadd.f32 %v1029, %v2566
        %v3706 = vadd.f32 %v1031, %v2568
        %v3707 = vadd.f32 %v1033, %v2570
        %v3708 = vadd.f32 %v1035, %v2572
        %v3709 = vadd.f32 %v1037, %v2574
        %v3710 = vadd.f32 %v1039, %v2576
        %v3711 = vadd.f32 %v1041, %v2578
        %v3712 = vadd.f32 %v1043, %v2580
        %v3713 = vadd.f32 %v1045, %v2582
        %v3714 = vadd.f32 %v1047, %v2584
        %v3715 = vadd.f32 %v1049, %v2586
        %v3716 = vadd.f32 %v1051, %v2588
        %v3717 = vadd.f32 %v1053, %v2590
        %v3718 = vadd.f32 %v1055, %v2592
        %v3719 = vadd.f32 %v1057, %v2594
        %v3720 = vadd.f32 %v1059, %v2596
        %v3721 = vadd.f32 %v1061, %v2598
        %v3722 = vadd.f32 %v1063, %v2600
        %v3723 = vadd.f32 %v1065, %v2602
        %v3724 = vadd.f32 %v1067, %v2604
        %v3725 = vadd.f32 %v1069, %v2606
        %v3726 = vadd.f32 %v1071, %v2608
        %v3727 = vadd.f32 %v1073, %v2610
        %v3728 = vadd.f32 %v1075, %v2612
        %v3729 = vadd.f32 %v1077, %v2614
        %v3730 = vadd.f32 %v1079, %v2616
        %v3731 = vadd.f32 %v1081, %v2618
        %v3732 = vadd.f32 %v1083, %v2620
        %v3733 = vadd.f32 %v1085, %v2622
        %v3734 = vadd.f32 %v1087, %v2624
        %v3735 = vadd.f32 %v1089, %v2626
        %v3736 = vadd.f32 %v1091, %v2628
        %v3737 = vadd.f32 %v1093, %v2630
        %v3738 = vadd.f32 %v1095, %v2632
        %v3739 = vadd.f32 %v1097, %v2634
        %v3740 = vadd.f32 %v1099, %v2636
        %v3741 = vadd.f32 %v1101, %v2638
        %v3742 = vadd.f32 %v1103, %v2640
        %v3743 = vadd.f32 %v1105, %v2642
        %v3744 = vadd.f32 %v1107, %v2644
        %v3745 = vadd.f32 %v1109, %v2646
        %v3746 = vadd.f32 %v1111, %v2648
        %v3747 = vadd.f32 %v1113, %v2650
        %v3748 = vadd.f32 %v1115, %v2652
        %v3749 = vadd.f32 %v1117, %v2654
        %v3750 = vadd.f32 %v1119, %v2656
        %v3751 = vadd.f32 %v1121, %v2658
        %v3752 = vadd.f32 %v1123, %v2660
        %v3753 = vadd.f32 %v1125, %v2662
        %v3754 = vadd.f32 %v1127, %v2664
        %v3755 = vadd.f32 %v1129, %v2666
        %v3756 = vadd.f32 %v1131, %v2668
        %v3757 = vadd.f32 %v1133, %v2670
        %v3758 = vadd.f32 %v1135, %v2672
        %v3759 = vadd.f32 %v1137, %v2674
        %v3760 = vadd.f32 %v1139, %v2676
        %v3761 = vadd.f32 %v1141, %v2678
        %v3762 = vadd.f32 %v1143, %v2680
        %v3763 = vadd.f32 %v1145, %v2682
        %v3764 = vadd.f32 %v1147, %v2684
        %v3765 = vadd.f32 %v1149, %v2686
        %v3766 = vadd.f32 %v1151, %v2688
        %v3767 = vadd.f32 %v1153, %v2690
        %v3768 = vadd.f32 %v1155, %v2692
        %v3769 = vadd.f32 %v1157, %v2694
        %v3770 = vadd.f32 %v1159, %v2696
        %v3771 = vadd.f32 %v1161, %v2698
        %v3772 = vadd.f32 %v1163, %v2700
        %v3773 = vadd.f32 %v1165, %v2702
        %v3774 = vadd.f32 %v1167, %v2704
        %v3775 = vadd.f32 %v1169, %v2706
        %v3776 = vadd.f32 %v1171, %v2708
        %v3777 = vadd.f32 %v1173, %v2710
        %v3778 = vadd.f32 %v1175, %v2712
        %v3779 = vadd.f32 %v1177, %v2714
        %v3780 = vadd.f32 %v1179, %v2716
        %v3781 = vadd.f32 %v1181, %v2718
        %v3782 = vadd.f32 %v1183, %v2720
        %v3783 = vadd.f32 %v1185, %v2722
        %v3784 = vadd.f32 %v1187, %v2724
        %v3785 = vadd.f32 %v1189, %v2726
        %v3786 = vadd.f32 %v1191, %v2728
        %v3787 = vadd.f32 %v1193, %v2730
        %v3788 = vadd.f32 %v1195, %v2732
        %v3789 = vadd.f32 %v1197, %v2734
        %v3790 = vadd.f32 %v1199, %v2736
        %v3791 = vadd.f32 %v1201, %v2738
        %v3792 = vadd.f32 %v1203, %v2740
        %v3793 = vadd.f32 %v1205, %v2742
        %v3794 = vadd.f32 %v1207, %v2744
        %v3795 = vadd.f32 %v1209, %v2746
        %v3796 = vadd.f32 %v1211, %v2748
        %v3797 = vadd.f32 %v1213, %v2750
        %v3798 = vadd.f32 %v1215, %v2752
        %v3799 = vadd.f32 %v1217, %v2754
        %v3800 = vadd.f32 %v1219, %v2756
        %v3801 = vadd.f32 %v1221, %v2758
        %v3802 = vadd.f32 %v1223, %v2760
        %v3803 = vadd.f32 %v1225, %v2762
        %v3804 = vadd.f32 %v1227, %v2764
        %v3805 = vadd.f32 %v1229, %v2766
        %v3806 = vadd.f32 %v1231, %v2768
        %v3807 = vadd.f32 %v1233, %v2770
        %v3808 = vadd.f32 %v1235, %v2772
        %v3809 = vadd.f32 %v1237, %v2774
        %v3810 = vadd.f32 %v1239, %v2776
        %v3811 = vadd.f32 %v1241, %v2778
        %v3812 = vadd.f32 %v1243, %v2780
        %v3813 = vadd.f32 %v1245, %v2782
        %v3814 = vadd.f32 %v1247, %v2784
        %v3815 = vadd.f32 %v1249, %v2786
        %v3816 = vadd.f32 %v1251, %v2788
        %v3817 = vadd.f32 %v1253, %v2790
        %v3818 = vadd.f32 %v1255, %v2792
        %v3819 = vadd.f32 %v1257, %v2794
        %v3820 = vadd.f32 %v1259, %v2796
        %v3821 = vadd.f32 %v3309, %v238
        %v3822 = vadd.f32 %v3310, %v240
        %v3823 = vadd.f32 %v3311, %v242
        %v3824 = vadd.f32 %v3312, %v244
        %v3825 = vadd.f32 %v3313, %v246
        %v3826 = vadd.f32 %v3314, %v248
        %v3827 = vadd.f32 %v3315, %v250
        %v3828 = vadd.f32 %v3316, %v252
        %v3829 = vadd.f32 %v3317, %v254
        %v3830 = vadd.f32 %v3318, %v256
        %v3831 = vadd.f32 %v3319, %v258
        %v3832 = vadd.f32 %v3320, %v260
        %v3833 = vadd.f32 %v3321, %v262
        %v3834 = vadd.f32 %v3322, %v264
        %v3835 = vadd.f32 %v3323, %v266
        %v3836 = vadd.f32 %v3324, %v268
        %v3837 = vadd.f32 %v3325, %v270
        %v3838 = vadd.f32 %v3326, %v272
        %v3839 = vadd.f32 %v3327, %v274
        %v3840 = vadd.f32 %v3328, %v276
        %v3841 = vadd.f32 %v3329, %v278
        %v3842 = vadd.f32 %v3330, %v280
        %v3843 = vadd.f32 %v3331, %v282
        %v3844 = vadd.f32 %v3332, %v284
        %v3845 = vadd.f32 %v3333, %v286
        %v3846 = vadd.f32 %v3334, %v288
        %v3847 = vadd.f32 %v3335, %v290
        %v3848 = vadd.f32 %v3336, %v292
        %v3849 = vadd.f32 %v3337, %v294
        %v3850 = vadd.f32 %v3338, %v296
        %v3851 = vadd.f32 %v3339, %v298
        %v3852 = vadd.f32 %v3340, %v300
        %v3853 = vadd.f32 %v3341, %v302
        %v3854 = vadd.f32 %v3342, %v304
        %v3855 = vadd.f32 %v3343, %v306
        %v3856 = vadd.f32 %v3344, %v308
        %v3857 = vadd.f32 %v3345, %v310
        %v3858 = vadd.f32 %v3346, %v312
        %v3859 = vadd.f32 %v3347, %v314
        %v3860 = vadd.f32 %v3348, %v316
        %v3861 = vadd.f32 %v3349, %v318
        %v3862 = vadd.f32 %v3350, %v320
        %v3863 = vadd.f32 %v3351, %v322
        %v3864 = vadd.f32 %v3352, %v324
        %v3865 = vadd.f32 %v3353, %v326
        %v3866 = vadd.f32 %v3354, %v328
        %v3867 = vadd.f32 %v3355, %v330
        %v3868 = vadd.f32 %v3356, %v332
        %v3869 = vadd.f32 %v3357, %v334
        %v3870 = vadd.f32 %v3358, %v336
        %v3871 = vadd.f32 %v3359, %v338
        %v3872 = vadd.f32 %v3360, %v340
        %v3873 = vadd.f32 %v3361, %v342
        %v3874 = vadd.f32 %v3362, %v344
        %v3875 = vadd.f32 %v3363, %v346
        %v3876 = vadd.f32 %v3364, %v348
        %v3877 = vadd.f32 %v3365, %v350
        %v3878 = vadd.f32 %v3366, %v352
        %v3879 = vadd.f32 %v3367, %v354
        %v3880 = vadd.f32 %v3368, %v356
        %v3881 = vadd.f32 %v3369, %v358
        %v3882 = vadd.f32 %v3370, %v360
        %v3883 = vadd.f32 %v3371, %v362
        %v3884 = vadd.f32 %v3372, %v364
        %v3885 = vadd.f32 %v3373, %v366
        %v3886 = vadd.f32 %v3374, %v368
        %v3887 = vadd.f32 %v3375, %v370
        %v3888 = vadd.f32 %v3376, %v372
        %v3889 = vadd.f32 %v3377, %v374
        %v3890 = vadd.f32 %v3378, %v376
        %v3891 = vadd.f32 %v3379, %v378
        %v3892 = vadd.f32 %v3380, %v380
        %v3893 = vadd.f32 %v3381, %v382
        %v3894 = vadd.f32 %v3382, %v384
        %v3895 = vadd.f32 %v3383, %v386
        %v3896 = vadd.f32 %v3384, %v388
        %v3897 = vadd.f32 %v3385, %v390
        %v3898 = vadd.f32 %v3386, %v392
        %v3899 = vadd.f32 %v3387, %v394
        %v3900 = vadd.f32 %v3388, %v396
        %v3901 = vadd.f32 %v3389, %v398
        %v3902 = vadd.f32 %v3390, %v400
        %v3903 = vadd.f32 %v3391, %v402
        %v3904 = vadd.f32 %v3392, %v404
        %v3905 = vadd.f32 %v3393, %v406
        %v3906 = vadd.f32 %v3394, %v408
        %v3907 = vadd.f32 %v3395, %v410
        %v3908 = vadd.f32 %v3396, %v412
        %v3909 = vadd.f32 %v3397, %v414
        %v3910 = vadd.f32 %v3398, %v416
        %v3911 = vadd.f32 %v3399, %v418
        %v3912 = vadd.f32 %v3400, %v420
        %v3913 = vadd.f32 %v3401, %v422
        %v3914 = vadd.f32 %v3402, %v424
        %v3915 = vadd.f32 %v3403, %v426
        %v3916 = vadd.f32 %v3404, %v428
        %v3917 = vadd.f32 %v3405, %v430
        %v3918 = vadd.f32 %v3406, %v432
        %v3919 = vadd.f32 %v3407, %v434
        %v3920 = vadd.f32 %v3408, %v436
        %v3921 = vadd.f32 %v3409, %v438
        %v3922 = vadd.f32 %v3410, %v440
        %v3923 = vadd.f32 %v3411, %v442
        %v3924 = vadd.f32 %v3412, %v444
        %v3925 = vadd.f32 %v3413, %v446
        %v3926 = vadd.f32 %v3414, %v448
        %v3927 = vadd.f32 %v3415, %v450
        %v3928 = vadd.f32 %v3416, %v452
        %v3929 = vadd.f32 %v3417, %v454
        %v3930 = vadd.f32 %v3418, %v456
        %v3931 = vadd.f32 %v3419, %v458
        %v3932 = vadd.f32 %v3420, %v460
        %v3933 = vadd.f32 %v3421, %v462
        %v3934 = vadd.f32 %v3422, %v464
        %v3935 = vadd.f32 %v3423, %v466
        %v3936 = vadd.f32 %v3424, %v468
        %v3937 = vadd.f32 %v3425, %v470
        %v3938 = vadd.f32 %v3426, %v472
        %v3939 = vadd.f32 %v3427, %v474
        %v3940 = vadd.f32 %v3428, %v476
        %v3941 = vadd.f32 %v3429, %v478
        %v3942 = vadd.f32 %v3430, %v480
        %v3943 = vadd.f32 %v3431, %v482
        %v3944 = vadd.f32 %v3432, %v484
        %v3945 = vadd.f32 %v3433, %v486
        %v3946 = vadd.f32 %v3434, %v488
        %v3947 = vadd.f32 %v3435, %v490
        %v3948 = vadd.f32 %v3436, %v492
        %v3949 = vadd.f32 %v3437, %v494
        %v3950 = vadd.f32 %v3438, %v496
        %v3951 = vadd.f32 %v3439, %v498
        %v3952 = vadd.f32 %v3440, %v500
        %v3953 = vadd.f32 %v3441, %v502
        %v3954 = vadd.f32 %v3442, %v504
        %v3955 = vadd.f32 %v3443, %v506
        %v3956 = vadd.f32 %v3444, %v508
        %v3957 = vadd.f32 %v3445, %v510
        %v3958 = vadd.f32 %v3446, %v512
        %v3959 = vadd.f32 %v3447, %v514
        %v3960 = vadd.f32 %v3448, %v516
        %v3961 = vadd.f32 %v3449, %v518
        %v3962 = vadd.f32 %v3450, %v520
        %v3963 = vadd.f32 %v3451, %v522
        %v3964 = vadd.f32 %v3452, %v524
        %v3965 = vadd.f32 %v3453, %v526
        %v3966 = vadd.f32 %v3454, %v528
        %v3967 = vadd.f32 %v3455, %v530
        %v3968 = vadd.f32 %v3456, %v532
        %v3969 = vadd.f32 %v3457, %v534
        %v3970 = vadd.f32 %v3458, %v536
        %v3971 = vadd.f32 %v3459, %v538
        %v3972 = vadd.f32 %v3460, %v540
        %v3973 = vadd.f32 %v3461, %v542
        %v3974 = vadd.f32 %v3462, %v544
        %v3975 = vadd.f32 %v3463, %v546
        %v3976 = vadd.f32 %v3464, %v548
        %v3977 = vadd.f32 %v3465, %v550
        %v3978 = vadd.f32 %v3466, %v552
        %v3979 = vadd.f32 %v3467, %v554
        %v3980 = vadd.f32 %v3468, %v556
        %v3981 = vadd.f32 %v3469, %v558
        %v3982 = vadd.f32 %v3470, %v560
        %v3983 = vadd.f32 %v3471, %v562
        %v3984 = vadd.f32 %v3472, %v564
        %v3985 = vadd.f32 %v3473, %v566
        %v3986 = vadd.f32 %v3474, %v568
        %v3987 = vadd.f32 %v3475, %v570
        %v3988 = vadd.f32 %v3476, %v572
        %v3989 = vadd.f32 %v3477, %v574
        %v3990 = vadd.f32 %v3478, %v576
        %v3991 = vadd.f32 %v3479, %v578
        %v3992 = vadd.f32 %v3480, %v580
        %v3993 = vadd.f32 %v3481, %v582
        %v3994 = vadd.f32 %v3482, %v584
        %v3995 = vadd.f32 %v3483, %v586
        %v3996 = vadd.f32 %v3484, %v588
        %v3997 = vadd.f32 %v3485, %v590
        %v3998 = vadd.f32 %v3486, %v592
        %v3999 = vadd.f32 %v3487, %v594
        %v4000 = vadd.f32 %v3488, %v596
        %v4001 = vadd.f32 %v3489, %v598
        %v4002 = vadd.f32 %v3490, %v600
        %v4003 = vadd.f32 %v3491, %v602
        %v4004 = vadd.f32 %v3492, %v604
        %v4005 = vadd.f32 %v3493, %v606
        %v4006 = vadd.f32 %v3494, %v608
        %v4007 = vadd.f32 %v3495, %v610
        %v4008 = vadd.f32 %v3496, %v612
        %v4009 = vadd.f32 %v3497, %v614
        %v4010 = vadd.f32 %v3498, %v616
        %v4011 = vadd.f32 %v3499, %v618
        %v4012 = vadd.f32 %v3500, %v620
        %v4013 = vadd.f32 %v3501, %v622
        %v4014 = vadd.f32 %v3502, %v624
        %v4015 = vadd.f32 %v3503, %v626
        %v4016 = vadd.f32 %v3504, %v628
        %v4017 = vadd.f32 %v3505, %v630
        %v4018 = vadd.f32 %v3506, %v632
        %v4019 = vadd.f32 %v3507, %v634
        %v4020 = vadd.f32 %v3508, %v636
        %v4021 = vadd.f32 %v3509, %v638
        %v4022 = vadd.f32 %v3510, %v640
        %v4023 = vadd.f32 %v3511, %v642
        %v4024 = vadd.f32 %v3512, %v644
        %v4025 = vadd.f32 %v3513, %v646
        %v4026 = vadd.f32 %v3514, %v648
        %v4027 = vadd.f32 %v3515, %v650
        %v4028 = vadd.f32 %v3516, %v652
        %v4029 = vadd.f32 %v3517, %v654
        %v4030 = vadd.f32 %v3518, %v656
        %v4031 = vadd.f32 %v3519, %v658
        %v4032 = vadd.f32 %v3520, %v660
        %v4033 = vadd.f32 %v3521, %v662
        %v4034 = vadd.f32 %v3522, %v664
        %v4035 = vadd.f32 %v3523, %v666
        %v4036 = vadd.f32 %v3524, %v668
        %v4037 = vadd.f32 %v3525, %v670
        %v4038 = vadd.f32 %v3526, %v672
        %v4039 = vadd.f32 %v3527, %v674
        %v4040 = vadd.f32 %v3528, %v676
        %v4041 = vadd.f32 %v3529, %v678
        %v4042 = vadd.f32 %v3530, %v680
        %v4043 = vadd.f32 %v3531, %v682
        %v4044 = vadd.f32 %v3532, %v684
        %v4045 = vadd.f32 %v3533, %v686
        %v4046 = vadd.f32 %v3534, %v688
        %v4047 = vadd.f32 %v3535, %v690
        %v4048 = vadd.f32 %v3536, %v692
        %v4049 = vadd.f32 %v3537, %v694
        %v4050 = vadd.f32 %v3538, %v696
        %v4051 = vadd.f32 %v3539, %v698
        %v4052 = vadd.f32 %v3540, %v700
        %v4053 = vadd.f32 %v3541, %v702
        %v4054 = vadd.f32 %v3542, %v704
        %v4055 = vadd.f32 %v3543, %v706
        %v4056 = vadd.f32 %v3544, %v708
        %v4057 = vadd.f32 %v3545, %v710
        %v4058 = vadd.f32 %v3546, %v712
        %v4059 = vadd.f32 %v3547, %v714
        %v4060 = vadd.f32 %v3548, %v716
        %v4061 = vadd.f32 %v3549, %v718
        %v4062 = vadd.f32 %v3550, %v720
        %v4063 = vadd.f32 %v3551, %v722
        %v4064 = vadd.f32 %v3552, %v724
        %v4065 = vadd.f32 %v3553, %v726
        %v4066 = vadd.f32 %v3554, %v728
        %v4067 = vadd.f32 %v3555, %v730
        %v4068 = vadd.f32 %v3556, %v732
        %v4069 = vadd.f32 %v3557, %v734
        %v4070 = vadd.f32 %v3558, %v736
        %v4071 = vadd.f32 %v3559, %v738
        %v4072 = vadd.f32 %v3560, %v740
        %v4073 = vadd.f32 %v3561, %v742
        %v4074 = vadd.f32 %v3562, %v744
        %v4075 = vadd.f32 %v3563, %v746
        %v4076 = vadd.f32 %v3564, %v748
        %v4077 = vadd.f32 %v3565, %v750
        %v4078 = vadd.f32 %v3566, %v752
        %v4079 = vadd.f32 %v3567, %v754
        %v4080 = vadd.f32 %v3568, %v756
        %v4081 = vadd.f32 %v3569, %v758
        %v4082 = vadd.f32 %v3570, %v760
        %v4083 = vadd.f32 %v3571, %v762
        %v4084 = vadd.f32 %v3572, %v764
        %v4085 = vadd.f32 %v3573, %v766
        %v4086 = vadd.f32 %v3574, %v768
        %v4087 = vadd.f32 %v3575, %v770
        %v4088 = vadd.f32 %v3576, %v772
        %v4089 = vadd.f32 %v3577, %v774
        %v4090 = vadd.f32 %v3578, %v776
        %v4091 = vadd.f32 %v3579, %v778
        %v4092 = vadd.f32 %v3580, %v780
        %v4093 = vadd.f32 %v3581, %v782
        %v4094 = vadd.f32 %v3582, %v784
        %v4095 = vadd.f32 %v3583, %v786
        %v4096 = vadd.f32 %v3584, %v788
        %v4097 = vadd.f32 %v3585, %v790
        %v4098 = vadd.f32 %v3586, %v792
        %v4099 = vadd.f32 %v3587, %v794
        %v4100 = vadd.f32 %v3588, %v796
        %v4101 = vadd.f32 %v3589, %v798
        %v4102 = vadd.f32 %v3590, %v800
        %v4103 = vadd.f32 %v3591, %v802
        %v4104 = vadd.f32 %v3592, %v804
        %v4105 = vadd.f32 %v3593, %v806
        %v4106 = vadd.f32 %v3594, %v808
        %v4107 = vadd.f32 %v3595, %v810
        %v4108 = vadd.f32 %v3596, %v812
        %v4109 = vadd.f32 %v3597, %v814
        %v4110 = vadd.f32 %v3598, %v816
        %v4111 = vadd.f32 %v3599, %v818
        %v4112 = vadd.f32 %v3600, %v820
        %v4113 = vadd.f32 %v3601, %v822
        %v4114 = vadd.f32 %v3602, %v824
        %v4115 = vadd.f32 %v3603, %v826
        %v4116 = vadd.f32 %v3604, %v828
        %v4117 = vadd.f32 %v3605, %v830
        %v4118 = vadd.f32 %v3606, %v832
        %v4119 = vadd.f32 %v3607, %v834
        %v4120 = vadd.f32 %v3608, %v836
        %v4121 = vadd.f32 %v3609, %v838
        %v4122 = vadd.f32 %v3610, %v840
        %v4123 = vadd.f32 %v3611, %v842
        %v4124 = vadd.f32 %v3612, %v844
        %v4125 = vadd.f32 %v3613, %v846
        %v4126 = vadd.f32 %v3614, %v848
        %v4127 = vadd.f32 %v3615, %v850
        %v4128 = vadd.f32 %v3616, %v852
        %v4129 = vadd.f32 %v3617, %v854
        %v4130 = vadd.f32 %v3618, %v856
        %v4131 = vadd.f32 %v3619, %v858
        %v4132 = vadd.f32 %v3620, %v860
        %v4133 = vadd.f32 %v3621, %v862
        %v4134 = vadd.f32 %v3622, %v864
        %v4135 = vadd.f32 %v3623, %v866
        %v4136 = vadd.f32 %v3624, %v868
        %v4137 = vadd.f32 %v3625, %v870
        %v4138 = vadd.f32 %v3626, %v872
        %v4139 = vadd.f32 %v3627, %v874
        %v4140 = vadd.f32 %v3628, %v876
        %v4141 = vadd.f32 %v3629, %v878
        %v4142 = vadd.f32 %v3630, %v880
        %v4143 = vadd.f32 %v3631, %v882
        %v4144 = vadd.f32 %v3632, %v884
        %v4145 = vadd.f32 %v3633, %v886
        %v4146 = vadd.f32 %v3634, %v888
        %v4147 = vadd.f32 %v3635, %v890
        %v4148 = vadd.f32 %v3636, %v892
        %v4149 = vadd.f32 %v3637, %v894
        %v4150 = vadd.f32 %v3638, %v896
        %v4151 = vadd.f32 %v3639, %v898
        %v4152 = vadd.f32 %v3640, %v900
        %v4153 = vadd.f32 %v3641, %v902
        %v4154 = vadd.f32 %v3642, %v904
        %v4155 = vadd.f32 %v3643, %v906
        %v4156 = vadd.f32 %v3644, %v908
        %v4157 = vadd.f32 %v3645, %v910
        %v4158 = vadd.f32 %v3646, %v912
        %v4159 = vadd.f32 %v3647, %v914
        %v4160 = vadd.f32 %v3648, %v916
        %v4161 = vadd.f32 %v3649, %v918
        %v4162 = vadd.f32 %v3650, %v920
        %v4163 = vadd.f32 %v3651, %v922
        %v4164 = vadd.f32 %v3652, %v924
        %v4165 = vadd.f32 %v3653, %v926
        %v4166 = vadd.f32 %v3654, %v928
        %v4167 = vadd.f32 %v3655, %v930
        %v4168 = vadd.f32 %v3656, %v932
        %v4169 = vadd.f32 %v3657, %v934
        %v4170 = vadd.f32 %v3658, %v936
        %v4171 = vadd.f32 %v3659, %v938
        %v4172 = vadd.f32 %v3660, %v940
        %v4173 = vadd.f32 %v3661, %v942
        %v4174 = vadd.f32 %v3662, %v944
        %v4175 = vadd.f32 %v3663, %v946
        %v4176 = vadd.f32 %v3664, %v948
        %v4177 = vadd.f32 %v3665, %v950
        %v4178 = vadd.f32 %v3666, %v952
        %v4179 = vadd.f32 %v3667, %v954
        %v4180 = vadd.f32 %v3668, %v956
        %v4181 = vadd.f32 %v3669, %v958
        %v4182 = vadd.f32 %v3670, %v960
        %v4183 = vadd.f32 %v3671, %v962
        %v4184 = vadd.f32 %v3672, %v964
        %v4185 = vadd.f32 %v3673, %v966
        %v4186 = vadd.f32 %v3674, %v968
        %v4187 = vadd.f32 %v3675, %v970
        %v4188 = vadd.f32 %v3676, %v972
        %v4189 = vadd.f32 %v3677, %v974
        %v4190 = vadd.f32 %v3678, %v976
        %v4191 = vadd.f32 %v3679, %v978
        %v4192 = vadd.f32 %v3680, %v980
        %v4193 = vadd.f32 %v3681, %v982
        %v4194 = vadd.f32 %v3682, %v984
        %v4195 = vadd.f32 %v3683, %v986
        %v4196 = vadd.f32 %v3684, %v988
        %v4197 = vadd.f32 %v3685, %v990
        %v4198 = vadd.f32 %v3686, %v992
        %v4199 = vadd.f32 %v3687, %v994
        %v4200 = vadd.f32 %v3688, %v996
        %v4201 = vadd.f32 %v3689, %v998
        %v4202 = vadd.f32 %v3690, %v1000
        %v4203 = vadd.f32 %v3691, %v1002
        %v4204 = vadd.f32 %v3692, %v1004
        %v4205 = vadd.f32 %v3693, %v1006
        %v4206 = vadd.f32 %v3694, %v1008
        %v4207 = vadd.f32 %v3695, %v1010
        %v4208 = vadd.f32 %v3696, %v1012
        %v4209 = vadd.f32 %v3697, %v1014
        %v4210 = vadd.f32 %v3698, %v1016
        %v4211 = vadd.f32 %v3699, %v1018
        %v4212 = vadd.f32 %v3700, %v1020
        %v4213 = vadd.f32 %v3701, %v1022
        %v4214 = vadd.f32 %v3702, %v1024
        %v4215 = vadd.f32 %v3703, %v1026
        %v4216 = vadd.f32 %v3704, %v1028
        %v4217 = vadd.f32 %v3705, %v1030
        %v4218 = vadd.f32 %v3706, %v1032
        %v4219 = vadd.f32 %v3707, %v1034
        %v4220 = vadd.f32 %v3708, %v1036
        %v4221 = vadd.f32 %v3709, %v1038
        %v4222 = vadd.f32 %v3710, %v1040
        %v4223 = vadd.f32 %v3711, %v1042
        %v4224 = vadd.f32 %v3712, %v1044
        %v4225 = vadd.f32 %v3713, %v1046
        %v4226 = vadd.f32 %v3714, %v1048
        %v4227 = vadd.f32 %v3715, %v1050
        %v4228 = vadd.f32 %v3716, %v1052
        %v4229 = vadd.f32 %v3717, %v1054
        %v4230 = vadd.f32 %v3718, %v1056
        %v4231 = vadd.f32 %v3719, %v1058
        %v4232 = vadd.f32 %v3720, %v1060
        %v4233 = vadd.f32 %v3721, %v1062
        %v4234 = vadd.f32 %v3722, %v1064
        %v4235 = vadd.f32 %v3723, %v1066
        %v4236 = vadd.f32 %v3724, %v1068
        %v4237 = vadd.f32 %v3725, %v1070
        %v4238 = vadd.f32 %v3726, %v1072
        %v4239 = vadd.f32 %v3727, %v1074
        %v4240 = vadd.f32 %v3728, %v1076
        %v4241 = vadd.f32 %v3729, %v1078
        %v4242 = vadd.f32 %v3730, %v1080
        %v4243 = vadd.f32 %v3731, %v1082
        %v4244 = vadd.f32 %v3732, %v1084
        %v4245 = vadd.f32 %v3733, %v1086
        %v4246 = vadd.f32 %v3734, %v1088
        %v4247 = vadd.f32 %v3735, %v1090
        %v4248 = vadd.f32 %v3736, %v1092
        %v4249 = vadd.f32 %v3737, %v1094
        %v4250 = vadd.f32 %v3738, %v1096
        %v4251 = vadd.f32 %v3739, %v1098
        %v4252 = vadd.f32 %v3740, %v1100
        %v4253 = vadd.f32 %v3741, %v1102
        %v4254 = vadd.f32 %v3742, %v1104
        %v4255 = vadd.f32 %v3743, %v1106
        %v4256 = vadd.f32 %v3744, %v1108
        %v4257 = vadd.f32 %v3745, %v1110
        %v4258 = vadd.f32 %v3746, %v1112
        %v4259 = vadd.f32 %v3747, %v1114
        %v4260 = vadd.f32 %v3748, %v1116
        %v4261 = vadd.f32 %v3749, %v1118
        %v4262 = vadd.f32 %v3750, %v1120
        %v4263 = vadd.f32 %v3751, %v1122
        %v4264 = vadd.f32 %v3752, %v1124
        %v4265 = vadd.f32 %v3753, %v1126
        %v4266 = vadd.f32 %v3754, %v1128
        %v4267 = vadd.f32 %v3755, %v1130
        %v4268 = vadd.f32 %v3756, %v1132
        %v4269 = vadd.f32 %v3757, %v1134
        %v4270 = vadd.f32 %v3758, %v1136
        %v4271 = vadd.f32 %v3759, %v1138
        %v4272 = vadd.f32 %v3760, %v1140
        %v4273 = vadd.f32 %v3761, %v1142
        %v4274 = vadd.f32 %v3762, %v1144
        %v4275 = vadd.f32 %v3763, %v1146
        %v4276 = vadd.f32 %v3764, %v1148
        %v4277 = vadd.f32 %v3765, %v1150
        %v4278 = vadd.f32 %v3766, %v1152
        %v4279 = vadd.f32 %v3767, %v1154
        %v4280 = vadd.f32 %v3768, %v1156
        %v4281 = vadd.f32 %v3769, %v1158
        %v4282 = vadd.f32 %v3770, %v1160
        %v4283 = vadd.f32 %v3771, %v1162
        %v4284 = vadd.f32 %v3772, %v1164
        %v4285 = vadd.f32 %v3773, %v1166
        %v4286 = vadd.f32 %v3774, %v1168
        %v4287 = vadd.f32 %v3775, %v1170
        %v4288 = vadd.f32 %v3776, %v1172
        %v4289 = vadd.f32 %v3777, %v1174
        %v4290 = vadd.f32 %v3778, %v1176
        %v4291 = vadd.f32 %v3779, %v1178
        %v4292 = vadd.f32 %v3780, %v1180
        %v4293 = vadd.f32 %v3781, %v1182
        %v4294 = vadd.f32 %v3782, %v1184
        %v4295 = vadd.f32 %v3783, %v1186
        %v4296 = vadd.f32 %v3784, %v1188
        %v4297 = vadd.f32 %v3785, %v1190
        %v4298 = vadd.f32 %v3786, %v1192
        %v4299 = vadd.f32 %v3787, %v1194
        %v4300 = vadd.f32 %v3788, %v1196
        %v4301 = vadd.f32 %v3789, %v1198
        %v4302 = vadd.f32 %v3790, %v1200
        %v4303 = vadd.f32 %v3791, %v1202
        %v4304 = vadd.f32 %v3792, %v1204
        %v4305 = vadd.f32 %v3793, %v1206
        %v4306 = vadd.f32 %v3794, %v1208
        %v4307 = vadd.f32 %v3795, %v1210
        %v4308 = vadd.f32 %v3796, %v1212
        %v4309 = vadd.f32 %v3797, %v1214
        %v4310 = vadd.f32 %v3798, %v1216
        %v4311 = vadd.f32 %v3799, %v1218
        %v4312 = vadd.f32 %v3800, %v1220
        %v4313 = vadd.f32 %v3801, %v1222
        %v4314 = vadd.f32 %v3802, %v1224
        %v4315 = vadd.f32 %v3803, %v1226
        %v4316 = vadd.f32 %v3804, %v1228
        %v4317 = vadd.f32 %v3805, %v1230
        %v4318 = vadd.f32 %v3806, %v1232
        %v4319 = vadd.f32 %v3807, %v1234
        %v4320 = vadd.f32 %v3808, %v1236
        %v4321 = vadd.f32 %v3809, %v1238
        %v4322 = vadd.f32 %v3810, %v1240
        %v4323 = vadd.f32 %v3811, %v1242
        %v4324 = vadd.f32 %v3812, %v1244
        %v4325 = vadd.f32 %v3813, %v1246
        %v4326 = vadd.f32 %v3814, %v1248
        %v4327 = vadd.f32 %v3815, %v1250
        %v4328 = vadd.f32 %v3816, %v1252
        %v4329 = vadd.f32 %v3817, %v1254
        %v4330 = vadd.f32 %v3818, %v1256
        %v4331 = vadd.f32 %v3819, %v1258
        %v4332 = vadd.f32 %v3820, %v1260
        %4845 = vrot.lane.b32.xlu0 %v238, 64
        %v4846 = vpop.permute.xlu0 %4845
        %4847 = vrot.lane.b32.xlu0 %v240, 64
        %v4848 = vpop.permute.xlu0 %4847
        %4849 = vrot.lane.b32.xlu0 %v242, 64
        %v4850 = vpop.permute.xlu0 %4849
        %4851 = vrot.lane.b32.xlu0 %v244, 64
        %v4852 = vpop.permute.xlu0 %4851
        %4853 = vrot.lane.b32.xlu0 %v246, 64
        %v4854 = vpop.permute.xlu0 %4853
        %4855 = vrot.lane.b32.xlu0 %v248, 64
        %v4856 = vpop.permute.xlu0 %4855
        %4857 = vrot.lane.b32.xlu0 %v250, 64
        %v4858 = vpop.permute.xlu0 %4857
        %4859 = vrot.lane.b32.xlu0 %v252, 64
        %v4860 = vpop.permute.xlu0 %4859
        %4861 = vrot.lane.b32.xlu0 %v254, 64
        %v4862 = vpop.permute.xlu0 %4861
        %4863 = vrot.lane.b32.xlu0 %v256, 64
        %v4864 = vpop.permute.xlu0 %4863
        %4865 = vrot.lane.b32.xlu0 %v258, 64
        %v4866 = vpop.permute.xlu0 %4865
        %4867 = vrot.lane.b32.xlu0 %v260, 64
        %v4868 = vpop.permute.xlu0 %4867
        %4869 = vrot.lane.b32.xlu0 %v262, 64
        %v4870 = vpop.permute.xlu0 %4869
        %4871 = vrot.lane.b32.xlu0 %v264, 64
        %v4872 = vpop.permute.xlu0 %4871
        %4873 = vrot.lane.b32.xlu0 %v266, 64
        %v4874 = vpop.permute.xlu0 %4873
        %4875 = vrot.lane.b32.xlu0 %v268, 64
        %v4876 = vpop.permute.xlu0 %4875
        %4877 = vrot.lane.b32.xlu0 %v270, 64
        %v4878 = vpop.permute.xlu0 %4877
        %4879 = vrot.lane.b32.xlu0 %v272, 64
        %v4880 = vpop.permute.xlu0 %4879
        %4881 = vrot.lane.b32.xlu0 %v274, 64
        %v4882 = vpop.permute.xlu0 %4881
        %4883 = vrot.lane.b32.xlu0 %v276, 64
        %v4884 = vpop.permute.xlu0 %4883
        %4885 = vrot.lane.b32.xlu0 %v278, 64
        %v4886 = vpop.permute.xlu0 %4885
        %4887 = vrot.lane.b32.xlu0 %v280, 64
        %v4888 = vpop.permute.xlu0 %4887
        %4889 = vrot.lane.b32.xlu0 %v282, 64
        %v4890 = vpop.permute.xlu0 %4889
        %4891 = vrot.lane.b32.xlu0 %v284, 64
        %v4892 = vpop.permute.xlu0 %4891
        %4893 = vrot.lane.b32.xlu0 %v286, 64
        %v4894 = vpop.permute.xlu0 %4893
        %4895 = vrot.lane.b32.xlu0 %v288, 64
        %v4896 = vpop.permute.xlu0 %4895
        %4897 = vrot.lane.b32.xlu0 %v290, 64
        %v4898 = vpop.permute.xlu0 %4897
        %4899 = vrot.lane.b32.xlu0 %v292, 64
        %v4900 = vpop.permute.xlu0 %4899
        %4901 = vrot.lane.b32.xlu0 %v294, 64
        %v4902 = vpop.permute.xlu0 %4901
        %4903 = vrot.lane.b32.xlu0 %v296, 64
        %v4904 = vpop.permute.xlu0 %4903
        %4905 = vrot.lane.b32.xlu0 %v298, 64
        %v4906 = vpop.permute.xlu0 %4905
        %4907 = vrot.lane.b32.xlu0 %v300, 64
        %v4908 = vpop.permute.xlu0 %4907
        %4909 = vrot.lane.b32.xlu0 %v302, 64
        %v4910 = vpop.permute.xlu0 %4909
        %4911 = vrot.lane.b32.xlu0 %v304, 64
        %v4912 = vpop.permute.xlu0 %4911
        %4913 = vrot.lane.b32.xlu0 %v306, 64
        %v4914 = vpop.permute.xlu0 %4913
        %4915 = vrot.lane.b32.xlu0 %v308, 64
        %v4916 = vpop.permute.xlu0 %4915
        %4917 = vrot.lane.b32.xlu0 %v310, 64
        %v4918 = vpop.permute.xlu0 %4917
        %4919 = vrot.lane.b32.xlu0 %v312, 64
        %v4920 = vpop.permute.xlu0 %4919
        %4921 = vrot.lane.b32.xlu0 %v314, 64
        %v4922 = vpop.permute.xlu0 %4921
        %4923 = vrot.lane.b32.xlu0 %v316, 64
        %v4924 = vpop.permute.xlu0 %4923
        %4925 = vrot.lane.b32.xlu0 %v318, 64
        %v4926 = vpop.permute.xlu0 %4925
        %4927 = vrot.lane.b32.xlu0 %v320, 64
        %v4928 = vpop.permute.xlu0 %4927
        %4929 = vrot.lane.b32.xlu0 %v322, 64
        %v4930 = vpop.permute.xlu0 %4929
        %4931 = vrot.lane.b32.xlu0 %v324, 64
        %v4932 = vpop.permute.xlu0 %4931
        %4933 = vrot.lane.b32.xlu0 %v326, 64
        %v4934 = vpop.permute.xlu0 %4933
        %4935 = vrot.lane.b32.xlu0 %v328, 64
        %v4936 = vpop.permute.xlu0 %4935
        %4937 = vrot.lane.b32.xlu0 %v330, 64
        %v4938 = vpop.permute.xlu0 %4937
        %4939 = vrot.lane.b32.xlu0 %v332, 64
        %v4940 = vpop.permute.xlu0 %4939
        %4941 = vrot.lane.b32.xlu0 %v334, 64
        %v4942 = vpop.permute.xlu0 %4941
        %4943 = vrot.lane.b32.xlu0 %v336, 64
        %v4944 = vpop.permute.xlu0 %4943
        %4945 = vrot.lane.b32.xlu0 %v338, 64
        %v4946 = vpop.permute.xlu0 %4945
        %4947 = vrot.lane.b32.xlu0 %v340, 64
        %v4948 = vpop.permute.xlu0 %4947
        %4949 = vrot.lane.b32.xlu0 %v342, 64
        %v4950 = vpop.permute.xlu0 %4949
        %4951 = vrot.lane.b32.xlu0 %v344, 64
        %v4952 = vpop.permute.xlu0 %4951
        %4953 = vrot.lane.b32.xlu0 %v346, 64
        %v4954 = vpop.permute.xlu0 %4953
        %4955 = vrot.lane.b32.xlu0 %v348, 64
        %v4956 = vpop.permute.xlu0 %4955
        %4957 = vrot.lane.b32.xlu0 %v350, 64
        %v4958 = vpop.permute.xlu0 %4957
        %4959 = vrot.lane.b32.xlu0 %v352, 64
        %v4960 = vpop.permute.xlu0 %4959
        %4961 = vrot.lane.b32.xlu0 %v354, 64
        %v4962 = vpop.permute.xlu0 %4961
        %4963 = vrot.lane.b32.xlu0 %v356, 64
        %v4964 = vpop.permute.xlu0 %4963
        %4965 = vrot.lane.b32.xlu0 %v358, 64
        %v4966 = vpop.permute.xlu0 %4965
        %4967 = vrot.lane.b32.xlu0 %v360, 64
        %v4968 = vpop.permute.xlu0 %4967
        %4969 = vrot.lane.b32.xlu0 %v362, 64
        %v4970 = vpop.permute.xlu0 %4969
        %4971 = vrot.lane.b32.xlu0 %v364, 64
        %v4972 = vpop.permute.xlu0 %4971
        %4973 = vrot.lane.b32.xlu0 %v366, 64
        %v4974 = vpop.permute.xlu0 %4973
        %4975 = vrot.lane.b32.xlu0 %v368, 64
        %v4976 = vpop.permute.xlu0 %4975
        %4977 = vrot.lane.b32.xlu0 %v370, 64
        %v4978 = vpop.permute.xlu0 %4977
        %4979 = vrot.lane.b32.xlu0 %v372, 64
        %v4980 = vpop.permute.xlu0 %4979
        %4981 = vrot.lane.b32.xlu0 %v374, 64
        %v4982 = vpop.permute.xlu0 %4981
        %4983 = vrot.lane.b32.xlu0 %v376, 64
        %v4984 = vpop.permute.xlu0 %4983
        %4985 = vrot.lane.b32.xlu0 %v378, 64
        %v4986 = vpop.permute.xlu0 %4985
        %4987 = vrot.lane.b32.xlu0 %v380, 64
        %v4988 = vpop.permute.xlu0 %4987
        %4989 = vrot.lane.b32.xlu0 %v382, 64
        %v4990 = vpop.permute.xlu0 %4989
        %4991 = vrot.lane.b32.xlu0 %v384, 64
        %v4992 = vpop.permute.xlu0 %4991
        %4993 = vrot.lane.b32.xlu0 %v386, 64
        %v4994 = vpop.permute.xlu0 %4993
        %4995 = vrot.lane.b32.xlu0 %v388, 64
        %v4996 = vpop.permute.xlu0 %4995
        %4997 = vrot.lane.b32.xlu0 %v390, 64
        %v4998 = vpop.permute.xlu0 %4997
        %4999 = vrot.lane.b32.xlu0 %v392, 64
        %v5000 = vpop.permute.xlu0 %4999
        %5001 = vrot.lane.b32.xlu0 %v394, 64
        %v5002 = vpop.permute.xlu0 %5001
        %5003 = vrot.lane.b32.xlu0 %v396, 64
        %v5004 = vpop.permute.xlu0 %5003
        %5005 = vrot.lane.b32.xlu0 %v398, 64
        %v5006 = vpop.permute.xlu0 %5005
        %5007 = vrot.lane.b32.xlu0 %v400, 64
        %v5008 = vpop.permute.xlu0 %5007
        %5009 = vrot.lane.b32.xlu0 %v402, 64
        %v5010 = vpop.permute.xlu0 %5009
        %5011 = vrot.lane.b32.xlu0 %v404, 64
        %v5012 = vpop.permute.xlu0 %5011
        %5013 = vrot.lane.b32.xlu0 %v406, 64
        %v5014 = vpop.permute.xlu0 %5013
        %5015 = vrot.lane.b32.xlu0 %v408, 64
        %v5016 = vpop.permute.xlu0 %5015
        %5017 = vrot.lane.b32.xlu0 %v410, 64
        %v5018 = vpop.permute.xlu0 %5017
        %5019 = vrot.lane.b32.xlu0 %v412, 64
        %v5020 = vpop.permute.xlu0 %5019
        %5021 = vrot.lane.b32.xlu0 %v414, 64
        %v5022 = vpop.permute.xlu0 %5021
        %5023 = vrot.lane.b32.xlu0 %v416, 64
        %v5024 = vpop.permute.xlu0 %5023
        %5025 = vrot.lane.b32.xlu0 %v418, 64
        %v5026 = vpop.permute.xlu0 %5025
        %5027 = vrot.lane.b32.xlu0 %v420, 64
        %v5028 = vpop.permute.xlu0 %5027
        %5029 = vrot.lane.b32.xlu0 %v422, 64
        %v5030 = vpop.permute.xlu0 %5029
        %5031 = vrot.lane.b32.xlu0 %v424, 64
        %v5032 = vpop.permute.xlu0 %5031
        %5033 = vrot.lane.b32.xlu0 %v426, 64
        %v5034 = vpop.permute.xlu0 %5033
        %5035 = vrot.lane.b32.xlu0 %v428, 64
        %v5036 = vpop.permute.xlu0 %5035
        %5037 = vrot.lane.b32.xlu0 %v430, 64
        %v5038 = vpop.permute.xlu0 %5037
        %5039 = vrot.lane.b32.xlu0 %v432, 64
        %v5040 = vpop.permute.xlu0 %5039
        %5041 = vrot.lane.b32.xlu0 %v434, 64
        %v5042 = vpop.permute.xlu0 %5041
        %5043 = vrot.lane.b32.xlu0 %v436, 64
        %v5044 = vpop.permute.xlu0 %5043
        %5045 = vrot.lane.b32.xlu0 %v438, 64
        %v5046 = vpop.permute.xlu0 %5045
        %5047 = vrot.lane.b32.xlu0 %v440, 64
        %v5048 = vpop.permute.xlu0 %5047
        %5049 = vrot.lane.b32.xlu0 %v442, 64
        %v5050 = vpop.permute.xlu0 %5049
        %5051 = vrot.lane.b32.xlu0 %v444, 64
        %v5052 = vpop.permute.xlu0 %5051
        %5053 = vrot.lane.b32.xlu0 %v446, 64
        %v5054 = vpop.permute.xlu0 %5053
        %5055 = vrot.lane.b32.xlu0 %v448, 64
        %v5056 = vpop.permute.xlu0 %5055
        %5057 = vrot.lane.b32.xlu0 %v450, 64
        %v5058 = vpop.permute.xlu0 %5057
        %5059 = vrot.lane.b32.xlu0 %v452, 64
        %v5060 = vpop.permute.xlu0 %5059
        %5061 = vrot.lane.b32.xlu0 %v454, 64
        %v5062 = vpop.permute.xlu0 %5061
        %5063 = vrot.lane.b32.xlu0 %v456, 64
        %v5064 = vpop.permute.xlu0 %5063
        %5065 = vrot.lane.b32.xlu0 %v458, 64
        %v5066 = vpop.permute.xlu0 %5065
        %5067 = vrot.lane.b32.xlu0 %v460, 64
        %v5068 = vpop.permute.xlu0 %5067
        %5069 = vrot.lane.b32.xlu0 %v462, 64
        %v5070 = vpop.permute.xlu0 %5069
        %5071 = vrot.lane.b32.xlu0 %v464, 64
        %v5072 = vpop.permute.xlu0 %5071
        %5073 = vrot.lane.b32.xlu0 %v466, 64
        %v5074 = vpop.permute.xlu0 %5073
        %5075 = vrot.lane.b32.xlu0 %v468, 64
        %v5076 = vpop.permute.xlu0 %5075
        %5077 = vrot.lane.b32.xlu0 %v470, 64
        %v5078 = vpop.permute.xlu0 %5077
        %5079 = vrot.lane.b32.xlu0 %v472, 64
        %v5080 = vpop.permute.xlu0 %5079
        %5081 = vrot.lane.b32.xlu0 %v474, 64
        %v5082 = vpop.permute.xlu0 %5081
        %5083 = vrot.lane.b32.xlu0 %v476, 64
        %v5084 = vpop.permute.xlu0 %5083
        %5085 = vrot.lane.b32.xlu0 %v478, 64
        %v5086 = vpop.permute.xlu0 %5085
        %5087 = vrot.lane.b32.xlu0 %v480, 64
        %v5088 = vpop.permute.xlu0 %5087
        %5089 = vrot.lane.b32.xlu0 %v482, 64
        %v5090 = vpop.permute.xlu0 %5089
        %5091 = vrot.lane.b32.xlu0 %v484, 64
        %v5092 = vpop.permute.xlu0 %5091
        %5093 = vrot.lane.b32.xlu0 %v486, 64
        %v5094 = vpop.permute.xlu0 %5093
        %5095 = vrot.lane.b32.xlu0 %v488, 64
        %v5096 = vpop.permute.xlu0 %5095
        %5097 = vrot.lane.b32.xlu0 %v490, 64
        %v5098 = vpop.permute.xlu0 %5097
        %5099 = vrot.lane.b32.xlu0 %v492, 64
        %v5100 = vpop.permute.xlu0 %5099
        %5101 = vrot.lane.b32.xlu0 %v494, 64
        %v5102 = vpop.permute.xlu0 %5101
        %5103 = vrot.lane.b32.xlu0 %v496, 64
        %v5104 = vpop.permute.xlu0 %5103
        %5105 = vrot.lane.b32.xlu0 %v498, 64
        %v5106 = vpop.permute.xlu0 %5105
        %5107 = vrot.lane.b32.xlu0 %v500, 64
        %v5108 = vpop.permute.xlu0 %5107
        %5109 = vrot.lane.b32.xlu0 %v502, 64
        %v5110 = vpop.permute.xlu0 %5109
        %5111 = vrot.lane.b32.xlu0 %v504, 64
        %v5112 = vpop.permute.xlu0 %5111
        %5113 = vrot.lane.b32.xlu0 %v506, 64
        %v5114 = vpop.permute.xlu0 %5113
        %5115 = vrot.lane.b32.xlu0 %v508, 64
        %v5116 = vpop.permute.xlu0 %5115
        %5117 = vrot.lane.b32.xlu0 %v510, 64
        %v5118 = vpop.permute.xlu0 %5117
        %5119 = vrot.lane.b32.xlu0 %v512, 64
        %v5120 = vpop.permute.xlu0 %5119
        %5121 = vrot.lane.b32.xlu0 %v514, 64
        %v5122 = vpop.permute.xlu0 %5121
        %5123 = vrot.lane.b32.xlu0 %v516, 64
        %v5124 = vpop.permute.xlu0 %5123
        %5125 = vrot.lane.b32.xlu0 %v518, 64
        %v5126 = vpop.permute.xlu0 %5125
        %5127 = vrot.lane.b32.xlu0 %v520, 64
        %v5128 = vpop.permute.xlu0 %5127
        %5129 = vrot.lane.b32.xlu0 %v522, 64
        %v5130 = vpop.permute.xlu0 %5129
        %5131 = vrot.lane.b32.xlu0 %v524, 64
        %v5132 = vpop.permute.xlu0 %5131
        %5133 = vrot.lane.b32.xlu0 %v526, 64
        %v5134 = vpop.permute.xlu0 %5133
        %5135 = vrot.lane.b32.xlu0 %v528, 64
        %v5136 = vpop.permute.xlu0 %5135
        %5137 = vrot.lane.b32.xlu0 %v530, 64
        %v5138 = vpop.permute.xlu0 %5137
        %5139 = vrot.lane.b32.xlu0 %v532, 64
        %v5140 = vpop.permute.xlu0 %5139
        %5141 = vrot.lane.b32.xlu0 %v534, 64
        %v5142 = vpop.permute.xlu0 %5141
        %5143 = vrot.lane.b32.xlu0 %v536, 64
        %v5144 = vpop.permute.xlu0 %5143
        %5145 = vrot.lane.b32.xlu0 %v538, 64
        %v5146 = vpop.permute.xlu0 %5145
        %5147 = vrot.lane.b32.xlu0 %v540, 64
        %v5148 = vpop.permute.xlu0 %5147
        %5149 = vrot.lane.b32.xlu0 %v542, 64
        %v5150 = vpop.permute.xlu0 %5149
        %5151 = vrot.lane.b32.xlu0 %v544, 64
        %v5152 = vpop.permute.xlu0 %5151
        %5153 = vrot.lane.b32.xlu0 %v546, 64
        %v5154 = vpop.permute.xlu0 %5153
        %5155 = vrot.lane.b32.xlu0 %v548, 64
        %v5156 = vpop.permute.xlu0 %5155
        %5157 = vrot.lane.b32.xlu0 %v550, 64
        %v5158 = vpop.permute.xlu0 %5157
        %5159 = vrot.lane.b32.xlu0 %v552, 64
        %v5160 = vpop.permute.xlu0 %5159
        %5161 = vrot.lane.b32.xlu0 %v554, 64
        %v5162 = vpop.permute.xlu0 %5161
        %5163 = vrot.lane.b32.xlu0 %v556, 64
        %v5164 = vpop.permute.xlu0 %5163
        %5165 = vrot.lane.b32.xlu0 %v558, 64
        %v5166 = vpop.permute.xlu0 %5165
        %5167 = vrot.lane.b32.xlu0 %v560, 64
        %v5168 = vpop.permute.xlu0 %5167
        %5169 = vrot.lane.b32.xlu0 %v562, 64
        %v5170 = vpop.permute.xlu0 %5169
        %5171 = vrot.lane.b32.xlu0 %v564, 64
        %v5172 = vpop.permute.xlu0 %5171
        %5173 = vrot.lane.b32.xlu0 %v566, 64
        %v5174 = vpop.permute.xlu0 %5173
        %5175 = vrot.lane.b32.xlu0 %v568, 64
        %v5176 = vpop.permute.xlu0 %5175
        %5177 = vrot.lane.b32.xlu0 %v570, 64
        %v5178 = vpop.permute.xlu0 %5177
        %5179 = vrot.lane.b32.xlu0 %v572, 64
        %v5180 = vpop.permute.xlu0 %5179
        %5181 = vrot.lane.b32.xlu0 %v574, 64
        %v5182 = vpop.permute.xlu0 %5181
        %5183 = vrot.lane.b32.xlu0 %v576, 64
        %v5184 = vpop.permute.xlu0 %5183
        %5185 = vrot.lane.b32.xlu0 %v578, 64
        %v5186 = vpop.permute.xlu0 %5185
        %5187 = vrot.lane.b32.xlu0 %v580, 64
        %v5188 = vpop.permute.xlu0 %5187
        %5189 = vrot.lane.b32.xlu0 %v582, 64
        %v5190 = vpop.permute.xlu0 %5189
        %5191 = vrot.lane.b32.xlu0 %v584, 64
        %v5192 = vpop.permute.xlu0 %5191
        %5193 = vrot.lane.b32.xlu0 %v586, 64
        %v5194 = vpop.permute.xlu0 %5193
        %5195 = vrot.lane.b32.xlu0 %v588, 64
        %v5196 = vpop.permute.xlu0 %5195
        %5197 = vrot.lane.b32.xlu0 %v590, 64
        %v5198 = vpop.permute.xlu0 %5197
        %5199 = vrot.lane.b32.xlu0 %v592, 64
        %v5200 = vpop.permute.xlu0 %5199
        %5201 = vrot.lane.b32.xlu0 %v594, 64
        %v5202 = vpop.permute.xlu0 %5201
        %5203 = vrot.lane.b32.xlu0 %v596, 64
        %v5204 = vpop.permute.xlu0 %5203
        %5205 = vrot.lane.b32.xlu0 %v598, 64
        %v5206 = vpop.permute.xlu0 %5205
        %5207 = vrot.lane.b32.xlu0 %v600, 64
        %v5208 = vpop.permute.xlu0 %5207
        %5209 = vrot.lane.b32.xlu0 %v602, 64
        %v5210 = vpop.permute.xlu0 %5209
        %5211 = vrot.lane.b32.xlu0 %v604, 64
        %v5212 = vpop.permute.xlu0 %5211
        %5213 = vrot.lane.b32.xlu0 %v606, 64
        %v5214 = vpop.permute.xlu0 %5213
        %5215 = vrot.lane.b32.xlu0 %v608, 64
        %v5216 = vpop.permute.xlu0 %5215
        %5217 = vrot.lane.b32.xlu0 %v610, 64
        %v5218 = vpop.permute.xlu0 %5217
        %5219 = vrot.lane.b32.xlu0 %v612, 64
        %v5220 = vpop.permute.xlu0 %5219
        %5221 = vrot.lane.b32.xlu0 %v614, 64
        %v5222 = vpop.permute.xlu0 %5221
        %5223 = vrot.lane.b32.xlu0 %v616, 64
        %v5224 = vpop.permute.xlu0 %5223
        %5225 = vrot.lane.b32.xlu0 %v618, 64
        %v5226 = vpop.permute.xlu0 %5225
        %5227 = vrot.lane.b32.xlu0 %v620, 64
        %v5228 = vpop.permute.xlu0 %5227
        %5229 = vrot.lane.b32.xlu0 %v622, 64
        %v5230 = vpop.permute.xlu0 %5229
        %5231 = vrot.lane.b32.xlu0 %v624, 64
        %v5232 = vpop.permute.xlu0 %5231
        %5233 = vrot.lane.b32.xlu0 %v626, 64
        %v5234 = vpop.permute.xlu0 %5233
        %5235 = vrot.lane.b32.xlu0 %v628, 64
        %v5236 = vpop.permute.xlu0 %5235
        %5237 = vrot.lane.b32.xlu0 %v630, 64
        %v5238 = vpop.permute.xlu0 %5237
        %5239 = vrot.lane.b32.xlu0 %v632, 64
        %v5240 = vpop.permute.xlu0 %5239
        %5241 = vrot.lane.b32.xlu0 %v634, 64
        %v5242 = vpop.permute.xlu0 %5241
        %5243 = vrot.lane.b32.xlu0 %v636, 64
        %v5244 = vpop.permute.xlu0 %5243
        %5245 = vrot.lane.b32.xlu0 %v638, 64
        %v5246 = vpop.permute.xlu0 %5245
        %5247 = vrot.lane.b32.xlu0 %v640, 64
        %v5248 = vpop.permute.xlu0 %5247
        %5249 = vrot.lane.b32.xlu0 %v642, 64
        %v5250 = vpop.permute.xlu0 %5249
        %5251 = vrot.lane.b32.xlu0 %v644, 64
        %v5252 = vpop.permute.xlu0 %5251
        %5253 = vrot.lane.b32.xlu0 %v646, 64
        %v5254 = vpop.permute.xlu0 %5253
        %5255 = vrot.lane.b32.xlu0 %v648, 64
        %v5256 = vpop.permute.xlu0 %5255
        %5257 = vrot.lane.b32.xlu0 %v650, 64
        %v5258 = vpop.permute.xlu0 %5257
        %5259 = vrot.lane.b32.xlu0 %v652, 64
        %v5260 = vpop.permute.xlu0 %5259
        %5261 = vrot.lane.b32.xlu0 %v654, 64
        %v5262 = vpop.permute.xlu0 %5261
        %5263 = vrot.lane.b32.xlu0 %v656, 64
        %v5264 = vpop.permute.xlu0 %5263
        %5265 = vrot.lane.b32.xlu0 %v658, 64
        %v5266 = vpop.permute.xlu0 %5265
        %5267 = vrot.lane.b32.xlu0 %v660, 64
        %v5268 = vpop.permute.xlu0 %5267
        %5269 = vrot.lane.b32.xlu0 %v662, 64
        %v5270 = vpop.permute.xlu0 %5269
        %5271 = vrot.lane.b32.xlu0 %v664, 64
        %v5272 = vpop.permute.xlu0 %5271
        %5273 = vrot.lane.b32.xlu0 %v666, 64
        %v5274 = vpop.permute.xlu0 %5273
        %5275 = vrot.lane.b32.xlu0 %v668, 64
        %v5276 = vpop.permute.xlu0 %5275
        %5277 = vrot.lane.b32.xlu0 %v670, 64
        %v5278 = vpop.permute.xlu0 %5277
        %5279 = vrot.lane.b32.xlu0 %v672, 64
        %v5280 = vpop.permute.xlu0 %5279
        %5281 = vrot.lane.b32.xlu0 %v674, 64
        %v5282 = vpop.permute.xlu0 %5281
        %5283 = vrot.lane.b32.xlu0 %v676, 64
        %v5284 = vpop.permute.xlu0 %5283
        %5285 = vrot.lane.b32.xlu0 %v678, 64
        %v5286 = vpop.permute.xlu0 %5285
        %5287 = vrot.lane.b32.xlu0 %v680, 64
        %v5288 = vpop.permute.xlu0 %5287
        %5289 = vrot.lane.b32.xlu0 %v682, 64
        %v5290 = vpop.permute.xlu0 %5289
        %5291 = vrot.lane.b32.xlu0 %v684, 64
        %v5292 = vpop.permute.xlu0 %5291
        %5293 = vrot.lane.b32.xlu0 %v686, 64
        %v5294 = vpop.permute.xlu0 %5293
        %5295 = vrot.lane.b32.xlu0 %v688, 64
        %v5296 = vpop.permute.xlu0 %5295
        %5297 = vrot.lane.b32.xlu0 %v690, 64
        %v5298 = vpop.permute.xlu0 %5297
        %5299 = vrot.lane.b32.xlu0 %v692, 64
        %v5300 = vpop.permute.xlu0 %5299
        %5301 = vrot.lane.b32.xlu0 %v694, 64
        %v5302 = vpop.permute.xlu0 %5301
        %5303 = vrot.lane.b32.xlu0 %v696, 64
        %v5304 = vpop.permute.xlu0 %5303
        %5305 = vrot.lane.b32.xlu0 %v698, 64
        %v5306 = vpop.permute.xlu0 %5305
        %5307 = vrot.lane.b32.xlu0 %v700, 64
        %v5308 = vpop.permute.xlu0 %5307
        %5309 = vrot.lane.b32.xlu0 %v702, 64
        %v5310 = vpop.permute.xlu0 %5309
        %5311 = vrot.lane.b32.xlu0 %v704, 64
        %v5312 = vpop.permute.xlu0 %5311
        %5313 = vrot.lane.b32.xlu0 %v706, 64
        %v5314 = vpop.permute.xlu0 %5313
        %5315 = vrot.lane.b32.xlu0 %v708, 64
        %v5316 = vpop.permute.xlu0 %5315
        %5317 = vrot.lane.b32.xlu0 %v710, 64
        %v5318 = vpop.permute.xlu0 %5317
        %5319 = vrot.lane.b32.xlu0 %v712, 64
        %v5320 = vpop.permute.xlu0 %5319
        %5321 = vrot.lane.b32.xlu0 %v714, 64
        %v5322 = vpop.permute.xlu0 %5321
        %5323 = vrot.lane.b32.xlu0 %v716, 64
        %v5324 = vpop.permute.xlu0 %5323
        %5325 = vrot.lane.b32.xlu0 %v718, 64
        %v5326 = vpop.permute.xlu0 %5325
        %5327 = vrot.lane.b32.xlu0 %v720, 64
        %v5328 = vpop.permute.xlu0 %5327
        %5329 = vrot.lane.b32.xlu0 %v722, 64
        %v5330 = vpop.permute.xlu0 %5329
        %5331 = vrot.lane.b32.xlu0 %v724, 64
        %v5332 = vpop.permute.xlu0 %5331
        %5333 = vrot.lane.b32.xlu0 %v726, 64
        %v5334 = vpop.permute.xlu0 %5333
        %5335 = vrot.lane.b32.xlu0 %v728, 64
        %v5336 = vpop.permute.xlu0 %5335
        %5337 = vrot.lane.b32.xlu0 %v730, 64
        %v5338 = vpop.permute.xlu0 %5337
        %5339 = vrot.lane.b32.xlu0 %v732, 64
        %v5340 = vpop.permute.xlu0 %5339
        %5341 = vrot.lane.b32.xlu0 %v734, 64
        %v5342 = vpop.permute.xlu0 %5341
        %5343 = vrot.lane.b32.xlu0 %v736, 64
        %v5344 = vpop.permute.xlu0 %5343
        %5345 = vrot.lane.b32.xlu0 %v738, 64
        %v5346 = vpop.permute.xlu0 %5345
        %5347 = vrot.lane.b32.xlu0 %v740, 64
        %v5348 = vpop.permute.xlu0 %5347
        %5349 = vrot.lane.b32.xlu0 %v742, 64
        %v5350 = vpop.permute.xlu0 %5349
        %5351 = vrot.lane.b32.xlu0 %v744, 64
        %v5352 = vpop.permute.xlu0 %5351
        %5353 = vrot.lane.b32.xlu0 %v746, 64
        %v5354 = vpop.permute.xlu0 %5353
        %5355 = vrot.lane.b32.xlu0 %v748, 64
        %v5356 = vpop.permute.xlu0 %5355
        %5357 = vrot.lane.b32.xlu0 %v750, 64
        %v5358 = vpop.permute.xlu0 %5357
        %5359 = vrot.lane.b32.xlu0 %v752, 64
        %v5360 = vpop.permute.xlu0 %5359
        %5361 = vrot.lane.b32.xlu0 %v754, 64
        %v5362 = vpop.permute.xlu0 %5361
        %5363 = vrot.lane.b32.xlu0 %v756, 64
        %v5364 = vpop.permute.xlu0 %5363
        %5365 = vrot.lane.b32.xlu0 %v758, 64
        %v5366 = vpop.permute.xlu0 %5365
        %5367 = vrot.lane.b32.xlu0 %v760, 64
        %v5368 = vpop.permute.xlu0 %5367
        %5369 = vrot.lane.b32.xlu0 %v762, 64
        %v5370 = vpop.permute.xlu0 %5369
        %5371 = vrot.lane.b32.xlu0 %v764, 64
        %v5372 = vpop.permute.xlu0 %5371
        %5373 = vrot.lane.b32.xlu0 %v766, 64
        %v5374 = vpop.permute.xlu0 %5373
        %5375 = vrot.lane.b32.xlu0 %v768, 64
        %v5376 = vpop.permute.xlu0 %5375
        %5377 = vrot.lane.b32.xlu0 %v770, 64
        %v5378 = vpop.permute.xlu0 %5377
        %5379 = vrot.lane.b32.xlu0 %v772, 64
        %v5380 = vpop.permute.xlu0 %5379
        %5381 = vrot.lane.b32.xlu0 %v774, 64
        %v5382 = vpop.permute.xlu0 %5381
        %5383 = vrot.lane.b32.xlu0 %v776, 64
        %v5384 = vpop.permute.xlu0 %5383
        %5385 = vrot.lane.b32.xlu0 %v778, 64
        %v5386 = vpop.permute.xlu0 %5385
        %5387 = vrot.lane.b32.xlu0 %v780, 64
        %v5388 = vpop.permute.xlu0 %5387
        %5389 = vrot.lane.b32.xlu0 %v782, 64
        %v5390 = vpop.permute.xlu0 %5389
        %5391 = vrot.lane.b32.xlu0 %v784, 64
        %v5392 = vpop.permute.xlu0 %5391
        %5393 = vrot.lane.b32.xlu0 %v786, 64
        %v5394 = vpop.permute.xlu0 %5393
        %5395 = vrot.lane.b32.xlu0 %v788, 64
        %v5396 = vpop.permute.xlu0 %5395
        %5397 = vrot.lane.b32.xlu0 %v790, 64
        %v5398 = vpop.permute.xlu0 %5397
        %5399 = vrot.lane.b32.xlu0 %v792, 64
        %v5400 = vpop.permute.xlu0 %5399
        %5401 = vrot.lane.b32.xlu0 %v794, 64
        %v5402 = vpop.permute.xlu0 %5401
        %5403 = vrot.lane.b32.xlu0 %v796, 64
        %v5404 = vpop.permute.xlu0 %5403
        %5405 = vrot.lane.b32.xlu0 %v798, 64
        %v5406 = vpop.permute.xlu0 %5405
        %5407 = vrot.lane.b32.xlu0 %v800, 64
        %v5408 = vpop.permute.xlu0 %5407
        %5409 = vrot.lane.b32.xlu0 %v802, 64
        %v5410 = vpop.permute.xlu0 %5409
        %5411 = vrot.lane.b32.xlu0 %v804, 64
        %v5412 = vpop.permute.xlu0 %5411
        %5413 = vrot.lane.b32.xlu0 %v806, 64
        %v5414 = vpop.permute.xlu0 %5413
        %5415 = vrot.lane.b32.xlu0 %v808, 64
        %v5416 = vpop.permute.xlu0 %5415
        %5417 = vrot.lane.b32.xlu0 %v810, 64
        %v5418 = vpop.permute.xlu0 %5417
        %5419 = vrot.lane.b32.xlu0 %v812, 64
        %v5420 = vpop.permute.xlu0 %5419
        %5421 = vrot.lane.b32.xlu0 %v814, 64
        %v5422 = vpop.permute.xlu0 %5421
        %5423 = vrot.lane.b32.xlu0 %v816, 64
        %v5424 = vpop.permute.xlu0 %5423
        %5425 = vrot.lane.b32.xlu0 %v818, 64
        %v5426 = vpop.permute.xlu0 %5425
        %5427 = vrot.lane.b32.xlu0 %v820, 64
        %v5428 = vpop.permute.xlu0 %5427
        %5429 = vrot.lane.b32.xlu0 %v822, 64
        %v5430 = vpop.permute.xlu0 %5429
        %5431 = vrot.lane.b32.xlu0 %v824, 64
        %v5432 = vpop.permute.xlu0 %5431
        %5433 = vrot.lane.b32.xlu0 %v826, 64
        %v5434 = vpop.permute.xlu0 %5433
        %5435 = vrot.lane.b32.xlu0 %v828, 64
        %v5436 = vpop.permute.xlu0 %5435
        %5437 = vrot.lane.b32.xlu0 %v830, 64
        %v5438 = vpop.permute.xlu0 %5437
        %5439 = vrot.lane.b32.xlu0 %v832, 64
        %v5440 = vpop.permute.xlu0 %5439
        %5441 = vrot.lane.b32.xlu0 %v834, 64
        %v5442 = vpop.permute.xlu0 %5441
        %5443 = vrot.lane.b32.xlu0 %v836, 64
        %v5444 = vpop.permute.xlu0 %5443
        %5445 = vrot.lane.b32.xlu0 %v838, 64
        %v5446 = vpop.permute.xlu0 %5445
        %5447 = vrot.lane.b32.xlu0 %v840, 64
        %v5448 = vpop.permute.xlu0 %5447
        %5449 = vrot.lane.b32.xlu0 %v842, 64
        %v5450 = vpop.permute.xlu0 %5449
        %5451 = vrot.lane.b32.xlu0 %v844, 64
        %v5452 = vpop.permute.xlu0 %5451
        %5453 = vrot.lane.b32.xlu0 %v846, 64
        %v5454 = vpop.permute.xlu0 %5453
        %5455 = vrot.lane.b32.xlu0 %v848, 64
        %v5456 = vpop.permute.xlu0 %5455
        %5457 = vrot.lane.b32.xlu0 %v850, 64
        %v5458 = vpop.permute.xlu0 %5457
        %5459 = vrot.lane.b32.xlu0 %v852, 64
        %v5460 = vpop.permute.xlu0 %5459
        %5461 = vrot.lane.b32.xlu0 %v854, 64
        %v5462 = vpop.permute.xlu0 %5461
        %5463 = vrot.lane.b32.xlu0 %v856, 64
        %v5464 = vpop.permute.xlu0 %5463
        %5465 = vrot.lane.b32.xlu0 %v858, 64
        %v5466 = vpop.permute.xlu0 %5465
        %5467 = vrot.lane.b32.xlu0 %v860, 64
        %v5468 = vpop.permute.xlu0 %5467
        %5469 = vrot.lane.b32.xlu0 %v862, 64
        %v5470 = vpop.permute.xlu0 %5469
        %5471 = vrot.lane.b32.xlu0 %v864, 64
        %v5472 = vpop.permute.xlu0 %5471
        %5473 = vrot.lane.b32.xlu0 %v866, 64
        %v5474 = vpop.permute.xlu0 %5473
        %5475 = vrot.lane.b32.xlu0 %v868, 64
        %v5476 = vpop.permute.xlu0 %5475
        %5477 = vrot.lane.b32.xlu0 %v870, 64
        %v5478 = vpop.permute.xlu0 %5477
        %5479 = vrot.lane.b32.xlu0 %v872, 64
        %v5480 = vpop.permute.xlu0 %5479
        %5481 = vrot.lane.b32.xlu0 %v874, 64
        %v5482 = vpop.permute.xlu0 %5481
        %5483 = vrot.lane.b32.xlu0 %v876, 64
        %v5484 = vpop.permute.xlu0 %5483
        %5485 = vrot.lane.b32.xlu0 %v878, 64
        %v5486 = vpop.permute.xlu0 %5485
        %5487 = vrot.lane.b32.xlu0 %v880, 64
        %v5488 = vpop.permute.xlu0 %5487
        %5489 = vrot.lane.b32.xlu0 %v882, 64
        %v5490 = vpop.permute.xlu0 %5489
        %5491 = vrot.lane.b32.xlu0 %v884, 64
        %v5492 = vpop.permute.xlu0 %5491
        %5493 = vrot.lane.b32.xlu0 %v886, 64
        %v5494 = vpop.permute.xlu0 %5493
        %5495 = vrot.lane.b32.xlu0 %v888, 64
        %v5496 = vpop.permute.xlu0 %5495
        %5497 = vrot.lane.b32.xlu0 %v890, 64
        %v5498 = vpop.permute.xlu0 %5497
        %5499 = vrot.lane.b32.xlu0 %v892, 64
        %v5500 = vpop.permute.xlu0 %5499
        %5501 = vrot.lane.b32.xlu0 %v894, 64
        %v5502 = vpop.permute.xlu0 %5501
        %5503 = vrot.lane.b32.xlu0 %v896, 64
        %v5504 = vpop.permute.xlu0 %5503
        %5505 = vrot.lane.b32.xlu0 %v898, 64
        %v5506 = vpop.permute.xlu0 %5505
        %5507 = vrot.lane.b32.xlu0 %v900, 64
        %v5508 = vpop.permute.xlu0 %5507
        %5509 = vrot.lane.b32.xlu0 %v902, 64
        %v5510 = vpop.permute.xlu0 %5509
        %5511 = vrot.lane.b32.xlu0 %v904, 64
        %v5512 = vpop.permute.xlu0 %5511
        %5513 = vrot.lane.b32.xlu0 %v906, 64
        %v5514 = vpop.permute.xlu0 %5513
        %5515 = vrot.lane.b32.xlu0 %v908, 64
        %v5516 = vpop.permute.xlu0 %5515
        %5517 = vrot.lane.b32.xlu0 %v910, 64
        %v5518 = vpop.permute.xlu0 %5517
        %5519 = vrot.lane.b32.xlu0 %v912, 64
        %v5520 = vpop.permute.xlu0 %5519
        %5521 = vrot.lane.b32.xlu0 %v914, 64
        %v5522 = vpop.permute.xlu0 %5521
        %5523 = vrot.lane.b32.xlu0 %v916, 64
        %v5524 = vpop.permute.xlu0 %5523
        %5525 = vrot.lane.b32.xlu0 %v918, 64
        %v5526 = vpop.permute.xlu0 %5525
        %5527 = vrot.lane.b32.xlu0 %v920, 64
        %v5528 = vpop.permute.xlu0 %5527
        %5529 = vrot.lane.b32.xlu0 %v922, 64
        %v5530 = vpop.permute.xlu0 %5529
        %5531 = vrot.lane.b32.xlu0 %v924, 64
        %v5532 = vpop.permute.xlu0 %5531
        %5533 = vrot.lane.b32.xlu0 %v926, 64
        %v5534 = vpop.permute.xlu0 %5533
        %5535 = vrot.lane.b32.xlu0 %v928, 64
        %v5536 = vpop.permute.xlu0 %5535
        %5537 = vrot.lane.b32.xlu0 %v930, 64
        %v5538 = vpop.permute.xlu0 %5537
        %5539 = vrot.lane.b32.xlu0 %v932, 64
        %v5540 = vpop.permute.xlu0 %5539
        %5541 = vrot.lane.b32.xlu0 %v934, 64
        %v5542 = vpop.permute.xlu0 %5541
        %5543 = vrot.lane.b32.xlu0 %v936, 64
        %v5544 = vpop.permute.xlu0 %5543
        %5545 = vrot.lane.b32.xlu0 %v938, 64
        %v5546 = vpop.permute.xlu0 %5545
        %5547 = vrot.lane.b32.xlu0 %v940, 64
        %v5548 = vpop.permute.xlu0 %5547
        %5549 = vrot.lane.b32.xlu0 %v942, 64
        %v5550 = vpop.permute.xlu0 %5549
        %5551 = vrot.lane.b32.xlu0 %v944, 64
        %v5552 = vpop.permute.xlu0 %5551
        %5553 = vrot.lane.b32.xlu0 %v946, 64
        %v5554 = vpop.permute.xlu0 %5553
        %5555 = vrot.lane.b32.xlu0 %v948, 64
        %v5556 = vpop.permute.xlu0 %5555
        %5557 = vrot.lane.b32.xlu0 %v950, 64
        %v5558 = vpop.permute.xlu0 %5557
        %5559 = vrot.lane.b32.xlu0 %v952, 64
        %v5560 = vpop.permute.xlu0 %5559
        %5561 = vrot.lane.b32.xlu0 %v954, 64
        %v5562 = vpop.permute.xlu0 %5561
        %5563 = vrot.lane.b32.xlu0 %v956, 64
        %v5564 = vpop.permute.xlu0 %5563
        %5565 = vrot.lane.b32.xlu0 %v958, 64
        %v5566 = vpop.permute.xlu0 %5565
        %5567 = vrot.lane.b32.xlu0 %v960, 64
        %v5568 = vpop.permute.xlu0 %5567
        %5569 = vrot.lane.b32.xlu0 %v962, 64
        %v5570 = vpop.permute.xlu0 %5569
        %5571 = vrot.lane.b32.xlu0 %v964, 64
        %v5572 = vpop.permute.xlu0 %5571
        %5573 = vrot.lane.b32.xlu0 %v966, 64
        %v5574 = vpop.permute.xlu0 %5573
        %5575 = vrot.lane.b32.xlu0 %v968, 64
        %v5576 = vpop.permute.xlu0 %5575
        %5577 = vrot.lane.b32.xlu0 %v970, 64
        %v5578 = vpop.permute.xlu0 %5577
        %5579 = vrot.lane.b32.xlu0 %v972, 64
        %v5580 = vpop.permute.xlu0 %5579
        %5581 = vrot.lane.b32.xlu0 %v974, 64
        %v5582 = vpop.permute.xlu0 %5581
        %5583 = vrot.lane.b32.xlu0 %v976, 64
        %v5584 = vpop.permute.xlu0 %5583
        %5585 = vrot.lane.b32.xlu0 %v978, 64
        %v5586 = vpop.permute.xlu0 %5585
        %5587 = vrot.lane.b32.xlu0 %v980, 64
        %v5588 = vpop.permute.xlu0 %5587
        %5589 = vrot.lane.b32.xlu0 %v982, 64
        %v5590 = vpop.permute.xlu0 %5589
        %5591 = vrot.lane.b32.xlu0 %v984, 64
        %v5592 = vpop.permute.xlu0 %5591
        %5593 = vrot.lane.b32.xlu0 %v986, 64
        %v5594 = vpop.permute.xlu0 %5593
        %5595 = vrot.lane.b32.xlu0 %v988, 64
        %v5596 = vpop.permute.xlu0 %5595
        %5597 = vrot.lane.b32.xlu0 %v990, 64
        %v5598 = vpop.permute.xlu0 %5597
        %5599 = vrot.lane.b32.xlu0 %v992, 64
        %v5600 = vpop.permute.xlu0 %5599
        %5601 = vrot.lane.b32.xlu0 %v994, 64
        %v5602 = vpop.permute.xlu0 %5601
        %5603 = vrot.lane.b32.xlu0 %v996, 64
        %v5604 = vpop.permute.xlu0 %5603
        %5605 = vrot.lane.b32.xlu0 %v998, 64
        %v5606 = vpop.permute.xlu0 %5605
        %5607 = vrot.lane.b32.xlu0 %v1000, 64
        %v5608 = vpop.permute.xlu0 %5607
        %5609 = vrot.lane.b32.xlu0 %v1002, 64
        %v5610 = vpop.permute.xlu0 %5609
        %5611 = vrot.lane.b32.xlu0 %v1004, 64
        %v5612 = vpop.permute.xlu0 %5611
        %5613 = vrot.lane.b32.xlu0 %v1006, 64
        %v5614 = vpop.permute.xlu0 %5613
        %5615 = vrot.lane.b32.xlu0 %v1008, 64
        %v5616 = vpop.permute.xlu0 %5615
        %5617 = vrot.lane.b32.xlu0 %v1010, 64
        %v5618 = vpop.permute.xlu0 %5617
        %5619 = vrot.lane.b32.xlu0 %v1012, 64
        %v5620 = vpop.permute.xlu0 %5619
        %5621 = vrot.lane.b32.xlu0 %v1014, 64
        %v5622 = vpop.permute.xlu0 %5621
        %5623 = vrot.lane.b32.xlu0 %v1016, 64
        %v5624 = vpop.permute.xlu0 %5623
        %5625 = vrot.lane.b32.xlu0 %v1018, 64
        %v5626 = vpop.permute.xlu0 %5625
        %5627 = vrot.lane.b32.xlu0 %v1020, 64
        %v5628 = vpop.permute.xlu0 %5627
        %5629 = vrot.lane.b32.xlu0 %v1022, 64
        %v5630 = vpop.permute.xlu0 %5629
        %5631 = vrot.lane.b32.xlu0 %v1024, 64
        %v5632 = vpop.permute.xlu0 %5631
        %5633 = vrot.lane.b32.xlu0 %v1026, 64
        %v5634 = vpop.permute.xlu0 %5633
        %5635 = vrot.lane.b32.xlu0 %v1028, 64
        %v5636 = vpop.permute.xlu0 %5635
        %5637 = vrot.lane.b32.xlu0 %v1030, 64
        %v5638 = vpop.permute.xlu0 %5637
        %5639 = vrot.lane.b32.xlu0 %v1032, 64
        %v5640 = vpop.permute.xlu0 %5639
        %5641 = vrot.lane.b32.xlu0 %v1034, 64
        %v5642 = vpop.permute.xlu0 %5641
        %5643 = vrot.lane.b32.xlu0 %v1036, 64
        %v5644 = vpop.permute.xlu0 %5643
        %5645 = vrot.lane.b32.xlu0 %v1038, 64
        %v5646 = vpop.permute.xlu0 %5645
        %5647 = vrot.lane.b32.xlu0 %v1040, 64
        %v5648 = vpop.permute.xlu0 %5647
        %5649 = vrot.lane.b32.xlu0 %v1042, 64
        %v5650 = vpop.permute.xlu0 %5649
        %5651 = vrot.lane.b32.xlu0 %v1044, 64
        %v5652 = vpop.permute.xlu0 %5651
        %5653 = vrot.lane.b32.xlu0 %v1046, 64
        %v5654 = vpop.permute.xlu0 %5653
        %5655 = vrot.lane.b32.xlu0 %v1048, 64
        %v5656 = vpop.permute.xlu0 %5655
        %5657 = vrot.lane.b32.xlu0 %v1050, 64
        %v5658 = vpop.permute.xlu0 %5657
        %5659 = vrot.lane.b32.xlu0 %v1052, 64
        %v5660 = vpop.permute.xlu0 %5659
        %5661 = vrot.lane.b32.xlu0 %v1054, 64
        %v5662 = vpop.permute.xlu0 %5661
        %5663 = vrot.lane.b32.xlu0 %v1056, 64
        %v5664 = vpop.permute.xlu0 %5663
        %5665 = vrot.lane.b32.xlu0 %v1058, 64
        %v5666 = vpop.permute.xlu0 %5665
        %5667 = vrot.lane.b32.xlu0 %v1060, 64
        %v5668 = vpop.permute.xlu0 %5667
        %5669 = vrot.lane.b32.xlu0 %v1062, 64
        %v5670 = vpop.permute.xlu0 %5669
        %5671 = vrot.lane.b32.xlu0 %v1064, 64
        %v5672 = vpop.permute.xlu0 %5671
        %5673 = vrot.lane.b32.xlu0 %v1066, 64
        %v5674 = vpop.permute.xlu0 %5673
        %5675 = vrot.lane.b32.xlu0 %v1068, 64
        %v5676 = vpop.permute.xlu0 %5675
        %5677 = vrot.lane.b32.xlu0 %v1070, 64
        %v5678 = vpop.permute.xlu0 %5677
        %5679 = vrot.lane.b32.xlu0 %v1072, 64
        %v5680 = vpop.permute.xlu0 %5679
        %5681 = vrot.lane.b32.xlu0 %v1074, 64
        %v5682 = vpop.permute.xlu0 %5681
        %5683 = vrot.lane.b32.xlu0 %v1076, 64
        %v5684 = vpop.permute.xlu0 %5683
        %5685 = vrot.lane.b32.xlu0 %v1078, 64
        %v5686 = vpop.permute.xlu0 %5685
        %5687 = vrot.lane.b32.xlu0 %v1080, 64
        %v5688 = vpop.permute.xlu0 %5687
        %5689 = vrot.lane.b32.xlu0 %v1082, 64
        %v5690 = vpop.permute.xlu0 %5689
        %5691 = vrot.lane.b32.xlu0 %v1084, 64
        %v5692 = vpop.permute.xlu0 %5691
        %5693 = vrot.lane.b32.xlu0 %v1086, 64
        %v5694 = vpop.permute.xlu0 %5693
        %5695 = vrot.lane.b32.xlu0 %v1088, 64
        %v5696 = vpop.permute.xlu0 %5695
        %5697 = vrot.lane.b32.xlu0 %v1090, 64
        %v5698 = vpop.permute.xlu0 %5697
        %5699 = vrot.lane.b32.xlu0 %v1092, 64
        %v5700 = vpop.permute.xlu0 %5699
        %5701 = vrot.lane.b32.xlu0 %v1094, 64
        %v5702 = vpop.permute.xlu0 %5701
        %5703 = vrot.lane.b32.xlu0 %v1096, 64
        %v5704 = vpop.permute.xlu0 %5703
        %5705 = vrot.lane.b32.xlu0 %v1098, 64
        %v5706 = vpop.permute.xlu0 %5705
        %5707 = vrot.lane.b32.xlu0 %v1100, 64
        %v5708 = vpop.permute.xlu0 %5707
        %5709 = vrot.lane.b32.xlu0 %v1102, 64
        %v5710 = vpop.permute.xlu0 %5709
        %5711 = vrot.lane.b32.xlu0 %v1104, 64
        %v5712 = vpop.permute.xlu0 %5711
        %5713 = vrot.lane.b32.xlu0 %v1106, 64
        %v5714 = vpop.permute.xlu0 %5713
        %5715 = vrot.lane.b32.xlu0 %v1108, 64
        %v5716 = vpop.permute.xlu0 %5715
        %5717 = vrot.lane.b32.xlu0 %v1110, 64
        %v5718 = vpop.permute.xlu0 %5717
        %5719 = vrot.lane.b32.xlu0 %v1112, 64
        %v5720 = vpop.permute.xlu0 %5719
        %5721 = vrot.lane.b32.xlu0 %v1114, 64
        %v5722 = vpop.permute.xlu0 %5721
        %5723 = vrot.lane.b32.xlu0 %v1116, 64
        %v5724 = vpop.permute.xlu0 %5723
        %5725 = vrot.lane.b32.xlu0 %v1118, 64
        %v5726 = vpop.permute.xlu0 %5725
        %5727 = vrot.lane.b32.xlu0 %v1120, 64
        %v5728 = vpop.permute.xlu0 %5727
        %5729 = vrot.lane.b32.xlu0 %v1122, 64
        %v5730 = vpop.permute.xlu0 %5729
        %5731 = vrot.lane.b32.xlu0 %v1124, 64
        %v5732 = vpop.permute.xlu0 %5731
        %5733 = vrot.lane.b32.xlu0 %v1126, 64
        %v5734 = vpop.permute.xlu0 %5733
        %5735 = vrot.lane.b32.xlu0 %v1128, 64
        %v5736 = vpop.permute.xlu0 %5735
        %5737 = vrot.lane.b32.xlu0 %v1130, 64
        %v5738 = vpop.permute.xlu0 %5737
        %5739 = vrot.lane.b32.xlu0 %v1132, 64
        %v5740 = vpop.permute.xlu0 %5739
        %5741 = vrot.lane.b32.xlu0 %v1134, 64
        %v5742 = vpop.permute.xlu0 %5741
        %5743 = vrot.lane.b32.xlu0 %v1136, 64
        %v5744 = vpop.permute.xlu0 %5743
        %5745 = vrot.lane.b32.xlu0 %v1138, 64
        %v5746 = vpop.permute.xlu0 %5745
        %5747 = vrot.lane.b32.xlu0 %v1140, 64
        %v5748 = vpop.permute.xlu0 %5747
        %5749 = vrot.lane.b32.xlu0 %v1142, 64
        %v5750 = vpop.permute.xlu0 %5749
        %5751 = vrot.lane.b32.xlu0 %v1144, 64
        %v5752 = vpop.permute.xlu0 %5751
        %5753 = vrot.lane.b32.xlu0 %v1146, 64
        %v5754 = vpop.permute.xlu0 %5753
        %5755 = vrot.lane.b32.xlu0 %v1148, 64
        %v5756 = vpop.permute.xlu0 %5755
        %5757 = vrot.lane.b32.xlu0 %v1150, 64
        %v5758 = vpop.permute.xlu0 %5757
        %5759 = vrot.lane.b32.xlu0 %v1152, 64
        %v5760 = vpop.permute.xlu0 %5759
        %5761 = vrot.lane.b32.xlu0 %v1154, 64
        %v5762 = vpop.permute.xlu0 %5761
        %5763 = vrot.lane.b32.xlu0 %v1156, 64
        %v5764 = vpop.permute.xlu0 %5763
        %5765 = vrot.lane.b32.xlu0 %v1158, 64
        %v5766 = vpop.permute.xlu0 %5765
        %5767 = vrot.lane.b32.xlu0 %v1160, 64
        %v5768 = vpop.permute.xlu0 %5767
        %5769 = vrot.lane.b32.xlu0 %v1162, 64
        %v5770 = vpop.permute.xlu0 %5769
        %5771 = vrot.lane.b32.xlu0 %v1164, 64
        %v5772 = vpop.permute.xlu0 %5771
        %5773 = vrot.lane.b32.xlu0 %v1166, 64
        %v5774 = vpop.permute.xlu0 %5773
        %5775 = vrot.lane.b32.xlu0 %v1168, 64
        %v5776 = vpop.permute.xlu0 %5775
        %5777 = vrot.lane.b32.xlu0 %v1170, 64
        %v5778 = vpop.permute.xlu0 %5777
        %5779 = vrot.lane.b32.xlu0 %v1172, 64
        %v5780 = vpop.permute.xlu0 %5779
        %5781 = vrot.lane.b32.xlu0 %v1174, 64
        %v5782 = vpop.permute.xlu0 %5781
        %5783 = vrot.lane.b32.xlu0 %v1176, 64
        %v5784 = vpop.permute.xlu0 %5783
        %5785 = vrot.lane.b32.xlu0 %v1178, 64
        %v5786 = vpop.permute.xlu0 %5785
        %5787 = vrot.lane.b32.xlu0 %v1180, 64
        %v5788 = vpop.permute.xlu0 %5787
        %5789 = vrot.lane.b32.xlu0 %v1182, 64
        %v5790 = vpop.permute.xlu0 %5789
        %5791 = vrot.lane.b32.xlu0 %v1184, 64
        %v5792 = vpop.permute.xlu0 %5791
        %5793 = vrot.lane.b32.xlu0 %v1186, 64
        %v5794 = vpop.permute.xlu0 %5793
        %5795 = vrot.lane.b32.xlu0 %v1188, 64
        %v5796 = vpop.permute.xlu0 %5795
        %5797 = vrot.lane.b32.xlu0 %v1190, 64
        %v5798 = vpop.permute.xlu0 %5797
        %5799 = vrot.lane.b32.xlu0 %v1192, 64
        %v5800 = vpop.permute.xlu0 %5799
        %5801 = vrot.lane.b32.xlu0 %v1194, 64
        %v5802 = vpop.permute.xlu0 %5801
        %5803 = vrot.lane.b32.xlu0 %v1196, 64
        %v5804 = vpop.permute.xlu0 %5803
        %5805 = vrot.lane.b32.xlu0 %v1198, 64
        %v5806 = vpop.permute.xlu0 %5805
        %5807 = vrot.lane.b32.xlu0 %v1200, 64
        %v5808 = vpop.permute.xlu0 %5807
        %5809 = vrot.lane.b32.xlu0 %v1202, 64
        %v5810 = vpop.permute.xlu0 %5809
        %5811 = vrot.lane.b32.xlu0 %v1204, 64
        %v5812 = vpop.permute.xlu0 %5811
        %5813 = vrot.lane.b32.xlu0 %v1206, 64
        %v5814 = vpop.permute.xlu0 %5813
        %5815 = vrot.lane.b32.xlu0 %v1208, 64
        %v5816 = vpop.permute.xlu0 %5815
        %5817 = vrot.lane.b32.xlu0 %v1210, 64
        %v5818 = vpop.permute.xlu0 %5817
        %5819 = vrot.lane.b32.xlu0 %v1212, 64
        %v5820 = vpop.permute.xlu0 %5819
        %5821 = vrot.lane.b32.xlu0 %v1214, 64
        %v5822 = vpop.permute.xlu0 %5821
        %5823 = vrot.lane.b32.xlu0 %v1216, 64
        %v5824 = vpop.permute.xlu0 %5823
        %5825 = vrot.lane.b32.xlu0 %v1218, 64
        %v5826 = vpop.permute.xlu0 %5825
        %5827 = vrot.lane.b32.xlu0 %v1220, 64
        %v5828 = vpop.permute.xlu0 %5827
        %5829 = vrot.lane.b32.xlu0 %v1222, 64
        %v5830 = vpop.permute.xlu0 %5829
        %5831 = vrot.lane.b32.xlu0 %v1224, 64
        %v5832 = vpop.permute.xlu0 %5831
        %5833 = vrot.lane.b32.xlu0 %v1226, 64
        %v5834 = vpop.permute.xlu0 %5833
        %5835 = vrot.lane.b32.xlu0 %v1228, 64
        %v5836 = vpop.permute.xlu0 %5835
        %5837 = vrot.lane.b32.xlu0 %v1230, 64
        %v5838 = vpop.permute.xlu0 %5837
        %5839 = vrot.lane.b32.xlu0 %v1232, 64
        %v5840 = vpop.permute.xlu0 %5839
        %5841 = vrot.lane.b32.xlu0 %v1234, 64
        %v5842 = vpop.permute.xlu0 %5841
        %5843 = vrot.lane.b32.xlu0 %v1236, 64
        %v5844 = vpop.permute.xlu0 %5843
        %5845 = vrot.lane.b32.xlu0 %v1238, 64
        %v5846 = vpop.permute.xlu0 %5845
        %5847 = vrot.lane.b32.xlu0 %v1240, 64
        %v5848 = vpop.permute.xlu0 %5847
        %5849 = vrot.lane.b32.xlu0 %v1242, 64
        %v5850 = vpop.permute.xlu0 %5849
        %5851 = vrot.lane.b32.xlu0 %v1244, 64
        %v5852 = vpop.permute.xlu0 %5851
        %5853 = vrot.lane.b32.xlu0 %v1246, 64
        %v5854 = vpop.permute.xlu0 %5853
        %5855 = vrot.lane.b32.xlu0 %v1248, 64
        %v5856 = vpop.permute.xlu0 %5855
        %5857 = vrot.lane.b32.xlu0 %v1250, 64
        %v5858 = vpop.permute.xlu0 %5857
        %5859 = vrot.lane.b32.xlu0 %v1252, 64
        %v5860 = vpop.permute.xlu0 %5859
        %5861 = vrot.lane.b32.xlu0 %v1254, 64
        %v5862 = vpop.permute.xlu0 %5861
        %5863 = vrot.lane.b32.xlu0 %v1256, 64
        %v5864 = vpop.permute.xlu0 %5863
        %5865 = vrot.lane.b32.xlu0 %v1258, 64
        %v5866 = vpop.permute.xlu0 %5865
        %5867 = vrot.lane.b32.xlu0 %v1260, 64
        %v5868 = vpop.permute.xlu0 %5867
        %v6381 = vadd.f32 %v3821, %v4846
        %v6382 = vadd.f32 %v3822, %v4848
        %v6383 = vadd.f32 %v3823, %v4850
        %v6384 = vadd.f32 %v3824, %v4852
        %v6385 = vadd.f32 %v3825, %v4854
        %v6386 = vadd.f32 %v3826, %v4856
        %v6387 = vadd.f32 %v3827, %v4858
        %v6388 = vadd.f32 %v3828, %v4860
        %v6389 = vadd.f32 %v3829, %v4862
        %v6390 = vadd.f32 %v3830, %v4864
        %v6391 = vadd.f32 %v3831, %v4866
        %v6392 = vadd.f32 %v3832, %v4868
        %v6393 = vadd.f32 %v3833, %v4870
        %v6394 = vadd.f32 %v3834, %v4872
        %v6395 = vadd.f32 %v3835, %v4874
        %v6396 = vadd.f32 %v3836, %v4876
        %v6397 = vadd.f32 %v3837, %v4878
        %v6398 = vadd.f32 %v3838, %v4880
        %v6399 = vadd.f32 %v3839, %v4882
        %v6400 = vadd.f32 %v3840, %v4884
        %v6401 = vadd.f32 %v3841, %v4886
        %v6402 = vadd.f32 %v3842, %v4888
        %v6403 = vadd.f32 %v3843, %v4890
        %v6404 = vadd.f32 %v3844, %v4892
        %v6405 = vadd.f32 %v3845, %v4894
        %v6406 = vadd.f32 %v3846, %v4896
        %v6407 = vadd.f32 %v3847, %v4898
        %v6408 = vadd.f32 %v3848, %v4900
        %v6409 = vadd.f32 %v3849, %v4902
        %v6410 = vadd.f32 %v3850, %v4904
        %v6411 = vadd.f32 %v3851, %v4906
        %v6412 = vadd.f32 %v3852, %v4908
        %v6413 = vadd.f32 %v3853, %v4910
        %v6414 = vadd.f32 %v3854, %v4912
        %v6415 = vadd.f32 %v3855, %v4914
        %v6416 = vadd.f32 %v3856, %v4916
        %v6417 = vadd.f32 %v3857, %v4918
        %v6418 = vadd.f32 %v3858, %v4920
        %v6419 = vadd.f32 %v3859, %v4922
        %v6420 = vadd.f32 %v3860, %v4924
        %v6421 = vadd.f32 %v3861, %v4926
        %v6422 = vadd.f32 %v3862, %v4928
        %v6423 = vadd.f32 %v3863, %v4930
        %v6424 = vadd.f32 %v3864, %v4932
        %v6425 = vadd.f32 %v3865, %v4934
        %v6426 = vadd.f32 %v3866, %v4936
        %v6427 = vadd.f32 %v3867, %v4938
        %v6428 = vadd.f32 %v3868, %v4940
        %v6429 = vadd.f32 %v3869, %v4942
        %v6430 = vadd.f32 %v3870, %v4944
        %v6431 = vadd.f32 %v3871, %v4946
        %v6432 = vadd.f32 %v3872, %v4948
        %v6433 = vadd.f32 %v3873, %v4950
        %v6434 = vadd.f32 %v3874, %v4952
        %v6435 = vadd.f32 %v3875, %v4954
        %v6436 = vadd.f32 %v3876, %v4956
        %v6437 = vadd.f32 %v3877, %v4958
        %v6438 = vadd.f32 %v3878, %v4960
        %v6439 = vadd.f32 %v3879, %v4962
        %v6440 = vadd.f32 %v3880, %v4964
        %v6441 = vadd.f32 %v3881, %v4966
        %v6442 = vadd.f32 %v3882, %v4968
        %v6443 = vadd.f32 %v3883, %v4970
        %v6444 = vadd.f32 %v3884, %v4972
        %v6445 = vadd.f32 %v3885, %v4974
        %v6446 = vadd.f32 %v3886, %v4976
        %v6447 = vadd.f32 %v3887, %v4978
        %v6448 = vadd.f32 %v3888, %v4980
        %v6449 = vadd.f32 %v3889, %v4982
        %v6450 = vadd.f32 %v3890, %v4984
        %v6451 = vadd.f32 %v3891, %v4986
        %v6452 = vadd.f32 %v3892, %v4988
        %v6453 = vadd.f32 %v3893, %v4990
        %v6454 = vadd.f32 %v3894, %v4992
        %v6455 = vadd.f32 %v3895, %v4994
        %v6456 = vadd.f32 %v3896, %v4996
        %v6457 = vadd.f32 %v3897, %v4998
        %v6458 = vadd.f32 %v3898, %v5000
        %v6459 = vadd.f32 %v3899, %v5002
        %v6460 = vadd.f32 %v3900, %v5004
        %v6461 = vadd.f32 %v3901, %v5006
        %v6462 = vadd.f32 %v3902, %v5008
        %v6463 = vadd.f32 %v3903, %v5010
        %v6464 = vadd.f32 %v3904, %v5012
        %v6465 = vadd.f32 %v3905, %v5014
        %v6466 = vadd.f32 %v3906, %v5016
        %v6467 = vadd.f32 %v3907, %v5018
        %v6468 = vadd.f32 %v3908, %v5020
        %v6469 = vadd.f32 %v3909, %v5022
        %v6470 = vadd.f32 %v3910, %v5024
        %v6471 = vadd.f32 %v3911, %v5026
        %v6472 = vadd.f32 %v3912, %v5028
        %v6473 = vadd.f32 %v3913, %v5030
        %v6474 = vadd.f32 %v3914, %v5032
        %v6475 = vadd.f32 %v3915, %v5034
        %v6476 = vadd.f32 %v3916, %v5036
        %v6477 = vadd.f32 %v3917, %v5038
        %v6478 = vadd.f32 %v3918, %v5040
        %v6479 = vadd.f32 %v3919, %v5042
        %v6480 = vadd.f32 %v3920, %v5044
        %v6481 = vadd.f32 %v3921, %v5046
        %v6482 = vadd.f32 %v3922, %v5048
        %v6483 = vadd.f32 %v3923, %v5050
        %v6484 = vadd.f32 %v3924, %v5052
        %v6485 = vadd.f32 %v3925, %v5054
        %v6486 = vadd.f32 %v3926, %v5056
        %v6487 = vadd.f32 %v3927, %v5058
        %v6488 = vadd.f32 %v3928, %v5060
        %v6489 = vadd.f32 %v3929, %v5062
        %v6490 = vadd.f32 %v3930, %v5064
        %v6491 = vadd.f32 %v3931, %v5066
        %v6492 = vadd.f32 %v3932, %v5068
        %v6493 = vadd.f32 %v3933, %v5070
        %v6494 = vadd.f32 %v3934, %v5072
        %v6495 = vadd.f32 %v3935, %v5074
        %v6496 = vadd.f32 %v3936, %v5076
        %v6497 = vadd.f32 %v3937, %v5078
        %v6498 = vadd.f32 %v3938, %v5080
        %v6499 = vadd.f32 %v3939, %v5082
        %v6500 = vadd.f32 %v3940, %v5084
        %v6501 = vadd.f32 %v3941, %v5086
        %v6502 = vadd.f32 %v3942, %v5088
        %v6503 = vadd.f32 %v3943, %v5090
        %v6504 = vadd.f32 %v3944, %v5092
        %v6505 = vadd.f32 %v3945, %v5094
        %v6506 = vadd.f32 %v3946, %v5096
        %v6507 = vadd.f32 %v3947, %v5098
        %v6508 = vadd.f32 %v3948, %v5100
        %v6509 = vadd.f32 %v3949, %v5102
        %v6510 = vadd.f32 %v3950, %v5104
        %v6511 = vadd.f32 %v3951, %v5106
        %v6512 = vadd.f32 %v3952, %v5108
        %v6513 = vadd.f32 %v3953, %v5110
        %v6514 = vadd.f32 %v3954, %v5112
        %v6515 = vadd.f32 %v3955, %v5114
        %v6516 = vadd.f32 %v3956, %v5116
        %v6517 = vadd.f32 %v3957, %v5118
        %v6518 = vadd.f32 %v3958, %v5120
        %v6519 = vadd.f32 %v3959, %v5122
        %v6520 = vadd.f32 %v3960, %v5124
        %v6521 = vadd.f32 %v3961, %v5126
        %v6522 = vadd.f32 %v3962, %v5128
        %v6523 = vadd.f32 %v3963, %v5130
        %v6524 = vadd.f32 %v3964, %v5132
        %v6525 = vadd.f32 %v3965, %v5134
        %v6526 = vadd.f32 %v3966, %v5136
        %v6527 = vadd.f32 %v3967, %v5138
        %v6528 = vadd.f32 %v3968, %v5140
        %v6529 = vadd.f32 %v3969, %v5142
        %v6530 = vadd.f32 %v3970, %v5144
        %v6531 = vadd.f32 %v3971, %v5146
        %v6532 = vadd.f32 %v3972, %v5148
        %v6533 = vadd.f32 %v3973, %v5150
        %v6534 = vadd.f32 %v3974, %v5152
        %v6535 = vadd.f32 %v3975, %v5154
        %v6536 = vadd.f32 %v3976, %v5156
        %v6537 = vadd.f32 %v3977, %v5158
        %v6538 = vadd.f32 %v3978, %v5160
        %v6539 = vadd.f32 %v3979, %v5162
        %v6540 = vadd.f32 %v3980, %v5164
        %v6541 = vadd.f32 %v3981, %v5166
        %v6542 = vadd.f32 %v3982, %v5168
        %v6543 = vadd.f32 %v3983, %v5170
        %v6544 = vadd.f32 %v3984, %v5172
        %v6545 = vadd.f32 %v3985, %v5174
        %v6546 = vadd.f32 %v3986, %v5176
        %v6547 = vadd.f32 %v3987, %v5178
        %v6548 = vadd.f32 %v3988, %v5180
        %v6549 = vadd.f32 %v3989, %v5182
        %v6550 = vadd.f32 %v3990, %v5184
        %v6551 = vadd.f32 %v3991, %v5186
        %v6552 = vadd.f32 %v3992, %v5188
        %v6553 = vadd.f32 %v3993, %v5190
        %v6554 = vadd.f32 %v3994, %v5192
        %v6555 = vadd.f32 %v3995, %v5194
        %v6556 = vadd.f32 %v3996, %v5196
        %v6557 = vadd.f32 %v3997, %v5198
        %v6558 = vadd.f32 %v3998, %v5200
        %v6559 = vadd.f32 %v3999, %v5202
        %v6560 = vadd.f32 %v4000, %v5204
        %v6561 = vadd.f32 %v4001, %v5206
        %v6562 = vadd.f32 %v4002, %v5208
        %v6563 = vadd.f32 %v4003, %v5210
        %v6564 = vadd.f32 %v4004, %v5212
        %v6565 = vadd.f32 %v4005, %v5214
        %v6566 = vadd.f32 %v4006, %v5216
        %v6567 = vadd.f32 %v4007, %v5218
        %v6568 = vadd.f32 %v4008, %v5220
        %v6569 = vadd.f32 %v4009, %v5222
        %v6570 = vadd.f32 %v4010, %v5224
        %v6571 = vadd.f32 %v4011, %v5226
        %v6572 = vadd.f32 %v4012, %v5228
        %v6573 = vadd.f32 %v4013, %v5230
        %v6574 = vadd.f32 %v4014, %v5232
        %v6575 = vadd.f32 %v4015, %v5234
        %v6576 = vadd.f32 %v4016, %v5236
        %v6577 = vadd.f32 %v4017, %v5238
        %v6578 = vadd.f32 %v4018, %v5240
        %v6579 = vadd.f32 %v4019, %v5242
        %v6580 = vadd.f32 %v4020, %v5244
        %v6581 = vadd.f32 %v4021, %v5246
        %v6582 = vadd.f32 %v4022, %v5248
        %v6583 = vadd.f32 %v4023, %v5250
        %v6584 = vadd.f32 %v4024, %v5252
        %v6585 = vadd.f32 %v4025, %v5254
        %v6586 = vadd.f32 %v4026, %v5256
        %v6587 = vadd.f32 %v4027, %v5258
        %v6588 = vadd.f32 %v4028, %v5260
        %v6589 = vadd.f32 %v4029, %v5262
        %v6590 = vadd.f32 %v4030, %v5264
        %v6591 = vadd.f32 %v4031, %v5266
        %v6592 = vadd.f32 %v4032, %v5268
        %v6593 = vadd.f32 %v4033, %v5270
        %v6594 = vadd.f32 %v4034, %v5272
        %v6595 = vadd.f32 %v4035, %v5274
        %v6596 = vadd.f32 %v4036, %v5276
        %v6597 = vadd.f32 %v4037, %v5278
        %v6598 = vadd.f32 %v4038, %v5280
        %v6599 = vadd.f32 %v4039, %v5282
        %v6600 = vadd.f32 %v4040, %v5284
        %v6601 = vadd.f32 %v4041, %v5286
        %v6602 = vadd.f32 %v4042, %v5288
        %v6603 = vadd.f32 %v4043, %v5290
        %v6604 = vadd.f32 %v4044, %v5292
        %v6605 = vadd.f32 %v4045, %v5294
        %v6606 = vadd.f32 %v4046, %v5296
        %v6607 = vadd.f32 %v4047, %v5298
        %v6608 = vadd.f32 %v4048, %v5300
        %v6609 = vadd.f32 %v4049, %v5302
        %v6610 = vadd.f32 %v4050, %v5304
        %v6611 = vadd.f32 %v4051, %v5306
        %v6612 = vadd.f32 %v4052, %v5308
        %v6613 = vadd.f32 %v4053, %v5310
        %v6614 = vadd.f32 %v4054, %v5312
        %v6615 = vadd.f32 %v4055, %v5314
        %v6616 = vadd.f32 %v4056, %v5316
        %v6617 = vadd.f32 %v4057, %v5318
        %v6618 = vadd.f32 %v4058, %v5320
        %v6619 = vadd.f32 %v4059, %v5322
        %v6620 = vadd.f32 %v4060, %v5324
        %v6621 = vadd.f32 %v4061, %v5326
        %v6622 = vadd.f32 %v4062, %v5328
        %v6623 = vadd.f32 %v4063, %v5330
        %v6624 = vadd.f32 %v4064, %v5332
        %v6625 = vadd.f32 %v4065, %v5334
        %v6626 = vadd.f32 %v4066, %v5336
        %v6627 = vadd.f32 %v4067, %v5338
        %v6628 = vadd.f32 %v4068, %v5340
        %v6629 = vadd.f32 %v4069, %v5342
        %v6630 = vadd.f32 %v4070, %v5344
        %v6631 = vadd.f32 %v4071, %v5346
        %v6632 = vadd.f32 %v4072, %v5348
        %v6633 = vadd.f32 %v4073, %v5350
        %v6634 = vadd.f32 %v4074, %v5352
        %v6635 = vadd.f32 %v4075, %v5354
        %v6636 = vadd.f32 %v4076, %v5356
        %v6637 = vadd.f32 %v4077, %v5358
        %v6638 = vadd.f32 %v4078, %v5360
        %v6639 = vadd.f32 %v4079, %v5362
        %v6640 = vadd.f32 %v4080, %v5364
        %v6641 = vadd.f32 %v4081, %v5366
        %v6642 = vadd.f32 %v4082, %v5368
        %v6643 = vadd.f32 %v4083, %v5370
        %v6644 = vadd.f32 %v4084, %v5372
        %v6645 = vadd.f32 %v4085, %v5374
        %v6646 = vadd.f32 %v4086, %v5376
        %v6647 = vadd.f32 %v4087, %v5378
        %v6648 = vadd.f32 %v4088, %v5380
        %v6649 = vadd.f32 %v4089, %v5382
        %v6650 = vadd.f32 %v4090, %v5384
        %v6651 = vadd.f32 %v4091, %v5386
        %v6652 = vadd.f32 %v4092, %v5388
        %v6653 = vadd.f32 %v4093, %v5390
        %v6654 = vadd.f32 %v4094, %v5392
        %v6655 = vadd.f32 %v4095, %v5394
        %v6656 = vadd.f32 %v4096, %v5396
        %v6657 = vadd.f32 %v4097, %v5398
        %v6658 = vadd.f32 %v4098, %v5400
        %v6659 = vadd.f32 %v4099, %v5402
        %v6660 = vadd.f32 %v4100, %v5404
        %v6661 = vadd.f32 %v4101, %v5406
        %v6662 = vadd.f32 %v4102, %v5408
        %v6663 = vadd.f32 %v4103, %v5410
        %v6664 = vadd.f32 %v4104, %v5412
        %v6665 = vadd.f32 %v4105, %v5414
        %v6666 = vadd.f32 %v4106, %v5416
        %v6667 = vadd.f32 %v4107, %v5418
        %v6668 = vadd.f32 %v4108, %v5420
        %v6669 = vadd.f32 %v4109, %v5422
        %v6670 = vadd.f32 %v4110, %v5424
        %v6671 = vadd.f32 %v4111, %v5426
        %v6672 = vadd.f32 %v4112, %v5428
        %v6673 = vadd.f32 %v4113, %v5430
        %v6674 = vadd.f32 %v4114, %v5432
        %v6675 = vadd.f32 %v4115, %v5434
        %v6676 = vadd.f32 %v4116, %v5436
        %v6677 = vadd.f32 %v4117, %v5438
        %v6678 = vadd.f32 %v4118, %v5440
        %v6679 = vadd.f32 %v4119, %v5442
        %v6680 = vadd.f32 %v4120, %v5444
        %v6681 = vadd.f32 %v4121, %v5446
        %v6682 = vadd.f32 %v4122, %v5448
        %v6683 = vadd.f32 %v4123, %v5450
        %v6684 = vadd.f32 %v4124, %v5452
        %v6685 = vadd.f32 %v4125, %v5454
        %v6686 = vadd.f32 %v4126, %v5456
        %v6687 = vadd.f32 %v4127, %v5458
        %v6688 = vadd.f32 %v4128, %v5460
        %v6689 = vadd.f32 %v4129, %v5462
        %v6690 = vadd.f32 %v4130, %v5464
        %v6691 = vadd.f32 %v4131, %v5466
        %v6692 = vadd.f32 %v4132, %v5468
        %v6693 = vadd.f32 %v4133, %v5470
        %v6694 = vadd.f32 %v4134, %v5472
        %v6695 = vadd.f32 %v4135, %v5474
        %v6696 = vadd.f32 %v4136, %v5476
        %v6697 = vadd.f32 %v4137, %v5478
        %v6698 = vadd.f32 %v4138, %v5480
        %v6699 = vadd.f32 %v4139, %v5482
        %v6700 = vadd.f32 %v4140, %v5484
        %v6701 = vadd.f32 %v4141, %v5486
        %v6702 = vadd.f32 %v4142, %v5488
        %v6703 = vadd.f32 %v4143, %v5490
        %v6704 = vadd.f32 %v4144, %v5492
        %v6705 = vadd.f32 %v4145, %v5494
        %v6706 = vadd.f32 %v4146, %v5496
        %v6707 = vadd.f32 %v4147, %v5498
        %v6708 = vadd.f32 %v4148, %v5500
        %v6709 = vadd.f32 %v4149, %v5502
        %v6710 = vadd.f32 %v4150, %v5504
        %v6711 = vadd.f32 %v4151, %v5506
        %v6712 = vadd.f32 %v4152, %v5508
        %v6713 = vadd.f32 %v4153, %v5510
        %v6714 = vadd.f32 %v4154, %v5512
        %v6715 = vadd.f32 %v4155, %v5514
        %v6716 = vadd.f32 %v4156, %v5516
        %v6717 = vadd.f32 %v4157, %v5518
        %v6718 = vadd.f32 %v4158, %v5520
        %v6719 = vadd.f32 %v4159, %v5522
        %v6720 = vadd.f32 %v4160, %v5524
        %v6721 = vadd.f32 %v4161, %v5526
        %v6722 = vadd.f32 %v4162, %v5528
        %v6723 = vadd.f32 %v4163, %v5530
        %v6724 = vadd.f32 %v4164, %v5532
        %v6725 = vadd.f32 %v4165, %v5534
        %v6726 = vadd.f32 %v4166, %v5536
        %v6727 = vadd.f32 %v4167, %v5538
        %v6728 = vadd.f32 %v4168, %v5540
        %v6729 = vadd.f32 %v4169, %v5542
        %v6730 = vadd.f32 %v4170, %v5544
        %v6731 = vadd.f32 %v4171, %v5546
        %v6732 = vadd.f32 %v4172, %v5548
        %v6733 = vadd.f32 %v4173, %v5550
        %v6734 = vadd.f32 %v4174, %v5552
        %v6735 = vadd.f32 %v4175, %v5554
        %v6736 = vadd.f32 %v4176, %v5556
        %v6737 = vadd.f32 %v4177, %v5558
        %v6738 = vadd.f32 %v4178, %v5560
        %v6739 = vadd.f32 %v4179, %v5562
        %v6740 = vadd.f32 %v4180, %v5564
        %v6741 = vadd.f32 %v4181, %v5566
        %v6742 = vadd.f32 %v4182, %v5568
        %v6743 = vadd.f32 %v4183, %v5570
        %v6744 = vadd.f32 %v4184, %v5572
        %v6745 = vadd.f32 %v4185, %v5574
        %v6746 = vadd.f32 %v4186, %v5576
        %v6747 = vadd.f32 %v4187, %v5578
        %v6748 = vadd.f32 %v4188, %v5580
        %v6749 = vadd.f32 %v4189, %v5582
        %v6750 = vadd.f32 %v4190, %v5584
        %v6751 = vadd.f32 %v4191, %v5586
        %v6752 = vadd.f32 %v4192, %v5588
        %v6753 = vadd.f32 %v4193, %v5590
        %v6754 = vadd.f32 %v4194, %v5592
        %v6755 = vadd.f32 %v4195, %v5594
        %v6756 = vadd.f32 %v4196, %v5596
        %v6757 = vadd.f32 %v4197, %v5598
        %v6758 = vadd.f32 %v4198, %v5600
        %v6759 = vadd.f32 %v4199, %v5602
        %v6760 = vadd.f32 %v4200, %v5604
        %v6761 = vadd.f32 %v4201, %v5606
        %v6762 = vadd.f32 %v4202, %v5608
        %v6763 = vadd.f32 %v4203, %v5610
        %v6764 = vadd.f32 %v4204, %v5612
        %v6765 = vadd.f32 %v4205, %v5614
        %v6766 = vadd.f32 %v4206, %v5616
        %v6767 = vadd.f32 %v4207, %v5618
        %v6768 = vadd.f32 %v4208, %v5620
        %v6769 = vadd.f32 %v4209, %v5622
        %v6770 = vadd.f32 %v4210, %v5624
        %v6771 = vadd.f32 %v4211, %v5626
        %v6772 = vadd.f32 %v4212, %v5628
        %v6773 = vadd.f32 %v4213, %v5630
        %v6774 = vadd.f32 %v4214, %v5632
        %v6775 = vadd.f32 %v4215, %v5634
        %v6776 = vadd.f32 %v4216, %v5636
        %v6777 = vadd.f32 %v4217, %v5638
        %v6778 = vadd.f32 %v4218, %v5640
        %v6779 = vadd.f32 %v4219, %v5642
        %v6780 = vadd.f32 %v4220, %v5644
        %v6781 = vadd.f32 %v4221, %v5646
        %v6782 = vadd.f32 %v4222, %v5648
        %v6783 = vadd.f32 %v4223, %v5650
        %v6784 = vadd.f32 %v4224, %v5652
        %v6785 = vadd.f32 %v4225, %v5654
        %v6786 = vadd.f32 %v4226, %v5656
        %v6787 = vadd.f32 %v4227, %v5658
        %v6788 = vadd.f32 %v4228, %v5660
        %v6789 = vadd.f32 %v4229, %v5662
        %v6790 = vadd.f32 %v4230, %v5664
        %v6791 = vadd.f32 %v4231, %v5666
        %v6792 = vadd.f32 %v4232, %v5668
        %v6793 = vadd.f32 %v4233, %v5670
        %v6794 = vadd.f32 %v4234, %v5672
        %v6795 = vadd.f32 %v4235, %v5674
        %v6796 = vadd.f32 %v4236, %v5676
        %v6797 = vadd.f32 %v4237, %v5678
        %v6798 = vadd.f32 %v4238, %v5680
        %v6799 = vadd.f32 %v4239, %v5682
        %v6800 = vadd.f32 %v4240, %v5684
        %v6801 = vadd.f32 %v4241, %v5686
        %v6802 = vadd.f32 %v4242, %v5688
        %v6803 = vadd.f32 %v4243, %v5690
        %v6804 = vadd.f32 %v4244, %v5692
        %v6805 = vadd.f32 %v4245, %v5694
        %v6806 = vadd.f32 %v4246, %v5696
        %v6807 = vadd.f32 %v4247, %v5698
        %v6808 = vadd.f32 %v4248, %v5700
        %v6809 = vadd.f32 %v4249, %v5702
        %v6810 = vadd.f32 %v4250, %v5704
        %v6811 = vadd.f32 %v4251, %v5706
        %v6812 = vadd.f32 %v4252, %v5708
        %v6813 = vadd.f32 %v4253, %v5710
        %v6814 = vadd.f32 %v4254, %v5712
        %v6815 = vadd.f32 %v4255, %v5714
        %v6816 = vadd.f32 %v4256, %v5716
        %v6817 = vadd.f32 %v4257, %v5718
        %v6818 = vadd.f32 %v4258, %v5720
        %v6819 = vadd.f32 %v4259, %v5722
        %v6820 = vadd.f32 %v4260, %v5724
        %v6821 = vadd.f32 %v4261, %v5726
        %v6822 = vadd.f32 %v4262, %v5728
        %v6823 = vadd.f32 %v4263, %v5730
        %v6824 = vadd.f32 %v4264, %v5732
        %v6825 = vadd.f32 %v4265, %v5734
        %v6826 = vadd.f32 %v4266, %v5736
        %v6827 = vadd.f32 %v4267, %v5738
        %v6828 = vadd.f32 %v4268, %v5740
        %v6829 = vadd.f32 %v4269, %v5742
        %v6830 = vadd.f32 %v4270, %v5744
        %v6831 = vadd.f32 %v4271, %v5746
        %v6832 = vadd.f32 %v4272, %v5748
        %v6833 = vadd.f32 %v4273, %v5750
        %v6834 = vadd.f32 %v4274, %v5752
        %v6835 = vadd.f32 %v4275, %v5754
        %v6836 = vadd.f32 %v4276, %v5756
        %v6837 = vadd.f32 %v4277, %v5758
        %v6838 = vadd.f32 %v4278, %v5760
        %v6839 = vadd.f32 %v4279, %v5762
        %v6840 = vadd.f32 %v4280, %v5764
        %v6841 = vadd.f32 %v4281, %v5766
        %v6842 = vadd.f32 %v4282, %v5768
        %v6843 = vadd.f32 %v4283, %v5770
        %v6844 = vadd.f32 %v4284, %v5772
        %v6845 = vadd.f32 %v4285, %v5774
        %v6846 = vadd.f32 %v4286, %v5776
        %v6847 = vadd.f32 %v4287, %v5778
        %v6848 = vadd.f32 %v4288, %v5780
        %v6849 = vadd.f32 %v4289, %v5782
        %v6850 = vadd.f32 %v4290, %v5784
        %v6851 = vadd.f32 %v4291, %v5786
        %v6852 = vadd.f32 %v4292, %v5788
        %v6853 = vadd.f32 %v4293, %v5790
        %v6854 = vadd.f32 %v4294, %v5792
        %v6855 = vadd.f32 %v4295, %v5794
        %v6856 = vadd.f32 %v4296, %v5796
        %v6857 = vadd.f32 %v4297, %v5798
        %v6858 = vadd.f32 %v4298, %v5800
        %v6859 = vadd.f32 %v4299, %v5802
        %v6860 = vadd.f32 %v4300, %v5804
        %v6861 = vadd.f32 %v4301, %v5806
        %v6862 = vadd.f32 %v4302, %v5808
        %v6863 = vadd.f32 %v4303, %v5810
        %v6864 = vadd.f32 %v4304, %v5812
        %v6865 = vadd.f32 %v4305, %v5814
        %v6866 = vadd.f32 %v4306, %v5816
        %v6867 = vadd.f32 %v4307, %v5818
        %v6868 = vadd.f32 %v4308, %v5820
        %v6869 = vadd.f32 %v4309, %v5822
        %v6870 = vadd.f32 %v4310, %v5824
        %v6871 = vadd.f32 %v4311, %v5826
        %v6872 = vadd.f32 %v4312, %v5828
        %v6873 = vadd.f32 %v4313, %v5830
        %v6874 = vadd.f32 %v4314, %v5832
        %v6875 = vadd.f32 %v4315, %v5834
        %v6876 = vadd.f32 %v4316, %v5836
        %v6877 = vadd.f32 %v4317, %v5838
        %v6878 = vadd.f32 %v4318, %v5840
        %v6879 = vadd.f32 %v4319, %v5842
        %v6880 = vadd.f32 %v4320, %v5844
        %v6881 = vadd.f32 %v4321, %v5846
        %v6882 = vadd.f32 %v4322, %v5848
        %v6883 = vadd.f32 %v4323, %v5850
        %v6884 = vadd.f32 %v4324, %v5852
        %v6885 = vadd.f32 %v4325, %v5854
        %v6886 = vadd.f32 %v4326, %v5856
        %v6887 = vadd.f32 %v4327, %v5858
        %v6888 = vadd.f32 %v4328, %v5860
        %v6889 = vadd.f32 %v4329, %v5862
        %v6890 = vadd.f32 %v4330, %v5864
        %v6891 = vadd.f32 %v4331, %v5866
        %v6892 = vadd.f32 %v4332, %v5868
        %v6893 = vmul.f32 %v6381, 0.25
        %v6894 = vmul.f32 %v6382, 0.25
        %v6895 = vmul.f32 %v6383, 0.25
        %v6896 = vmul.f32 %v6384, 0.25
        %v6897 = vmul.f32 %v6385, 0.25
        %v6898 = vmul.f32 %v6386, 0.25
        %v6899 = vmul.f32 %v6387, 0.25
        %v6900 = vmul.f32 %v6388, 0.25
        %v6901 = vmul.f32 %v6389, 0.25
        %v6902 = vmul.f32 %v6390, 0.25
        %v6903 = vmul.f32 %v6391, 0.25
        %v6904 = vmul.f32 %v6392, 0.25
        %v6905 = vmul.f32 %v6393, 0.25
        %v6906 = vmul.f32 %v6394, 0.25
        %v6907 = vmul.f32 %v6395, 0.25
        %v6908 = vmul.f32 %v6396, 0.25
        %v6909 = vmul.f32 %v6397, 0.25
        %v6910 = vmul.f32 %v6398, 0.25
        %v6911 = vmul.f32 %v6399, 0.25
        %v6912 = vmul.f32 %v6400, 0.25
        %v6913 = vmul.f32 %v6401, 0.25
        %v6914 = vmul.f32 %v6402, 0.25
        %v6915 = vmul.f32 %v6403, 0.25
        %v6916 = vmul.f32 %v6404, 0.25
        %v6917 = vmul.f32 %v6405, 0.25
        %v6918 = vmul.f32 %v6406, 0.25
        %v6919 = vmul.f32 %v6407, 0.25
        %v6920 = vmul.f32 %v6408, 0.25
        %v6921 = vmul.f32 %v6409, 0.25
        %v6922 = vmul.f32 %v6410, 0.25
        %v6923 = vmul.f32 %v6411, 0.25
        %v6924 = vmul.f32 %v6412, 0.25
        %v6925 = vmul.f32 %v6413, 0.25
        %v6926 = vmul.f32 %v6414, 0.25
        %v6927 = vmul.f32 %v6415, 0.25
        %v6928 = vmul.f32 %v6416, 0.25
        %v6929 = vmul.f32 %v6417, 0.25
        %v6930 = vmul.f32 %v6418, 0.25
        %v6931 = vmul.f32 %v6419, 0.25
        %v6932 = vmul.f32 %v6420, 0.25
        %v6933 = vmul.f32 %v6421, 0.25
        %v6934 = vmul.f32 %v6422, 0.25
        %v6935 = vmul.f32 %v6423, 0.25
        %v6936 = vmul.f32 %v6424, 0.25
        %v6937 = vmul.f32 %v6425, 0.25
        %v6938 = vmul.f32 %v6426, 0.25
        %v6939 = vmul.f32 %v6427, 0.25
        %v6940 = vmul.f32 %v6428, 0.25
        %v6941 = vmul.f32 %v6429, 0.25
        %v6942 = vmul.f32 %v6430, 0.25
        %v6943 = vmul.f32 %v6431, 0.25
        %v6944 = vmul.f32 %v6432, 0.25
        %v6945 = vmul.f32 %v6433, 0.25
        %v6946 = vmul.f32 %v6434, 0.25
        %v6947 = vmul.f32 %v6435, 0.25
        %v6948 = vmul.f32 %v6436, 0.25
        %v6949 = vmul.f32 %v6437, 0.25
        %v6950 = vmul.f32 %v6438, 0.25
        %v6951 = vmul.f32 %v6439, 0.25
        %v6952 = vmul.f32 %v6440, 0.25
        %v6953 = vmul.f32 %v6441, 0.25
        %v6954 = vmul.f32 %v6442, 0.25
        %v6955 = vmul.f32 %v6443, 0.25
        %v6956 = vmul.f32 %v6444, 0.25
        %v6957 = vmul.f32 %v6445, 0.25
        %v6958 = vmul.f32 %v6446, 0.25
        %v6959 = vmul.f32 %v6447, 0.25
        %v6960 = vmul.f32 %v6448, 0.25
        %v6961 = vmul.f32 %v6449, 0.25
        %v6962 = vmul.f32 %v6450, 0.25
        %v6963 = vmul.f32 %v6451, 0.25
        %v6964 = vmul.f32 %v6452, 0.25
        %v6965 = vmul.f32 %v6453, 0.25
        %v6966 = vmul.f32 %v6454, 0.25
        %v6967 = vmul.f32 %v6455, 0.25
        %v6968 = vmul.f32 %v6456, 0.25
        %v6969 = vmul.f32 %v6457, 0.25
        %v6970 = vmul.f32 %v6458, 0.25
        %v6971 = vmul.f32 %v6459, 0.25
        %v6972 = vmul.f32 %v6460, 0.25
        %v6973 = vmul.f32 %v6461, 0.25
        %v6974 = vmul.f32 %v6462, 0.25
        %v6975 = vmul.f32 %v6463, 0.25
        %v6976 = vmul.f32 %v6464, 0.25
        %v6977 = vmul.f32 %v6465, 0.25
        %v6978 = vmul.f32 %v6466, 0.25
        %v6979 = vmul.f32 %v6467, 0.25
        %v6980 = vmul.f32 %v6468, 0.25
        %v6981 = vmul.f32 %v6469, 0.25
        %v6982 = vmul.f32 %v6470, 0.25
        %v6983 = vmul.f32 %v6471, 0.25
        %v6984 = vmul.f32 %v6472, 0.25
        %v6985 = vmul.f32 %v6473, 0.25
        %v6986 = vmul.f32 %v6474, 0.25
        %v6987 = vmul.f32 %v6475, 0.25
        %v6988 = vmul.f32 %v6476, 0.25
        %v6989 = vmul.f32 %v6477, 0.25
        %v6990 = vmul.f32 %v6478, 0.25
        %v6991 = vmul.f32 %v6479, 0.25
        %v6992 = vmul.f32 %v6480, 0.25
        %v6993 = vmul.f32 %v6481, 0.25
        %v6994 = vmul.f32 %v6482, 0.25
        %v6995 = vmul.f32 %v6483, 0.25
        %v6996 = vmul.f32 %v6484, 0.25
        %v6997 = vmul.f32 %v6485, 0.25
        %v6998 = vmul.f32 %v6486, 0.25
        %v6999 = vmul.f32 %v6487, 0.25
        %v7000 = vmul.f32 %v6488, 0.25
        %v7001 = vmul.f32 %v6489, 0.25
        %v7002 = vmul.f32 %v6490, 0.25
        %v7003 = vmul.f32 %v6491, 0.25
        %v7004 = vmul.f32 %v6492, 0.25
        %v7005 = vmul.f32 %v6493, 0.25
        %v7006 = vmul.f32 %v6494, 0.25
        %v7007 = vmul.f32 %v6495, 0.25
        %v7008 = vmul.f32 %v6496, 0.25
        %v7009 = vmul.f32 %v6497, 0.25
        %v7010 = vmul.f32 %v6498, 0.25
        %v7011 = vmul.f32 %v6499, 0.25
        %v7012 = vmul.f32 %v6500, 0.25
        %v7013 = vmul.f32 %v6501, 0.25
        %v7014 = vmul.f32 %v6502, 0.25
        %v7015 = vmul.f32 %v6503, 0.25
        %v7016 = vmul.f32 %v6504, 0.25
        %v7017 = vmul.f32 %v6505, 0.25
        %v7018 = vmul.f32 %v6506, 0.25
        %v7019 = vmul.f32 %v6507, 0.25
        %v7020 = vmul.f32 %v6508, 0.25
        %v7021 = vmul.f32 %v6509, 0.25
        %v7022 = vmul.f32 %v6510, 0.25
        %v7023 = vmul.f32 %v6511, 0.25
        %v7024 = vmul.f32 %v6512, 0.25
        %v7025 = vmul.f32 %v6513, 0.25
        %v7026 = vmul.f32 %v6514, 0.25
        %v7027 = vmul.f32 %v6515, 0.25
        %v7028 = vmul.f32 %v6516, 0.25
        %v7029 = vmul.f32 %v6517, 0.25
        %v7030 = vmul.f32 %v6518, 0.25
        %v7031 = vmul.f32 %v6519, 0.25
        %v7032 = vmul.f32 %v6520, 0.25
        %v7033 = vmul.f32 %v6521, 0.25
        %v7034 = vmul.f32 %v6522, 0.25
        %v7035 = vmul.f32 %v6523, 0.25
        %v7036 = vmul.f32 %v6524, 0.25
        %v7037 = vmul.f32 %v6525, 0.25
        %v7038 = vmul.f32 %v6526, 0.25
        %v7039 = vmul.f32 %v6527, 0.25
        %v7040 = vmul.f32 %v6528, 0.25
        %v7041 = vmul.f32 %v6529, 0.25
        %v7042 = vmul.f32 %v6530, 0.25
        %v7043 = vmul.f32 %v6531, 0.25
        %v7044 = vmul.f32 %v6532, 0.25
        %v7045 = vmul.f32 %v6533, 0.25
        %v7046 = vmul.f32 %v6534, 0.25
        %v7047 = vmul.f32 %v6535, 0.25
        %v7048 = vmul.f32 %v6536, 0.25
        %v7049 = vmul.f32 %v6537, 0.25
        %v7050 = vmul.f32 %v6538, 0.25
        %v7051 = vmul.f32 %v6539, 0.25
        %v7052 = vmul.f32 %v6540, 0.25
        %v7053 = vmul.f32 %v6541, 0.25
        %v7054 = vmul.f32 %v6542, 0.25
        %v7055 = vmul.f32 %v6543, 0.25
        %v7056 = vmul.f32 %v6544, 0.25
        %v7057 = vmul.f32 %v6545, 0.25
        %v7058 = vmul.f32 %v6546, 0.25
        %v7059 = vmul.f32 %v6547, 0.25
        %v7060 = vmul.f32 %v6548, 0.25
        %v7061 = vmul.f32 %v6549, 0.25
        %v7062 = vmul.f32 %v6550, 0.25
        %v7063 = vmul.f32 %v6551, 0.25
        %v7064 = vmul.f32 %v6552, 0.25
        %v7065 = vmul.f32 %v6553, 0.25
        %v7066 = vmul.f32 %v6554, 0.25
        %v7067 = vmul.f32 %v6555, 0.25
        %v7068 = vmul.f32 %v6556, 0.25
        %v7069 = vmul.f32 %v6557, 0.25
        %v7070 = vmul.f32 %v6558, 0.25
        %v7071 = vmul.f32 %v6559, 0.25
        %v7072 = vmul.f32 %v6560, 0.25
        %v7073 = vmul.f32 %v6561, 0.25
        %v7074 = vmul.f32 %v6562, 0.25
        %v7075 = vmul.f32 %v6563, 0.25
        %v7076 = vmul.f32 %v6564, 0.25
        %v7077 = vmul.f32 %v6565, 0.25
        %v7078 = vmul.f32 %v6566, 0.25
        %v7079 = vmul.f32 %v6567, 0.25
        %v7080 = vmul.f32 %v6568, 0.25
        %v7081 = vmul.f32 %v6569, 0.25
        %v7082 = vmul.f32 %v6570, 0.25
        %v7083 = vmul.f32 %v6571, 0.25
        %v7084 = vmul.f32 %v6572, 0.25
        %v7085 = vmul.f32 %v6573, 0.25
        %v7086 = vmul.f32 %v6574, 0.25
        %v7087 = vmul.f32 %v6575, 0.25
        %v7088 = vmul.f32 %v6576, 0.25
        %v7089 = vmul.f32 %v6577, 0.25
        %v7090 = vmul.f32 %v6578, 0.25
        %v7091 = vmul.f32 %v6579, 0.25
        %v7092 = vmul.f32 %v6580, 0.25
        %v7093 = vmul.f32 %v6581, 0.25
        %v7094 = vmul.f32 %v6582, 0.25
        %v7095 = vmul.f32 %v6583, 0.25
        %v7096 = vmul.f32 %v6584, 0.25
        %v7097 = vmul.f32 %v6585, 0.25
        %v7098 = vmul.f32 %v6586, 0.25
        %v7099 = vmul.f32 %v6587, 0.25
        %v7100 = vmul.f32 %v6588, 0.25
        %v7101 = vmul.f32 %v6589, 0.25
        %v7102 = vmul.f32 %v6590, 0.25
        %v7103 = vmul.f32 %v6591, 0.25
        %v7104 = vmul.f32 %v6592, 0.25
        %v7105 = vmul.f32 %v6593, 0.25
        %v7106 = vmul.f32 %v6594, 0.25
        %v7107 = vmul.f32 %v6595, 0.25
        %v7108 = vmul.f32 %v6596, 0.25
        %v7109 = vmul.f32 %v6597, 0.25
        %v7110 = vmul.f32 %v6598, 0.25
        %v7111 = vmul.f32 %v6599, 0.25
        %v7112 = vmul.f32 %v6600, 0.25
        %v7113 = vmul.f32 %v6601, 0.25
        %v7114 = vmul.f32 %v6602, 0.25
        %v7115 = vmul.f32 %v6603, 0.25
        %v7116 = vmul.f32 %v6604, 0.25
        %v7117 = vmul.f32 %v6605, 0.25
        %v7118 = vmul.f32 %v6606, 0.25
        %v7119 = vmul.f32 %v6607, 0.25
        %v7120 = vmul.f32 %v6608, 0.25
        %v7121 = vmul.f32 %v6609, 0.25
        %v7122 = vmul.f32 %v6610, 0.25
        %v7123 = vmul.f32 %v6611, 0.25
        %v7124 = vmul.f32 %v6612, 0.25
        %v7125 = vmul.f32 %v6613, 0.25
        %v7126 = vmul.f32 %v6614, 0.25
        %v7127 = vmul.f32 %v6615, 0.25
        %v7128 = vmul.f32 %v6616, 0.25
        %v7129 = vmul.f32 %v6617, 0.25
        %v7130 = vmul.f32 %v6618, 0.25
        %v7131 = vmul.f32 %v6619, 0.25
        %v7132 = vmul.f32 %v6620, 0.25
        %v7133 = vmul.f32 %v6621, 0.25
        %v7134 = vmul.f32 %v6622, 0.25
        %v7135 = vmul.f32 %v6623, 0.25
        %v7136 = vmul.f32 %v6624, 0.25
        %v7137 = vmul.f32 %v6625, 0.25
        %v7138 = vmul.f32 %v6626, 0.25
        %v7139 = vmul.f32 %v6627, 0.25
        %v7140 = vmul.f32 %v6628, 0.25
        %v7141 = vmul.f32 %v6629, 0.25
        %v7142 = vmul.f32 %v6630, 0.25
        %v7143 = vmul.f32 %v6631, 0.25
        %v7144 = vmul.f32 %v6632, 0.25
        %v7145 = vmul.f32 %v6633, 0.25
        %v7146 = vmul.f32 %v6634, 0.25
        %v7147 = vmul.f32 %v6635, 0.25
        %v7148 = vmul.f32 %v6636, 0.25
        %v7149 = vmul.f32 %v6637, 0.25
        %v7150 = vmul.f32 %v6638, 0.25
        %v7151 = vmul.f32 %v6639, 0.25
        %v7152 = vmul.f32 %v6640, 0.25
        %v7153 = vmul.f32 %v6641, 0.25
        %v7154 = vmul.f32 %v6642, 0.25
        %v7155 = vmul.f32 %v6643, 0.25
        %v7156 = vmul.f32 %v6644, 0.25
        %v7157 = vmul.f32 %v6645, 0.25
        %v7158 = vmul.f32 %v6646, 0.25
        %v7159 = vmul.f32 %v6647, 0.25
        %v7160 = vmul.f32 %v6648, 0.25
        %v7161 = vmul.f32 %v6649, 0.25
        %v7162 = vmul.f32 %v6650, 0.25
        %v7163 = vmul.f32 %v6651, 0.25
        %v7164 = vmul.f32 %v6652, 0.25
        %v7165 = vmul.f32 %v6653, 0.25
        %v7166 = vmul.f32 %v6654, 0.25
        %v7167 = vmul.f32 %v6655, 0.25
        %v7168 = vmul.f32 %v6656, 0.25
        %v7169 = vmul.f32 %v6657, 0.25
        %v7170 = vmul.f32 %v6658, 0.25
        %v7171 = vmul.f32 %v6659, 0.25
        %v7172 = vmul.f32 %v6660, 0.25
        %v7173 = vmul.f32 %v6661, 0.25
        %v7174 = vmul.f32 %v6662, 0.25
        %v7175 = vmul.f32 %v6663, 0.25
        %v7176 = vmul.f32 %v6664, 0.25
        %v7177 = vmul.f32 %v6665, 0.25
        %v7178 = vmul.f32 %v6666, 0.25
        %v7179 = vmul.f32 %v6667, 0.25
        %v7180 = vmul.f32 %v6668, 0.25
        %v7181 = vmul.f32 %v6669, 0.25
        %v7182 = vmul.f32 %v6670, 0.25
        %v7183 = vmul.f32 %v6671, 0.25
        %v7184 = vmul.f32 %v6672, 0.25
        %v7185 = vmul.f32 %v6673, 0.25
        %v7186 = vmul.f32 %v6674, 0.25
        %v7187 = vmul.f32 %v6675, 0.25
        %v7188 = vmul.f32 %v6676, 0.25
        %v7189 = vmul.f32 %v6677, 0.25
        %v7190 = vmul.f32 %v6678, 0.25
        %v7191 = vmul.f32 %v6679, 0.25
        %v7192 = vmul.f32 %v6680, 0.25
        %v7193 = vmul.f32 %v6681, 0.25
        %v7194 = vmul.f32 %v6682, 0.25
        %v7195 = vmul.f32 %v6683, 0.25
        %v7196 = vmul.f32 %v6684, 0.25
        %v7197 = vmul.f32 %v6685, 0.25
        %v7198 = vmul.f32 %v6686, 0.25
        %v7199 = vmul.f32 %v6687, 0.25
        %v7200 = vmul.f32 %v6688, 0.25
        %v7201 = vmul.f32 %v6689, 0.25
        %v7202 = vmul.f32 %v6690, 0.25
        %v7203 = vmul.f32 %v6691, 0.25
        %v7204 = vmul.f32 %v6692, 0.25
        %v7205 = vmul.f32 %v6693, 0.25
        %v7206 = vmul.f32 %v6694, 0.25
        %v7207 = vmul.f32 %v6695, 0.25
        %v7208 = vmul.f32 %v6696, 0.25
        %v7209 = vmul.f32 %v6697, 0.25
        %v7210 = vmul.f32 %v6698, 0.25
        %v7211 = vmul.f32 %v6699, 0.25
        %v7212 = vmul.f32 %v6700, 0.25
        %v7213 = vmul.f32 %v6701, 0.25
        %v7214 = vmul.f32 %v6702, 0.25
        %v7215 = vmul.f32 %v6703, 0.25
        %v7216 = vmul.f32 %v6704, 0.25
        %v7217 = vmul.f32 %v6705, 0.25
        %v7218 = vmul.f32 %v6706, 0.25
        %v7219 = vmul.f32 %v6707, 0.25
        %v7220 = vmul.f32 %v6708, 0.25
        %v7221 = vmul.f32 %v6709, 0.25
        %v7222 = vmul.f32 %v6710, 0.25
        %v7223 = vmul.f32 %v6711, 0.25
        %v7224 = vmul.f32 %v6712, 0.25
        %v7225 = vmul.f32 %v6713, 0.25
        %v7226 = vmul.f32 %v6714, 0.25
        %v7227 = vmul.f32 %v6715, 0.25
        %v7228 = vmul.f32 %v6716, 0.25
        %v7229 = vmul.f32 %v6717, 0.25
        %v7230 = vmul.f32 %v6718, 0.25
        %v7231 = vmul.f32 %v6719, 0.25
        %v7232 = vmul.f32 %v6720, 0.25
        %v7233 = vmul.f32 %v6721, 0.25
        %v7234 = vmul.f32 %v6722, 0.25
        %v7235 = vmul.f32 %v6723, 0.25
        %v7236 = vmul.f32 %v6724, 0.25
        %v7237 = vmul.f32 %v6725, 0.25
        %v7238 = vmul.f32 %v6726, 0.25
        %v7239 = vmul.f32 %v6727, 0.25
        %v7240 = vmul.f32 %v6728, 0.25
        %v7241 = vmul.f32 %v6729, 0.25
        %v7242 = vmul.f32 %v6730, 0.25
        %v7243 = vmul.f32 %v6731, 0.25
        %v7244 = vmul.f32 %v6732, 0.25
        %v7245 = vmul.f32 %v6733, 0.25
        %v7246 = vmul.f32 %v6734, 0.25
        %v7247 = vmul.f32 %v6735, 0.25
        %v7248 = vmul.f32 %v6736, 0.25
        %v7249 = vmul.f32 %v6737, 0.25
        %v7250 = vmul.f32 %v6738, 0.25
        %v7251 = vmul.f32 %v6739, 0.25
        %v7252 = vmul.f32 %v6740, 0.25
        %v7253 = vmul.f32 %v6741, 0.25
        %v7254 = vmul.f32 %v6742, 0.25
        %v7255 = vmul.f32 %v6743, 0.25
        %v7256 = vmul.f32 %v6744, 0.25
        %v7257 = vmul.f32 %v6745, 0.25
        %v7258 = vmul.f32 %v6746, 0.25
        %v7259 = vmul.f32 %v6747, 0.25
        %v7260 = vmul.f32 %v6748, 0.25
        %v7261 = vmul.f32 %v6749, 0.25
        %v7262 = vmul.f32 %v6750, 0.25
        %v7263 = vmul.f32 %v6751, 0.25
        %v7264 = vmul.f32 %v6752, 0.25
        %v7265 = vmul.f32 %v6753, 0.25
        %v7266 = vmul.f32 %v6754, 0.25
        %v7267 = vmul.f32 %v6755, 0.25
        %v7268 = vmul.f32 %v6756, 0.25
        %v7269 = vmul.f32 %v6757, 0.25
        %v7270 = vmul.f32 %v6758, 0.25
        %v7271 = vmul.f32 %v6759, 0.25
        %v7272 = vmul.f32 %v6760, 0.25
        %v7273 = vmul.f32 %v6761, 0.25
        %v7274 = vmul.f32 %v6762, 0.25
        %v7275 = vmul.f32 %v6763, 0.25
        %v7276 = vmul.f32 %v6764, 0.25
        %v7277 = vmul.f32 %v6765, 0.25
        %v7278 = vmul.f32 %v6766, 0.25
        %v7279 = vmul.f32 %v6767, 0.25
        %v7280 = vmul.f32 %v6768, 0.25
        %v7281 = vmul.f32 %v6769, 0.25
        %v7282 = vmul.f32 %v6770, 0.25
        %v7283 = vmul.f32 %v6771, 0.25
        %v7284 = vmul.f32 %v6772, 0.25
        %v7285 = vmul.f32 %v6773, 0.25
        %v7286 = vmul.f32 %v6774, 0.25
        %v7287 = vmul.f32 %v6775, 0.25
        %v7288 = vmul.f32 %v6776, 0.25
        %v7289 = vmul.f32 %v6777, 0.25
        %v7290 = vmul.f32 %v6778, 0.25
        %v7291 = vmul.f32 %v6779, 0.25
        %v7292 = vmul.f32 %v6780, 0.25
        %v7293 = vmul.f32 %v6781, 0.25
        %v7294 = vmul.f32 %v6782, 0.25
        %v7295 = vmul.f32 %v6783, 0.25
        %v7296 = vmul.f32 %v6784, 0.25
        %v7297 = vmul.f32 %v6785, 0.25
        %v7298 = vmul.f32 %v6786, 0.25
        %v7299 = vmul.f32 %v6787, 0.25
        %v7300 = vmul.f32 %v6788, 0.25
        %v7301 = vmul.f32 %v6789, 0.25
        %v7302 = vmul.f32 %v6790, 0.25
        %v7303 = vmul.f32 %v6791, 0.25
        %v7304 = vmul.f32 %v6792, 0.25
        %v7305 = vmul.f32 %v6793, 0.25
        %v7306 = vmul.f32 %v6794, 0.25
        %v7307 = vmul.f32 %v6795, 0.25
        %v7308 = vmul.f32 %v6796, 0.25
        %v7309 = vmul.f32 %v6797, 0.25
        %v7310 = vmul.f32 %v6798, 0.25
        %v7311 = vmul.f32 %v6799, 0.25
        %v7312 = vmul.f32 %v6800, 0.25
        %v7313 = vmul.f32 %v6801, 0.25
        %v7314 = vmul.f32 %v6802, 0.25
        %v7315 = vmul.f32 %v6803, 0.25
        %v7316 = vmul.f32 %v6804, 0.25
        %v7317 = vmul.f32 %v6805, 0.25
        %v7318 = vmul.f32 %v6806, 0.25
        %v7319 = vmul.f32 %v6807, 0.25
        %v7320 = vmul.f32 %v6808, 0.25
        %v7321 = vmul.f32 %v6809, 0.25
        %v7322 = vmul.f32 %v6810, 0.25
        %v7323 = vmul.f32 %v6811, 0.25
        %v7324 = vmul.f32 %v6812, 0.25
        %v7325 = vmul.f32 %v6813, 0.25
        %v7326 = vmul.f32 %v6814, 0.25
        %v7327 = vmul.f32 %v6815, 0.25
        %v7328 = vmul.f32 %v6816, 0.25
        %v7329 = vmul.f32 %v6817, 0.25
        %v7330 = vmul.f32 %v6818, 0.25
        %v7331 = vmul.f32 %v6819, 0.25
        %v7332 = vmul.f32 %v6820, 0.25
        %v7333 = vmul.f32 %v6821, 0.25
        %v7334 = vmul.f32 %v6822, 0.25
        %v7335 = vmul.f32 %v6823, 0.25
        %v7336 = vmul.f32 %v6824, 0.25
        %v7337 = vmul.f32 %v6825, 0.25
        %v7338 = vmul.f32 %v6826, 0.25
        %v7339 = vmul.f32 %v6827, 0.25
        %v7340 = vmul.f32 %v6828, 0.25
        %v7341 = vmul.f32 %v6829, 0.25
        %v7342 = vmul.f32 %v6830, 0.25
        %v7343 = vmul.f32 %v6831, 0.25
        %v7344 = vmul.f32 %v6832, 0.25
        %v7345 = vmul.f32 %v6833, 0.25
        %v7346 = vmul.f32 %v6834, 0.25
        %v7347 = vmul.f32 %v6835, 0.25
        %v7348 = vmul.f32 %v6836, 0.25
        %v7349 = vmul.f32 %v6837, 0.25
        %v7350 = vmul.f32 %v6838, 0.25
        %v7351 = vmul.f32 %v6839, 0.25
        %v7352 = vmul.f32 %v6840, 0.25
        %v7353 = vmul.f32 %v6841, 0.25
        %v7354 = vmul.f32 %v6842, 0.25
        %v7355 = vmul.f32 %v6843, 0.25
        %v7356 = vmul.f32 %v6844, 0.25
        %v7357 = vmul.f32 %v6845, 0.25
        %v7358 = vmul.f32 %v6846, 0.25
        %v7359 = vmul.f32 %v6847, 0.25
        %v7360 = vmul.f32 %v6848, 0.25
        %v7361 = vmul.f32 %v6849, 0.25
        %v7362 = vmul.f32 %v6850, 0.25
        %v7363 = vmul.f32 %v6851, 0.25
        %v7364 = vmul.f32 %v6852, 0.25
        %v7365 = vmul.f32 %v6853, 0.25
        %v7366 = vmul.f32 %v6854, 0.25
        %v7367 = vmul.f32 %v6855, 0.25
        %v7368 = vmul.f32 %v6856, 0.25
        %v7369 = vmul.f32 %v6857, 0.25
        %v7370 = vmul.f32 %v6858, 0.25
        %v7371 = vmul.f32 %v6859, 0.25
        %v7372 = vmul.f32 %v6860, 0.25
        %v7373 = vmul.f32 %v6861, 0.25
        %v7374 = vmul.f32 %v6862, 0.25
        %v7375 = vmul.f32 %v6863, 0.25
        %v7376 = vmul.f32 %v6864, 0.25
        %v7377 = vmul.f32 %v6865, 0.25
        %v7378 = vmul.f32 %v6866, 0.25
        %v7379 = vmul.f32 %v6867, 0.25
        %v7380 = vmul.f32 %v6868, 0.25
        %v7381 = vmul.f32 %v6869, 0.25
        %v7382 = vmul.f32 %v6870, 0.25
        %v7383 = vmul.f32 %v6871, 0.25
        %v7384 = vmul.f32 %v6872, 0.25
        %v7385 = vmul.f32 %v6873, 0.25
        %v7386 = vmul.f32 %v6874, 0.25
        %v7387 = vmul.f32 %v6875, 0.25
        %v7388 = vmul.f32 %v6876, 0.25
        %v7389 = vmul.f32 %v6877, 0.25
        %v7390 = vmul.f32 %v6878, 0.25
        %v7391 = vmul.f32 %v6879, 0.25
        %v7392 = vmul.f32 %v6880, 0.25
        %v7393 = vmul.f32 %v6881, 0.25
        %v7394 = vmul.f32 %v6882, 0.25
        %v7395 = vmul.f32 %v6883, 0.25
        %v7396 = vmul.f32 %v6884, 0.25
        %v7397 = vmul.f32 %v6885, 0.25
        %v7398 = vmul.f32 %v6886, 0.25
        %v7399 = vmul.f32 %v6887, 0.25
        %v7400 = vmul.f32 %v6888, 0.25
        %v7401 = vmul.f32 %v6889, 0.25
        %v7402 = vmul.f32 %v6890, 0.25
        %v7403 = vmul.f32 %v6891, 0.25
        %v7404 = vmul.f32 %v6892, 0.25
        %vm7405 = vcmask 523264
        %v7406 = vsel %vm7405, %v6893, -inf
        %7407 = vmax.xlane.f32.xlu0 %v7406
        %v7408 = vpop.xlane.xlu0 %7407
        %v7409 = vsel %vm7405, %v6894, -inf
        %7410 = vmax.xlane.f32.xlu0 %v7409
        %v7411 = vpop.xlane.xlu0 %7410
        %v7412 = vsel %vm7405, %v6895, -inf
        %7413 = vmax.xlane.f32.xlu0 %v7412
        %v7414 = vpop.xlane.xlu0 %7413
        %v7415 = vsel %vm7405, %v6896, -inf
        %7416 = vmax.xlane.f32.xlu0 %v7415
        %v7417 = vpop.xlane.xlu0 %7416
        %v7418 = vsel %vm7405, %v6897, -inf
        %7419 = vmax.xlane.f32.xlu0 %v7418
        %v7420 = vpop.xlane.xlu0 %7419
        %v7421 = vsel %vm7405, %v6898, -inf
        %7422 = vmax.xlane.f32.xlu0 %v7421
        %v7423 = vpop.xlane.xlu0 %7422
        %v7424 = vsel %vm7405, %v6899, -inf
        %7425 = vmax.xlane.f32.xlu0 %v7424
        %v7426 = vpop.xlane.xlu0 %7425
        %v7427 = vsel %vm7405, %v6900, -inf
        %7428 = vmax.xlane.f32.xlu0 %v7427
        %v7429 = vpop.xlane.xlu0 %7428
        %v7430 = vsel %vm7405, %v6901, -inf
        %7431 = vmax.xlane.f32.xlu0 %v7430
        %v7432 = vpop.xlane.xlu0 %7431
        %v7433 = vsel %vm7405, %v6902, -inf
        %7434 = vmax.xlane.f32.xlu0 %v7433
        %v7435 = vpop.xlane.xlu0 %7434
        %v7436 = vsel %vm7405, %v6903, -inf
        %7437 = vmax.xlane.f32.xlu0 %v7436
        %v7438 = vpop.xlane.xlu0 %7437
        %v7439 = vsel %vm7405, %v6904, -inf
        %7440 = vmax.xlane.f32.xlu0 %v7439
        %v7441 = vpop.xlane.xlu0 %7440
        %v7442 = vsel %vm7405, %v6905, -inf
        %7443 = vmax.xlane.f32.xlu0 %v7442
        %v7444 = vpop.xlane.xlu0 %7443
        %v7445 = vsel %vm7405, %v6906, -inf
        %7446 = vmax.xlane.f32.xlu0 %v7445
        %v7447 = vpop.xlane.xlu0 %7446
        %v7448 = vsel %vm7405, %v6907, -inf
        %7449 = vmax.xlane.f32.xlu0 %v7448
        %v7450 = vpop.xlane.xlu0 %7449
        %v7451 = vsel %vm7405, %v6908, -inf
        %7452 = vmax.xlane.f32.xlu0 %v7451
        %v7453 = vpop.xlane.xlu0 %7452
        %v7454 = vsel %vm7405, %v6909, -inf
        %7455 = vmax.xlane.f32.xlu0 %v7454
        %v7456 = vpop.xlane.xlu0 %7455
        %v7457 = vsel %vm7405, %v6910, -inf
        %7458 = vmax.xlane.f32.xlu0 %v7457
        %v7459 = vpop.xlane.xlu0 %7458
        %v7460 = vsel %vm7405, %v6911, -inf
        %7461 = vmax.xlane.f32.xlu0 %v7460
        %v7462 = vpop.xlane.xlu0 %7461
        %v7463 = vsel %vm7405, %v6912, -inf
        %7464 = vmax.xlane.f32.xlu0 %v7463
        %v7465 = vpop.xlane.xlu0 %7464
        %v7466 = vsel %vm7405, %v6913, -inf
        %7467 = vmax.xlane.f32.xlu0 %v7466
        %v7468 = vpop.xlane.xlu0 %7467
        %v7469 = vsel %vm7405, %v6914, -inf
        %7470 = vmax.xlane.f32.xlu0 %v7469
        %v7471 = vpop.xlane.xlu0 %7470
        %v7472 = vsel %vm7405, %v6915, -inf
        %7473 = vmax.xlane.f32.xlu0 %v7472
        %v7474 = vpop.xlane.xlu0 %7473
        %v7475 = vsel %vm7405, %v6916, -inf
        %7476 = vmax.xlane.f32.xlu0 %v7475
        %v7477 = vpop.xlane.xlu0 %7476
        %v7478 = vsel %vm7405, %v6917, -inf
        %7479 = vmax.xlane.f32.xlu0 %v7478
        %v7480 = vpop.xlane.xlu0 %7479
        %v7481 = vsel %vm7405, %v6918, -inf
        %7482 = vmax.xlane.f32.xlu0 %v7481
        %v7483 = vpop.xlane.xlu0 %7482
        %v7484 = vsel %vm7405, %v6919, -inf
        %7485 = vmax.xlane.f32.xlu0 %v7484
        %v7486 = vpop.xlane.xlu0 %7485
        %v7487 = vsel %vm7405, %v6920, -inf
        %7488 = vmax.xlane.f32.xlu0 %v7487
        %v7489 = vpop.xlane.xlu0 %7488
        %v7490 = vsel %vm7405, %v6921, -inf
        %7491 = vmax.xlane.f32.xlu0 %v7490
        %v7492 = vpop.xlane.xlu0 %7491
        %v7493 = vsel %vm7405, %v6922, -inf
        %7494 = vmax.xlane.f32.xlu0 %v7493
        %v7495 = vpop.xlane.xlu0 %7494
        %v7496 = vsel %vm7405, %v6923, -inf
        %7497 = vmax.xlane.f32.xlu0 %v7496
        %v7498 = vpop.xlane.xlu0 %7497
        %v7499 = vsel %vm7405, %v6924, -inf
        %7500 = vmax.xlane.f32.xlu0 %v7499
        %v7501 = vpop.xlane.xlu0 %7500
        %v7502 = vsel %vm7405, %v6925, -inf
        %7503 = vmax.xlane.f32.xlu0 %v7502
        %v7504 = vpop.xlane.xlu0 %7503
        %v7505 = vsel %vm7405, %v6926, -inf
        %7506 = vmax.xlane.f32.xlu0 %v7505
        %v7507 = vpop.xlane.xlu0 %7506
        %v7508 = vsel %vm7405, %v6927, -inf
        %7509 = vmax.xlane.f32.xlu0 %v7508
        %v7510 = vpop.xlane.xlu0 %7509
        %v7511 = vsel %vm7405, %v6928, -inf
        %7512 = vmax.xlane.f32.xlu0 %v7511
        %v7513 = vpop.xlane.xlu0 %7512
        %v7514 = vsel %vm7405, %v6929, -inf
        %7515 = vmax.xlane.f32.xlu0 %v7514
        %v7516 = vpop.xlane.xlu0 %7515
        %v7517 = vsel %vm7405, %v6930, -inf
        %7518 = vmax.xlane.f32.xlu0 %v7517
        %v7519 = vpop.xlane.xlu0 %7518
        %v7520 = vsel %vm7405, %v6931, -inf
        %7521 = vmax.xlane.f32.xlu0 %v7520
        %v7522 = vpop.xlane.xlu0 %7521
        %v7523 = vsel %vm7405, %v6932, -inf
        %7524 = vmax.xlane.f32.xlu0 %v7523
        %v7525 = vpop.xlane.xlu0 %7524
        %v7526 = vsel %vm7405, %v6933, -inf
        %7527 = vmax.xlane.f32.xlu0 %v7526
        %v7528 = vpop.xlane.xlu0 %7527
        %v7529 = vsel %vm7405, %v6934, -inf
        %7530 = vmax.xlane.f32.xlu0 %v7529
        %v7531 = vpop.xlane.xlu0 %7530
        %v7532 = vsel %vm7405, %v6935, -inf
        %7533 = vmax.xlane.f32.xlu0 %v7532
        %v7534 = vpop.xlane.xlu0 %7533
        %v7535 = vsel %vm7405, %v6936, -inf
        %7536 = vmax.xlane.f32.xlu0 %v7535
        %v7537 = vpop.xlane.xlu0 %7536
        %v7538 = vsel %vm7405, %v6937, -inf
        %7539 = vmax.xlane.f32.xlu0 %v7538
        %v7540 = vpop.xlane.xlu0 %7539
        %v7541 = vsel %vm7405, %v6938, -inf
        %7542 = vmax.xlane.f32.xlu0 %v7541
        %v7543 = vpop.xlane.xlu0 %7542
        %v7544 = vsel %vm7405, %v6939, -inf
        %7545 = vmax.xlane.f32.xlu0 %v7544
        %v7546 = vpop.xlane.xlu0 %7545
        %v7547 = vsel %vm7405, %v6940, -inf
        %7548 = vmax.xlane.f32.xlu0 %v7547
        %v7549 = vpop.xlane.xlu0 %7548
        %v7550 = vsel %vm7405, %v6941, -inf
        %7551 = vmax.xlane.f32.xlu0 %v7550
        %v7552 = vpop.xlane.xlu0 %7551
        %v7553 = vsel %vm7405, %v6942, -inf
        %7554 = vmax.xlane.f32.xlu0 %v7553
        %v7555 = vpop.xlane.xlu0 %7554
        %v7556 = vsel %vm7405, %v6943, -inf
        %7557 = vmax.xlane.f32.xlu0 %v7556
        %v7558 = vpop.xlane.xlu0 %7557
        %v7559 = vsel %vm7405, %v6944, -inf
        %7560 = vmax.xlane.f32.xlu0 %v7559
        %v7561 = vpop.xlane.xlu0 %7560
        %v7562 = vsel %vm7405, %v6945, -inf
        %7563 = vmax.xlane.f32.xlu0 %v7562
        %v7564 = vpop.xlane.xlu0 %7563
        %v7565 = vsel %vm7405, %v6946, -inf
        %7566 = vmax.xlane.f32.xlu0 %v7565
        %v7567 = vpop.xlane.xlu0 %7566
        %v7568 = vsel %vm7405, %v6947, -inf
        %7569 = vmax.xlane.f32.xlu0 %v7568
        %v7570 = vpop.xlane.xlu0 %7569
        %v7571 = vsel %vm7405, %v6948, -inf
        %7572 = vmax.xlane.f32.xlu0 %v7571
        %v7573 = vpop.xlane.xlu0 %7572
        %v7574 = vsel %vm7405, %v6949, -inf
        %7575 = vmax.xlane.f32.xlu0 %v7574
        %v7576 = vpop.xlane.xlu0 %7575
        %v7577 = vsel %vm7405, %v6950, -inf
        %7578 = vmax.xlane.f32.xlu0 %v7577
        %v7579 = vpop.xlane.xlu0 %7578
        %v7580 = vsel %vm7405, %v6951, -inf
        %7581 = vmax.xlane.f32.xlu0 %v7580
        %v7582 = vpop.xlane.xlu0 %7581
        %v7583 = vsel %vm7405, %v6952, -inf
        %7584 = vmax.xlane.f32.xlu0 %v7583
        %v7585 = vpop.xlane.xlu0 %7584
        %v7586 = vsel %vm7405, %v6953, -inf
        %7587 = vmax.xlane.f32.xlu0 %v7586
        %v7588 = vpop.xlane.xlu0 %7587
        %v7589 = vsel %vm7405, %v6954, -inf
        %7590 = vmax.xlane.f32.xlu0 %v7589
        %v7591 = vpop.xlane.xlu0 %7590
        %v7592 = vsel %vm7405, %v6955, -inf
        %7593 = vmax.xlane.f32.xlu0 %v7592
        %v7594 = vpop.xlane.xlu0 %7593
        %v7595 = vsel %vm7405, %v6956, -inf
        %7596 = vmax.xlane.f32.xlu0 %v7595
        %v7597 = vpop.xlane.xlu0 %7596
        %v7598 = vsel %vm7405, %v6957, -inf
        %7599 = vmax.xlane.f32.xlu0 %v7598
        %v7600 = vpop.xlane.xlu0 %7599
        %v7601 = vsel %vm7405, %v6958, -inf
        %7602 = vmax.xlane.f32.xlu0 %v7601
        %v7603 = vpop.xlane.xlu0 %7602
        %v7604 = vsel %vm7405, %v6959, -inf
        %7605 = vmax.xlane.f32.xlu0 %v7604
        %v7606 = vpop.xlane.xlu0 %7605
        %v7607 = vsel %vm7405, %v6960, -inf
        %7608 = vmax.xlane.f32.xlu0 %v7607
        %v7609 = vpop.xlane.xlu0 %7608
        %v7610 = vsel %vm7405, %v6961, -inf
        %7611 = vmax.xlane.f32.xlu0 %v7610
        %v7612 = vpop.xlane.xlu0 %7611
        %v7613 = vsel %vm7405, %v6962, -inf
        %7614 = vmax.xlane.f32.xlu0 %v7613
        %v7615 = vpop.xlane.xlu0 %7614
        %v7616 = vsel %vm7405, %v6963, -inf
        %7617 = vmax.xlane.f32.xlu0 %v7616
        %v7618 = vpop.xlane.xlu0 %7617
        %v7619 = vsel %vm7405, %v6964, -inf
        %7620 = vmax.xlane.f32.xlu0 %v7619
        %v7621 = vpop.xlane.xlu0 %7620
        %v7622 = vsel %vm7405, %v6965, -inf
        %7623 = vmax.xlane.f32.xlu0 %v7622
        %v7624 = vpop.xlane.xlu0 %7623
        %v7625 = vsel %vm7405, %v6966, -inf
        %7626 = vmax.xlane.f32.xlu0 %v7625
        %v7627 = vpop.xlane.xlu0 %7626
        %v7628 = vsel %vm7405, %v6967, -inf
        %7629 = vmax.xlane.f32.xlu0 %v7628
        %v7630 = vpop.xlane.xlu0 %7629
        %v7631 = vsel %vm7405, %v6968, -inf
        %7632 = vmax.xlane.f32.xlu0 %v7631
        %v7633 = vpop.xlane.xlu0 %7632
        %v7634 = vsel %vm7405, %v6969, -inf
        %7635 = vmax.xlane.f32.xlu0 %v7634
        %v7636 = vpop.xlane.xlu0 %7635
        %v7637 = vsel %vm7405, %v6970, -inf
        %7638 = vmax.xlane.f32.xlu0 %v7637
        %v7639 = vpop.xlane.xlu0 %7638
        %v7640 = vsel %vm7405, %v6971, -inf
        %7641 = vmax.xlane.f32.xlu0 %v7640
        %v7642 = vpop.xlane.xlu0 %7641
        %v7643 = vsel %vm7405, %v6972, -inf
        %7644 = vmax.xlane.f32.xlu0 %v7643
        %v7645 = vpop.xlane.xlu0 %7644
        %v7646 = vsel %vm7405, %v6973, -inf
        %7647 = vmax.xlane.f32.xlu0 %v7646
        %v7648 = vpop.xlane.xlu0 %7647
        %v7649 = vsel %vm7405, %v6974, -inf
        %7650 = vmax.xlane.f32.xlu0 %v7649
        %v7651 = vpop.xlane.xlu0 %7650
        %v7652 = vsel %vm7405, %v6975, -inf
        %7653 = vmax.xlane.f32.xlu0 %v7652
        %v7654 = vpop.xlane.xlu0 %7653
        %v7655 = vsel %vm7405, %v6976, -inf
        %7656 = vmax.xlane.f32.xlu0 %v7655
        %v7657 = vpop.xlane.xlu0 %7656
        %v7658 = vsel %vm7405, %v6977, -inf
        %7659 = vmax.xlane.f32.xlu0 %v7658
        %v7660 = vpop.xlane.xlu0 %7659
        %v7661 = vsel %vm7405, %v6978, -inf
        %7662 = vmax.xlane.f32.xlu0 %v7661
        %v7663 = vpop.xlane.xlu0 %7662
        %v7664 = vsel %vm7405, %v6979, -inf
        %7665 = vmax.xlane.f32.xlu0 %v7664
        %v7666 = vpop.xlane.xlu0 %7665
        %v7667 = vsel %vm7405, %v6980, -inf
        %7668 = vmax.xlane.f32.xlu0 %v7667
        %v7669 = vpop.xlane.xlu0 %7668
        %v7670 = vsel %vm7405, %v6981, -inf
        %7671 = vmax.xlane.f32.xlu0 %v7670
        %v7672 = vpop.xlane.xlu0 %7671
        %v7673 = vsel %vm7405, %v6982, -inf
        %7674 = vmax.xlane.f32.xlu0 %v7673
        %v7675 = vpop.xlane.xlu0 %7674
        %v7676 = vsel %vm7405, %v6983, -inf
        %7677 = vmax.xlane.f32.xlu0 %v7676
        %v7678 = vpop.xlane.xlu0 %7677
        %v7679 = vsel %vm7405, %v6984, -inf
        %7680 = vmax.xlane.f32.xlu0 %v7679
        %v7681 = vpop.xlane.xlu0 %7680
        %v7682 = vsel %vm7405, %v6985, -inf
        %7683 = vmax.xlane.f32.xlu0 %v7682
        %v7684 = vpop.xlane.xlu0 %7683
        %v7685 = vsel %vm7405, %v6986, -inf
        %7686 = vmax.xlane.f32.xlu0 %v7685
        %v7687 = vpop.xlane.xlu0 %7686
        %v7688 = vsel %vm7405, %v6987, -inf
        %7689 = vmax.xlane.f32.xlu0 %v7688
        %v7690 = vpop.xlane.xlu0 %7689
        %v7691 = vsel %vm7405, %v6988, -inf
        %7692 = vmax.xlane.f32.xlu0 %v7691
        %v7693 = vpop.xlane.xlu0 %7692
        %v7694 = vsel %vm7405, %v6989, -inf
        %7695 = vmax.xlane.f32.xlu0 %v7694
        %v7696 = vpop.xlane.xlu0 %7695
        %v7697 = vsel %vm7405, %v6990, -inf
        %7698 = vmax.xlane.f32.xlu0 %v7697
        %v7699 = vpop.xlane.xlu0 %7698
        %v7700 = vsel %vm7405, %v6991, -inf
        %7701 = vmax.xlane.f32.xlu0 %v7700
        %v7702 = vpop.xlane.xlu0 %7701
        %v7703 = vsel %vm7405, %v6992, -inf
        %7704 = vmax.xlane.f32.xlu0 %v7703
        %v7705 = vpop.xlane.xlu0 %7704
        %v7706 = vsel %vm7405, %v6993, -inf
        %7707 = vmax.xlane.f32.xlu0 %v7706
        %v7708 = vpop.xlane.xlu0 %7707
        %v7709 = vsel %vm7405, %v6994, -inf
        %7710 = vmax.xlane.f32.xlu0 %v7709
        %v7711 = vpop.xlane.xlu0 %7710
        %v7712 = vsel %vm7405, %v6995, -inf
        %7713 = vmax.xlane.f32.xlu0 %v7712
        %v7714 = vpop.xlane.xlu0 %7713
        %v7715 = vsel %vm7405, %v6996, -inf
        %7716 = vmax.xlane.f32.xlu0 %v7715
        %v7717 = vpop.xlane.xlu0 %7716
        %v7718 = vsel %vm7405, %v6997, -inf
        %7719 = vmax.xlane.f32.xlu0 %v7718
        %v7720 = vpop.xlane.xlu0 %7719
        %v7721 = vsel %vm7405, %v6998, -inf
        %7722 = vmax.xlane.f32.xlu0 %v7721
        %v7723 = vpop.xlane.xlu0 %7722
        %v7724 = vsel %vm7405, %v6999, -inf
        %7725 = vmax.xlane.f32.xlu0 %v7724
        %v7726 = vpop.xlane.xlu0 %7725
        %v7727 = vsel %vm7405, %v7000, -inf
        %7728 = vmax.xlane.f32.xlu0 %v7727
        %v7729 = vpop.xlane.xlu0 %7728
        %v7730 = vsel %vm7405, %v7001, -inf
        %7731 = vmax.xlane.f32.xlu0 %v7730
        %v7732 = vpop.xlane.xlu0 %7731
        %v7733 = vsel %vm7405, %v7002, -inf
        %7734 = vmax.xlane.f32.xlu0 %v7733
        %v7735 = vpop.xlane.xlu0 %7734
        %v7736 = vsel %vm7405, %v7003, -inf
        %7737 = vmax.xlane.f32.xlu0 %v7736
        %v7738 = vpop.xlane.xlu0 %7737
        %v7739 = vsel %vm7405, %v7004, -inf
        %7740 = vmax.xlane.f32.xlu0 %v7739
        %v7741 = vpop.xlane.xlu0 %7740
        %v7742 = vsel %vm7405, %v7005, -inf
        %7743 = vmax.xlane.f32.xlu0 %v7742
        %v7744 = vpop.xlane.xlu0 %7743
        %v7745 = vsel %vm7405, %v7006, -inf
        %7746 = vmax.xlane.f32.xlu0 %v7745
        %v7747 = vpop.xlane.xlu0 %7746
        %v7748 = vsel %vm7405, %v7007, -inf
        %7749 = vmax.xlane.f32.xlu0 %v7748
        %v7750 = vpop.xlane.xlu0 %7749
        %v7751 = vsel %vm7405, %v7008, -inf
        %7752 = vmax.xlane.f32.xlu0 %v7751
        %v7753 = vpop.xlane.xlu0 %7752
        %v7754 = vsel %vm7405, %v7009, -inf
        %7755 = vmax.xlane.f32.xlu0 %v7754
        %v7756 = vpop.xlane.xlu0 %7755
        %v7757 = vsel %vm7405, %v7010, -inf
        %7758 = vmax.xlane.f32.xlu0 %v7757
        %v7759 = vpop.xlane.xlu0 %7758
        %v7760 = vsel %vm7405, %v7011, -inf
        %7761 = vmax.xlane.f32.xlu0 %v7760
        %v7762 = vpop.xlane.xlu0 %7761
        %v7763 = vsel %vm7405, %v7012, -inf
        %7764 = vmax.xlane.f32.xlu0 %v7763
        %v7765 = vpop.xlane.xlu0 %7764
        %v7766 = vsel %vm7405, %v7013, -inf
        %7767 = vmax.xlane.f32.xlu0 %v7766
        %v7768 = vpop.xlane.xlu0 %7767
        %v7769 = vsel %vm7405, %v7014, -inf
        %7770 = vmax.xlane.f32.xlu0 %v7769
        %v7771 = vpop.xlane.xlu0 %7770
        %v7772 = vsel %vm7405, %v7015, -inf
        %7773 = vmax.xlane.f32.xlu0 %v7772
        %v7774 = vpop.xlane.xlu0 %7773
        %v7775 = vsel %vm7405, %v7016, -inf
        %7776 = vmax.xlane.f32.xlu0 %v7775
        %v7777 = vpop.xlane.xlu0 %7776
        %v7778 = vsel %vm7405, %v7017, -inf
        %7779 = vmax.xlane.f32.xlu0 %v7778
        %v7780 = vpop.xlane.xlu0 %7779
        %v7781 = vsel %vm7405, %v7018, -inf
        %7782 = vmax.xlane.f32.xlu0 %v7781
        %v7783 = vpop.xlane.xlu0 %7782
        %v7784 = vsel %vm7405, %v7019, -inf
        %7785 = vmax.xlane.f32.xlu0 %v7784
        %v7786 = vpop.xlane.xlu0 %7785
        %v7787 = vsel %vm7405, %v7020, -inf
        %7788 = vmax.xlane.f32.xlu0 %v7787
        %v7789 = vpop.xlane.xlu0 %7788
        %v7790 = vsel %vm7405, %v7021, -inf
        %7791 = vmax.xlane.f32.xlu0 %v7790
        %v7792 = vpop.xlane.xlu0 %7791
        %v7793 = vsel %vm7405, %v7022, -inf
        %7794 = vmax.xlane.f32.xlu0 %v7793
        %v7795 = vpop.xlane.xlu0 %7794
        %v7796 = vsel %vm7405, %v7023, -inf
        %7797 = vmax.xlane.f32.xlu0 %v7796
        %v7798 = vpop.xlane.xlu0 %7797
        %v7799 = vsel %vm7405, %v7024, -inf
        %7800 = vmax.xlane.f32.xlu0 %v7799
        %v7801 = vpop.xlane.xlu0 %7800
        %v7802 = vsel %vm7405, %v7025, -inf
        %7803 = vmax.xlane.f32.xlu0 %v7802
        %v7804 = vpop.xlane.xlu0 %7803
        %v7805 = vsel %vm7405, %v7026, -inf
        %7806 = vmax.xlane.f32.xlu0 %v7805
        %v7807 = vpop.xlane.xlu0 %7806
        %v7808 = vsel %vm7405, %v7027, -inf
        %7809 = vmax.xlane.f32.xlu0 %v7808
        %v7810 = vpop.xlane.xlu0 %7809
        %v7811 = vsel %vm7405, %v7028, -inf
        %7812 = vmax.xlane.f32.xlu0 %v7811
        %v7813 = vpop.xlane.xlu0 %7812
        %v7814 = vsel %vm7405, %v7029, -inf
        %7815 = vmax.xlane.f32.xlu0 %v7814
        %v7816 = vpop.xlane.xlu0 %7815
        %v7817 = vsel %vm7405, %v7030, -inf
        %7818 = vmax.xlane.f32.xlu0 %v7817
        %v7819 = vpop.xlane.xlu0 %7818
        %v7820 = vsel %vm7405, %v7031, -inf
        %7821 = vmax.xlane.f32.xlu0 %v7820
        %v7822 = vpop.xlane.xlu0 %7821
        %v7823 = vsel %vm7405, %v7032, -inf
        %7824 = vmax.xlane.f32.xlu0 %v7823
        %v7825 = vpop.xlane.xlu0 %7824
        %v7826 = vsel %vm7405, %v7033, -inf
        %7827 = vmax.xlane.f32.xlu0 %v7826
        %v7828 = vpop.xlane.xlu0 %7827
        %v7829 = vsel %vm7405, %v7034, -inf
        %7830 = vmax.xlane.f32.xlu0 %v7829
        %v7831 = vpop.xlane.xlu0 %7830
        %v7832 = vsel %vm7405, %v7035, -inf
        %7833 = vmax.xlane.f32.xlu0 %v7832
        %v7834 = vpop.xlane.xlu0 %7833
        %v7835 = vsel %vm7405, %v7036, -inf
        %7836 = vmax.xlane.f32.xlu0 %v7835
        %v7837 = vpop.xlane.xlu0 %7836
        %v7838 = vsel %vm7405, %v7037, -inf
        %7839 = vmax.xlane.f32.xlu0 %v7838
        %v7840 = vpop.xlane.xlu0 %7839
        %v7841 = vsel %vm7405, %v7038, -inf
        %7842 = vmax.xlane.f32.xlu0 %v7841
        %v7843 = vpop.xlane.xlu0 %7842
        %v7844 = vsel %vm7405, %v7039, -inf
        %7845 = vmax.xlane.f32.xlu0 %v7844
        %v7846 = vpop.xlane.xlu0 %7845
        %v7847 = vsel %vm7405, %v7040, -inf
        %7848 = vmax.xlane.f32.xlu0 %v7847
        %v7849 = vpop.xlane.xlu0 %7848
        %v7850 = vsel %vm7405, %v7041, -inf
        %7851 = vmax.xlane.f32.xlu0 %v7850
        %v7852 = vpop.xlane.xlu0 %7851
        %v7853 = vsel %vm7405, %v7042, -inf
        %7854 = vmax.xlane.f32.xlu0 %v7853
        %v7855 = vpop.xlane.xlu0 %7854
        %v7856 = vsel %vm7405, %v7043, -inf
        %7857 = vmax.xlane.f32.xlu0 %v7856
        %v7858 = vpop.xlane.xlu0 %7857
        %v7859 = vsel %vm7405, %v7044, -inf
        %7860 = vmax.xlane.f32.xlu0 %v7859
        %v7861 = vpop.xlane.xlu0 %7860
        %v7862 = vsel %vm7405, %v7045, -inf
        %7863 = vmax.xlane.f32.xlu0 %v7862
        %v7864 = vpop.xlane.xlu0 %7863
        %v7865 = vsel %vm7405, %v7046, -inf
        %7866 = vmax.xlane.f32.xlu0 %v7865
        %v7867 = vpop.xlane.xlu0 %7866
        %v7868 = vsel %vm7405, %v7047, -inf
        %7869 = vmax.xlane.f32.xlu0 %v7868
        %v7870 = vpop.xlane.xlu0 %7869
        %v7871 = vsel %vm7405, %v7048, -inf
        %7872 = vmax.xlane.f32.xlu0 %v7871
        %v7873 = vpop.xlane.xlu0 %7872
        %v7874 = vsel %vm7405, %v7049, -inf
        %7875 = vmax.xlane.f32.xlu0 %v7874
        %v7876 = vpop.xlane.xlu0 %7875
        %v7877 = vsel %vm7405, %v7050, -inf
        %7878 = vmax.xlane.f32.xlu0 %v7877
        %v7879 = vpop.xlane.xlu0 %7878
        %v7880 = vsel %vm7405, %v7051, -inf
        %7881 = vmax.xlane.f32.xlu0 %v7880
        %v7882 = vpop.xlane.xlu0 %7881
        %v7883 = vsel %vm7405, %v7052, -inf
        %7884 = vmax.xlane.f32.xlu0 %v7883
        %v7885 = vpop.xlane.xlu0 %7884
        %v7886 = vsel %vm7405, %v7053, -inf
        %7887 = vmax.xlane.f32.xlu0 %v7886
        %v7888 = vpop.xlane.xlu0 %7887
        %v7889 = vsel %vm7405, %v7054, -inf
        %7890 = vmax.xlane.f32.xlu0 %v7889
        %v7891 = vpop.xlane.xlu0 %7890
        %v7892 = vsel %vm7405, %v7055, -inf
        %7893 = vmax.xlane.f32.xlu0 %v7892
        %v7894 = vpop.xlane.xlu0 %7893
        %v7895 = vsel %vm7405, %v7056, -inf
        %7896 = vmax.xlane.f32.xlu0 %v7895
        %v7897 = vpop.xlane.xlu0 %7896
        %v7898 = vsel %vm7405, %v7057, -inf
        %7899 = vmax.xlane.f32.xlu0 %v7898
        %v7900 = vpop.xlane.xlu0 %7899
        %v7901 = vsel %vm7405, %v7058, -inf
        %7902 = vmax.xlane.f32.xlu0 %v7901
        %v7903 = vpop.xlane.xlu0 %7902
        %v7904 = vsel %vm7405, %v7059, -inf
        %7905 = vmax.xlane.f32.xlu0 %v7904
        %v7906 = vpop.xlane.xlu0 %7905
        %v7907 = vsel %vm7405, %v7060, -inf
        %7908 = vmax.xlane.f32.xlu0 %v7907
        %v7909 = vpop.xlane.xlu0 %7908
        %v7910 = vsel %vm7405, %v7061, -inf
        %7911 = vmax.xlane.f32.xlu0 %v7910
        %v7912 = vpop.xlane.xlu0 %7911
        %v7913 = vsel %vm7405, %v7062, -inf
        %7914 = vmax.xlane.f32.xlu0 %v7913
        %v7915 = vpop.xlane.xlu0 %7914
        %v7916 = vsel %vm7405, %v7063, -inf
        %7917 = vmax.xlane.f32.xlu0 %v7916
        %v7918 = vpop.xlane.xlu0 %7917
        %v7919 = vsel %vm7405, %v7064, -inf
        %7920 = vmax.xlane.f32.xlu0 %v7919
        %v7921 = vpop.xlane.xlu0 %7920
        %v7922 = vsel %vm7405, %v7065, -inf
        %7923 = vmax.xlane.f32.xlu0 %v7922
        %v7924 = vpop.xlane.xlu0 %7923
        %v7925 = vsel %vm7405, %v7066, -inf
        %7926 = vmax.xlane.f32.xlu0 %v7925
        %v7927 = vpop.xlane.xlu0 %7926
        %v7928 = vsel %vm7405, %v7067, -inf
        %7929 = vmax.xlane.f32.xlu0 %v7928
        %v7930 = vpop.xlane.xlu0 %7929
        %v7931 = vsel %vm7405, %v7068, -inf
        %7932 = vmax.xlane.f32.xlu0 %v7931
        %v7933 = vpop.xlane.xlu0 %7932
        %v7934 = vsel %vm7405, %v7069, -inf
        %7935 = vmax.xlane.f32.xlu0 %v7934
        %v7936 = vpop.xlane.xlu0 %7935
        %v7937 = vsel %vm7405, %v7070, -inf
        %7938 = vmax.xlane.f32.xlu0 %v7937
        %v7939 = vpop.xlane.xlu0 %7938
        %v7940 = vsel %vm7405, %v7071, -inf
        %7941 = vmax.xlane.f32.xlu0 %v7940
        %v7942 = vpop.xlane.xlu0 %7941
        %v7943 = vsel %vm7405, %v7072, -inf
        %7944 = vmax.xlane.f32.xlu0 %v7943
        %v7945 = vpop.xlane.xlu0 %7944
        %v7946 = vsel %vm7405, %v7073, -inf
        %7947 = vmax.xlane.f32.xlu0 %v7946
        %v7948 = vpop.xlane.xlu0 %7947
        %v7949 = vsel %vm7405, %v7074, -inf
        %7950 = vmax.xlane.f32.xlu0 %v7949
        %v7951 = vpop.xlane.xlu0 %7950
        %v7952 = vsel %vm7405, %v7075, -inf
        %7953 = vmax.xlane.f32.xlu0 %v7952
        %v7954 = vpop.xlane.xlu0 %7953
        %v7955 = vsel %vm7405, %v7076, -inf
        %7956 = vmax.xlane.f32.xlu0 %v7955
        %v7957 = vpop.xlane.xlu0 %7956
        %v7958 = vsel %vm7405, %v7077, -inf
        %7959 = vmax.xlane.f32.xlu0 %v7958
        %v7960 = vpop.xlane.xlu0 %7959
        %v7961 = vsel %vm7405, %v7078, -inf
        %7962 = vmax.xlane.f32.xlu0 %v7961
        %v7963 = vpop.xlane.xlu0 %7962
        %v7964 = vsel %vm7405, %v7079, -inf
        %7965 = vmax.xlane.f32.xlu0 %v7964
        %v7966 = vpop.xlane.xlu0 %7965
        %v7967 = vsel %vm7405, %v7080, -inf
        %7968 = vmax.xlane.f32.xlu0 %v7967
        %v7969 = vpop.xlane.xlu0 %7968
        %v7970 = vsel %vm7405, %v7081, -inf
        %7971 = vmax.xlane.f32.xlu0 %v7970
        %v7972 = vpop.xlane.xlu0 %7971
        %v7973 = vsel %vm7405, %v7082, -inf
        %7974 = vmax.xlane.f32.xlu0 %v7973
        %v7975 = vpop.xlane.xlu0 %7974
        %v7976 = vsel %vm7405, %v7083, -inf
        %7977 = vmax.xlane.f32.xlu0 %v7976
        %v7978 = vpop.xlane.xlu0 %7977
        %v7979 = vsel %vm7405, %v7084, -inf
        %7980 = vmax.xlane.f32.xlu0 %v7979
        %v7981 = vpop.xlane.xlu0 %7980
        %v7982 = vsel %vm7405, %v7085, -inf
        %7983 = vmax.xlane.f32.xlu0 %v7982
        %v7984 = vpop.xlane.xlu0 %7983
        %v7985 = vsel %vm7405, %v7086, -inf
        %7986 = vmax.xlane.f32.xlu0 %v7985
        %v7987 = vpop.xlane.xlu0 %7986
        %v7988 = vsel %vm7405, %v7087, -inf
        %7989 = vmax.xlane.f32.xlu0 %v7988
        %v7990 = vpop.xlane.xlu0 %7989
        %v7991 = vsel %vm7405, %v7088, -inf
        %7992 = vmax.xlane.f32.xlu0 %v7991
        %v7993 = vpop.xlane.xlu0 %7992
        %v7994 = vsel %vm7405, %v7089, -inf
        %7995 = vmax.xlane.f32.xlu0 %v7994
        %v7996 = vpop.xlane.xlu0 %7995
        %v7997 = vsel %vm7405, %v7090, -inf
        %7998 = vmax.xlane.f32.xlu0 %v7997
        %v7999 = vpop.xlane.xlu0 %7998
        %v8000 = vsel %vm7405, %v7091, -inf
        %8001 = vmax.xlane.f32.xlu0 %v8000
        %v8002 = vpop.xlane.xlu0 %8001
        %v8003 = vsel %vm7405, %v7092, -inf
        %8004 = vmax.xlane.f32.xlu0 %v8003
        %v8005 = vpop.xlane.xlu0 %8004
        %v8006 = vsel %vm7405, %v7093, -inf
        %8007 = vmax.xlane.f32.xlu0 %v8006
        %v8008 = vpop.xlane.xlu0 %8007
        %v8009 = vsel %vm7405, %v7094, -inf
        %8010 = vmax.xlane.f32.xlu0 %v8009
        %v8011 = vpop.xlane.xlu0 %8010
        %v8012 = vsel %vm7405, %v7095, -inf
        %8013 = vmax.xlane.f32.xlu0 %v8012
        %v8014 = vpop.xlane.xlu0 %8013
        %v8015 = vsel %vm7405, %v7096, -inf
        %8016 = vmax.xlane.f32.xlu0 %v8015
        %v8017 = vpop.xlane.xlu0 %8016
        %v8018 = vsel %vm7405, %v7097, -inf
        %8019 = vmax.xlane.f32.xlu0 %v8018
        %v8020 = vpop.xlane.xlu0 %8019
        %v8021 = vsel %vm7405, %v7098, -inf
        %8022 = vmax.xlane.f32.xlu0 %v8021
        %v8023 = vpop.xlane.xlu0 %8022
        %v8024 = vsel %vm7405, %v7099, -inf
        %8025 = vmax.xlane.f32.xlu0 %v8024
        %v8026 = vpop.xlane.xlu0 %8025
        %v8027 = vsel %vm7405, %v7100, -inf
        %8028 = vmax.xlane.f32.xlu0 %v8027
        %v8029 = vpop.xlane.xlu0 %8028
        %v8030 = vsel %vm7405, %v7101, -inf
        %8031 = vmax.xlane.f32.xlu0 %v8030
        %v8032 = vpop.xlane.xlu0 %8031
        %v8033 = vsel %vm7405, %v7102, -inf
        %8034 = vmax.xlane.f32.xlu0 %v8033
        %v8035 = vpop.xlane.xlu0 %8034
        %v8036 = vsel %vm7405, %v7103, -inf
        %8037 = vmax.xlane.f32.xlu0 %v8036
        %v8038 = vpop.xlane.xlu0 %8037
        %v8039 = vsel %vm7405, %v7104, -inf
        %8040 = vmax.xlane.f32.xlu0 %v8039
        %v8041 = vpop.xlane.xlu0 %8040
        %v8042 = vsel %vm7405, %v7105, -inf
        %8043 = vmax.xlane.f32.xlu0 %v8042
        %v8044 = vpop.xlane.xlu0 %8043
        %v8045 = vsel %vm7405, %v7106, -inf
        %8046 = vmax.xlane.f32.xlu0 %v8045
        %v8047 = vpop.xlane.xlu0 %8046
        %v8048 = vsel %vm7405, %v7107, -inf
        %8049 = vmax.xlane.f32.xlu0 %v8048
        %v8050 = vpop.xlane.xlu0 %8049
        %v8051 = vsel %vm7405, %v7108, -inf
        %8052 = vmax.xlane.f32.xlu0 %v8051
        %v8053 = vpop.xlane.xlu0 %8052
        %v8054 = vsel %vm7405, %v7109, -inf
        %8055 = vmax.xlane.f32.xlu0 %v8054
        %v8056 = vpop.xlane.xlu0 %8055
        %v8057 = vsel %vm7405, %v7110, -inf
        %8058 = vmax.xlane.f32.xlu0 %v8057
        %v8059 = vpop.xlane.xlu0 %8058
        %v8060 = vsel %vm7405, %v7111, -inf
        %8061 = vmax.xlane.f32.xlu0 %v8060
        %v8062 = vpop.xlane.xlu0 %8061
        %v8063 = vsel %vm7405, %v7112, -inf
        %8064 = vmax.xlane.f32.xlu0 %v8063
        %v8065 = vpop.xlane.xlu0 %8064
        %v8066 = vsel %vm7405, %v7113, -inf
        %8067 = vmax.xlane.f32.xlu0 %v8066
        %v8068 = vpop.xlane.xlu0 %8067
        %v8069 = vsel %vm7405, %v7114, -inf
        %8070 = vmax.xlane.f32.xlu0 %v8069
        %v8071 = vpop.xlane.xlu0 %8070
        %v8072 = vsel %vm7405, %v7115, -inf
        %8073 = vmax.xlane.f32.xlu0 %v8072
        %v8074 = vpop.xlane.xlu0 %8073
        %v8075 = vsel %vm7405, %v7116, -inf
        %8076 = vmax.xlane.f32.xlu0 %v8075
        %v8077 = vpop.xlane.xlu0 %8076
        %v8078 = vsel %vm7405, %v7117, -inf
        %8079 = vmax.xlane.f32.xlu0 %v8078
        %v8080 = vpop.xlane.xlu0 %8079
        %v8081 = vsel %vm7405, %v7118, -inf
        %8082 = vmax.xlane.f32.xlu0 %v8081
        %v8083 = vpop.xlane.xlu0 %8082
        %v8084 = vsel %vm7405, %v7119, -inf
        %8085 = vmax.xlane.f32.xlu0 %v8084
        %v8086 = vpop.xlane.xlu0 %8085
        %v8087 = vsel %vm7405, %v7120, -inf
        %8088 = vmax.xlane.f32.xlu0 %v8087
        %v8089 = vpop.xlane.xlu0 %8088
        %v8090 = vsel %vm7405, %v7121, -inf
        %8091 = vmax.xlane.f32.xlu0 %v8090
        %v8092 = vpop.xlane.xlu0 %8091
        %v8093 = vsel %vm7405, %v7122, -inf
        %8094 = vmax.xlane.f32.xlu0 %v8093
        %v8095 = vpop.xlane.xlu0 %8094
        %v8096 = vsel %vm7405, %v7123, -inf
        %8097 = vmax.xlane.f32.xlu0 %v8096
        %v8098 = vpop.xlane.xlu0 %8097
        %v8099 = vsel %vm7405, %v7124, -inf
        %8100 = vmax.xlane.f32.xlu0 %v8099
        %v8101 = vpop.xlane.xlu0 %8100
        %v8102 = vsel %vm7405, %v7125, -inf
        %8103 = vmax.xlane.f32.xlu0 %v8102
        %v8104 = vpop.xlane.xlu0 %8103
        %v8105 = vsel %vm7405, %v7126, -inf
        %8106 = vmax.xlane.f32.xlu0 %v8105
        %v8107 = vpop.xlane.xlu0 %8106
        %v8108 = vsel %vm7405, %v7127, -inf
        %8109 = vmax.xlane.f32.xlu0 %v8108
        %v8110 = vpop.xlane.xlu0 %8109
        %v8111 = vsel %vm7405, %v7128, -inf
        %8112 = vmax.xlane.f32.xlu0 %v8111
        %v8113 = vpop.xlane.xlu0 %8112
        %v8114 = vsel %vm7405, %v7129, -inf
        %8115 = vmax.xlane.f32.xlu0 %v8114
        %v8116 = vpop.xlane.xlu0 %8115
        %v8117 = vsel %vm7405, %v7130, -inf
        %8118 = vmax.xlane.f32.xlu0 %v8117
        %v8119 = vpop.xlane.xlu0 %8118
        %v8120 = vsel %vm7405, %v7131, -inf
        %8121 = vmax.xlane.f32.xlu0 %v8120
        %v8122 = vpop.xlane.xlu0 %8121
        %v8123 = vsel %vm7405, %v7132, -inf
        %8124 = vmax.xlane.f32.xlu0 %v8123
        %v8125 = vpop.xlane.xlu0 %8124
        %v8126 = vsel %vm7405, %v7133, -inf
        %8127 = vmax.xlane.f32.xlu0 %v8126
        %v8128 = vpop.xlane.xlu0 %8127
        %v8129 = vsel %vm7405, %v7134, -inf
        %8130 = vmax.xlane.f32.xlu0 %v8129
        %v8131 = vpop.xlane.xlu0 %8130
        %v8132 = vsel %vm7405, %v7135, -inf
        %8133 = vmax.xlane.f32.xlu0 %v8132
        %v8134 = vpop.xlane.xlu0 %8133
        %v8135 = vsel %vm7405, %v7136, -inf
        %8136 = vmax.xlane.f32.xlu0 %v8135
        %v8137 = vpop.xlane.xlu0 %8136
        %v8138 = vsel %vm7405, %v7137, -inf
        %8139 = vmax.xlane.f32.xlu0 %v8138
        %v8140 = vpop.xlane.xlu0 %8139
        %v8141 = vsel %vm7405, %v7138, -inf
        %8142 = vmax.xlane.f32.xlu0 %v8141
        %v8143 = vpop.xlane.xlu0 %8142
        %v8144 = vsel %vm7405, %v7139, -inf
        %8145 = vmax.xlane.f32.xlu0 %v8144
        %v8146 = vpop.xlane.xlu0 %8145
        %v8147 = vsel %vm7405, %v7140, -inf
        %8148 = vmax.xlane.f32.xlu0 %v8147
        %v8149 = vpop.xlane.xlu0 %8148
        %v8150 = vsel %vm7405, %v7141, -inf
        %8151 = vmax.xlane.f32.xlu0 %v8150
        %v8152 = vpop.xlane.xlu0 %8151
        %v8153 = vsel %vm7405, %v7142, -inf
        %8154 = vmax.xlane.f32.xlu0 %v8153
        %v8155 = vpop.xlane.xlu0 %8154
        %v8156 = vsel %vm7405, %v7143, -inf
        %8157 = vmax.xlane.f32.xlu0 %v8156
        %v8158 = vpop.xlane.xlu0 %8157
        %v8159 = vsel %vm7405, %v7144, -inf
        %8160 = vmax.xlane.f32.xlu0 %v8159
        %v8161 = vpop.xlane.xlu0 %8160
        %v8162 = vsel %vm7405, %v7145, -inf
        %8163 = vmax.xlane.f32.xlu0 %v8162
        %v8164 = vpop.xlane.xlu0 %8163
        %v8165 = vsel %vm7405, %v7146, -inf
        %8166 = vmax.xlane.f32.xlu0 %v8165
        %v8167 = vpop.xlane.xlu0 %8166
        %v8168 = vsel %vm7405, %v7147, -inf
        %8169 = vmax.xlane.f32.xlu0 %v8168
        %v8170 = vpop.xlane.xlu0 %8169
        %v8171 = vsel %vm7405, %v7148, -inf
        %8172 = vmax.xlane.f32.xlu0 %v8171
        %v8173 = vpop.xlane.xlu0 %8172
        %v8174 = vsel %vm7405, %v7149, -inf
        %8175 = vmax.xlane.f32.xlu0 %v8174
        %v8176 = vpop.xlane.xlu0 %8175
        %v8177 = vsel %vm7405, %v7150, -inf
        %8178 = vmax.xlane.f32.xlu0 %v8177
        %v8179 = vpop.xlane.xlu0 %8178
        %v8180 = vsel %vm7405, %v7151, -inf
        %8181 = vmax.xlane.f32.xlu0 %v8180
        %v8182 = vpop.xlane.xlu0 %8181
        %v8183 = vsel %vm7405, %v7152, -inf
        %8184 = vmax.xlane.f32.xlu0 %v8183
        %v8185 = vpop.xlane.xlu0 %8184
        %v8186 = vsel %vm7405, %v7153, -inf
        %8187 = vmax.xlane.f32.xlu0 %v8186
        %v8188 = vpop.xlane.xlu0 %8187
        %v8189 = vsel %vm7405, %v7154, -inf
        %8190 = vmax.xlane.f32.xlu0 %v8189
        %v8191 = vpop.xlane.xlu0 %8190
        %v8192 = vsel %vm7405, %v7155, -inf
        %8193 = vmax.xlane.f32.xlu0 %v8192
        %v8194 = vpop.xlane.xlu0 %8193
        %v8195 = vsel %vm7405, %v7156, -inf
        %8196 = vmax.xlane.f32.xlu0 %v8195
        %v8197 = vpop.xlane.xlu0 %8196
        %v8198 = vsel %vm7405, %v7157, -inf
        %8199 = vmax.xlane.f32.xlu0 %v8198
        %v8200 = vpop.xlane.xlu0 %8199
        %v8201 = vsel %vm7405, %v7158, -inf
        %8202 = vmax.xlane.f32.xlu0 %v8201
        %v8203 = vpop.xlane.xlu0 %8202
        %v8204 = vsel %vm7405, %v7159, -inf
        %8205 = vmax.xlane.f32.xlu0 %v8204
        %v8206 = vpop.xlane.xlu0 %8205
        %v8207 = vsel %vm7405, %v7160, -inf
        %8208 = vmax.xlane.f32.xlu0 %v8207
        %v8209 = vpop.xlane.xlu0 %8208
        %v8210 = vsel %vm7405, %v7161, -inf
        %8211 = vmax.xlane.f32.xlu0 %v8210
        %v8212 = vpop.xlane.xlu0 %8211
        %v8213 = vsel %vm7405, %v7162, -inf
        %8214 = vmax.xlane.f32.xlu0 %v8213
        %v8215 = vpop.xlane.xlu0 %8214
        %v8216 = vsel %vm7405, %v7163, -inf
        %8217 = vmax.xlane.f32.xlu0 %v8216
        %v8218 = vpop.xlane.xlu0 %8217
        %v8219 = vsel %vm7405, %v7164, -inf
        %8220 = vmax.xlane.f32.xlu0 %v8219
        %v8221 = vpop.xlane.xlu0 %8220
        %v8222 = vsel %vm7405, %v7165, -inf
        %8223 = vmax.xlane.f32.xlu0 %v8222
        %v8224 = vpop.xlane.xlu0 %8223
        %v8225 = vsel %vm7405, %v7166, -inf
        %8226 = vmax.xlane.f32.xlu0 %v8225
        %v8227 = vpop.xlane.xlu0 %8226
        %v8228 = vsel %vm7405, %v7167, -inf
        %8229 = vmax.xlane.f32.xlu0 %v8228
        %v8230 = vpop.xlane.xlu0 %8229
        %v8231 = vsel %vm7405, %v7168, -inf
        %8232 = vmax.xlane.f32.xlu0 %v8231
        %v8233 = vpop.xlane.xlu0 %8232
        %v8234 = vsel %vm7405, %v7169, -inf
        %8235 = vmax.xlane.f32.xlu0 %v8234
        %v8236 = vpop.xlane.xlu0 %8235
        %v8237 = vsel %vm7405, %v7170, -inf
        %8238 = vmax.xlane.f32.xlu0 %v8237
        %v8239 = vpop.xlane.xlu0 %8238
        %v8240 = vsel %vm7405, %v7171, -inf
        %8241 = vmax.xlane.f32.xlu0 %v8240
        %v8242 = vpop.xlane.xlu0 %8241
        %v8243 = vsel %vm7405, %v7172, -inf
        %8244 = vmax.xlane.f32.xlu0 %v8243
        %v8245 = vpop.xlane.xlu0 %8244
        %v8246 = vsel %vm7405, %v7173, -inf
        %8247 = vmax.xlane.f32.xlu0 %v8246
        %v8248 = vpop.xlane.xlu0 %8247
        %v8249 = vsel %vm7405, %v7174, -inf
        %8250 = vmax.xlane.f32.xlu0 %v8249
        %v8251 = vpop.xlane.xlu0 %8250
        %v8252 = vsel %vm7405, %v7175, -inf
        %8253 = vmax.xlane.f32.xlu0 %v8252
        %v8254 = vpop.xlane.xlu0 %8253
        %v8255 = vsel %vm7405, %v7176, -inf
        %8256 = vmax.xlane.f32.xlu0 %v8255
        %v8257 = vpop.xlane.xlu0 %8256
        %v8258 = vsel %vm7405, %v7177, -inf
        %8259 = vmax.xlane.f32.xlu0 %v8258
        %v8260 = vpop.xlane.xlu0 %8259
        %v8261 = vsel %vm7405, %v7178, -inf
        %8262 = vmax.xlane.f32.xlu0 %v8261
        %v8263 = vpop.xlane.xlu0 %8262
        %v8264 = vsel %vm7405, %v7179, -inf
        %8265 = vmax.xlane.f32.xlu0 %v8264
        %v8266 = vpop.xlane.xlu0 %8265
        %v8267 = vsel %vm7405, %v7180, -inf
        %8268 = vmax.xlane.f32.xlu0 %v8267
        %v8269 = vpop.xlane.xlu0 %8268
        %v8270 = vsel %vm7405, %v7181, -inf
        %8271 = vmax.xlane.f32.xlu0 %v8270
        %v8272 = vpop.xlane.xlu0 %8271
        %v8273 = vsel %vm7405, %v7182, -inf
        %8274 = vmax.xlane.f32.xlu0 %v8273
        %v8275 = vpop.xlane.xlu0 %8274
        %v8276 = vsel %vm7405, %v7183, -inf
        %8277 = vmax.xlane.f32.xlu0 %v8276
        %v8278 = vpop.xlane.xlu0 %8277
        %v8279 = vsel %vm7405, %v7184, -inf
        %8280 = vmax.xlane.f32.xlu0 %v8279
        %v8281 = vpop.xlane.xlu0 %8280
        %v8282 = vsel %vm7405, %v7185, -inf
        %8283 = vmax.xlane.f32.xlu0 %v8282
        %v8284 = vpop.xlane.xlu0 %8283
        %v8285 = vsel %vm7405, %v7186, -inf
        %8286 = vmax.xlane.f32.xlu0 %v8285
        %v8287 = vpop.xlane.xlu0 %8286
        %v8288 = vsel %vm7405, %v7187, -inf
        %8289 = vmax.xlane.f32.xlu0 %v8288
        %v8290 = vpop.xlane.xlu0 %8289
        %v8291 = vsel %vm7405, %v7188, -inf
        %8292 = vmax.xlane.f32.xlu0 %v8291
        %v8293 = vpop.xlane.xlu0 %8292
        %v8294 = vsel %vm7405, %v7189, -inf
        %8295 = vmax.xlane.f32.xlu0 %v8294
        %v8296 = vpop.xlane.xlu0 %8295
        %v8297 = vsel %vm7405, %v7190, -inf
        %8298 = vmax.xlane.f32.xlu0 %v8297
        %v8299 = vpop.xlane.xlu0 %8298
        %v8300 = vsel %vm7405, %v7191, -inf
        %8301 = vmax.xlane.f32.xlu0 %v8300
        %v8302 = vpop.xlane.xlu0 %8301
        %v8303 = vsel %vm7405, %v7192, -inf
        %8304 = vmax.xlane.f32.xlu0 %v8303
        %v8305 = vpop.xlane.xlu0 %8304
        %v8306 = vsel %vm7405, %v7193, -inf
        %8307 = vmax.xlane.f32.xlu0 %v8306
        %v8308 = vpop.xlane.xlu0 %8307
        %v8309 = vsel %vm7405, %v7194, -inf
        %8310 = vmax.xlane.f32.xlu0 %v8309
        %v8311 = vpop.xlane.xlu0 %8310
        %v8312 = vsel %vm7405, %v7195, -inf
        %8313 = vmax.xlane.f32.xlu0 %v8312
        %v8314 = vpop.xlane.xlu0 %8313
        %v8315 = vsel %vm7405, %v7196, -inf
        %8316 = vmax.xlane.f32.xlu0 %v8315
        %v8317 = vpop.xlane.xlu0 %8316
        %v8318 = vsel %vm7405, %v7197, -inf
        %8319 = vmax.xlane.f32.xlu0 %v8318
        %v8320 = vpop.xlane.xlu0 %8319
        %v8321 = vsel %vm7405, %v7198, -inf
        %8322 = vmax.xlane.f32.xlu0 %v8321
        %v8323 = vpop.xlane.xlu0 %8322
        %v8324 = vsel %vm7405, %v7199, -inf
        %8325 = vmax.xlane.f32.xlu0 %v8324
        %v8326 = vpop.xlane.xlu0 %8325
        %v8327 = vsel %vm7405, %v7200, -inf
        %8328 = vmax.xlane.f32.xlu0 %v8327
        %v8329 = vpop.xlane.xlu0 %8328
        %v8330 = vsel %vm7405, %v7201, -inf
        %8331 = vmax.xlane.f32.xlu0 %v8330
        %v8332 = vpop.xlane.xlu0 %8331
        %v8333 = vsel %vm7405, %v7202, -inf
        %8334 = vmax.xlane.f32.xlu0 %v8333
        %v8335 = vpop.xlane.xlu0 %8334
        %v8336 = vsel %vm7405, %v7203, -inf
        %8337 = vmax.xlane.f32.xlu0 %v8336
        %v8338 = vpop.xlane.xlu0 %8337
        %v8339 = vsel %vm7405, %v7204, -inf
        %8340 = vmax.xlane.f32.xlu0 %v8339
        %v8341 = vpop.xlane.xlu0 %8340
        %v8342 = vsel %vm7405, %v7205, -inf
        %8343 = vmax.xlane.f32.xlu0 %v8342
        %v8344 = vpop.xlane.xlu0 %8343
        %v8345 = vsel %vm7405, %v7206, -inf
        %8346 = vmax.xlane.f32.xlu0 %v8345
        %v8347 = vpop.xlane.xlu0 %8346
        %v8348 = vsel %vm7405, %v7207, -inf
        %8349 = vmax.xlane.f32.xlu0 %v8348
        %v8350 = vpop.xlane.xlu0 %8349
        %v8351 = vsel %vm7405, %v7208, -inf
        %8352 = vmax.xlane.f32.xlu0 %v8351
        %v8353 = vpop.xlane.xlu0 %8352
        %v8354 = vsel %vm7405, %v7209, -inf
        %8355 = vmax.xlane.f32.xlu0 %v8354
        %v8356 = vpop.xlane.xlu0 %8355
        %v8357 = vsel %vm7405, %v7210, -inf
        %8358 = vmax.xlane.f32.xlu0 %v8357
        %v8359 = vpop.xlane.xlu0 %8358
        %v8360 = vsel %vm7405, %v7211, -inf
        %8361 = vmax.xlane.f32.xlu0 %v8360
        %v8362 = vpop.xlane.xlu0 %8361
        %v8363 = vsel %vm7405, %v7212, -inf
        %8364 = vmax.xlane.f32.xlu0 %v8363
        %v8365 = vpop.xlane.xlu0 %8364
        %v8366 = vsel %vm7405, %v7213, -inf
        %8367 = vmax.xlane.f32.xlu0 %v8366
        %v8368 = vpop.xlane.xlu0 %8367
        %v8369 = vsel %vm7405, %v7214, -inf
        %8370 = vmax.xlane.f32.xlu0 %v8369
        %v8371 = vpop.xlane.xlu0 %8370
        %v8372 = vsel %vm7405, %v7215, -inf
        %8373 = vmax.xlane.f32.xlu0 %v8372
        %v8374 = vpop.xlane.xlu0 %8373
        %v8375 = vsel %vm7405, %v7216, -inf
        %8376 = vmax.xlane.f32.xlu0 %v8375
        %v8377 = vpop.xlane.xlu0 %8376
        %v8378 = vsel %vm7405, %v7217, -inf
        %8379 = vmax.xlane.f32.xlu0 %v8378
        %v8380 = vpop.xlane.xlu0 %8379
        %v8381 = vsel %vm7405, %v7218, -inf
        %8382 = vmax.xlane.f32.xlu0 %v8381
        %v8383 = vpop.xlane.xlu0 %8382
        %v8384 = vsel %vm7405, %v7219, -inf
        %8385 = vmax.xlane.f32.xlu0 %v8384
        %v8386 = vpop.xlane.xlu0 %8385
        %v8387 = vsel %vm7405, %v7220, -inf
        %8388 = vmax.xlane.f32.xlu0 %v8387
        %v8389 = vpop.xlane.xlu0 %8388
        %v8390 = vsel %vm7405, %v7221, -inf
        %8391 = vmax.xlane.f32.xlu0 %v8390
        %v8392 = vpop.xlane.xlu0 %8391
        %v8393 = vsel %vm7405, %v7222, -inf
        %8394 = vmax.xlane.f32.xlu0 %v8393
        %v8395 = vpop.xlane.xlu0 %8394
        %v8396 = vsel %vm7405, %v7223, -inf
        %8397 = vmax.xlane.f32.xlu0 %v8396
        %v8398 = vpop.xlane.xlu0 %8397
        %v8399 = vsel %vm7405, %v7224, -inf
        %8400 = vmax.xlane.f32.xlu0 %v8399
        %v8401 = vpop.xlane.xlu0 %8400
        %v8402 = vsel %vm7405, %v7225, -inf
        %8403 = vmax.xlane.f32.xlu0 %v8402
        %v8404 = vpop.xlane.xlu0 %8403
        %v8405 = vsel %vm7405, %v7226, -inf
        %8406 = vmax.xlane.f32.xlu0 %v8405
        %v8407 = vpop.xlane.xlu0 %8406
        %v8408 = vsel %vm7405, %v7227, -inf
        %8409 = vmax.xlane.f32.xlu0 %v8408
        %v8410 = vpop.xlane.xlu0 %8409
        %v8411 = vsel %vm7405, %v7228, -inf
        %8412 = vmax.xlane.f32.xlu0 %v8411
        %v8413 = vpop.xlane.xlu0 %8412
        %v8414 = vsel %vm7405, %v7229, -inf
        %8415 = vmax.xlane.f32.xlu0 %v8414
        %v8416 = vpop.xlane.xlu0 %8415
        %v8417 = vsel %vm7405, %v7230, -inf
        %8418 = vmax.xlane.f32.xlu0 %v8417
        %v8419 = vpop.xlane.xlu0 %8418
        %v8420 = vsel %vm7405, %v7231, -inf
        %8421 = vmax.xlane.f32.xlu0 %v8420
        %v8422 = vpop.xlane.xlu0 %8421
        %v8423 = vsel %vm7405, %v7232, -inf
        %8424 = vmax.xlane.f32.xlu0 %v8423
        %v8425 = vpop.xlane.xlu0 %8424
        %v8426 = vsel %vm7405, %v7233, -inf
        %8427 = vmax.xlane.f32.xlu0 %v8426
        %v8428 = vpop.xlane.xlu0 %8427
        %v8429 = vsel %vm7405, %v7234, -inf
        %8430 = vmax.xlane.f32.xlu0 %v8429
        %v8431 = vpop.xlane.xlu0 %8430
        %v8432 = vsel %vm7405, %v7235, -inf
        %8433 = vmax.xlane.f32.xlu0 %v8432
        %v8434 = vpop.xlane.xlu0 %8433
        %v8435 = vsel %vm7405, %v7236, -inf
        %8436 = vmax.xlane.f32.xlu0 %v8435
        %v8437 = vpop.xlane.xlu0 %8436
        %v8438 = vsel %vm7405, %v7237, -inf
        %8439 = vmax.xlane.f32.xlu0 %v8438
        %v8440 = vpop.xlane.xlu0 %8439
        %v8441 = vsel %vm7405, %v7238, -inf
        %8442 = vmax.xlane.f32.xlu0 %v8441
        %v8443 = vpop.xlane.xlu0 %8442
        %v8444 = vsel %vm7405, %v7239, -inf
        %8445 = vmax.xlane.f32.xlu0 %v8444
        %v8446 = vpop.xlane.xlu0 %8445
        %v8447 = vsel %vm7405, %v7240, -inf
        %8448 = vmax.xlane.f32.xlu0 %v8447
        %v8449 = vpop.xlane.xlu0 %8448
        %v8450 = vsel %vm7405, %v7241, -inf
        %8451 = vmax.xlane.f32.xlu0 %v8450
        %v8452 = vpop.xlane.xlu0 %8451
        %v8453 = vsel %vm7405, %v7242, -inf
        %8454 = vmax.xlane.f32.xlu0 %v8453
        %v8455 = vpop.xlane.xlu0 %8454
        %v8456 = vsel %vm7405, %v7243, -inf
        %8457 = vmax.xlane.f32.xlu0 %v8456
        %v8458 = vpop.xlane.xlu0 %8457
        %v8459 = vsel %vm7405, %v7244, -inf
        %8460 = vmax.xlane.f32.xlu0 %v8459
        %v8461 = vpop.xlane.xlu0 %8460
        %v8462 = vsel %vm7405, %v7245, -inf
        %8463 = vmax.xlane.f32.xlu0 %v8462
        %v8464 = vpop.xlane.xlu0 %8463
        %v8465 = vsel %vm7405, %v7246, -inf
        %8466 = vmax.xlane.f32.xlu0 %v8465
        %v8467 = vpop.xlane.xlu0 %8466
        %v8468 = vsel %vm7405, %v7247, -inf
        %8469 = vmax.xlane.f32.xlu0 %v8468
        %v8470 = vpop.xlane.xlu0 %8469
        %v8471 = vsel %vm7405, %v7248, -inf
        %8472 = vmax.xlane.f32.xlu0 %v8471
        %v8473 = vpop.xlane.xlu0 %8472
        %v8474 = vsel %vm7405, %v7249, -inf
        %8475 = vmax.xlane.f32.xlu0 %v8474
        %v8476 = vpop.xlane.xlu0 %8475
        %v8477 = vsel %vm7405, %v7250, -inf
        %8478 = vmax.xlane.f32.xlu0 %v8477
        %v8479 = vpop.xlane.xlu0 %8478
        %v8480 = vsel %vm7405, %v7251, -inf
        %8481 = vmax.xlane.f32.xlu0 %v8480
        %v8482 = vpop.xlane.xlu0 %8481
        %v8483 = vsel %vm7405, %v7252, -inf
        %8484 = vmax.xlane.f32.xlu0 %v8483
        %v8485 = vpop.xlane.xlu0 %8484
        %v8486 = vsel %vm7405, %v7253, -inf
        %8487 = vmax.xlane.f32.xlu0 %v8486
        %v8488 = vpop.xlane.xlu0 %8487
        %v8489 = vsel %vm7405, %v7254, -inf
        %8490 = vmax.xlane.f32.xlu0 %v8489
        %v8491 = vpop.xlane.xlu0 %8490
        %v8492 = vsel %vm7405, %v7255, -inf
        %8493 = vmax.xlane.f32.xlu0 %v8492
        %v8494 = vpop.xlane.xlu0 %8493
        %v8495 = vsel %vm7405, %v7256, -inf
        %8496 = vmax.xlane.f32.xlu0 %v8495
        %v8497 = vpop.xlane.xlu0 %8496
        %v8498 = vsel %vm7405, %v7257, -inf
        %8499 = vmax.xlane.f32.xlu0 %v8498
        %v8500 = vpop.xlane.xlu0 %8499
        %v8501 = vsel %vm7405, %v7258, -inf
        %8502 = vmax.xlane.f32.xlu0 %v8501
        %v8503 = vpop.xlane.xlu0 %8502
        %v8504 = vsel %vm7405, %v7259, -inf
        %8505 = vmax.xlane.f32.xlu0 %v8504
        %v8506 = vpop.xlane.xlu0 %8505
        %v8507 = vsel %vm7405, %v7260, -inf
        %8508 = vmax.xlane.f32.xlu0 %v8507
        %v8509 = vpop.xlane.xlu0 %8508
        %v8510 = vsel %vm7405, %v7261, -inf
        %8511 = vmax.xlane.f32.xlu0 %v8510
        %v8512 = vpop.xlane.xlu0 %8511
        %v8513 = vsel %vm7405, %v7262, -inf
        %8514 = vmax.xlane.f32.xlu0 %v8513
        %v8515 = vpop.xlane.xlu0 %8514
        %v8516 = vsel %vm7405, %v7263, -inf
        %8517 = vmax.xlane.f32.xlu0 %v8516
        %v8518 = vpop.xlane.xlu0 %8517
        %v8519 = vsel %vm7405, %v7264, -inf
        %8520 = vmax.xlane.f32.xlu0 %v8519
        %v8521 = vpop.xlane.xlu0 %8520
        %v8522 = vsel %vm7405, %v7265, -inf
        %8523 = vmax.xlane.f32.xlu0 %v8522
        %v8524 = vpop.xlane.xlu0 %8523
        %v8525 = vsel %vm7405, %v7266, -inf
        %8526 = vmax.xlane.f32.xlu0 %v8525
        %v8527 = vpop.xlane.xlu0 %8526
        %v8528 = vsel %vm7405, %v7267, -inf
        %8529 = vmax.xlane.f32.xlu0 %v8528
        %v8530 = vpop.xlane.xlu0 %8529
        %v8531 = vsel %vm7405, %v7268, -inf
        %8532 = vmax.xlane.f32.xlu0 %v8531
        %v8533 = vpop.xlane.xlu0 %8532
        %v8534 = vsel %vm7405, %v7269, -inf
        %8535 = vmax.xlane.f32.xlu0 %v8534
        %v8536 = vpop.xlane.xlu0 %8535
        %v8537 = vsel %vm7405, %v7270, -inf
        %8538 = vmax.xlane.f32.xlu0 %v8537
        %v8539 = vpop.xlane.xlu0 %8538
        %v8540 = vsel %vm7405, %v7271, -inf
        %8541 = vmax.xlane.f32.xlu0 %v8540
        %v8542 = vpop.xlane.xlu0 %8541
        %v8543 = vsel %vm7405, %v7272, -inf
        %8544 = vmax.xlane.f32.xlu0 %v8543
        %v8545 = vpop.xlane.xlu0 %8544
        %v8546 = vsel %vm7405, %v7273, -inf
        %8547 = vmax.xlane.f32.xlu0 %v8546
        %v8548 = vpop.xlane.xlu0 %8547
        %v8549 = vsel %vm7405, %v7274, -inf
        %8550 = vmax.xlane.f32.xlu0 %v8549
        %v8551 = vpop.xlane.xlu0 %8550
        %v8552 = vsel %vm7405, %v7275, -inf
        %8553 = vmax.xlane.f32.xlu0 %v8552
        %v8554 = vpop.xlane.xlu0 %8553
        %v8555 = vsel %vm7405, %v7276, -inf
        %8556 = vmax.xlane.f32.xlu0 %v8555
        %v8557 = vpop.xlane.xlu0 %8556
        %v8558 = vsel %vm7405, %v7277, -inf
        %8559 = vmax.xlane.f32.xlu0 %v8558
        %v8560 = vpop.xlane.xlu0 %8559
        %v8561 = vsel %vm7405, %v7278, -inf
        %8562 = vmax.xlane.f32.xlu0 %v8561
        %v8563 = vpop.xlane.xlu0 %8562
        %v8564 = vsel %vm7405, %v7279, -inf
        %8565 = vmax.xlane.f32.xlu0 %v8564
        %v8566 = vpop.xlane.xlu0 %8565
        %v8567 = vsel %vm7405, %v7280, -inf
        %8568 = vmax.xlane.f32.xlu0 %v8567
        %v8569 = vpop.xlane.xlu0 %8568
        %v8570 = vsel %vm7405, %v7281, -inf
        %8571 = vmax.xlane.f32.xlu0 %v8570
        %v8572 = vpop.xlane.xlu0 %8571
        %v8573 = vsel %vm7405, %v7282, -inf
        %8574 = vmax.xlane.f32.xlu0 %v8573
        %v8575 = vpop.xlane.xlu0 %8574
        %v8576 = vsel %vm7405, %v7283, -inf
        %8577 = vmax.xlane.f32.xlu0 %v8576
        %v8578 = vpop.xlane.xlu0 %8577
        %v8579 = vsel %vm7405, %v7284, -inf
        %8580 = vmax.xlane.f32.xlu0 %v8579
        %v8581 = vpop.xlane.xlu0 %8580
        %v8582 = vsel %vm7405, %v7285, -inf
        %8583 = vmax.xlane.f32.xlu0 %v8582
        %v8584 = vpop.xlane.xlu0 %8583
        %v8585 = vsel %vm7405, %v7286, -inf
        %8586 = vmax.xlane.f32.xlu0 %v8585
        %v8587 = vpop.xlane.xlu0 %8586
        %v8588 = vsel %vm7405, %v7287, -inf
        %8589 = vmax.xlane.f32.xlu0 %v8588
        %v8590 = vpop.xlane.xlu0 %8589
        %v8591 = vsel %vm7405, %v7288, -inf
        %8592 = vmax.xlane.f32.xlu0 %v8591
        %v8593 = vpop.xlane.xlu0 %8592
        %v8594 = vsel %vm7405, %v7289, -inf
        %8595 = vmax.xlane.f32.xlu0 %v8594
        %v8596 = vpop.xlane.xlu0 %8595
        %v8597 = vsel %vm7405, %v7290, -inf
        %8598 = vmax.xlane.f32.xlu0 %v8597
        %v8599 = vpop.xlane.xlu0 %8598
        %v8600 = vsel %vm7405, %v7291, -inf
        %8601 = vmax.xlane.f32.xlu0 %v8600
        %v8602 = vpop.xlane.xlu0 %8601
        %v8603 = vsel %vm7405, %v7292, -inf
        %8604 = vmax.xlane.f32.xlu0 %v8603
        %v8605 = vpop.xlane.xlu0 %8604
        %v8606 = vsel %vm7405, %v7293, -inf
        %8607 = vmax.xlane.f32.xlu0 %v8606
        %v8608 = vpop.xlane.xlu0 %8607
        %v8609 = vsel %vm7405, %v7294, -inf
        %8610 = vmax.xlane.f32.xlu0 %v8609
        %v8611 = vpop.xlane.xlu0 %8610
        %v8612 = vsel %vm7405, %v7295, -inf
        %8613 = vmax.xlane.f32.xlu0 %v8612
        %v8614 = vpop.xlane.xlu0 %8613
        %v8615 = vsel %vm7405, %v7296, -inf
        %8616 = vmax.xlane.f32.xlu0 %v8615
        %v8617 = vpop.xlane.xlu0 %8616
        %v8618 = vsel %vm7405, %v7297, -inf
        %8619 = vmax.xlane.f32.xlu0 %v8618
        %v8620 = vpop.xlane.xlu0 %8619
        %v8621 = vsel %vm7405, %v7298, -inf
        %8622 = vmax.xlane.f32.xlu0 %v8621
        %v8623 = vpop.xlane.xlu0 %8622
        %v8624 = vsel %vm7405, %v7299, -inf
        %8625 = vmax.xlane.f32.xlu0 %v8624
        %v8626 = vpop.xlane.xlu0 %8625
        %v8627 = vsel %vm7405, %v7300, -inf
        %8628 = vmax.xlane.f32.xlu0 %v8627
        %v8629 = vpop.xlane.xlu0 %8628
        %v8630 = vsel %vm7405, %v7301, -inf
        %8631 = vmax.xlane.f32.xlu0 %v8630
        %v8632 = vpop.xlane.xlu0 %8631
        %v8633 = vsel %vm7405, %v7302, -inf
        %8634 = vmax.xlane.f32.xlu0 %v8633
        %v8635 = vpop.xlane.xlu0 %8634
        %v8636 = vsel %vm7405, %v7303, -inf
        %8637 = vmax.xlane.f32.xlu0 %v8636
        %v8638 = vpop.xlane.xlu0 %8637
        %v8639 = vsel %vm7405, %v7304, -inf
        %8640 = vmax.xlane.f32.xlu0 %v8639
        %v8641 = vpop.xlane.xlu0 %8640
        %v8642 = vsel %vm7405, %v7305, -inf
        %8643 = vmax.xlane.f32.xlu0 %v8642
        %v8644 = vpop.xlane.xlu0 %8643
        %v8645 = vsel %vm7405, %v7306, -inf
        %8646 = vmax.xlane.f32.xlu0 %v8645
        %v8647 = vpop.xlane.xlu0 %8646
        %v8648 = vsel %vm7405, %v7307, -inf
        %8649 = vmax.xlane.f32.xlu0 %v8648
        %v8650 = vpop.xlane.xlu0 %8649
        %v8651 = vsel %vm7405, %v7308, -inf
        %8652 = vmax.xlane.f32.xlu0 %v8651
        %v8653 = vpop.xlane.xlu0 %8652
        %v8654 = vsel %vm7405, %v7309, -inf
        %8655 = vmax.xlane.f32.xlu0 %v8654
        %v8656 = vpop.xlane.xlu0 %8655
        %v8657 = vsel %vm7405, %v7310, -inf
        %8658 = vmax.xlane.f32.xlu0 %v8657
        %v8659 = vpop.xlane.xlu0 %8658
        %v8660 = vsel %vm7405, %v7311, -inf
        %8661 = vmax.xlane.f32.xlu0 %v8660
        %v8662 = vpop.xlane.xlu0 %8661
        %v8663 = vsel %vm7405, %v7312, -inf
        %8664 = vmax.xlane.f32.xlu0 %v8663
        %v8665 = vpop.xlane.xlu0 %8664
        %v8666 = vsel %vm7405, %v7313, -inf
        %8667 = vmax.xlane.f32.xlu0 %v8666
        %v8668 = vpop.xlane.xlu0 %8667
        %v8669 = vsel %vm7405, %v7314, -inf
        %8670 = vmax.xlane.f32.xlu0 %v8669
        %v8671 = vpop.xlane.xlu0 %8670
        %v8672 = vsel %vm7405, %v7315, -inf
        %8673 = vmax.xlane.f32.xlu0 %v8672
        %v8674 = vpop.xlane.xlu0 %8673
        %v8675 = vsel %vm7405, %v7316, -inf
        %8676 = vmax.xlane.f32.xlu0 %v8675
        %v8677 = vpop.xlane.xlu0 %8676
        %v8678 = vsel %vm7405, %v7317, -inf
        %8679 = vmax.xlane.f32.xlu0 %v8678
        %v8680 = vpop.xlane.xlu0 %8679
        %v8681 = vsel %vm7405, %v7318, -inf
        %8682 = vmax.xlane.f32.xlu0 %v8681
        %v8683 = vpop.xlane.xlu0 %8682
        %v8684 = vsel %vm7405, %v7319, -inf
        %8685 = vmax.xlane.f32.xlu0 %v8684
        %v8686 = vpop.xlane.xlu0 %8685
        %v8687 = vsel %vm7405, %v7320, -inf
        %8688 = vmax.xlane.f32.xlu0 %v8687
        %v8689 = vpop.xlane.xlu0 %8688
        %v8690 = vsel %vm7405, %v7321, -inf
        %8691 = vmax.xlane.f32.xlu0 %v8690
        %v8692 = vpop.xlane.xlu0 %8691
        %v8693 = vsel %vm7405, %v7322, -inf
        %8694 = vmax.xlane.f32.xlu0 %v8693
        %v8695 = vpop.xlane.xlu0 %8694
        %v8696 = vsel %vm7405, %v7323, -inf
        %8697 = vmax.xlane.f32.xlu0 %v8696
        %v8698 = vpop.xlane.xlu0 %8697
        %v8699 = vsel %vm7405, %v7324, -inf
        %8700 = vmax.xlane.f32.xlu0 %v8699
        %v8701 = vpop.xlane.xlu0 %8700
        %v8702 = vsel %vm7405, %v7325, -inf
        %8703 = vmax.xlane.f32.xlu0 %v8702
        %v8704 = vpop.xlane.xlu0 %8703
        %v8705 = vsel %vm7405, %v7326, -inf
        %8706 = vmax.xlane.f32.xlu0 %v8705
        %v8707 = vpop.xlane.xlu0 %8706
        %v8708 = vsel %vm7405, %v7327, -inf
        %8709 = vmax.xlane.f32.xlu0 %v8708
        %v8710 = vpop.xlane.xlu0 %8709
        %v8711 = vsel %vm7405, %v7328, -inf
        %8712 = vmax.xlane.f32.xlu0 %v8711
        %v8713 = vpop.xlane.xlu0 %8712
        %v8714 = vsel %vm7405, %v7329, -inf
        %8715 = vmax.xlane.f32.xlu0 %v8714
        %v8716 = vpop.xlane.xlu0 %8715
        %v8717 = vsel %vm7405, %v7330, -inf
        %8718 = vmax.xlane.f32.xlu0 %v8717
        %v8719 = vpop.xlane.xlu0 %8718
        %v8720 = vsel %vm7405, %v7331, -inf
        %8721 = vmax.xlane.f32.xlu0 %v8720
        %v8722 = vpop.xlane.xlu0 %8721
        %v8723 = vsel %vm7405, %v7332, -inf
        %8724 = vmax.xlane.f32.xlu0 %v8723
        %v8725 = vpop.xlane.xlu0 %8724
        %v8726 = vsel %vm7405, %v7333, -inf
        %8727 = vmax.xlane.f32.xlu0 %v8726
        %v8728 = vpop.xlane.xlu0 %8727
        %v8729 = vsel %vm7405, %v7334, -inf
        %8730 = vmax.xlane.f32.xlu0 %v8729
        %v8731 = vpop.xlane.xlu0 %8730
        %v8732 = vsel %vm7405, %v7335, -inf
        %8733 = vmax.xlane.f32.xlu0 %v8732
        %v8734 = vpop.xlane.xlu0 %8733
        %v8735 = vsel %vm7405, %v7336, -inf
        %8736 = vmax.xlane.f32.xlu0 %v8735
        %v8737 = vpop.xlane.xlu0 %8736
        %v8738 = vsel %vm7405, %v7337, -inf
        %8739 = vmax.xlane.f32.xlu0 %v8738
        %v8740 = vpop.xlane.xlu0 %8739
        %v8741 = vsel %vm7405, %v7338, -inf
        %8742 = vmax.xlane.f32.xlu0 %v8741
        %v8743 = vpop.xlane.xlu0 %8742
        %v8744 = vsel %vm7405, %v7339, -inf
        %8745 = vmax.xlane.f32.xlu0 %v8744
        %v8746 = vpop.xlane.xlu0 %8745
        %v8747 = vsel %vm7405, %v7340, -inf
        %8748 = vmax.xlane.f32.xlu0 %v8747
        %v8749 = vpop.xlane.xlu0 %8748
        %v8750 = vsel %vm7405, %v7341, -inf
        %8751 = vmax.xlane.f32.xlu0 %v8750
        %v8752 = vpop.xlane.xlu0 %8751
        %v8753 = vsel %vm7405, %v7342, -inf
        %8754 = vmax.xlane.f32.xlu0 %v8753
        %v8755 = vpop.xlane.xlu0 %8754
        %v8756 = vsel %vm7405, %v7343, -inf
        %8757 = vmax.xlane.f32.xlu0 %v8756
        %v8758 = vpop.xlane.xlu0 %8757
        %v8759 = vsel %vm7405, %v7344, -inf
        %8760 = vmax.xlane.f32.xlu0 %v8759
        %v8761 = vpop.xlane.xlu0 %8760
        %v8762 = vsel %vm7405, %v7345, -inf
        %8763 = vmax.xlane.f32.xlu0 %v8762
        %v8764 = vpop.xlane.xlu0 %8763
        %v8765 = vsel %vm7405, %v7346, -inf
        %8766 = vmax.xlane.f32.xlu0 %v8765
        %v8767 = vpop.xlane.xlu0 %8766
        %v8768 = vsel %vm7405, %v7347, -inf
        %8769 = vmax.xlane.f32.xlu0 %v8768
        %v8770 = vpop.xlane.xlu0 %8769
        %v8771 = vsel %vm7405, %v7348, -inf
        %8772 = vmax.xlane.f32.xlu0 %v8771
        %v8773 = vpop.xlane.xlu0 %8772
        %v8774 = vsel %vm7405, %v7349, -inf
        %8775 = vmax.xlane.f32.xlu0 %v8774
        %v8776 = vpop.xlane.xlu0 %8775
        %v8777 = vsel %vm7405, %v7350, -inf
        %8778 = vmax.xlane.f32.xlu0 %v8777
        %v8779 = vpop.xlane.xlu0 %8778
        %v8780 = vsel %vm7405, %v7351, -inf
        %8781 = vmax.xlane.f32.xlu0 %v8780
        %v8782 = vpop.xlane.xlu0 %8781
        %v8783 = vsel %vm7405, %v7352, -inf
        %8784 = vmax.xlane.f32.xlu0 %v8783
        %v8785 = vpop.xlane.xlu0 %8784
        %v8786 = vsel %vm7405, %v7353, -inf
        %8787 = vmax.xlane.f32.xlu0 %v8786
        %v8788 = vpop.xlane.xlu0 %8787
        %v8789 = vsel %vm7405, %v7354, -inf
        %8790 = vmax.xlane.f32.xlu0 %v8789
        %v8791 = vpop.xlane.xlu0 %8790
        %v8792 = vsel %vm7405, %v7355, -inf
        %8793 = vmax.xlane.f32.xlu0 %v8792
        %v8794 = vpop.xlane.xlu0 %8793
        %v8795 = vsel %vm7405, %v7356, -inf
        %8796 = vmax.xlane.f32.xlu0 %v8795
        %v8797 = vpop.xlane.xlu0 %8796
        %v8798 = vsel %vm7405, %v7357, -inf
        %8799 = vmax.xlane.f32.xlu0 %v8798
        %v8800 = vpop.xlane.xlu0 %8799
        %v8801 = vsel %vm7405, %v7358, -inf
        %8802 = vmax.xlane.f32.xlu0 %v8801
        %v8803 = vpop.xlane.xlu0 %8802
        %v8804 = vsel %vm7405, %v7359, -inf
        %8805 = vmax.xlane.f32.xlu0 %v8804
        %v8806 = vpop.xlane.xlu0 %8805
        %v8807 = vsel %vm7405, %v7360, -inf
        %8808 = vmax.xlane.f32.xlu0 %v8807
        %v8809 = vpop.xlane.xlu0 %8808
        %v8810 = vsel %vm7405, %v7361, -inf
        %8811 = vmax.xlane.f32.xlu0 %v8810
        %v8812 = vpop.xlane.xlu0 %8811
        %v8813 = vsel %vm7405, %v7362, -inf
        %8814 = vmax.xlane.f32.xlu0 %v8813
        %v8815 = vpop.xlane.xlu0 %8814
        %v8816 = vsel %vm7405, %v7363, -inf
        %8817 = vmax.xlane.f32.xlu0 %v8816
        %v8818 = vpop.xlane.xlu0 %8817
        %v8819 = vsel %vm7405, %v7364, -inf
        %8820 = vmax.xlane.f32.xlu0 %v8819
        %v8821 = vpop.xlane.xlu0 %8820
        %v8822 = vsel %vm7405, %v7365, -inf
        %8823 = vmax.xlane.f32.xlu0 %v8822
        %v8824 = vpop.xlane.xlu0 %8823
        %v8825 = vsel %vm7405, %v7366, -inf
        %8826 = vmax.xlane.f32.xlu0 %v8825
        %v8827 = vpop.xlane.xlu0 %8826
        %v8828 = vsel %vm7405, %v7367, -inf
        %8829 = vmax.xlane.f32.xlu0 %v8828
        %v8830 = vpop.xlane.xlu0 %8829
        %v8831 = vsel %vm7405, %v7368, -inf
        %8832 = vmax.xlane.f32.xlu0 %v8831
        %v8833 = vpop.xlane.xlu0 %8832
        %v8834 = vsel %vm7405, %v7369, -inf
        %8835 = vmax.xlane.f32.xlu0 %v8834
        %v8836 = vpop.xlane.xlu0 %8835
        %v8837 = vsel %vm7405, %v7370, -inf
        %8838 = vmax.xlane.f32.xlu0 %v8837
        %v8839 = vpop.xlane.xlu0 %8838
        %v8840 = vsel %vm7405, %v7371, -inf
        %8841 = vmax.xlane.f32.xlu0 %v8840
        %v8842 = vpop.xlane.xlu0 %8841
        %v8843 = vsel %vm7405, %v7372, -inf
        %8844 = vmax.xlane.f32.xlu0 %v8843
        %v8845 = vpop.xlane.xlu0 %8844
        %v8846 = vsel %vm7405, %v7373, -inf
        %8847 = vmax.xlane.f32.xlu0 %v8846
        %v8848 = vpop.xlane.xlu0 %8847
        %v8849 = vsel %vm7405, %v7374, -inf
        %8850 = vmax.xlane.f32.xlu0 %v8849
        %v8851 = vpop.xlane.xlu0 %8850
        %v8852 = vsel %vm7405, %v7375, -inf
        %8853 = vmax.xlane.f32.xlu0 %v8852
        %v8854 = vpop.xlane.xlu0 %8853
        %v8855 = vsel %vm7405, %v7376, -inf
        %8856 = vmax.xlane.f32.xlu0 %v8855
        %v8857 = vpop.xlane.xlu0 %8856
        %v8858 = vsel %vm7405, %v7377, -inf
        %8859 = vmax.xlane.f32.xlu0 %v8858
        %v8860 = vpop.xlane.xlu0 %8859
        %v8861 = vsel %vm7405, %v7378, -inf
        %8862 = vmax.xlane.f32.xlu0 %v8861
        %v8863 = vpop.xlane.xlu0 %8862
        %v8864 = vsel %vm7405, %v7379, -inf
        %8865 = vmax.xlane.f32.xlu0 %v8864
        %v8866 = vpop.xlane.xlu0 %8865
        %v8867 = vsel %vm7405, %v7380, -inf
        %8868 = vmax.xlane.f32.xlu0 %v8867
        %v8869 = vpop.xlane.xlu0 %8868
        %v8870 = vsel %vm7405, %v7381, -inf
        %8871 = vmax.xlane.f32.xlu0 %v8870
        %v8872 = vpop.xlane.xlu0 %8871
        %v8873 = vsel %vm7405, %v7382, -inf
        %8874 = vmax.xlane.f32.xlu0 %v8873
        %v8875 = vpop.xlane.xlu0 %8874
        %v8876 = vsel %vm7405, %v7383, -inf
        %8877 = vmax.xlane.f32.xlu0 %v8876
        %v8878 = vpop.xlane.xlu0 %8877
        %v8879 = vsel %vm7405, %v7384, -inf
        %8880 = vmax.xlane.f32.xlu0 %v8879
        %v8881 = vpop.xlane.xlu0 %8880
        %v8882 = vsel %vm7405, %v7385, -inf
        %8883 = vmax.xlane.f32.xlu0 %v8882
        %v8884 = vpop.xlane.xlu0 %8883
        %v8885 = vsel %vm7405, %v7386, -inf
        %8886 = vmax.xlane.f32.xlu0 %v8885
        %v8887 = vpop.xlane.xlu0 %8886
        %v8888 = vsel %vm7405, %v7387, -inf
        %8889 = vmax.xlane.f32.xlu0 %v8888
        %v8890 = vpop.xlane.xlu0 %8889
        %v8891 = vsel %vm7405, %v7388, -inf
        %8892 = vmax.xlane.f32.xlu0 %v8891
        %v8893 = vpop.xlane.xlu0 %8892
        %v8894 = vsel %vm7405, %v7389, -inf
        %8895 = vmax.xlane.f32.xlu0 %v8894
        %v8896 = vpop.xlane.xlu0 %8895
        %v8897 = vsel %vm7405, %v7390, -inf
        %8898 = vmax.xlane.f32.xlu0 %v8897
        %v8899 = vpop.xlane.xlu0 %8898
        %v8900 = vsel %vm7405, %v7391, -inf
        %8901 = vmax.xlane.f32.xlu0 %v8900
        %v8902 = vpop.xlane.xlu0 %8901
        %v8903 = vsel %vm7405, %v7392, -inf
        %8904 = vmax.xlane.f32.xlu0 %v8903
        %v8905 = vpop.xlane.xlu0 %8904
        %v8906 = vsel %vm7405, %v7393, -inf
        %8907 = vmax.xlane.f32.xlu0 %v8906
        %v8908 = vpop.xlane.xlu0 %8907
        %v8909 = vsel %vm7405, %v7394, -inf
        %8910 = vmax.xlane.f32.xlu0 %v8909
        %v8911 = vpop.xlane.xlu0 %8910
        %v8912 = vsel %vm7405, %v7395, -inf
        %8913 = vmax.xlane.f32.xlu0 %v8912
        %v8914 = vpop.xlane.xlu0 %8913
        %v8915 = vsel %vm7405, %v7396, -inf
        %8916 = vmax.xlane.f32.xlu0 %v8915
        %v8917 = vpop.xlane.xlu0 %8916
        %v8918 = vsel %vm7405, %v7397, -inf
        %8919 = vmax.xlane.f32.xlu0 %v8918
        %v8920 = vpop.xlane.xlu0 %8919
        %v8921 = vsel %vm7405, %v7398, -inf
        %8922 = vmax.xlane.f32.xlu0 %v8921
        %v8923 = vpop.xlane.xlu0 %8922
        %v8924 = vsel %vm7405, %v7399, -inf
        %8925 = vmax.xlane.f32.xlu0 %v8924
        %v8926 = vpop.xlane.xlu0 %8925
        %v8927 = vsel %vm7405, %v7400, -inf
        %8928 = vmax.xlane.f32.xlu0 %v8927
        %v8929 = vpop.xlane.xlu0 %8928
        %v8930 = vsel %vm7405, %v7401, -inf
        %8931 = vmax.xlane.f32.xlu0 %v8930
        %v8932 = vpop.xlane.xlu0 %8931
        %v8933 = vsel %vm7405, %v7402, -inf
        %8934 = vmax.xlane.f32.xlu0 %v8933
        %v8935 = vpop.xlane.xlu0 %8934
        %v8936 = vsel %vm7405, %v7403, -inf
        %8937 = vmax.xlane.f32.xlu0 %v8936
        %v8938 = vpop.xlane.xlu0 %8937
        %v8939 = vsel %vm7405, %v7404, -inf
        %8940 = vmax.xlane.f32.xlu0 %v8939
        %v8941 = vpop.xlane.xlu0 %8940
        %s8942 = smul.u32 %s26, 256
        %s8943 = scalar_lea.vmem [#allocation5], %s8942
        %v8944 = vld [vmem:[%s8943] sm:$0xff]
        %v8945 = vld [vmem:[%s8943 + $0x8] sm:$0xff]
        %v8946 = vld [vmem:[%s8943 + $0x10] sm:$0xff]
        %v8947 = vld [vmem:[%s8943 + $0x18] sm:$0xff]
        %v8948 = vld [vmem:[%s8943 + $0x20] sm:$0xff]
        %v8949 = vld [vmem:[%s8943 + $0x28] sm:$0xff]
        %v8950 = vld [vmem:[%s8943 + $0x30] sm:$0xff]
        %v8951 = vld [vmem:[%s8943 + $0x38] sm:$0xff]
        %v8952 = vld [vmem:[%s8943 + $0x40] sm:$0xff]
        %v8953 = vld [vmem:[%s8943 + $0x48] sm:$0xff]
        %v8954 = vld [vmem:[%s8943 + $0x50] sm:$0xff]
        %v8955 = vld [vmem:[%s8943 + $0x58] sm:$0xff]
        %v8956 = vld [vmem:[%s8943 + $0x60] sm:$0xff]
        %v8957 = vld [vmem:[%s8943 + $0x68] sm:$0xff]
        %v8958 = vld [vmem:[%s8943 + $0x70] sm:$0xff]
        %v8959 = vld [vmem:[%s8943 + $0x78] sm:$0xff]
        %v8960 = vld [vmem:[%s8943 + $0x80] sm:$0xff]
        %v8961 = vld [vmem:[%s8943 + $0x88] sm:$0xff]
        %v8962 = vld [vmem:[%s8943 + $0x90] sm:$0xff]
        %v8963 = vld [vmem:[%s8943 + $0x98] sm:$0xff]
        %v8964 = vld [vmem:[%s8943 + $0xa0] sm:$0xff]
        %v8965 = vld [vmem:[%s8943 + $0xa8] sm:$0xff]
        %v8966 = vld [vmem:[%s8943 + $0xb0] sm:$0xff]
        %v8967 = vld [vmem:[%s8943 + $0xb8] sm:$0xff]
        %v8968 = vld [vmem:[%s8943 + $0xc0] sm:$0xff]
        %v8969 = vld [vmem:[%s8943 + $0xc8] sm:$0xff]
        %v8970 = vld [vmem:[%s8943 + $0xd0] sm:$0xff]
        %v8971 = vld [vmem:[%s8943 + $0xd8] sm:$0xff]
        %v8972 = vld [vmem:[%s8943 + $0xe0] sm:$0xff]
        %v8973 = vld [vmem:[%s8943 + $0xe8] sm:$0xff]
        %v8974 = vld [vmem:[%s8943 + $0xf0] sm:$0xff]
        %v8975 = vld [vmem:[%s8943 + $0xf8] sm:$0xff]
        %v9488 = vlaneseq
        %v9489 = vand.u32 %v9488, 127
        %v9490 = vlaneseq
        %v9491 = vshrl.u32 %v9490, 7
        %v9492 = vsub.s32 %v9489, %v9491
        %v9493 = vrot.slane %v7408, %v9492
        %v9494 = vadd.s32 %v9489, 4294967288
        %v9495 = vlaneseq
        %v9496 = vshrl.u32 %v9495, 7
        %v9497 = vsub.s32 %v9494, %v9496
        %v9498 = vrot.slane %v7411, %v9497
        %vm9499 = vcmask 130112
        %v9500 = vsel %vm9499, %v9498, %v9493
        %v9501 = vadd.s32 %v9489, 4294967280
        %v9502 = vlaneseq
        %v9503 = vshrl.u32 %v9502, 7
        %v9504 = vsub.s32 %v9501, %v9503
        %v9505 = vrot.slane %v7414, %v9504
        %vm9506 = vcmask 195712
        %v9507 = vsel %vm9506, %v9505, %v9500
        %v9508 = vadd.s32 %v9489, 4294967272
        %v9509 = vlaneseq
        %v9510 = vshrl.u32 %v9509, 7
        %v9511 = vsub.s32 %v9508, %v9510
        %v9512 = vrot.slane %v7417, %v9511
        %vm9513 = vcmask 261312
        %v9514 = vsel %vm9513, %v9512, %v9507
        %v9515 = vadd.s32 %v9489, 4294967264
        %v9516 = vlaneseq
        %v9517 = vshrl.u32 %v9516, 7
        %v9518 = vsub.s32 %v9515, %v9517
        %v9519 = vrot.slane %v7420, %v9518
        %vm9520 = vcmask 326912
        %v9521 = vsel %vm9520, %v9519, %v9514
        %v9522 = vadd.s32 %v9489, 4294967256
        %v9523 = vlaneseq
        %v9524 = vshrl.u32 %v9523, 7
        %v9525 = vsub.s32 %v9522, %v9524
        %v9526 = vrot.slane %v7423, %v9525
        %vm9527 = vcmask 392512
        %v9528 = vsel %vm9527, %v9526, %v9521
        %v9529 = vadd.s32 %v9489, 4294967248
        %v9530 = vlaneseq
        %v9531 = vshrl.u32 %v9530, 7
        %v9532 = vsub.s32 %v9529, %v9531
        %v9533 = vrot.slane %v7426, %v9532
        %vm9534 = vcmask 458112
        %v9535 = vsel %vm9534, %v9533, %v9528
        %v9536 = vadd.s32 %v9489, 4294967240
        %v9537 = vlaneseq
        %v9538 = vshrl.u32 %v9537, 7
        %v9539 = vsub.s32 %v9536, %v9538
        %v9540 = vrot.slane %v7429, %v9539
        %vm9541 = vcmask 523712
        %v9542 = vsel %vm9541, %v9540, %v9535
        %v9543 = vadd.s32 %v9489, 4294967232
        %v9544 = vlaneseq
        %v9545 = vshrl.u32 %v9544, 7
        %v9546 = vsub.s32 %v9543, %v9545
        %v9547 = vrot.slane %v7432, %v9546
        %vm9548 = vcmask 589312
        %v9549 = vsel %vm9548, %v9547, %v9542
        %v9550 = vadd.s32 %v9489, 4294967224
        %v9551 = vlaneseq
        %v9552 = vshrl.u32 %v9551, 7
        %v9553 = vsub.s32 %v9550, %v9552
        %v9554 = vrot.slane %v7435, %v9553
        %vm9555 = vcmask 654912
        %v9556 = vsel %vm9555, %v9554, %v9549
        %v9557 = vadd.s32 %v9489, 4294967216
        %v9558 = vlaneseq
        %v9559 = vshrl.u32 %v9558, 7
        %v9560 = vsub.s32 %v9557, %v9559
        %v9561 = vrot.slane %v7438, %v9560
        %vm9562 = vcmask 720512
        %v9563 = vsel %vm9562, %v9561, %v9556
        %v9564 = vadd.s32 %v9489, 4294967208
        %v9565 = vlaneseq
        %v9566 = vshrl.u32 %v9565, 7
        %v9567 = vsub.s32 %v9564, %v9566
        %v9568 = vrot.slane %v7441, %v9567
        %vm9569 = vcmask 786112
        %v9570 = vsel %vm9569, %v9568, %v9563
        %v9571 = vadd.s32 %v9489, 4294967200
        %v9572 = vlaneseq
        %v9573 = vshrl.u32 %v9572, 7
        %v9574 = vsub.s32 %v9571, %v9573
        %v9575 = vrot.slane %v7444, %v9574
        %vm9576 = vcmask 851712
        %v9577 = vsel %vm9576, %v9575, %v9570
        %v9578 = vadd.s32 %v9489, 4294967192
        %v9579 = vlaneseq
        %v9580 = vshrl.u32 %v9579, 7
        %v9581 = vsub.s32 %v9578, %v9580
        %v9582 = vrot.slane %v7447, %v9581
        %vm9583 = vcmask 917312
        %v9584 = vsel %vm9583, %v9582, %v9577
        %v9585 = vadd.s32 %v9489, 4294967184
        %v9586 = vlaneseq
        %v9587 = vshrl.u32 %v9586, 7
        %v9588 = vsub.s32 %v9585, %v9587
        %v9589 = vrot.slane %v7450, %v9588
        %vm9590 = vcmask 982912
        %v9591 = vsel %vm9590, %v9589, %v9584
        %v9592 = vadd.s32 %v9489, 4294967176
        %v9593 = vlaneseq
        %v9594 = vshrl.u32 %v9593, 7
        %v9595 = vsub.s32 %v9592, %v9594
        %v9596 = vrot.slane %v7453, %v9595
        %vm9597 = vcmask 1048512
        %v9598 = vsel %vm9597, %v9596, %v9591
        %v9599 = vlaneseq
        %v9600 = vshrl.u32 %v9599, 7
        %v9601 = vsub.s32 %v9489, %v9600
        %v9602 = vrot.slane %v7456, %v9601
        %v9603 = vlaneseq
        %v9604 = vshrl.u32 %v9603, 7
        %v9605 = vsub.s32 %v9494, %v9604
        %v9606 = vrot.slane %v7459, %v9605
        %v9607 = vsel %vm9499, %v9606, %v9602
        %v9608 = vlaneseq
        %v9609 = vshrl.u32 %v9608, 7
        %v9610 = vsub.s32 %v9501, %v9609
        %v9611 = vrot.slane %v7462, %v9610
        %v9612 = vsel %vm9506, %v9611, %v9607
        %v9613 = vlaneseq
        %v9614 = vshrl.u32 %v9613, 7
        %v9615 = vsub.s32 %v9508, %v9614
        %v9616 = vrot.slane %v7465, %v9615
        %v9617 = vsel %vm9513, %v9616, %v9612
        %v9618 = vlaneseq
        %v9619 = vshrl.u32 %v9618, 7
        %v9620 = vsub.s32 %v9515, %v9619
        %v9621 = vrot.slane %v7468, %v9620
        %v9622 = vsel %vm9520, %v9621, %v9617
        %v9623 = vlaneseq
        %v9624 = vshrl.u32 %v9623, 7
        %v9625 = vsub.s32 %v9522, %v9624
        %v9626 = vrot.slane %v7471, %v9625
        %v9627 = vsel %vm9527, %v9626, %v9622
        %v9628 = vlaneseq
        %v9629 = vshrl.u32 %v9628, 7
        %v9630 = vsub.s32 %v9529, %v9629
        %v9631 = vrot.slane %v7474, %v9630
        %v9632 = vsel %vm9534, %v9631, %v9627
        %v9633 = vlaneseq
        %v9634 = vshrl.u32 %v9633, 7
        %v9635 = vsub.s32 %v9536, %v9634
        %v9636 = vrot.slane %v7477, %v9635
        %v9637 = vsel %vm9541, %v9636, %v9632
        %v9638 = vlaneseq
        %v9639 = vshrl.u32 %v9638, 7
        %v9640 = vsub.s32 %v9543, %v9639
        %v9641 = vrot.slane %v7480, %v9640
        %v9642 = vsel %vm9548, %v9641, %v9637
        %v9643 = vlaneseq
        %v9644 = vshrl.u32 %v9643, 7
        %v9645 = vsub.s32 %v9550, %v9644
        %v9646 = vrot.slane %v7483, %v9645
        %v9647 = vsel %vm9555, %v9646, %v9642
        %v9648 = vlaneseq
        %v9649 = vshrl.u32 %v9648, 7
        %v9650 = vsub.s32 %v9557, %v9649
        %v9651 = vrot.slane %v7486, %v9650
        %v9652 = vsel %vm9562, %v9651, %v9647
        %v9653 = vlaneseq
        %v9654 = vshrl.u32 %v9653, 7
        %v9655 = vsub.s32 %v9564, %v9654
        %v9656 = vrot.slane %v7489, %v9655
        %v9657 = vsel %vm9569, %v9656, %v9652
        %v9658 = vlaneseq
        %v9659 = vshrl.u32 %v9658, 7
        %v9660 = vsub.s32 %v9571, %v9659
        %v9661 = vrot.slane %v7492, %v9660
        %v9662 = vsel %vm9576, %v9661, %v9657
        %v9663 = vlaneseq
        %v9664 = vshrl.u32 %v9663, 7
        %v9665 = vsub.s32 %v9578, %v9664
        %v9666 = vrot.slane %v7495, %v9665
        %v9667 = vsel %vm9583, %v9666, %v9662
        %v9668 = vlaneseq
        %v9669 = vshrl.u32 %v9668, 7
        %v9670 = vsub.s32 %v9585, %v9669
        %v9671 = vrot.slane %v7498, %v9670
        %v9672 = vsel %vm9590, %v9671, %v9667
        %v9673 = vlaneseq
        %v9674 = vshrl.u32 %v9673, 7
        %v9675 = vsub.s32 %v9592, %v9674
        %v9676 = vrot.slane %v7501, %v9675
        %v9677 = vsel %vm9597, %v9676, %v9672
        %v9678 = vlaneseq
        %v9679 = vshrl.u32 %v9678, 7
        %v9680 = vsub.s32 %v9489, %v9679
        %v9681 = vrot.slane %v7504, %v9680
        %v9682 = vlaneseq
        %v9683 = vshrl.u32 %v9682, 7
        %v9684 = vsub.s32 %v9494, %v9683
        %v9685 = vrot.slane %v7507, %v9684
        %v9686 = vsel %vm9499, %v9685, %v9681
        %v9687 = vlaneseq
        %v9688 = vshrl.u32 %v9687, 7
        %v9689 = vsub.s32 %v9501, %v9688
        %v9690 = vrot.slane %v7510, %v9689
        %v9691 = vsel %vm9506, %v9690, %v9686
        %v9692 = vlaneseq
        %v9693 = vshrl.u32 %v9692, 7
        %v9694 = vsub.s32 %v9508, %v9693
        %v9695 = vrot.slane %v7513, %v9694
        %v9696 = vsel %vm9513, %v9695, %v9691
        %v9697 = vlaneseq
        %v9698 = vshrl.u32 %v9697, 7
        %v9699 = vsub.s32 %v9515, %v9698
        %v9700 = vrot.slane %v7516, %v9699
        %v9701 = vsel %vm9520, %v9700, %v9696
        %v9702 = vlaneseq
        %v9703 = vshrl.u32 %v9702, 7
        %v9704 = vsub.s32 %v9522, %v9703
        %v9705 = vrot.slane %v7519, %v9704
        %v9706 = vsel %vm9527, %v9705, %v9701
        %v9707 = vlaneseq
        %v9708 = vshrl.u32 %v9707, 7
        %v9709 = vsub.s32 %v9529, %v9708
        %v9710 = vrot.slane %v7522, %v9709
        %v9711 = vsel %vm9534, %v9710, %v9706
        %v9712 = vlaneseq
        %v9713 = vshrl.u32 %v9712, 7
        %v9714 = vsub.s32 %v9536, %v9713
        %v9715 = vrot.slane %v7525, %v9714
        %v9716 = vsel %vm9541, %v9715, %v9711
        %v9717 = vlaneseq
        %v9718 = vshrl.u32 %v9717, 7
        %v9719 = vsub.s32 %v9543, %v9718
        %v9720 = vrot.slane %v7528, %v9719
        %v9721 = vsel %vm9548, %v9720, %v9716
        %v9722 = vlaneseq
        %v9723 = vshrl.u32 %v9722, 7
        %v9724 = vsub.s32 %v9550, %v9723
        %v9725 = vrot.slane %v7531, %v9724
        %v9726 = vsel %vm9555, %v9725, %v9721
        %v9727 = vlaneseq
        %v9728 = vshrl.u32 %v9727, 7
        %v9729 = vsub.s32 %v9557, %v9728
        %v9730 = vrot.slane %v7534, %v9729
        %v9731 = vsel %vm9562, %v9730, %v9726
        %v9732 = vlaneseq
        %v9733 = vshrl.u32 %v9732, 7
        %v9734 = vsub.s32 %v9564, %v9733
        %v9735 = vrot.slane %v7537, %v9734
        %v9736 = vsel %vm9569, %v9735, %v9731
        %v9737 = vlaneseq
        %v9738 = vshrl.u32 %v9737, 7
        %v9739 = vsub.s32 %v9571, %v9738
        %v9740 = vrot.slane %v7540, %v9739
        %v9741 = vsel %vm9576, %v9740, %v9736
        %v9742 = vlaneseq
        %v9743 = vshrl.u32 %v9742, 7
        %v9744 = vsub.s32 %v9578, %v9743
        %v9745 = vrot.slane %v7543, %v9744
        %v9746 = vsel %vm9583, %v9745, %v9741
        %v9747 = vlaneseq
        %v9748 = vshrl.u32 %v9747, 7
        %v9749 = vsub.s32 %v9585, %v9748
        %v9750 = vrot.slane %v7546, %v9749
        %v9751 = vsel %vm9590, %v9750, %v9746
        %v9752 = vlaneseq
        %v9753 = vshrl.u32 %v9752, 7
        %v9754 = vsub.s32 %v9592, %v9753
        %v9755 = vrot.slane %v7549, %v9754
        %v9756 = vsel %vm9597, %v9755, %v9751
        %v9757 = vlaneseq
        %v9758 = vshrl.u32 %v9757, 7
        %v9759 = vsub.s32 %v9489, %v9758
        %v9760 = vrot.slane %v7552, %v9759
        %v9761 = vlaneseq
        %v9762 = vshrl.u32 %v9761, 7
        %v9763 = vsub.s32 %v9494, %v9762
        %v9764 = vrot.slane %v7555, %v9763
        %v9765 = vsel %vm9499, %v9764, %v9760
        %v9766 = vlaneseq
        %v9767 = vshrl.u32 %v9766, 7
        %v9768 = vsub.s32 %v9501, %v9767
        %v9769 = vrot.slane %v7558, %v9768
        %v9770 = vsel %vm9506, %v9769, %v9765
        %v9771 = vlaneseq
        %v9772 = vshrl.u32 %v9771, 7
        %v9773 = vsub.s32 %v9508, %v9772
        %v9774 = vrot.slane %v7561, %v9773
        %v9775 = vsel %vm9513, %v9774, %v9770
        %v9776 = vlaneseq
        %v9777 = vshrl.u32 %v9776, 7
        %v9778 = vsub.s32 %v9515, %v9777
        %v9779 = vrot.slane %v7564, %v9778
        %v9780 = vsel %vm9520, %v9779, %v9775
        %v9781 = vlaneseq
        %v9782 = vshrl.u32 %v9781, 7
        %v9783 = vsub.s32 %v9522, %v9782
        %v9784 = vrot.slane %v7567, %v9783
        %v9785 = vsel %vm9527, %v9784, %v9780
        %v9786 = vlaneseq
        %v9787 = vshrl.u32 %v9786, 7
        %v9788 = vsub.s32 %v9529, %v9787
        %v9789 = vrot.slane %v7570, %v9788
        %v9790 = vsel %vm9534, %v9789, %v9785
        %v9791 = vlaneseq
        %v9792 = vshrl.u32 %v9791, 7
        %v9793 = vsub.s32 %v9536, %v9792
        %v9794 = vrot.slane %v7573, %v9793
        %v9795 = vsel %vm9541, %v9794, %v9790
        %v9796 = vlaneseq
        %v9797 = vshrl.u32 %v9796, 7
        %v9798 = vsub.s32 %v9543, %v9797
        %v9799 = vrot.slane %v7576, %v9798
        %v9800 = vsel %vm9548, %v9799, %v9795
        %v9801 = vlaneseq
        %v9802 = vshrl.u32 %v9801, 7
        %v9803 = vsub.s32 %v9550, %v9802
        %v9804 = vrot.slane %v7579, %v9803
        %v9805 = vsel %vm9555, %v9804, %v9800
        %v9806 = vlaneseq
        %v9807 = vshrl.u32 %v9806, 7
        %v9808 = vsub.s32 %v9557, %v9807
        %v9809 = vrot.slane %v7582, %v9808
        %v9810 = vsel %vm9562, %v9809, %v9805
        %v9811 = vlaneseq
        %v9812 = vshrl.u32 %v9811, 7
        %v9813 = vsub.s32 %v9564, %v9812
        %v9814 = vrot.slane %v7585, %v9813
        %v9815 = vsel %vm9569, %v9814, %v9810
        %v9816 = vlaneseq
        %v9817 = vshrl.u32 %v9816, 7
        %v9818 = vsub.s32 %v9571, %v9817
        %v9819 = vrot.slane %v7588, %v9818
        %v9820 = vsel %vm9576, %v9819, %v9815
        %v9821 = vlaneseq
        %v9822 = vshrl.u32 %v9821, 7
        %v9823 = vsub.s32 %v9578, %v9822
        %v9824 = vrot.slane %v7591, %v9823
        %v9825 = vsel %vm9583, %v9824, %v9820
        %v9826 = vlaneseq
        %v9827 = vshrl.u32 %v9826, 7
        %v9828 = vsub.s32 %v9585, %v9827
        %v9829 = vrot.slane %v7594, %v9828
        %v9830 = vsel %vm9590, %v9829, %v9825
        %v9831 = vlaneseq
        %v9832 = vshrl.u32 %v9831, 7
        %v9833 = vsub.s32 %v9592, %v9832
        %v9834 = vrot.slane %v7597, %v9833
        %v9835 = vsel %vm9597, %v9834, %v9830
        %v9836 = vlaneseq
        %v9837 = vshrl.u32 %v9836, 7
        %v9838 = vsub.s32 %v9489, %v9837
        %v9839 = vrot.slane %v7600, %v9838
        %v9840 = vlaneseq
        %v9841 = vshrl.u32 %v9840, 7
        %v9842 = vsub.s32 %v9494, %v9841
        %v9843 = vrot.slane %v7603, %v9842
        %v9844 = vsel %vm9499, %v9843, %v9839
        %v9845 = vlaneseq
        %v9846 = vshrl.u32 %v9845, 7
        %v9847 = vsub.s32 %v9501, %v9846
        %v9848 = vrot.slane %v7606, %v9847
        %v9849 = vsel %vm9506, %v9848, %v9844
        %v9850 = vlaneseq
        %v9851 = vshrl.u32 %v9850, 7
        %v9852 = vsub.s32 %v9508, %v9851
        %v9853 = vrot.slane %v7609, %v9852
        %v9854 = vsel %vm9513, %v9853, %v9849
        %v9855 = vlaneseq
        %v9856 = vshrl.u32 %v9855, 7
        %v9857 = vsub.s32 %v9515, %v9856
        %v9858 = vrot.slane %v7612, %v9857
        %v9859 = vsel %vm9520, %v9858, %v9854
        %v9860 = vlaneseq
        %v9861 = vshrl.u32 %v9860, 7
        %v9862 = vsub.s32 %v9522, %v9861
        %v9863 = vrot.slane %v7615, %v9862
        %v9864 = vsel %vm9527, %v9863, %v9859
        %v9865 = vlaneseq
        %v9866 = vshrl.u32 %v9865, 7
        %v9867 = vsub.s32 %v9529, %v9866
        %v9868 = vrot.slane %v7618, %v9867
        %v9869 = vsel %vm9534, %v9868, %v9864
        %v9870 = vlaneseq
        %v9871 = vshrl.u32 %v9870, 7
        %v9872 = vsub.s32 %v9536, %v9871
        %v9873 = vrot.slane %v7621, %v9872
        %v9874 = vsel %vm9541, %v9873, %v9869
        %v9875 = vlaneseq
        %v9876 = vshrl.u32 %v9875, 7
        %v9877 = vsub.s32 %v9543, %v9876
        %v9878 = vrot.slane %v7624, %v9877
        %v9879 = vsel %vm9548, %v9878, %v9874
        %v9880 = vlaneseq
        %v9881 = vshrl.u32 %v9880, 7
        %v9882 = vsub.s32 %v9550, %v9881
        %v9883 = vrot.slane %v7627, %v9882
        %v9884 = vsel %vm9555, %v9883, %v9879
        %v9885 = vlaneseq
        %v9886 = vshrl.u32 %v9885, 7
        %v9887 = vsub.s32 %v9557, %v9886
        %v9888 = vrot.slane %v7630, %v9887
        %v9889 = vsel %vm9562, %v9888, %v9884
        %v9890 = vlaneseq
        %v9891 = vshrl.u32 %v9890, 7
        %v9892 = vsub.s32 %v9564, %v9891
        %v9893 = vrot.slane %v7633, %v9892
        %v9894 = vsel %vm9569, %v9893, %v9889
        %v9895 = vlaneseq
        %v9896 = vshrl.u32 %v9895, 7
        %v9897 = vsub.s32 %v9571, %v9896
        %v9898 = vrot.slane %v7636, %v9897
        %v9899 = vsel %vm9576, %v9898, %v9894
        %v9900 = vlaneseq
        %v9901 = vshrl.u32 %v9900, 7
        %v9902 = vsub.s32 %v9578, %v9901
        %v9903 = vrot.slane %v7639, %v9902
        %v9904 = vsel %vm9583, %v9903, %v9899
        %v9905 = vlaneseq
        %v9906 = vshrl.u32 %v9905, 7
        %v9907 = vsub.s32 %v9585, %v9906
        %v9908 = vrot.slane %v7642, %v9907
        %v9909 = vsel %vm9590, %v9908, %v9904
        %v9910 = vlaneseq
        %v9911 = vshrl.u32 %v9910, 7
        %v9912 = vsub.s32 %v9592, %v9911
        %v9913 = vrot.slane %v7645, %v9912
        %v9914 = vsel %vm9597, %v9913, %v9909
        %v9915 = vlaneseq
        %v9916 = vshrl.u32 %v9915, 7
        %v9917 = vsub.s32 %v9489, %v9916
        %v9918 = vrot.slane %v7648, %v9917
        %v9919 = vlaneseq
        %v9920 = vshrl.u32 %v9919, 7
        %v9921 = vsub.s32 %v9494, %v9920
        %v9922 = vrot.slane %v7651, %v9921
        %v9923 = vsel %vm9499, %v9922, %v9918
        %v9924 = vlaneseq
        %v9925 = vshrl.u32 %v9924, 7
        %v9926 = vsub.s32 %v9501, %v9925
        %v9927 = vrot.slane %v7654, %v9926
        %v9928 = vsel %vm9506, %v9927, %v9923
        %v9929 = vlaneseq
        %v9930 = vshrl.u32 %v9929, 7
        %v9931 = vsub.s32 %v9508, %v9930
        %v9932 = vrot.slane %v7657, %v9931
        %v9933 = vsel %vm9513, %v9932, %v9928
        %v9934 = vlaneseq
        %v9935 = vshrl.u32 %v9934, 7
        %v9936 = vsub.s32 %v9515, %v9935
        %v9937 = vrot.slane %v7660, %v9936
        %v9938 = vsel %vm9520, %v9937, %v9933
        %v9939 = vlaneseq
        %v9940 = vshrl.u32 %v9939, 7
        %v9941 = vsub.s32 %v9522, %v9940
        %v9942 = vrot.slane %v7663, %v9941
        %v9943 = vsel %vm9527, %v9942, %v9938
        %v9944 = vlaneseq
        %v9945 = vshrl.u32 %v9944, 7
        %v9946 = vsub.s32 %v9529, %v9945
        %v9947 = vrot.slane %v7666, %v9946
        %v9948 = vsel %vm9534, %v9947, %v9943
        %v9949 = vlaneseq
        %v9950 = vshrl.u32 %v9949, 7
        %v9951 = vsub.s32 %v9536, %v9950
        %v9952 = vrot.slane %v7669, %v9951
        %v9953 = vsel %vm9541, %v9952, %v9948
        %v9954 = vlaneseq
        %v9955 = vshrl.u32 %v9954, 7
        %v9956 = vsub.s32 %v9543, %v9955
        %v9957 = vrot.slane %v7672, %v9956
        %v9958 = vsel %vm9548, %v9957, %v9953
        %v9959 = vlaneseq
        %v9960 = vshrl.u32 %v9959, 7
        %v9961 = vsub.s32 %v9550, %v9960
        %v9962 = vrot.slane %v7675, %v9961
        %v9963 = vsel %vm9555, %v9962, %v9958
        %v9964 = vlaneseq
        %v9965 = vshrl.u32 %v9964, 7
        %v9966 = vsub.s32 %v9557, %v9965
        %v9967 = vrot.slane %v7678, %v9966
        %v9968 = vsel %vm9562, %v9967, %v9963
        %v9969 = vlaneseq
        %v9970 = vshrl.u32 %v9969, 7
        %v9971 = vsub.s32 %v9564, %v9970
        %v9972 = vrot.slane %v7681, %v9971
        %v9973 = vsel %vm9569, %v9972, %v9968
        %v9974 = vlaneseq
        %v9975 = vshrl.u32 %v9974, 7
        %v9976 = vsub.s32 %v9571, %v9975
        %v9977 = vrot.slane %v7684, %v9976
        %v9978 = vsel %vm9576, %v9977, %v9973
        %v9979 = vlaneseq
        %v9980 = vshrl.u32 %v9979, 7
        %v9981 = vsub.s32 %v9578, %v9980
        %v9982 = vrot.slane %v7687, %v9981
        %v9983 = vsel %vm9583, %v9982, %v9978
        %v9984 = vlaneseq
        %v9985 = vshrl.u32 %v9984, 7
        %v9986 = vsub.s32 %v9585, %v9985
        %v9987 = vrot.slane %v7690, %v9986
        %v9988 = vsel %vm9590, %v9987, %v9983
        %v9989 = vlaneseq
        %v9990 = vshrl.u32 %v9989, 7
        %v9991 = vsub.s32 %v9592, %v9990
        %v9992 = vrot.slane %v7693, %v9991
        %v9993 = vsel %vm9597, %v9992, %v9988
        %v9994 = vlaneseq
        %v9995 = vshrl.u32 %v9994, 7
        %v9996 = vsub.s32 %v9489, %v9995
        %v9997 = vrot.slane %v7696, %v9996
        %v9998 = vlaneseq
        %v9999 = vshrl.u32 %v9998, 7
        %v10000 = vsub.s32 %v9494, %v9999
        %v10001 = vrot.slane %v7699, %v10000
        %v10002 = vsel %vm9499, %v10001, %v9997
        %v10003 = vlaneseq
        %v10004 = vshrl.u32 %v10003, 7
        %v10005 = vsub.s32 %v9501, %v10004
        %v10006 = vrot.slane %v7702, %v10005
        %v10007 = vsel %vm9506, %v10006, %v10002
        %v10008 = vlaneseq
        %v10009 = vshrl.u32 %v10008, 7
        %v10010 = vsub.s32 %v9508, %v10009
        %v10011 = vrot.slane %v7705, %v10010
        %v10012 = vsel %vm9513, %v10011, %v10007
        %v10013 = vlaneseq
        %v10014 = vshrl.u32 %v10013, 7
        %v10015 = vsub.s32 %v9515, %v10014
        %v10016 = vrot.slane %v7708, %v10015
        %v10017 = vsel %vm9520, %v10016, %v10012
        %v10018 = vlaneseq
        %v10019 = vshrl.u32 %v10018, 7
        %v10020 = vsub.s32 %v9522, %v10019
        %v10021 = vrot.slane %v7711, %v10020
        %v10022 = vsel %vm9527, %v10021, %v10017
        %v10023 = vlaneseq
        %v10024 = vshrl.u32 %v10023, 7
        %v10025 = vsub.s32 %v9529, %v10024
        %v10026 = vrot.slane %v7714, %v10025
        %v10027 = vsel %vm9534, %v10026, %v10022
        %v10028 = vlaneseq
        %v10029 = vshrl.u32 %v10028, 7
        %v10030 = vsub.s32 %v9536, %v10029
        %v10031 = vrot.slane %v7717, %v10030
        %v10032 = vsel %vm9541, %v10031, %v10027
        %v10033 = vlaneseq
        %v10034 = vshrl.u32 %v10033, 7
        %v10035 = vsub.s32 %v9543, %v10034
        %v10036 = vrot.slane %v7720, %v10035
        %v10037 = vsel %vm9548, %v10036, %v10032
        %v10038 = vlaneseq
        %v10039 = vshrl.u32 %v10038, 7
        %v10040 = vsub.s32 %v9550, %v10039
        %v10041 = vrot.slane %v7723, %v10040
        %v10042 = vsel %vm9555, %v10041, %v10037
        %v10043 = vlaneseq
        %v10044 = vshrl.u32 %v10043, 7
        %v10045 = vsub.s32 %v9557, %v10044
        %v10046 = vrot.slane %v7726, %v10045
        %v10047 = vsel %vm9562, %v10046, %v10042
        %v10048 = vlaneseq
        %v10049 = vshrl.u32 %v10048, 7
        %v10050 = vsub.s32 %v9564, %v10049
        %v10051 = vrot.slane %v7729, %v10050
        %v10052 = vsel %vm9569, %v10051, %v10047
        %v10053 = vlaneseq
        %v10054 = vshrl.u32 %v10053, 7
        %v10055 = vsub.s32 %v9571, %v10054
        %v10056 = vrot.slane %v7732, %v10055
        %v10057 = vsel %vm9576, %v10056, %v10052
        %v10058 = vlaneseq
        %v10059 = vshrl.u32 %v10058, 7
        %v10060 = vsub.s32 %v9578, %v10059
        %v10061 = vrot.slane %v7735, %v10060
        %v10062 = vsel %vm9583, %v10061, %v10057
        %v10063 = vlaneseq
        %v10064 = vshrl.u32 %v10063, 7
        %v10065 = vsub.s32 %v9585, %v10064
        %v10066 = vrot.slane %v7738, %v10065
        %v10067 = vsel %vm9590, %v10066, %v10062
        %v10068 = vlaneseq
        %v10069 = vshrl.u32 %v10068, 7
        %v10070 = vsub.s32 %v9592, %v10069
        %v10071 = vrot.slane %v7741, %v10070
        %v10072 = vsel %vm9597, %v10071, %v10067
        %v10073 = vlaneseq
        %v10074 = vshrl.u32 %v10073, 7
        %v10075 = vsub.s32 %v9489, %v10074
        %v10076 = vrot.slane %v7744, %v10075
        %v10077 = vlaneseq
        %v10078 = vshrl.u32 %v10077, 7
        %v10079 = vsub.s32 %v9494, %v10078
        %v10080 = vrot.slane %v7747, %v10079
        %v10081 = vsel %vm9499, %v10080, %v10076
        %v10082 = vlaneseq
        %v10083 = vshrl.u32 %v10082, 7
        %v10084 = vsub.s32 %v9501, %v10083
        %v10085 = vrot.slane %v7750, %v10084
        %v10086 = vsel %vm9506, %v10085, %v10081
        %v10087 = vlaneseq
        %v10088 = vshrl.u32 %v10087, 7
        %v10089 = vsub.s32 %v9508, %v10088
        %v10090 = vrot.slane %v7753, %v10089
        %v10091 = vsel %vm9513, %v10090, %v10086
        %v10092 = vlaneseq
        %v10093 = vshrl.u32 %v10092, 7
        %v10094 = vsub.s32 %v9515, %v10093
        %v10095 = vrot.slane %v7756, %v10094
        %v10096 = vsel %vm9520, %v10095, %v10091
        %v10097 = vlaneseq
        %v10098 = vshrl.u32 %v10097, 7
        %v10099 = vsub.s32 %v9522, %v10098
        %v10100 = vrot.slane %v7759, %v10099
        %v10101 = vsel %vm9527, %v10100, %v10096
        %v10102 = vlaneseq
        %v10103 = vshrl.u32 %v10102, 7
        %v10104 = vsub.s32 %v9529, %v10103
        %v10105 = vrot.slane %v7762, %v10104
        %v10106 = vsel %vm9534, %v10105, %v10101
        %v10107 = vlaneseq
        %v10108 = vshrl.u32 %v10107, 7
        %v10109 = vsub.s32 %v9536, %v10108
        %v10110 = vrot.slane %v7765, %v10109
        %v10111 = vsel %vm9541, %v10110, %v10106
        %v10112 = vlaneseq
        %v10113 = vshrl.u32 %v10112, 7
        %v10114 = vsub.s32 %v9543, %v10113
        %v10115 = vrot.slane %v7768, %v10114
        %v10116 = vsel %vm9548, %v10115, %v10111
        %v10117 = vlaneseq
        %v10118 = vshrl.u32 %v10117, 7
        %v10119 = vsub.s32 %v9550, %v10118
        %v10120 = vrot.slane %v7771, %v10119
        %v10121 = vsel %vm9555, %v10120, %v10116
        %v10122 = vlaneseq
        %v10123 = vshrl.u32 %v10122, 7
        %v10124 = vsub.s32 %v9557, %v10123
        %v10125 = vrot.slane %v7774, %v10124
        %v10126 = vsel %vm9562, %v10125, %v10121
        %v10127 = vlaneseq
        %v10128 = vshrl.u32 %v10127, 7
        %v10129 = vsub.s32 %v9564, %v10128
        %v10130 = vrot.slane %v7777, %v10129
        %v10131 = vsel %vm9569, %v10130, %v10126
        %v10132 = vlaneseq
        %v10133 = vshrl.u32 %v10132, 7
        %v10134 = vsub.s32 %v9571, %v10133
        %v10135 = vrot.slane %v7780, %v10134
        %v10136 = vsel %vm9576, %v10135, %v10131
        %v10137 = vlaneseq
        %v10138 = vshrl.u32 %v10137, 7
        %v10139 = vsub.s32 %v9578, %v10138
        %v10140 = vrot.slane %v7783, %v10139
        %v10141 = vsel %vm9583, %v10140, %v10136
        %v10142 = vlaneseq
        %v10143 = vshrl.u32 %v10142, 7
        %v10144 = vsub.s32 %v9585, %v10143
        %v10145 = vrot.slane %v7786, %v10144
        %v10146 = vsel %vm9590, %v10145, %v10141
        %v10147 = vlaneseq
        %v10148 = vshrl.u32 %v10147, 7
        %v10149 = vsub.s32 %v9592, %v10148
        %v10150 = vrot.slane %v7789, %v10149
        %v10151 = vsel %vm9597, %v10150, %v10146
        %v10152 = vlaneseq
        %v10153 = vshrl.u32 %v10152, 7
        %v10154 = vsub.s32 %v9489, %v10153
        %v10155 = vrot.slane %v7792, %v10154
        %v10156 = vlaneseq
        %v10157 = vshrl.u32 %v10156, 7
        %v10158 = vsub.s32 %v9494, %v10157
        %v10159 = vrot.slane %v7795, %v10158
        %v10160 = vsel %vm9499, %v10159, %v10155
        %v10161 = vlaneseq
        %v10162 = vshrl.u32 %v10161, 7
        %v10163 = vsub.s32 %v9501, %v10162
        %v10164 = vrot.slane %v7798, %v10163
        %v10165 = vsel %vm9506, %v10164, %v10160
        %v10166 = vlaneseq
        %v10167 = vshrl.u32 %v10166, 7
        %v10168 = vsub.s32 %v9508, %v10167
        %v10169 = vrot.slane %v7801, %v10168
        %v10170 = vsel %vm9513, %v10169, %v10165
        %v10171 = vlaneseq
        %v10172 = vshrl.u32 %v10171, 7
        %v10173 = vsub.s32 %v9515, %v10172
        %v10174 = vrot.slane %v7804, %v10173
        %v10175 = vsel %vm9520, %v10174, %v10170
        %v10176 = vlaneseq
        %v10177 = vshrl.u32 %v10176, 7
        %v10178 = vsub.s32 %v9522, %v10177
        %v10179 = vrot.slane %v7807, %v10178
        %v10180 = vsel %vm9527, %v10179, %v10175
        %v10181 = vlaneseq
        %v10182 = vshrl.u32 %v10181, 7
        %v10183 = vsub.s32 %v9529, %v10182
        %v10184 = vrot.slane %v7810, %v10183
        %v10185 = vsel %vm9534, %v10184, %v10180
        %v10186 = vlaneseq
        %v10187 = vshrl.u32 %v10186, 7
        %v10188 = vsub.s32 %v9536, %v10187
        %v10189 = vrot.slane %v7813, %v10188
        %v10190 = vsel %vm9541, %v10189, %v10185
        %v10191 = vlaneseq
        %v10192 = vshrl.u32 %v10191, 7
        %v10193 = vsub.s32 %v9543, %v10192
        %v10194 = vrot.slane %v7816, %v10193
        %v10195 = vsel %vm9548, %v10194, %v10190
        %v10196 = vlaneseq
        %v10197 = vshrl.u32 %v10196, 7
        %v10198 = vsub.s32 %v9550, %v10197
        %v10199 = vrot.slane %v7819, %v10198
        %v10200 = vsel %vm9555, %v10199, %v10195
        %v10201 = vlaneseq
        %v10202 = vshrl.u32 %v10201, 7
        %v10203 = vsub.s32 %v9557, %v10202
        %v10204 = vrot.slane %v7822, %v10203
        %v10205 = vsel %vm9562, %v10204, %v10200
        %v10206 = vlaneseq
        %v10207 = vshrl.u32 %v10206, 7
        %v10208 = vsub.s32 %v9564, %v10207
        %v10209 = vrot.slane %v7825, %v10208
        %v10210 = vsel %vm9569, %v10209, %v10205
        %v10211 = vlaneseq
        %v10212 = vshrl.u32 %v10211, 7
        %v10213 = vsub.s32 %v9571, %v10212
        %v10214 = vrot.slane %v7828, %v10213
        %v10215 = vsel %vm9576, %v10214, %v10210
        %v10216 = vlaneseq
        %v10217 = vshrl.u32 %v10216, 7
        %v10218 = vsub.s32 %v9578, %v10217
        %v10219 = vrot.slane %v7831, %v10218
        %v10220 = vsel %vm9583, %v10219, %v10215
        %v10221 = vlaneseq
        %v10222 = vshrl.u32 %v10221, 7
        %v10223 = vsub.s32 %v9585, %v10222
        %v10224 = vrot.slane %v7834, %v10223
        %v10225 = vsel %vm9590, %v10224, %v10220
        %v10226 = vlaneseq
        %v10227 = vshrl.u32 %v10226, 7
        %v10228 = vsub.s32 %v9592, %v10227
        %v10229 = vrot.slane %v7837, %v10228
        %v10230 = vsel %vm9597, %v10229, %v10225
        %v10231 = vlaneseq
        %v10232 = vshrl.u32 %v10231, 7
        %v10233 = vsub.s32 %v9489, %v10232
        %v10234 = vrot.slane %v7840, %v10233
        %v10235 = vlaneseq
        %v10236 = vshrl.u32 %v10235, 7
        %v10237 = vsub.s32 %v9494, %v10236
        %v10238 = vrot.slane %v7843, %v10237
        %v10239 = vsel %vm9499, %v10238, %v10234
        %v10240 = vlaneseq
        %v10241 = vshrl.u32 %v10240, 7
        %v10242 = vsub.s32 %v9501, %v10241
        %v10243 = vrot.slane %v7846, %v10242
        %v10244 = vsel %vm9506, %v10243, %v10239
        %v10245 = vlaneseq
        %v10246 = vshrl.u32 %v10245, 7
        %v10247 = vsub.s32 %v9508, %v10246
        %v10248 = vrot.slane %v7849, %v10247
        %v10249 = vsel %vm9513, %v10248, %v10244
        %v10250 = vlaneseq
        %v10251 = vshrl.u32 %v10250, 7
        %v10252 = vsub.s32 %v9515, %v10251
        %v10253 = vrot.slane %v7852, %v10252
        %v10254 = vsel %vm9520, %v10253, %v10249
        %v10255 = vlaneseq
        %v10256 = vshrl.u32 %v10255, 7
        %v10257 = vsub.s32 %v9522, %v10256
        %v10258 = vrot.slane %v7855, %v10257
        %v10259 = vsel %vm9527, %v10258, %v10254
        %v10260 = vlaneseq
        %v10261 = vshrl.u32 %v10260, 7
        %v10262 = vsub.s32 %v9529, %v10261
        %v10263 = vrot.slane %v7858, %v10262
        %v10264 = vsel %vm9534, %v10263, %v10259
        %v10265 = vlaneseq
        %v10266 = vshrl.u32 %v10265, 7
        %v10267 = vsub.s32 %v9536, %v10266
        %v10268 = vrot.slane %v7861, %v10267
        %v10269 = vsel %vm9541, %v10268, %v10264
        %v10270 = vlaneseq
        %v10271 = vshrl.u32 %v10270, 7
        %v10272 = vsub.s32 %v9543, %v10271
        %v10273 = vrot.slane %v7864, %v10272
        %v10274 = vsel %vm9548, %v10273, %v10269
        %v10275 = vlaneseq
        %v10276 = vshrl.u32 %v10275, 7
        %v10277 = vsub.s32 %v9550, %v10276
        %v10278 = vrot.slane %v7867, %v10277
        %v10279 = vsel %vm9555, %v10278, %v10274
        %v10280 = vlaneseq
        %v10281 = vshrl.u32 %v10280, 7
        %v10282 = vsub.s32 %v9557, %v10281
        %v10283 = vrot.slane %v7870, %v10282
        %v10284 = vsel %vm9562, %v10283, %v10279
        %v10285 = vlaneseq
        %v10286 = vshrl.u32 %v10285, 7
        %v10287 = vsub.s32 %v9564, %v10286
        %v10288 = vrot.slane %v7873, %v10287
        %v10289 = vsel %vm9569, %v10288, %v10284
        %v10290 = vlaneseq
        %v10291 = vshrl.u32 %v10290, 7
        %v10292 = vsub.s32 %v9571, %v10291
        %v10293 = vrot.slane %v7876, %v10292
        %v10294 = vsel %vm9576, %v10293, %v10289
        %v10295 = vlaneseq
        %v10296 = vshrl.u32 %v10295, 7
        %v10297 = vsub.s32 %v9578, %v10296
        %v10298 = vrot.slane %v7879, %v10297
        %v10299 = vsel %vm9583, %v10298, %v10294
        %v10300 = vlaneseq
        %v10301 = vshrl.u32 %v10300, 7
        %v10302 = vsub.s32 %v9585, %v10301
        %v10303 = vrot.slane %v7882, %v10302
        %v10304 = vsel %vm9590, %v10303, %v10299
        %v10305 = vlaneseq
        %v10306 = vshrl.u32 %v10305, 7
        %v10307 = vsub.s32 %v9592, %v10306
        %v10308 = vrot.slane %v7885, %v10307
        %v10309 = vsel %vm9597, %v10308, %v10304
        %v10310 = vlaneseq
        %v10311 = vshrl.u32 %v10310, 7
        %v10312 = vsub.s32 %v9489, %v10311
        %v10313 = vrot.slane %v7888, %v10312
        %v10314 = vlaneseq
        %v10315 = vshrl.u32 %v10314, 7
        %v10316 = vsub.s32 %v9494, %v10315
        %v10317 = vrot.slane %v7891, %v10316
        %v10318 = vsel %vm9499, %v10317, %v10313
        %v10319 = vlaneseq
        %v10320 = vshrl.u32 %v10319, 7
        %v10321 = vsub.s32 %v9501, %v10320
        %v10322 = vrot.slane %v7894, %v10321
        %v10323 = vsel %vm9506, %v10322, %v10318
        %v10324 = vlaneseq
        %v10325 = vshrl.u32 %v10324, 7
        %v10326 = vsub.s32 %v9508, %v10325
        %v10327 = vrot.slane %v7897, %v10326
        %v10328 = vsel %vm9513, %v10327, %v10323
        %v10329 = vlaneseq
        %v10330 = vshrl.u32 %v10329, 7
        %v10331 = vsub.s32 %v9515, %v10330
        %v10332 = vrot.slane %v7900, %v10331
        %v10333 = vsel %vm9520, %v10332, %v10328
        %v10334 = vlaneseq
        %v10335 = vshrl.u32 %v10334, 7
        %v10336 = vsub.s32 %v9522, %v10335
        %v10337 = vrot.slane %v7903, %v10336
        %v10338 = vsel %vm9527, %v10337, %v10333
        %v10339 = vlaneseq
        %v10340 = vshrl.u32 %v10339, 7
        %v10341 = vsub.s32 %v9529, %v10340
        %v10342 = vrot.slane %v7906, %v10341
        %v10343 = vsel %vm9534, %v10342, %v10338
        %v10344 = vlaneseq
        %v10345 = vshrl.u32 %v10344, 7
        %v10346 = vsub.s32 %v9536, %v10345
        %v10347 = vrot.slane %v7909, %v10346
        %v10348 = vsel %vm9541, %v10347, %v10343
        %v10349 = vlaneseq
        %v10350 = vshrl.u32 %v10349, 7
        %v10351 = vsub.s32 %v9543, %v10350
        %v10352 = vrot.slane %v7912, %v10351
        %v10353 = vsel %vm9548, %v10352, %v10348
        %v10354 = vlaneseq
        %v10355 = vshrl.u32 %v10354, 7
        %v10356 = vsub.s32 %v9550, %v10355
        %v10357 = vrot.slane %v7915, %v10356
        %v10358 = vsel %vm9555, %v10357, %v10353
        %v10359 = vlaneseq
        %v10360 = vshrl.u32 %v10359, 7
        %v10361 = vsub.s32 %v9557, %v10360
        %v10362 = vrot.slane %v7918, %v10361
        %v10363 = vsel %vm9562, %v10362, %v10358
        %v10364 = vlaneseq
        %v10365 = vshrl.u32 %v10364, 7
        %v10366 = vsub.s32 %v9564, %v10365
        %v10367 = vrot.slane %v7921, %v10366
        %v10368 = vsel %vm9569, %v10367, %v10363
        %v10369 = vlaneseq
        %v10370 = vshrl.u32 %v10369, 7
        %v10371 = vsub.s32 %v9571, %v10370
        %v10372 = vrot.slane %v7924, %v10371
        %v10373 = vsel %vm9576, %v10372, %v10368
        %v10374 = vlaneseq
        %v10375 = vshrl.u32 %v10374, 7
        %v10376 = vsub.s32 %v9578, %v10375
        %v10377 = vrot.slane %v7927, %v10376
        %v10378 = vsel %vm9583, %v10377, %v10373
        %v10379 = vlaneseq
        %v10380 = vshrl.u32 %v10379, 7
        %v10381 = vsub.s32 %v9585, %v10380
        %v10382 = vrot.slane %v7930, %v10381
        %v10383 = vsel %vm9590, %v10382, %v10378
        %v10384 = vlaneseq
        %v10385 = vshrl.u32 %v10384, 7
        %v10386 = vsub.s32 %v9592, %v10385
        %v10387 = vrot.slane %v7933, %v10386
        %v10388 = vsel %vm9597, %v10387, %v10383
        %v10389 = vlaneseq
        %v10390 = vshrl.u32 %v10389, 7
        %v10391 = vsub.s32 %v9489, %v10390
        %v10392 = vrot.slane %v7936, %v10391
        %v10393 = vlaneseq
        %v10394 = vshrl.u32 %v10393, 7
        %v10395 = vsub.s32 %v9494, %v10394
        %v10396 = vrot.slane %v7939, %v10395
        %v10397 = vsel %vm9499, %v10396, %v10392
        %v10398 = vlaneseq
        %v10399 = vshrl.u32 %v10398, 7
        %v10400 = vsub.s32 %v9501, %v10399
        %v10401 = vrot.slane %v7942, %v10400
        %v10402 = vsel %vm9506, %v10401, %v10397
        %v10403 = vlaneseq
        %v10404 = vshrl.u32 %v10403, 7
        %v10405 = vsub.s32 %v9508, %v10404
        %v10406 = vrot.slane %v7945, %v10405
        %v10407 = vsel %vm9513, %v10406, %v10402
        %v10408 = vlaneseq
        %v10409 = vshrl.u32 %v10408, 7
        %v10410 = vsub.s32 %v9515, %v10409
        %v10411 = vrot.slane %v7948, %v10410
        %v10412 = vsel %vm9520, %v10411, %v10407
        %v10413 = vlaneseq
        %v10414 = vshrl.u32 %v10413, 7
        %v10415 = vsub.s32 %v9522, %v10414
        %v10416 = vrot.slane %v7951, %v10415
        %v10417 = vsel %vm9527, %v10416, %v10412
        %v10418 = vlaneseq
        %v10419 = vshrl.u32 %v10418, 7
        %v10420 = vsub.s32 %v9529, %v10419
        %v10421 = vrot.slane %v7954, %v10420
        %v10422 = vsel %vm9534, %v10421, %v10417
        %v10423 = vlaneseq
        %v10424 = vshrl.u32 %v10423, 7
        %v10425 = vsub.s32 %v9536, %v10424
        %v10426 = vrot.slane %v7957, %v10425
        %v10427 = vsel %vm9541, %v10426, %v10422
        %v10428 = vlaneseq
        %v10429 = vshrl.u32 %v10428, 7
        %v10430 = vsub.s32 %v9543, %v10429
        %v10431 = vrot.slane %v7960, %v10430
        %v10432 = vsel %vm9548, %v10431, %v10427
        %v10433 = vlaneseq
        %v10434 = vshrl.u32 %v10433, 7
        %v10435 = vsub.s32 %v9550, %v10434
        %v10436 = vrot.slane %v7963, %v10435
        %v10437 = vsel %vm9555, %v10436, %v10432
        %v10438 = vlaneseq
        %v10439 = vshrl.u32 %v10438, 7
        %v10440 = vsub.s32 %v9557, %v10439
        %v10441 = vrot.slane %v7966, %v10440
        %v10442 = vsel %vm9562, %v10441, %v10437
        %v10443 = vlaneseq
        %v10444 = vshrl.u32 %v10443, 7
        %v10445 = vsub.s32 %v9564, %v10444
        %v10446 = vrot.slane %v7969, %v10445
        %v10447 = vsel %vm9569, %v10446, %v10442
        %v10448 = vlaneseq
        %v10449 = vshrl.u32 %v10448, 7
        %v10450 = vsub.s32 %v9571, %v10449
        %v10451 = vrot.slane %v7972, %v10450
        %v10452 = vsel %vm9576, %v10451, %v10447
        %v10453 = vlaneseq
        %v10454 = vshrl.u32 %v10453, 7
        %v10455 = vsub.s32 %v9578, %v10454
        %v10456 = vrot.slane %v7975, %v10455
        %v10457 = vsel %vm9583, %v10456, %v10452
        %v10458 = vlaneseq
        %v10459 = vshrl.u32 %v10458, 7
        %v10460 = vsub.s32 %v9585, %v10459
        %v10461 = vrot.slane %v7978, %v10460
        %v10462 = vsel %vm9590, %v10461, %v10457
        %v10463 = vlaneseq
        %v10464 = vshrl.u32 %v10463, 7
        %v10465 = vsub.s32 %v9592, %v10464
        %v10466 = vrot.slane %v7981, %v10465
        %v10467 = vsel %vm9597, %v10466, %v10462
        %v10468 = vlaneseq
        %v10469 = vshrl.u32 %v10468, 7
        %v10470 = vsub.s32 %v9489, %v10469
        %v10471 = vrot.slane %v7984, %v10470
        %v10472 = vlaneseq
        %v10473 = vshrl.u32 %v10472, 7
        %v10474 = vsub.s32 %v9494, %v10473
        %v10475 = vrot.slane %v7987, %v10474
        %v10476 = vsel %vm9499, %v10475, %v10471
        %v10477 = vlaneseq
        %v10478 = vshrl.u32 %v10477, 7
        %v10479 = vsub.s32 %v9501, %v10478
        %v10480 = vrot.slane %v7990, %v10479
        %v10481 = vsel %vm9506, %v10480, %v10476
        %v10482 = vlaneseq
        %v10483 = vshrl.u32 %v10482, 7
        %v10484 = vsub.s32 %v9508, %v10483
        %v10485 = vrot.slane %v7993, %v10484
        %v10486 = vsel %vm9513, %v10485, %v10481
        %v10487 = vlaneseq
        %v10488 = vshrl.u32 %v10487, 7
        %v10489 = vsub.s32 %v9515, %v10488
        %v10490 = vrot.slane %v7996, %v10489
        %v10491 = vsel %vm9520, %v10490, %v10486
        %v10492 = vlaneseq
        %v10493 = vshrl.u32 %v10492, 7
        %v10494 = vsub.s32 %v9522, %v10493
        %v10495 = vrot.slane %v7999, %v10494
        %v10496 = vsel %vm9527, %v10495, %v10491
        %v10497 = vlaneseq
        %v10498 = vshrl.u32 %v10497, 7
        %v10499 = vsub.s32 %v9529, %v10498
        %v10500 = vrot.slane %v8002, %v10499
        %v10501 = vsel %vm9534, %v10500, %v10496
        %v10502 = vlaneseq
        %v10503 = vshrl.u32 %v10502, 7
        %v10504 = vsub.s32 %v9536, %v10503
        %v10505 = vrot.slane %v8005, %v10504
        %v10506 = vsel %vm9541, %v10505, %v10501
        %v10507 = vlaneseq
        %v10508 = vshrl.u32 %v10507, 7
        %v10509 = vsub.s32 %v9543, %v10508
        %v10510 = vrot.slane %v8008, %v10509
        %v10511 = vsel %vm9548, %v10510, %v10506
        %v10512 = vlaneseq
        %v10513 = vshrl.u32 %v10512, 7
        %v10514 = vsub.s32 %v9550, %v10513
        %v10515 = vrot.slane %v8011, %v10514
        %v10516 = vsel %vm9555, %v10515, %v10511
        %v10517 = vlaneseq
        %v10518 = vshrl.u32 %v10517, 7
        %v10519 = vsub.s32 %v9557, %v10518
        %v10520 = vrot.slane %v8014, %v10519
        %v10521 = vsel %vm9562, %v10520, %v10516
        %v10522 = vlaneseq
        %v10523 = vshrl.u32 %v10522, 7
        %v10524 = vsub.s32 %v9564, %v10523
        %v10525 = vrot.slane %v8017, %v10524
        %v10526 = vsel %vm9569, %v10525, %v10521
        %v10527 = vlaneseq
        %v10528 = vshrl.u32 %v10527, 7
        %v10529 = vsub.s32 %v9571, %v10528
        %v10530 = vrot.slane %v8020, %v10529
        %v10531 = vsel %vm9576, %v10530, %v10526
        %v10532 = vlaneseq
        %v10533 = vshrl.u32 %v10532, 7
        %v10534 = vsub.s32 %v9578, %v10533
        %v10535 = vrot.slane %v8023, %v10534
        %v10536 = vsel %vm9583, %v10535, %v10531
        %v10537 = vlaneseq
        %v10538 = vshrl.u32 %v10537, 7
        %v10539 = vsub.s32 %v9585, %v10538
        %v10540 = vrot.slane %v8026, %v10539
        %v10541 = vsel %vm9590, %v10540, %v10536
        %v10542 = vlaneseq
        %v10543 = vshrl.u32 %v10542, 7
        %v10544 = vsub.s32 %v9592, %v10543
        %v10545 = vrot.slane %v8029, %v10544
        %v10546 = vsel %vm9597, %v10545, %v10541
        %v10547 = vlaneseq
        %v10548 = vshrl.u32 %v10547, 7
        %v10549 = vsub.s32 %v9489, %v10548
        %v10550 = vrot.slane %v8032, %v10549
        %v10551 = vlaneseq
        %v10552 = vshrl.u32 %v10551, 7
        %v10553 = vsub.s32 %v9494, %v10552
        %v10554 = vrot.slane %v8035, %v10553
        %v10555 = vsel %vm9499, %v10554, %v10550
        %v10556 = vlaneseq
        %v10557 = vshrl.u32 %v10556, 7
        %v10558 = vsub.s32 %v9501, %v10557
        %v10559 = vrot.slane %v8038, %v10558
        %v10560 = vsel %vm9506, %v10559, %v10555
        %v10561 = vlaneseq
        %v10562 = vshrl.u32 %v10561, 7
        %v10563 = vsub.s32 %v9508, %v10562
        %v10564 = vrot.slane %v8041, %v10563
        %v10565 = vsel %vm9513, %v10564, %v10560
        %v10566 = vlaneseq
        %v10567 = vshrl.u32 %v10566, 7
        %v10568 = vsub.s32 %v9515, %v10567
        %v10569 = vrot.slane %v8044, %v10568
        %v10570 = vsel %vm9520, %v10569, %v10565
        %v10571 = vlaneseq
        %v10572 = vshrl.u32 %v10571, 7
        %v10573 = vsub.s32 %v9522, %v10572
        %v10574 = vrot.slane %v8047, %v10573
        %v10575 = vsel %vm9527, %v10574, %v10570
        %v10576 = vlaneseq
        %v10577 = vshrl.u32 %v10576, 7
        %v10578 = vsub.s32 %v9529, %v10577
        %v10579 = vrot.slane %v8050, %v10578
        %v10580 = vsel %vm9534, %v10579, %v10575
        %v10581 = vlaneseq
        %v10582 = vshrl.u32 %v10581, 7
        %v10583 = vsub.s32 %v9536, %v10582
        %v10584 = vrot.slane %v8053, %v10583
        %v10585 = vsel %vm9541, %v10584, %v10580
        %v10586 = vlaneseq
        %v10587 = vshrl.u32 %v10586, 7
        %v10588 = vsub.s32 %v9543, %v10587
        %v10589 = vrot.slane %v8056, %v10588
        %v10590 = vsel %vm9548, %v10589, %v10585
        %v10591 = vlaneseq
        %v10592 = vshrl.u32 %v10591, 7
        %v10593 = vsub.s32 %v9550, %v10592
        %v10594 = vrot.slane %v8059, %v10593
        %v10595 = vsel %vm9555, %v10594, %v10590
        %v10596 = vlaneseq
        %v10597 = vshrl.u32 %v10596, 7
        %v10598 = vsub.s32 %v9557, %v10597
        %v10599 = vrot.slane %v8062, %v10598
        %v10600 = vsel %vm9562, %v10599, %v10595
        %v10601 = vlaneseq
        %v10602 = vshrl.u32 %v10601, 7
        %v10603 = vsub.s32 %v9564, %v10602
        %v10604 = vrot.slane %v8065, %v10603
        %v10605 = vsel %vm9569, %v10604, %v10600
        %v10606 = vlaneseq
        %v10607 = vshrl.u32 %v10606, 7
        %v10608 = vsub.s32 %v9571, %v10607
        %v10609 = vrot.slane %v8068, %v10608
        %v10610 = vsel %vm9576, %v10609, %v10605
        %v10611 = vlaneseq
        %v10612 = vshrl.u32 %v10611, 7
        %v10613 = vsub.s32 %v9578, %v10612
        %v10614 = vrot.slane %v8071, %v10613
        %v10615 = vsel %vm9583, %v10614, %v10610
        %v10616 = vlaneseq
        %v10617 = vshrl.u32 %v10616, 7
        %v10618 = vsub.s32 %v9585, %v10617
        %v10619 = vrot.slane %v8074, %v10618
        %v10620 = vsel %vm9590, %v10619, %v10615
        %v10621 = vlaneseq
        %v10622 = vshrl.u32 %v10621, 7
        %v10623 = vsub.s32 %v9592, %v10622
        %v10624 = vrot.slane %v8077, %v10623
        %v10625 = vsel %vm9597, %v10624, %v10620
        %v10626 = vlaneseq
        %v10627 = vshrl.u32 %v10626, 7
        %v10628 = vsub.s32 %v9489, %v10627
        %v10629 = vrot.slane %v8080, %v10628
        %v10630 = vlaneseq
        %v10631 = vshrl.u32 %v10630, 7
        %v10632 = vsub.s32 %v9494, %v10631
        %v10633 = vrot.slane %v8083, %v10632
        %v10634 = vsel %vm9499, %v10633, %v10629
        %v10635 = vlaneseq
        %v10636 = vshrl.u32 %v10635, 7
        %v10637 = vsub.s32 %v9501, %v10636
        %v10638 = vrot.slane %v8086, %v10637
        %v10639 = vsel %vm9506, %v10638, %v10634
        %v10640 = vlaneseq
        %v10641 = vshrl.u32 %v10640, 7
        %v10642 = vsub.s32 %v9508, %v10641
        %v10643 = vrot.slane %v8089, %v10642
        %v10644 = vsel %vm9513, %v10643, %v10639
        %v10645 = vlaneseq
        %v10646 = vshrl.u32 %v10645, 7
        %v10647 = vsub.s32 %v9515, %v10646
        %v10648 = vrot.slane %v8092, %v10647
        %v10649 = vsel %vm9520, %v10648, %v10644
        %v10650 = vlaneseq
        %v10651 = vshrl.u32 %v10650, 7
        %v10652 = vsub.s32 %v9522, %v10651
        %v10653 = vrot.slane %v8095, %v10652
        %v10654 = vsel %vm9527, %v10653, %v10649
        %v10655 = vlaneseq
        %v10656 = vshrl.u32 %v10655, 7
        %v10657 = vsub.s32 %v9529, %v10656
        %v10658 = vrot.slane %v8098, %v10657
        %v10659 = vsel %vm9534, %v10658, %v10654
        %v10660 = vlaneseq
        %v10661 = vshrl.u32 %v10660, 7
        %v10662 = vsub.s32 %v9536, %v10661
        %v10663 = vrot.slane %v8101, %v10662
        %v10664 = vsel %vm9541, %v10663, %v10659
        %v10665 = vlaneseq
        %v10666 = vshrl.u32 %v10665, 7
        %v10667 = vsub.s32 %v9543, %v10666
        %v10668 = vrot.slane %v8104, %v10667
        %v10669 = vsel %vm9548, %v10668, %v10664
        %v10670 = vlaneseq
        %v10671 = vshrl.u32 %v10670, 7
        %v10672 = vsub.s32 %v9550, %v10671
        %v10673 = vrot.slane %v8107, %v10672
        %v10674 = vsel %vm9555, %v10673, %v10669
        %v10675 = vlaneseq
        %v10676 = vshrl.u32 %v10675, 7
        %v10677 = vsub.s32 %v9557, %v10676
        %v10678 = vrot.slane %v8110, %v10677
        %v10679 = vsel %vm9562, %v10678, %v10674
        %v10680 = vlaneseq
        %v10681 = vshrl.u32 %v10680, 7
        %v10682 = vsub.s32 %v9564, %v10681
        %v10683 = vrot.slane %v8113, %v10682
        %v10684 = vsel %vm9569, %v10683, %v10679
        %v10685 = vlaneseq
        %v10686 = vshrl.u32 %v10685, 7
        %v10687 = vsub.s32 %v9571, %v10686
        %v10688 = vrot.slane %v8116, %v10687
        %v10689 = vsel %vm9576, %v10688, %v10684
        %v10690 = vlaneseq
        %v10691 = vshrl.u32 %v10690, 7
        %v10692 = vsub.s32 %v9578, %v10691
        %v10693 = vrot.slane %v8119, %v10692
        %v10694 = vsel %vm9583, %v10693, %v10689
        %v10695 = vlaneseq
        %v10696 = vshrl.u32 %v10695, 7
        %v10697 = vsub.s32 %v9585, %v10696
        %v10698 = vrot.slane %v8122, %v10697
        %v10699 = vsel %vm9590, %v10698, %v10694
        %v10700 = vlaneseq
        %v10701 = vshrl.u32 %v10700, 7
        %v10702 = vsub.s32 %v9592, %v10701
        %v10703 = vrot.slane %v8125, %v10702
        %v10704 = vsel %vm9597, %v10703, %v10699
        %v10705 = vlaneseq
        %v10706 = vshrl.u32 %v10705, 7
        %v10707 = vsub.s32 %v9489, %v10706
        %v10708 = vrot.slane %v8128, %v10707
        %v10709 = vlaneseq
        %v10710 = vshrl.u32 %v10709, 7
        %v10711 = vsub.s32 %v9494, %v10710
        %v10712 = vrot.slane %v8131, %v10711
        %v10713 = vsel %vm9499, %v10712, %v10708
        %v10714 = vlaneseq
        %v10715 = vshrl.u32 %v10714, 7
        %v10716 = vsub.s32 %v9501, %v10715
        %v10717 = vrot.slane %v8134, %v10716
        %v10718 = vsel %vm9506, %v10717, %v10713
        %v10719 = vlaneseq
        %v10720 = vshrl.u32 %v10719, 7
        %v10721 = vsub.s32 %v9508, %v10720
        %v10722 = vrot.slane %v8137, %v10721
        %v10723 = vsel %vm9513, %v10722, %v10718
        %v10724 = vlaneseq
        %v10725 = vshrl.u32 %v10724, 7
        %v10726 = vsub.s32 %v9515, %v10725
        %v10727 = vrot.slane %v8140, %v10726
        %v10728 = vsel %vm9520, %v10727, %v10723
        %v10729 = vlaneseq
        %v10730 = vshrl.u32 %v10729, 7
        %v10731 = vsub.s32 %v9522, %v10730
        %v10732 = vrot.slane %v8143, %v10731
        %v10733 = vsel %vm9527, %v10732, %v10728
        %v10734 = vlaneseq
        %v10735 = vshrl.u32 %v10734, 7
        %v10736 = vsub.s32 %v9529, %v10735
        %v10737 = vrot.slane %v8146, %v10736
        %v10738 = vsel %vm9534, %v10737, %v10733
        %v10739 = vlaneseq
        %v10740 = vshrl.u32 %v10739, 7
        %v10741 = vsub.s32 %v9536, %v10740
        %v10742 = vrot.slane %v8149, %v10741
        %v10743 = vsel %vm9541, %v10742, %v10738
        %v10744 = vlaneseq
        %v10745 = vshrl.u32 %v10744, 7
        %v10746 = vsub.s32 %v9543, %v10745
        %v10747 = vrot.slane %v8152, %v10746
        %v10748 = vsel %vm9548, %v10747, %v10743
        %v10749 = vlaneseq
        %v10750 = vshrl.u32 %v10749, 7
        %v10751 = vsub.s32 %v9550, %v10750
        %v10752 = vrot.slane %v8155, %v10751
        %v10753 = vsel %vm9555, %v10752, %v10748
        %v10754 = vlaneseq
        %v10755 = vshrl.u32 %v10754, 7
        %v10756 = vsub.s32 %v9557, %v10755
        %v10757 = vrot.slane %v8158, %v10756
        %v10758 = vsel %vm9562, %v10757, %v10753
        %v10759 = vlaneseq
        %v10760 = vshrl.u32 %v10759, 7
        %v10761 = vsub.s32 %v9564, %v10760
        %v10762 = vrot.slane %v8161, %v10761
        %v10763 = vsel %vm9569, %v10762, %v10758
        %v10764 = vlaneseq
        %v10765 = vshrl.u32 %v10764, 7
        %v10766 = vsub.s32 %v9571, %v10765
        %v10767 = vrot.slane %v8164, %v10766
        %v10768 = vsel %vm9576, %v10767, %v10763
        %v10769 = vlaneseq
        %v10770 = vshrl.u32 %v10769, 7
        %v10771 = vsub.s32 %v9578, %v10770
        %v10772 = vrot.slane %v8167, %v10771
        %v10773 = vsel %vm9583, %v10772, %v10768
        %v10774 = vlaneseq
        %v10775 = vshrl.u32 %v10774, 7
        %v10776 = vsub.s32 %v9585, %v10775
        %v10777 = vrot.slane %v8170, %v10776
        %v10778 = vsel %vm9590, %v10777, %v10773
        %v10779 = vlaneseq
        %v10780 = vshrl.u32 %v10779, 7
        %v10781 = vsub.s32 %v9592, %v10780
        %v10782 = vrot.slane %v8173, %v10781
        %v10783 = vsel %vm9597, %v10782, %v10778
        %v10784 = vlaneseq
        %v10785 = vshrl.u32 %v10784, 7
        %v10786 = vsub.s32 %v9489, %v10785
        %v10787 = vrot.slane %v8176, %v10786
        %v10788 = vlaneseq
        %v10789 = vshrl.u32 %v10788, 7
        %v10790 = vsub.s32 %v9494, %v10789
        %v10791 = vrot.slane %v8179, %v10790
        %v10792 = vsel %vm9499, %v10791, %v10787
        %v10793 = vlaneseq
        %v10794 = vshrl.u32 %v10793, 7
        %v10795 = vsub.s32 %v9501, %v10794
        %v10796 = vrot.slane %v8182, %v10795
        %v10797 = vsel %vm9506, %v10796, %v10792
        %v10798 = vlaneseq
        %v10799 = vshrl.u32 %v10798, 7
        %v10800 = vsub.s32 %v9508, %v10799
        %v10801 = vrot.slane %v8185, %v10800
        %v10802 = vsel %vm9513, %v10801, %v10797
        %v10803 = vlaneseq
        %v10804 = vshrl.u32 %v10803, 7
        %v10805 = vsub.s32 %v9515, %v10804
        %v10806 = vrot.slane %v8188, %v10805
        %v10807 = vsel %vm9520, %v10806, %v10802
        %v10808 = vlaneseq
        %v10809 = vshrl.u32 %v10808, 7
        %v10810 = vsub.s32 %v9522, %v10809
        %v10811 = vrot.slane %v8191, %v10810
        %v10812 = vsel %vm9527, %v10811, %v10807
        %v10813 = vlaneseq
        %v10814 = vshrl.u32 %v10813, 7
        %v10815 = vsub.s32 %v9529, %v10814
        %v10816 = vrot.slane %v8194, %v10815
        %v10817 = vsel %vm9534, %v10816, %v10812
        %v10818 = vlaneseq
        %v10819 = vshrl.u32 %v10818, 7
        %v10820 = vsub.s32 %v9536, %v10819
        %v10821 = vrot.slane %v8197, %v10820
        %v10822 = vsel %vm9541, %v10821, %v10817
        %v10823 = vlaneseq
        %v10824 = vshrl.u32 %v10823, 7
        %v10825 = vsub.s32 %v9543, %v10824
        %v10826 = vrot.slane %v8200, %v10825
        %v10827 = vsel %vm9548, %v10826, %v10822
        %v10828 = vlaneseq
        %v10829 = vshrl.u32 %v10828, 7
        %v10830 = vsub.s32 %v9550, %v10829
        %v10831 = vrot.slane %v8203, %v10830
        %v10832 = vsel %vm9555, %v10831, %v10827
        %v10833 = vlaneseq
        %v10834 = vshrl.u32 %v10833, 7
        %v10835 = vsub.s32 %v9557, %v10834
        %v10836 = vrot.slane %v8206, %v10835
        %v10837 = vsel %vm9562, %v10836, %v10832
        %v10838 = vlaneseq
        %v10839 = vshrl.u32 %v10838, 7
        %v10840 = vsub.s32 %v9564, %v10839
        %v10841 = vrot.slane %v8209, %v10840
        %v10842 = vsel %vm9569, %v10841, %v10837
        %v10843 = vlaneseq
        %v10844 = vshrl.u32 %v10843, 7
        %v10845 = vsub.s32 %v9571, %v10844
        %v10846 = vrot.slane %v8212, %v10845
        %v10847 = vsel %vm9576, %v10846, %v10842
        %v10848 = vlaneseq
        %v10849 = vshrl.u32 %v10848, 7
        %v10850 = vsub.s32 %v9578, %v10849
        %v10851 = vrot.slane %v8215, %v10850
        %v10852 = vsel %vm9583, %v10851, %v10847
        %v10853 = vlaneseq
        %v10854 = vshrl.u32 %v10853, 7
        %v10855 = vsub.s32 %v9585, %v10854
        %v10856 = vrot.slane %v8218, %v10855
        %v10857 = vsel %vm9590, %v10856, %v10852
        %v10858 = vlaneseq
        %v10859 = vshrl.u32 %v10858, 7
        %v10860 = vsub.s32 %v9592, %v10859
        %v10861 = vrot.slane %v8221, %v10860
        %v10862 = vsel %vm9597, %v10861, %v10857
        %v10863 = vlaneseq
        %v10864 = vshrl.u32 %v10863, 7
        %v10865 = vsub.s32 %v9489, %v10864
        %v10866 = vrot.slane %v8224, %v10865
        %v10867 = vlaneseq
        %v10868 = vshrl.u32 %v10867, 7
        %v10869 = vsub.s32 %v9494, %v10868
        %v10870 = vrot.slane %v8227, %v10869
        %v10871 = vsel %vm9499, %v10870, %v10866
        %v10872 = vlaneseq
        %v10873 = vshrl.u32 %v10872, 7
        %v10874 = vsub.s32 %v9501, %v10873
        %v10875 = vrot.slane %v8230, %v10874
        %v10876 = vsel %vm9506, %v10875, %v10871
        %v10877 = vlaneseq
        %v10878 = vshrl.u32 %v10877, 7
        %v10879 = vsub.s32 %v9508, %v10878
        %v10880 = vrot.slane %v8233, %v10879
        %v10881 = vsel %vm9513, %v10880, %v10876
        %v10882 = vlaneseq
        %v10883 = vshrl.u32 %v10882, 7
        %v10884 = vsub.s32 %v9515, %v10883
        %v10885 = vrot.slane %v8236, %v10884
        %v10886 = vsel %vm9520, %v10885, %v10881
        %v10887 = vlaneseq
        %v10888 = vshrl.u32 %v10887, 7
        %v10889 = vsub.s32 %v9522, %v10888
        %v10890 = vrot.slane %v8239, %v10889
        %v10891 = vsel %vm9527, %v10890, %v10886
        %v10892 = vlaneseq
        %v10893 = vshrl.u32 %v10892, 7
        %v10894 = vsub.s32 %v9529, %v10893
        %v10895 = vrot.slane %v8242, %v10894
        %v10896 = vsel %vm9534, %v10895, %v10891
        %v10897 = vlaneseq
        %v10898 = vshrl.u32 %v10897, 7
        %v10899 = vsub.s32 %v9536, %v10898
        %v10900 = vrot.slane %v8245, %v10899
        %v10901 = vsel %vm9541, %v10900, %v10896
        %v10902 = vlaneseq
        %v10903 = vshrl.u32 %v10902, 7
        %v10904 = vsub.s32 %v9543, %v10903
        %v10905 = vrot.slane %v8248, %v10904
        %v10906 = vsel %vm9548, %v10905, %v10901
        %v10907 = vlaneseq
        %v10908 = vshrl.u32 %v10907, 7
        %v10909 = vsub.s32 %v9550, %v10908
        %v10910 = vrot.slane %v8251, %v10909
        %v10911 = vsel %vm9555, %v10910, %v10906
        %v10912 = vlaneseq
        %v10913 = vshrl.u32 %v10912, 7
        %v10914 = vsub.s32 %v9557, %v10913
        %v10915 = vrot.slane %v8254, %v10914
        %v10916 = vsel %vm9562, %v10915, %v10911
        %v10917 = vlaneseq
        %v10918 = vshrl.u32 %v10917, 7
        %v10919 = vsub.s32 %v9564, %v10918
        %v10920 = vrot.slane %v8257, %v10919
        %v10921 = vsel %vm9569, %v10920, %v10916
        %v10922 = vlaneseq
        %v10923 = vshrl.u32 %v10922, 7
        %v10924 = vsub.s32 %v9571, %v10923
        %v10925 = vrot.slane %v8260, %v10924
        %v10926 = vsel %vm9576, %v10925, %v10921
        %v10927 = vlaneseq
        %v10928 = vshrl.u32 %v10927, 7
        %v10929 = vsub.s32 %v9578, %v10928
        %v10930 = vrot.slane %v8263, %v10929
        %v10931 = vsel %vm9583, %v10930, %v10926
        %v10932 = vlaneseq
        %v10933 = vshrl.u32 %v10932, 7
        %v10934 = vsub.s32 %v9585, %v10933
        %v10935 = vrot.slane %v8266, %v10934
        %v10936 = vsel %vm9590, %v10935, %v10931
        %v10937 = vlaneseq
        %v10938 = vshrl.u32 %v10937, 7
        %v10939 = vsub.s32 %v9592, %v10938
        %v10940 = vrot.slane %v8269, %v10939
        %v10941 = vsel %vm9597, %v10940, %v10936
        %v10942 = vlaneseq
        %v10943 = vshrl.u32 %v10942, 7
        %v10944 = vsub.s32 %v9489, %v10943
        %v10945 = vrot.slane %v8272, %v10944
        %v10946 = vlaneseq
        %v10947 = vshrl.u32 %v10946, 7
        %v10948 = vsub.s32 %v9494, %v10947
        %v10949 = vrot.slane %v8275, %v10948
        %v10950 = vsel %vm9499, %v10949, %v10945
        %v10951 = vlaneseq
        %v10952 = vshrl.u32 %v10951, 7
        %v10953 = vsub.s32 %v9501, %v10952
        %v10954 = vrot.slane %v8278, %v10953
        %v10955 = vsel %vm9506, %v10954, %v10950
        %v10956 = vlaneseq
        %v10957 = vshrl.u32 %v10956, 7
        %v10958 = vsub.s32 %v9508, %v10957
        %v10959 = vrot.slane %v8281, %v10958
        %v10960 = vsel %vm9513, %v10959, %v10955
        %v10961 = vlaneseq
        %v10962 = vshrl.u32 %v10961, 7
        %v10963 = vsub.s32 %v9515, %v10962
        %v10964 = vrot.slane %v8284, %v10963
        %v10965 = vsel %vm9520, %v10964, %v10960
        %v10966 = vlaneseq
        %v10967 = vshrl.u32 %v10966, 7
        %v10968 = vsub.s32 %v9522, %v10967
        %v10969 = vrot.slane %v8287, %v10968
        %v10970 = vsel %vm9527, %v10969, %v10965
        %v10971 = vlaneseq
        %v10972 = vshrl.u32 %v10971, 7
        %v10973 = vsub.s32 %v9529, %v10972
        %v10974 = vrot.slane %v8290, %v10973
        %v10975 = vsel %vm9534, %v10974, %v10970
        %v10976 = vlaneseq
        %v10977 = vshrl.u32 %v10976, 7
        %v10978 = vsub.s32 %v9536, %v10977
        %v10979 = vrot.slane %v8293, %v10978
        %v10980 = vsel %vm9541, %v10979, %v10975
        %v10981 = vlaneseq
        %v10982 = vshrl.u32 %v10981, 7
        %v10983 = vsub.s32 %v9543, %v10982
        %v10984 = vrot.slane %v8296, %v10983
        %v10985 = vsel %vm9548, %v10984, %v10980
        %v10986 = vlaneseq
        %v10987 = vshrl.u32 %v10986, 7
        %v10988 = vsub.s32 %v9550, %v10987
        %v10989 = vrot.slane %v8299, %v10988
        %v10990 = vsel %vm9555, %v10989, %v10985
        %v10991 = vlaneseq
        %v10992 = vshrl.u32 %v10991, 7
        %v10993 = vsub.s32 %v9557, %v10992
        %v10994 = vrot.slane %v8302, %v10993
        %v10995 = vsel %vm9562, %v10994, %v10990
        %v10996 = vlaneseq
        %v10997 = vshrl.u32 %v10996, 7
        %v10998 = vsub.s32 %v9564, %v10997
        %v10999 = vrot.slane %v8305, %v10998
        %v11000 = vsel %vm9569, %v10999, %v10995
        %v11001 = vlaneseq
        %v11002 = vshrl.u32 %v11001, 7
        %v11003 = vsub.s32 %v9571, %v11002
        %v11004 = vrot.slane %v8308, %v11003
        %v11005 = vsel %vm9576, %v11004, %v11000
        %v11006 = vlaneseq
        %v11007 = vshrl.u32 %v11006, 7
        %v11008 = vsub.s32 %v9578, %v11007
        %v11009 = vrot.slane %v8311, %v11008
        %v11010 = vsel %vm9583, %v11009, %v11005
        %v11011 = vlaneseq
        %v11012 = vshrl.u32 %v11011, 7
        %v11013 = vsub.s32 %v9585, %v11012
        %v11014 = vrot.slane %v8314, %v11013
        %v11015 = vsel %vm9590, %v11014, %v11010
        %v11016 = vlaneseq
        %v11017 = vshrl.u32 %v11016, 7
        %v11018 = vsub.s32 %v9592, %v11017
        %v11019 = vrot.slane %v8317, %v11018
        %v11020 = vsel %vm9597, %v11019, %v11015
        %v11021 = vlaneseq
        %v11022 = vshrl.u32 %v11021, 7
        %v11023 = vsub.s32 %v9489, %v11022
        %v11024 = vrot.slane %v8320, %v11023
        %v11025 = vlaneseq
        %v11026 = vshrl.u32 %v11025, 7
        %v11027 = vsub.s32 %v9494, %v11026
        %v11028 = vrot.slane %v8323, %v11027
        %v11029 = vsel %vm9499, %v11028, %v11024
        %v11030 = vlaneseq
        %v11031 = vshrl.u32 %v11030, 7
        %v11032 = vsub.s32 %v9501, %v11031
        %v11033 = vrot.slane %v8326, %v11032
        %v11034 = vsel %vm9506, %v11033, %v11029
        %v11035 = vlaneseq
        %v11036 = vshrl.u32 %v11035, 7
        %v11037 = vsub.s32 %v9508, %v11036
        %v11038 = vrot.slane %v8329, %v11037
        %v11039 = vsel %vm9513, %v11038, %v11034
        %v11040 = vlaneseq
        %v11041 = vshrl.u32 %v11040, 7
        %v11042 = vsub.s32 %v9515, %v11041
        %v11043 = vrot.slane %v8332, %v11042
        %v11044 = vsel %vm9520, %v11043, %v11039
        %v11045 = vlaneseq
        %v11046 = vshrl.u32 %v11045, 7
        %v11047 = vsub.s32 %v9522, %v11046
        %v11048 = vrot.slane %v8335, %v11047
        %v11049 = vsel %vm9527, %v11048, %v11044
        %v11050 = vlaneseq
        %v11051 = vshrl.u32 %v11050, 7
        %v11052 = vsub.s32 %v9529, %v11051
        %v11053 = vrot.slane %v8338, %v11052
        %v11054 = vsel %vm9534, %v11053, %v11049
        %v11055 = vlaneseq
        %v11056 = vshrl.u32 %v11055, 7
        %v11057 = vsub.s32 %v9536, %v11056
        %v11058 = vrot.slane %v8341, %v11057
        %v11059 = vsel %vm9541, %v11058, %v11054
        %v11060 = vlaneseq
        %v11061 = vshrl.u32 %v11060, 7
        %v11062 = vsub.s32 %v9543, %v11061
        %v11063 = vrot.slane %v8344, %v11062
        %v11064 = vsel %vm9548, %v11063, %v11059
        %v11065 = vlaneseq
        %v11066 = vshrl.u32 %v11065, 7
        %v11067 = vsub.s32 %v9550, %v11066
        %v11068 = vrot.slane %v8347, %v11067
        %v11069 = vsel %vm9555, %v11068, %v11064
        %v11070 = vlaneseq
        %v11071 = vshrl.u32 %v11070, 7
        %v11072 = vsub.s32 %v9557, %v11071
        %v11073 = vrot.slane %v8350, %v11072
        %v11074 = vsel %vm9562, %v11073, %v11069
        %v11075 = vlaneseq
        %v11076 = vshrl.u32 %v11075, 7
        %v11077 = vsub.s32 %v9564, %v11076
        %v11078 = vrot.slane %v8353, %v11077
        %v11079 = vsel %vm9569, %v11078, %v11074
        %v11080 = vlaneseq
        %v11081 = vshrl.u32 %v11080, 7
        %v11082 = vsub.s32 %v9571, %v11081
        %v11083 = vrot.slane %v8356, %v11082
        %v11084 = vsel %vm9576, %v11083, %v11079
        %v11085 = vlaneseq
        %v11086 = vshrl.u32 %v11085, 7
        %v11087 = vsub.s32 %v9578, %v11086
        %v11088 = vrot.slane %v8359, %v11087
        %v11089 = vsel %vm9583, %v11088, %v11084
        %v11090 = vlaneseq
        %v11091 = vshrl.u32 %v11090, 7
        %v11092 = vsub.s32 %v9585, %v11091
        %v11093 = vrot.slane %v8362, %v11092
        %v11094 = vsel %vm9590, %v11093, %v11089
        %v11095 = vlaneseq
        %v11096 = vshrl.u32 %v11095, 7
        %v11097 = vsub.s32 %v9592, %v11096
        %v11098 = vrot.slane %v8365, %v11097
        %v11099 = vsel %vm9597, %v11098, %v11094
        %v11100 = vlaneseq
        %v11101 = vshrl.u32 %v11100, 7
        %v11102 = vsub.s32 %v9489, %v11101
        %v11103 = vrot.slane %v8368, %v11102
        %v11104 = vlaneseq
        %v11105 = vshrl.u32 %v11104, 7
        %v11106 = vsub.s32 %v9494, %v11105
        %v11107 = vrot.slane %v8371, %v11106
        %v11108 = vsel %vm9499, %v11107, %v11103
        %v11109 = vlaneseq
        %v11110 = vshrl.u32 %v11109, 7
        %v11111 = vsub.s32 %v9501, %v11110
        %v11112 = vrot.slane %v8374, %v11111
        %v11113 = vsel %vm9506, %v11112, %v11108
        %v11114 = vlaneseq
        %v11115 = vshrl.u32 %v11114, 7
        %v11116 = vsub.s32 %v9508, %v11115
        %v11117 = vrot.slane %v8377, %v11116
        %v11118 = vsel %vm9513, %v11117, %v11113
        %v11119 = vlaneseq
        %v11120 = vshrl.u32 %v11119, 7
        %v11121 = vsub.s32 %v9515, %v11120
        %v11122 = vrot.slane %v8380, %v11121
        %v11123 = vsel %vm9520, %v11122, %v11118
        %v11124 = vlaneseq
        %v11125 = vshrl.u32 %v11124, 7
        %v11126 = vsub.s32 %v9522, %v11125
        %v11127 = vrot.slane %v8383, %v11126
        %v11128 = vsel %vm9527, %v11127, %v11123
        %v11129 = vlaneseq
        %v11130 = vshrl.u32 %v11129, 7
        %v11131 = vsub.s32 %v9529, %v11130
        %v11132 = vrot.slane %v8386, %v11131
        %v11133 = vsel %vm9534, %v11132, %v11128
        %v11134 = vlaneseq
        %v11135 = vshrl.u32 %v11134, 7
        %v11136 = vsub.s32 %v9536, %v11135
        %v11137 = vrot.slane %v8389, %v11136
        %v11138 = vsel %vm9541, %v11137, %v11133
        %v11139 = vlaneseq
        %v11140 = vshrl.u32 %v11139, 7
        %v11141 = vsub.s32 %v9543, %v11140
        %v11142 = vrot.slane %v8392, %v11141
        %v11143 = vsel %vm9548, %v11142, %v11138
        %v11144 = vlaneseq
        %v11145 = vshrl.u32 %v11144, 7
        %v11146 = vsub.s32 %v9550, %v11145
        %v11147 = vrot.slane %v8395, %v11146
        %v11148 = vsel %vm9555, %v11147, %v11143
        %v11149 = vlaneseq
        %v11150 = vshrl.u32 %v11149, 7
        %v11151 = vsub.s32 %v9557, %v11150
        %v11152 = vrot.slane %v8398, %v11151
        %v11153 = vsel %vm9562, %v11152, %v11148
        %v11154 = vlaneseq
        %v11155 = vshrl.u32 %v11154, 7
        %v11156 = vsub.s32 %v9564, %v11155
        %v11157 = vrot.slane %v8401, %v11156
        %v11158 = vsel %vm9569, %v11157, %v11153
        %v11159 = vlaneseq
        %v11160 = vshrl.u32 %v11159, 7
        %v11161 = vsub.s32 %v9571, %v11160
        %v11162 = vrot.slane %v8404, %v11161
        %v11163 = vsel %vm9576, %v11162, %v11158
        %v11164 = vlaneseq
        %v11165 = vshrl.u32 %v11164, 7
        %v11166 = vsub.s32 %v9578, %v11165
        %v11167 = vrot.slane %v8407, %v11166
        %v11168 = vsel %vm9583, %v11167, %v11163
        %v11169 = vlaneseq
        %v11170 = vshrl.u32 %v11169, 7
        %v11171 = vsub.s32 %v9585, %v11170
        %v11172 = vrot.slane %v8410, %v11171
        %v11173 = vsel %vm9590, %v11172, %v11168
        %v11174 = vlaneseq
        %v11175 = vshrl.u32 %v11174, 7
        %v11176 = vsub.s32 %v9592, %v11175
        %v11177 = vrot.slane %v8413, %v11176
        %v11178 = vsel %vm9597, %v11177, %v11173
        %v11179 = vlaneseq
        %v11180 = vshrl.u32 %v11179, 7
        %v11181 = vsub.s32 %v9489, %v11180
        %v11182 = vrot.slane %v8416, %v11181
        %v11183 = vlaneseq
        %v11184 = vshrl.u32 %v11183, 7
        %v11185 = vsub.s32 %v9494, %v11184
        %v11186 = vrot.slane %v8419, %v11185
        %v11187 = vsel %vm9499, %v11186, %v11182
        %v11188 = vlaneseq
        %v11189 = vshrl.u32 %v11188, 7
        %v11190 = vsub.s32 %v9501, %v11189
        %v11191 = vrot.slane %v8422, %v11190
        %v11192 = vsel %vm9506, %v11191, %v11187
        %v11193 = vlaneseq
        %v11194 = vshrl.u32 %v11193, 7
        %v11195 = vsub.s32 %v9508, %v11194
        %v11196 = vrot.slane %v8425, %v11195
        %v11197 = vsel %vm9513, %v11196, %v11192
        %v11198 = vlaneseq
        %v11199 = vshrl.u32 %v11198, 7
        %v11200 = vsub.s32 %v9515, %v11199
        %v11201 = vrot.slane %v8428, %v11200
        %v11202 = vsel %vm9520, %v11201, %v11197
        %v11203 = vlaneseq
        %v11204 = vshrl.u32 %v11203, 7
        %v11205 = vsub.s32 %v9522, %v11204
        %v11206 = vrot.slane %v8431, %v11205
        %v11207 = vsel %vm9527, %v11206, %v11202
        %v11208 = vlaneseq
        %v11209 = vshrl.u32 %v11208, 7
        %v11210 = vsub.s32 %v9529, %v11209
        %v11211 = vrot.slane %v8434, %v11210
        %v11212 = vsel %vm9534, %v11211, %v11207
        %v11213 = vlaneseq
        %v11214 = vshrl.u32 %v11213, 7
        %v11215 = vsub.s32 %v9536, %v11214
        %v11216 = vrot.slane %v8437, %v11215
        %v11217 = vsel %vm9541, %v11216, %v11212
        %v11218 = vlaneseq
        %v11219 = vshrl.u32 %v11218, 7
        %v11220 = vsub.s32 %v9543, %v11219
        %v11221 = vrot.slane %v8440, %v11220
        %v11222 = vsel %vm9548, %v11221, %v11217
        %v11223 = vlaneseq
        %v11224 = vshrl.u32 %v11223, 7
        %v11225 = vsub.s32 %v9550, %v11224
        %v11226 = vrot.slane %v8443, %v11225
        %v11227 = vsel %vm9555, %v11226, %v11222
        %v11228 = vlaneseq
        %v11229 = vshrl.u32 %v11228, 7
        %v11230 = vsub.s32 %v9557, %v11229
        %v11231 = vrot.slane %v8446, %v11230
        %v11232 = vsel %vm9562, %v11231, %v11227
        %v11233 = vlaneseq
        %v11234 = vshrl.u32 %v11233, 7
        %v11235 = vsub.s32 %v9564, %v11234
        %v11236 = vrot.slane %v8449, %v11235
        %v11237 = vsel %vm9569, %v11236, %v11232
        %v11238 = vlaneseq
        %v11239 = vshrl.u32 %v11238, 7
        %v11240 = vsub.s32 %v9571, %v11239
        %v11241 = vrot.slane %v8452, %v11240
        %v11242 = vsel %vm9576, %v11241, %v11237
        %v11243 = vlaneseq
        %v11244 = vshrl.u32 %v11243, 7
        %v11245 = vsub.s32 %v9578, %v11244
        %v11246 = vrot.slane %v8455, %v11245
        %v11247 = vsel %vm9583, %v11246, %v11242
        %v11248 = vlaneseq
        %v11249 = vshrl.u32 %v11248, 7
        %v11250 = vsub.s32 %v9585, %v11249
        %v11251 = vrot.slane %v8458, %v11250
        %v11252 = vsel %vm9590, %v11251, %v11247
        %v11253 = vlaneseq
        %v11254 = vshrl.u32 %v11253, 7
        %v11255 = vsub.s32 %v9592, %v11254
        %v11256 = vrot.slane %v8461, %v11255
        %v11257 = vsel %vm9597, %v11256, %v11252
        %v11258 = vlaneseq
        %v11259 = vshrl.u32 %v11258, 7
        %v11260 = vsub.s32 %v9489, %v11259
        %v11261 = vrot.slane %v8464, %v11260
        %v11262 = vlaneseq
        %v11263 = vshrl.u32 %v11262, 7
        %v11264 = vsub.s32 %v9494, %v11263
        %v11265 = vrot.slane %v8467, %v11264
        %v11266 = vsel %vm9499, %v11265, %v11261
        %v11267 = vlaneseq
        %v11268 = vshrl.u32 %v11267, 7
        %v11269 = vsub.s32 %v9501, %v11268
        %v11270 = vrot.slane %v8470, %v11269
        %v11271 = vsel %vm9506, %v11270, %v11266
        %v11272 = vlaneseq
        %v11273 = vshrl.u32 %v11272, 7
        %v11274 = vsub.s32 %v9508, %v11273
        %v11275 = vrot.slane %v8473, %v11274
        %v11276 = vsel %vm9513, %v11275, %v11271
        %v11277 = vlaneseq
        %v11278 = vshrl.u32 %v11277, 7
        %v11279 = vsub.s32 %v9515, %v11278
        %v11280 = vrot.slane %v8476, %v11279
        %v11281 = vsel %vm9520, %v11280, %v11276
        %v11282 = vlaneseq
        %v11283 = vshrl.u32 %v11282, 7
        %v11284 = vsub.s32 %v9522, %v11283
        %v11285 = vrot.slane %v8479, %v11284
        %v11286 = vsel %vm9527, %v11285, %v11281
        %v11287 = vlaneseq
        %v11288 = vshrl.u32 %v11287, 7
        %v11289 = vsub.s32 %v9529, %v11288
        %v11290 = vrot.slane %v8482, %v11289
        %v11291 = vsel %vm9534, %v11290, %v11286
        %v11292 = vlaneseq
        %v11293 = vshrl.u32 %v11292, 7
        %v11294 = vsub.s32 %v9536, %v11293
        %v11295 = vrot.slane %v8485, %v11294
        %v11296 = vsel %vm9541, %v11295, %v11291
        %v11297 = vlaneseq
        %v11298 = vshrl.u32 %v11297, 7
        %v11299 = vsub.s32 %v9543, %v11298
        %v11300 = vrot.slane %v8488, %v11299
        %v11301 = vsel %vm9548, %v11300, %v11296
        %v11302 = vlaneseq
        %v11303 = vshrl.u32 %v11302, 7
        %v11304 = vsub.s32 %v9550, %v11303
        %v11305 = vrot.slane %v8491, %v11304
        %v11306 = vsel %vm9555, %v11305, %v11301
        %v11307 = vlaneseq
        %v11308 = vshrl.u32 %v11307, 7
        %v11309 = vsub.s32 %v9557, %v11308
        %v11310 = vrot.slane %v8494, %v11309
        %v11311 = vsel %vm9562, %v11310, %v11306
        %v11312 = vlaneseq
        %v11313 = vshrl.u32 %v11312, 7
        %v11314 = vsub.s32 %v9564, %v11313
        %v11315 = vrot.slane %v8497, %v11314
        %v11316 = vsel %vm9569, %v11315, %v11311
        %v11317 = vlaneseq
        %v11318 = vshrl.u32 %v11317, 7
        %v11319 = vsub.s32 %v9571, %v11318
        %v11320 = vrot.slane %v8500, %v11319
        %v11321 = vsel %vm9576, %v11320, %v11316
        %v11322 = vlaneseq
        %v11323 = vshrl.u32 %v11322, 7
        %v11324 = vsub.s32 %v9578, %v11323
        %v11325 = vrot.slane %v8503, %v11324
        %v11326 = vsel %vm9583, %v11325, %v11321
        %v11327 = vlaneseq
        %v11328 = vshrl.u32 %v11327, 7
        %v11329 = vsub.s32 %v9585, %v11328
        %v11330 = vrot.slane %v8506, %v11329
        %v11331 = vsel %vm9590, %v11330, %v11326
        %v11332 = vlaneseq
        %v11333 = vshrl.u32 %v11332, 7
        %v11334 = vsub.s32 %v9592, %v11333
        %v11335 = vrot.slane %v8509, %v11334
        %v11336 = vsel %vm9597, %v11335, %v11331
        %v11337 = vlaneseq
        %v11338 = vshrl.u32 %v11337, 7
        %v11339 = vsub.s32 %v9489, %v11338
        %v11340 = vrot.slane %v8512, %v11339
        %v11341 = vlaneseq
        %v11342 = vshrl.u32 %v11341, 7
        %v11343 = vsub.s32 %v9494, %v11342
        %v11344 = vrot.slane %v8515, %v11343
        %v11345 = vsel %vm9499, %v11344, %v11340
        %v11346 = vlaneseq
        %v11347 = vshrl.u32 %v11346, 7
        %v11348 = vsub.s32 %v9501, %v11347
        %v11349 = vrot.slane %v8518, %v11348
        %v11350 = vsel %vm9506, %v11349, %v11345
        %v11351 = vlaneseq
        %v11352 = vshrl.u32 %v11351, 7
        %v11353 = vsub.s32 %v9508, %v11352
        %v11354 = vrot.slane %v8521, %v11353
        %v11355 = vsel %vm9513, %v11354, %v11350
        %v11356 = vlaneseq
        %v11357 = vshrl.u32 %v11356, 7
        %v11358 = vsub.s32 %v9515, %v11357
        %v11359 = vrot.slane %v8524, %v11358
        %v11360 = vsel %vm9520, %v11359, %v11355
        %v11361 = vlaneseq
        %v11362 = vshrl.u32 %v11361, 7
        %v11363 = vsub.s32 %v9522, %v11362
        %v11364 = vrot.slane %v8527, %v11363
        %v11365 = vsel %vm9527, %v11364, %v11360
        %v11366 = vlaneseq
        %v11367 = vshrl.u32 %v11366, 7
        %v11368 = vsub.s32 %v9529, %v11367
        %v11369 = vrot.slane %v8530, %v11368
        %v11370 = vsel %vm9534, %v11369, %v11365
        %v11371 = vlaneseq
        %v11372 = vshrl.u32 %v11371, 7
        %v11373 = vsub.s32 %v9536, %v11372
        %v11374 = vrot.slane %v8533, %v11373
        %v11375 = vsel %vm9541, %v11374, %v11370
        %v11376 = vlaneseq
        %v11377 = vshrl.u32 %v11376, 7
        %v11378 = vsub.s32 %v9543, %v11377
        %v11379 = vrot.slane %v8536, %v11378
        %v11380 = vsel %vm9548, %v11379, %v11375
        %v11381 = vlaneseq
        %v11382 = vshrl.u32 %v11381, 7
        %v11383 = vsub.s32 %v9550, %v11382
        %v11384 = vrot.slane %v8539, %v11383
        %v11385 = vsel %vm9555, %v11384, %v11380
        %v11386 = vlaneseq
        %v11387 = vshrl.u32 %v11386, 7
        %v11388 = vsub.s32 %v9557, %v11387
        %v11389 = vrot.slane %v8542, %v11388
        %v11390 = vsel %vm9562, %v11389, %v11385
        %v11391 = vlaneseq
        %v11392 = vshrl.u32 %v11391, 7
        %v11393 = vsub.s32 %v9564, %v11392
        %v11394 = vrot.slane %v8545, %v11393
        %v11395 = vsel %vm9569, %v11394, %v11390
        %v11396 = vlaneseq
        %v11397 = vshrl.u32 %v11396, 7
        %v11398 = vsub.s32 %v9571, %v11397
        %v11399 = vrot.slane %v8548, %v11398
        %v11400 = vsel %vm9576, %v11399, %v11395
        %v11401 = vlaneseq
        %v11402 = vshrl.u32 %v11401, 7
        %v11403 = vsub.s32 %v9578, %v11402
        %v11404 = vrot.slane %v8551, %v11403
        %v11405 = vsel %vm9583, %v11404, %v11400
        %v11406 = vlaneseq
        %v11407 = vshrl.u32 %v11406, 7
        %v11408 = vsub.s32 %v9585, %v11407
        %v11409 = vrot.slane %v8554, %v11408
        %v11410 = vsel %vm9590, %v11409, %v11405
        %v11411 = vlaneseq
        %v11412 = vshrl.u32 %v11411, 7
        %v11413 = vsub.s32 %v9592, %v11412
        %v11414 = vrot.slane %v8557, %v11413
        %v11415 = vsel %vm9597, %v11414, %v11410
        %v11416 = vlaneseq
        %v11417 = vshrl.u32 %v11416, 7
        %v11418 = vsub.s32 %v9489, %v11417
        %v11419 = vrot.slane %v8560, %v11418
        %v11420 = vlaneseq
        %v11421 = vshrl.u32 %v11420, 7
        %v11422 = vsub.s32 %v9494, %v11421
        %v11423 = vrot.slane %v8563, %v11422
        %v11424 = vsel %vm9499, %v11423, %v11419
        %v11425 = vlaneseq
        %v11426 = vshrl.u32 %v11425, 7
        %v11427 = vsub.s32 %v9501, %v11426
        %v11428 = vrot.slane %v8566, %v11427
        %v11429 = vsel %vm9506, %v11428, %v11424
        %v11430 = vlaneseq
        %v11431 = vshrl.u32 %v11430, 7
        %v11432 = vsub.s32 %v9508, %v11431
        %v11433 = vrot.slane %v8569, %v11432
        %v11434 = vsel %vm9513, %v11433, %v11429
        %v11435 = vlaneseq
        %v11436 = vshrl.u32 %v11435, 7
        %v11437 = vsub.s32 %v9515, %v11436
        %v11438 = vrot.slane %v8572, %v11437
        %v11439 = vsel %vm9520, %v11438, %v11434
        %v11440 = vlaneseq
        %v11441 = vshrl.u32 %v11440, 7
        %v11442 = vsub.s32 %v9522, %v11441
        %v11443 = vrot.slane %v8575, %v11442
        %v11444 = vsel %vm9527, %v11443, %v11439
        %v11445 = vlaneseq
        %v11446 = vshrl.u32 %v11445, 7
        %v11447 = vsub.s32 %v9529, %v11446
        %v11448 = vrot.slane %v8578, %v11447
        %v11449 = vsel %vm9534, %v11448, %v11444
        %v11450 = vlaneseq
        %v11451 = vshrl.u32 %v11450, 7
        %v11452 = vsub.s32 %v9536, %v11451
        %v11453 = vrot.slane %v8581, %v11452
        %v11454 = vsel %vm9541, %v11453, %v11449
        %v11455 = vlaneseq
        %v11456 = vshrl.u32 %v11455, 7
        %v11457 = vsub.s32 %v9543, %v11456
        %v11458 = vrot.slane %v8584, %v11457
        %v11459 = vsel %vm9548, %v11458, %v11454
        %v11460 = vlaneseq
        %v11461 = vshrl.u32 %v11460, 7
        %v11462 = vsub.s32 %v9550, %v11461
        %v11463 = vrot.slane %v8587, %v11462
        %v11464 = vsel %vm9555, %v11463, %v11459
        %v11465 = vlaneseq
        %v11466 = vshrl.u32 %v11465, 7
        %v11467 = vsub.s32 %v9557, %v11466
        %v11468 = vrot.slane %v8590, %v11467
        %v11469 = vsel %vm9562, %v11468, %v11464
        %v11470 = vlaneseq
        %v11471 = vshrl.u32 %v11470, 7
        %v11472 = vsub.s32 %v9564, %v11471
        %v11473 = vrot.slane %v8593, %v11472
        %v11474 = vsel %vm9569, %v11473, %v11469
        %v11475 = vlaneseq
        %v11476 = vshrl.u32 %v11475, 7
        %v11477 = vsub.s32 %v9571, %v11476
        %v11478 = vrot.slane %v8596, %v11477
        %v11479 = vsel %vm9576, %v11478, %v11474
        %v11480 = vlaneseq
        %v11481 = vshrl.u32 %v11480, 7
        %v11482 = vsub.s32 %v9578, %v11481
        %v11483 = vrot.slane %v8599, %v11482
        %v11484 = vsel %vm9583, %v11483, %v11479
        %v11485 = vlaneseq
        %v11486 = vshrl.u32 %v11485, 7
        %v11487 = vsub.s32 %v9585, %v11486
        %v11488 = vrot.slane %v8602, %v11487
        %v11489 = vsel %vm9590, %v11488, %v11484
        %v11490 = vlaneseq
        %v11491 = vshrl.u32 %v11490, 7
        %v11492 = vsub.s32 %v9592, %v11491
        %v11493 = vrot.slane %v8605, %v11492
        %v11494 = vsel %vm9597, %v11493, %v11489
        %v11495 = vlaneseq
        %v11496 = vshrl.u32 %v11495, 7
        %v11497 = vsub.s32 %v9489, %v11496
        %v11498 = vrot.slane %v8608, %v11497
        %v11499 = vlaneseq
        %v11500 = vshrl.u32 %v11499, 7
        %v11501 = vsub.s32 %v9494, %v11500
        %v11502 = vrot.slane %v8611, %v11501
        %v11503 = vsel %vm9499, %v11502, %v11498
        %v11504 = vlaneseq
        %v11505 = vshrl.u32 %v11504, 7
        %v11506 = vsub.s32 %v9501, %v11505
        %v11507 = vrot.slane %v8614, %v11506
        %v11508 = vsel %vm9506, %v11507, %v11503
        %v11509 = vlaneseq
        %v11510 = vshrl.u32 %v11509, 7
        %v11511 = vsub.s32 %v9508, %v11510
        %v11512 = vrot.slane %v8617, %v11511
        %v11513 = vsel %vm9513, %v11512, %v11508
        %v11514 = vlaneseq
        %v11515 = vshrl.u32 %v11514, 7
        %v11516 = vsub.s32 %v9515, %v11515
        %v11517 = vrot.slane %v8620, %v11516
        %v11518 = vsel %vm9520, %v11517, %v11513
        %v11519 = vlaneseq
        %v11520 = vshrl.u32 %v11519, 7
        %v11521 = vsub.s32 %v9522, %v11520
        %v11522 = vrot.slane %v8623, %v11521
        %v11523 = vsel %vm9527, %v11522, %v11518
        %v11524 = vlaneseq
        %v11525 = vshrl.u32 %v11524, 7
        %v11526 = vsub.s32 %v9529, %v11525
        %v11527 = vrot.slane %v8626, %v11526
        %v11528 = vsel %vm9534, %v11527, %v11523
        %v11529 = vlaneseq
        %v11530 = vshrl.u32 %v11529, 7
        %v11531 = vsub.s32 %v9536, %v11530
        %v11532 = vrot.slane %v8629, %v11531
        %v11533 = vsel %vm9541, %v11532, %v11528
        %v11534 = vlaneseq
        %v11535 = vshrl.u32 %v11534, 7
        %v11536 = vsub.s32 %v9543, %v11535
        %v11537 = vrot.slane %v8632, %v11536
        %v11538 = vsel %vm9548, %v11537, %v11533
        %v11539 = vlaneseq
        %v11540 = vshrl.u32 %v11539, 7
        %v11541 = vsub.s32 %v9550, %v11540
        %v11542 = vrot.slane %v8635, %v11541
        %v11543 = vsel %vm9555, %v11542, %v11538
        %v11544 = vlaneseq
        %v11545 = vshrl.u32 %v11544, 7
        %v11546 = vsub.s32 %v9557, %v11545
        %v11547 = vrot.slane %v8638, %v11546
        %v11548 = vsel %vm9562, %v11547, %v11543
        %v11549 = vlaneseq
        %v11550 = vshrl.u32 %v11549, 7
        %v11551 = vsub.s32 %v9564, %v11550
        %v11552 = vrot.slane %v8641, %v11551
        %v11553 = vsel %vm9569, %v11552, %v11548
        %v11554 = vlaneseq
        %v11555 = vshrl.u32 %v11554, 7
        %v11556 = vsub.s32 %v9571, %v11555
        %v11557 = vrot.slane %v8644, %v11556
        %v11558 = vsel %vm9576, %v11557, %v11553
        %v11559 = vlaneseq
        %v11560 = vshrl.u32 %v11559, 7
        %v11561 = vsub.s32 %v9578, %v11560
        %v11562 = vrot.slane %v8647, %v11561
        %v11563 = vsel %vm9583, %v11562, %v11558
        %v11564 = vlaneseq
        %v11565 = vshrl.u32 %v11564, 7
        %v11566 = vsub.s32 %v9585, %v11565
        %v11567 = vrot.slane %v8650, %v11566
        %v11568 = vsel %vm9590, %v11567, %v11563
        %v11569 = vlaneseq
        %v11570 = vshrl.u32 %v11569, 7
        %v11571 = vsub.s32 %v9592, %v11570
        %v11572 = vrot.slane %v8653, %v11571
        %v11573 = vsel %vm9597, %v11572, %v11568
        %v11574 = vlaneseq
        %v11575 = vshrl.u32 %v11574, 7
        %v11576 = vsub.s32 %v9489, %v11575
        %v11577 = vrot.slane %v8656, %v11576
        %v11578 = vlaneseq
        %v11579 = vshrl.u32 %v11578, 7
        %v11580 = vsub.s32 %v9494, %v11579
        %v11581 = vrot.slane %v8659, %v11580
        %v11582 = vsel %vm9499, %v11581, %v11577
        %v11583 = vlaneseq
        %v11584 = vshrl.u32 %v11583, 7
        %v11585 = vsub.s32 %v9501, %v11584
        %v11586 = vrot.slane %v8662, %v11585
        %v11587 = vsel %vm9506, %v11586, %v11582
        %v11588 = vlaneseq
        %v11589 = vshrl.u32 %v11588, 7
        %v11590 = vsub.s32 %v9508, %v11589
        %v11591 = vrot.slane %v8665, %v11590
        %v11592 = vsel %vm9513, %v11591, %v11587
        %v11593 = vlaneseq
        %v11594 = vshrl.u32 %v11593, 7
        %v11595 = vsub.s32 %v9515, %v11594
        %v11596 = vrot.slane %v8668, %v11595
        %v11597 = vsel %vm9520, %v11596, %v11592
        %v11598 = vlaneseq
        %v11599 = vshrl.u32 %v11598, 7
        %v11600 = vsub.s32 %v9522, %v11599
        %v11601 = vrot.slane %v8671, %v11600
        %v11602 = vsel %vm9527, %v11601, %v11597
        %v11603 = vlaneseq
        %v11604 = vshrl.u32 %v11603, 7
        %v11605 = vsub.s32 %v9529, %v11604
        %v11606 = vrot.slane %v8674, %v11605
        %v11607 = vsel %vm9534, %v11606, %v11602
        %v11608 = vlaneseq
        %v11609 = vshrl.u32 %v11608, 7
        %v11610 = vsub.s32 %v9536, %v11609
        %v11611 = vrot.slane %v8677, %v11610
        %v11612 = vsel %vm9541, %v11611, %v11607
        %v11613 = vlaneseq
        %v11614 = vshrl.u32 %v11613, 7
        %v11615 = vsub.s32 %v9543, %v11614
        %v11616 = vrot.slane %v8680, %v11615
        %v11617 = vsel %vm9548, %v11616, %v11612
        %v11618 = vlaneseq
        %v11619 = vshrl.u32 %v11618, 7
        %v11620 = vsub.s32 %v9550, %v11619
        %v11621 = vrot.slane %v8683, %v11620
        %v11622 = vsel %vm9555, %v11621, %v11617
        %v11623 = vlaneseq
        %v11624 = vshrl.u32 %v11623, 7
        %v11625 = vsub.s32 %v9557, %v11624
        %v11626 = vrot.slane %v8686, %v11625
        %v11627 = vsel %vm9562, %v11626, %v11622
        %v11628 = vlaneseq
        %v11629 = vshrl.u32 %v11628, 7
        %v11630 = vsub.s32 %v9564, %v11629
        %v11631 = vrot.slane %v8689, %v11630
        %v11632 = vsel %vm9569, %v11631, %v11627
        %v11633 = vlaneseq
        %v11634 = vshrl.u32 %v11633, 7
        %v11635 = vsub.s32 %v9571, %v11634
        %v11636 = vrot.slane %v8692, %v11635
        %v11637 = vsel %vm9576, %v11636, %v11632
        %v11638 = vlaneseq
        %v11639 = vshrl.u32 %v11638, 7
        %v11640 = vsub.s32 %v9578, %v11639
        %v11641 = vrot.slane %v8695, %v11640
        %v11642 = vsel %vm9583, %v11641, %v11637
        %v11643 = vlaneseq
        %v11644 = vshrl.u32 %v11643, 7
        %v11645 = vsub.s32 %v9585, %v11644
        %v11646 = vrot.slane %v8698, %v11645
        %v11647 = vsel %vm9590, %v11646, %v11642
        %v11648 = vlaneseq
        %v11649 = vshrl.u32 %v11648, 7
        %v11650 = vsub.s32 %v9592, %v11649
        %v11651 = vrot.slane %v8701, %v11650
        %v11652 = vsel %vm9597, %v11651, %v11647
        %v11653 = vlaneseq
        %v11654 = vshrl.u32 %v11653, 7
        %v11655 = vsub.s32 %v9489, %v11654
        %v11656 = vrot.slane %v8704, %v11655
        %v11657 = vlaneseq
        %v11658 = vshrl.u32 %v11657, 7
        %v11659 = vsub.s32 %v9494, %v11658
        %v11660 = vrot.slane %v8707, %v11659
        %v11661 = vsel %vm9499, %v11660, %v11656
        %v11662 = vlaneseq
        %v11663 = vshrl.u32 %v11662, 7
        %v11664 = vsub.s32 %v9501, %v11663
        %v11665 = vrot.slane %v8710, %v11664
        %v11666 = vsel %vm9506, %v11665, %v11661
        %v11667 = vlaneseq
        %v11668 = vshrl.u32 %v11667, 7
        %v11669 = vsub.s32 %v9508, %v11668
        %v11670 = vrot.slane %v8713, %v11669
        %v11671 = vsel %vm9513, %v11670, %v11666
        %v11672 = vlaneseq
        %v11673 = vshrl.u32 %v11672, 7
        %v11674 = vsub.s32 %v9515, %v11673
        %v11675 = vrot.slane %v8716, %v11674
        %v11676 = vsel %vm9520, %v11675, %v11671
        %v11677 = vlaneseq
        %v11678 = vshrl.u32 %v11677, 7
        %v11679 = vsub.s32 %v9522, %v11678
        %v11680 = vrot.slane %v8719, %v11679
        %v11681 = vsel %vm9527, %v11680, %v11676
        %v11682 = vlaneseq
        %v11683 = vshrl.u32 %v11682, 7
        %v11684 = vsub.s32 %v9529, %v11683
        %v11685 = vrot.slane %v8722, %v11684
        %v11686 = vsel %vm9534, %v11685, %v11681
        %v11687 = vlaneseq
        %v11688 = vshrl.u32 %v11687, 7
        %v11689 = vsub.s32 %v9536, %v11688
        %v11690 = vrot.slane %v8725, %v11689
        %v11691 = vsel %vm9541, %v11690, %v11686
        %v11692 = vlaneseq
        %v11693 = vshrl.u32 %v11692, 7
        %v11694 = vsub.s32 %v9543, %v11693
        %v11695 = vrot.slane %v8728, %v11694
        %v11696 = vsel %vm9548, %v11695, %v11691
        %v11697 = vlaneseq
        %v11698 = vshrl.u32 %v11697, 7
        %v11699 = vsub.s32 %v9550, %v11698
        %v11700 = vrot.slane %v8731, %v11699
        %v11701 = vsel %vm9555, %v11700, %v11696
        %v11702 = vlaneseq
        %v11703 = vshrl.u32 %v11702, 7
        %v11704 = vsub.s32 %v9557, %v11703
        %v11705 = vrot.slane %v8734, %v11704
        %v11706 = vsel %vm9562, %v11705, %v11701
        %v11707 = vlaneseq
        %v11708 = vshrl.u32 %v11707, 7
        %v11709 = vsub.s32 %v9564, %v11708
        %v11710 = vrot.slane %v8737, %v11709
        %v11711 = vsel %vm9569, %v11710, %v11706
        %v11712 = vlaneseq
        %v11713 = vshrl.u32 %v11712, 7
        %v11714 = vsub.s32 %v9571, %v11713
        %v11715 = vrot.slane %v8740, %v11714
        %v11716 = vsel %vm9576, %v11715, %v11711
        %v11717 = vlaneseq
        %v11718 = vshrl.u32 %v11717, 7
        %v11719 = vsub.s32 %v9578, %v11718
        %v11720 = vrot.slane %v8743, %v11719
        %v11721 = vsel %vm9583, %v11720, %v11716
        %v11722 = vlaneseq
        %v11723 = vshrl.u32 %v11722, 7
        %v11724 = vsub.s32 %v9585, %v11723
        %v11725 = vrot.slane %v8746, %v11724
        %v11726 = vsel %vm9590, %v11725, %v11721
        %v11727 = vlaneseq
        %v11728 = vshrl.u32 %v11727, 7
        %v11729 = vsub.s32 %v9592, %v11728
        %v11730 = vrot.slane %v8749, %v11729
        %v11731 = vsel %vm9597, %v11730, %v11726
        %v11732 = vlaneseq
        %v11733 = vshrl.u32 %v11732, 7
        %v11734 = vsub.s32 %v9489, %v11733
        %v11735 = vrot.slane %v8752, %v11734
        %v11736 = vlaneseq
        %v11737 = vshrl.u32 %v11736, 7
        %v11738 = vsub.s32 %v9494, %v11737
        %v11739 = vrot.slane %v8755, %v11738
        %v11740 = vsel %vm9499, %v11739, %v11735
        %v11741 = vlaneseq
        %v11742 = vshrl.u32 %v11741, 7
        %v11743 = vsub.s32 %v9501, %v11742
        %v11744 = vrot.slane %v8758, %v11743
        %v11745 = vsel %vm9506, %v11744, %v11740
        %v11746 = vlaneseq
        %v11747 = vshrl.u32 %v11746, 7
        %v11748 = vsub.s32 %v9508, %v11747
        %v11749 = vrot.slane %v8761, %v11748
        %v11750 = vsel %vm9513, %v11749, %v11745
        %v11751 = vlaneseq
        %v11752 = vshrl.u32 %v11751, 7
        %v11753 = vsub.s32 %v9515, %v11752
        %v11754 = vrot.slane %v8764, %v11753
        %v11755 = vsel %vm9520, %v11754, %v11750
        %v11756 = vlaneseq
        %v11757 = vshrl.u32 %v11756, 7
        %v11758 = vsub.s32 %v9522, %v11757
        %v11759 = vrot.slane %v8767, %v11758
        %v11760 = vsel %vm9527, %v11759, %v11755
        %v11761 = vlaneseq
        %v11762 = vshrl.u32 %v11761, 7
        %v11763 = vsub.s32 %v9529, %v11762
        %v11764 = vrot.slane %v8770, %v11763
        %v11765 = vsel %vm9534, %v11764, %v11760
        %v11766 = vlaneseq
        %v11767 = vshrl.u32 %v11766, 7
        %v11768 = vsub.s32 %v9536, %v11767
        %v11769 = vrot.slane %v8773, %v11768
        %v11770 = vsel %vm9541, %v11769, %v11765
        %v11771 = vlaneseq
        %v11772 = vshrl.u32 %v11771, 7
        %v11773 = vsub.s32 %v9543, %v11772
        %v11774 = vrot.slane %v8776, %v11773
        %v11775 = vsel %vm9548, %v11774, %v11770
        %v11776 = vlaneseq
        %v11777 = vshrl.u32 %v11776, 7
        %v11778 = vsub.s32 %v9550, %v11777
        %v11779 = vrot.slane %v8779, %v11778
        %v11780 = vsel %vm9555, %v11779, %v11775
        %v11781 = vlaneseq
        %v11782 = vshrl.u32 %v11781, 7
        %v11783 = vsub.s32 %v9557, %v11782
        %v11784 = vrot.slane %v8782, %v11783
        %v11785 = vsel %vm9562, %v11784, %v11780
        %v11786 = vlaneseq
        %v11787 = vshrl.u32 %v11786, 7
        %v11788 = vsub.s32 %v9564, %v11787
        %v11789 = vrot.slane %v8785, %v11788
        %v11790 = vsel %vm9569, %v11789, %v11785
        %v11791 = vlaneseq
        %v11792 = vshrl.u32 %v11791, 7
        %v11793 = vsub.s32 %v9571, %v11792
        %v11794 = vrot.slane %v8788, %v11793
        %v11795 = vsel %vm9576, %v11794, %v11790
        %v11796 = vlaneseq
        %v11797 = vshrl.u32 %v11796, 7
        %v11798 = vsub.s32 %v9578, %v11797
        %v11799 = vrot.slane %v8791, %v11798
        %v11800 = vsel %vm9583, %v11799, %v11795
        %v11801 = vlaneseq
        %v11802 = vshrl.u32 %v11801, 7
        %v11803 = vsub.s32 %v9585, %v11802
        %v11804 = vrot.slane %v8794, %v11803
        %v11805 = vsel %vm9590, %v11804, %v11800
        %v11806 = vlaneseq
        %v11807 = vshrl.u32 %v11806, 7
        %v11808 = vsub.s32 %v9592, %v11807
        %v11809 = vrot.slane %v8797, %v11808
        %v11810 = vsel %vm9597, %v11809, %v11805
        %v11811 = vlaneseq
        %v11812 = vshrl.u32 %v11811, 7
        %v11813 = vsub.s32 %v9489, %v11812
        %v11814 = vrot.slane %v8800, %v11813
        %v11815 = vlaneseq
        %v11816 = vshrl.u32 %v11815, 7
        %v11817 = vsub.s32 %v9494, %v11816
        %v11818 = vrot.slane %v8803, %v11817
        %v11819 = vsel %vm9499, %v11818, %v11814
        %v11820 = vlaneseq
        %v11821 = vshrl.u32 %v11820, 7
        %v11822 = vsub.s32 %v9501, %v11821
        %v11823 = vrot.slane %v8806, %v11822
        %v11824 = vsel %vm9506, %v11823, %v11819
        %v11825 = vlaneseq
        %v11826 = vshrl.u32 %v11825, 7
        %v11827 = vsub.s32 %v9508, %v11826
        %v11828 = vrot.slane %v8809, %v11827
        %v11829 = vsel %vm9513, %v11828, %v11824
        %v11830 = vlaneseq
        %v11831 = vshrl.u32 %v11830, 7
        %v11832 = vsub.s32 %v9515, %v11831
        %v11833 = vrot.slane %v8812, %v11832
        %v11834 = vsel %vm9520, %v11833, %v11829
        %v11835 = vlaneseq
        %v11836 = vshrl.u32 %v11835, 7
        %v11837 = vsub.s32 %v9522, %v11836
        %v11838 = vrot.slane %v8815, %v11837
        %v11839 = vsel %vm9527, %v11838, %v11834
        %v11840 = vlaneseq
        %v11841 = vshrl.u32 %v11840, 7
        %v11842 = vsub.s32 %v9529, %v11841
        %v11843 = vrot.slane %v8818, %v11842
        %v11844 = vsel %vm9534, %v11843, %v11839
        %v11845 = vlaneseq
        %v11846 = vshrl.u32 %v11845, 7
        %v11847 = vsub.s32 %v9536, %v11846
        %v11848 = vrot.slane %v8821, %v11847
        %v11849 = vsel %vm9541, %v11848, %v11844
        %v11850 = vlaneseq
        %v11851 = vshrl.u32 %v11850, 7
        %v11852 = vsub.s32 %v9543, %v11851
        %v11853 = vrot.slane %v8824, %v11852
        %v11854 = vsel %vm9548, %v11853, %v11849
        %v11855 = vlaneseq
        %v11856 = vshrl.u32 %v11855, 7
        %v11857 = vsub.s32 %v9550, %v11856
        %v11858 = vrot.slane %v8827, %v11857
        %v11859 = vsel %vm9555, %v11858, %v11854
        %v11860 = vlaneseq
        %v11861 = vshrl.u32 %v11860, 7
        %v11862 = vsub.s32 %v9557, %v11861
        %v11863 = vrot.slane %v8830, %v11862
        %v11864 = vsel %vm9562, %v11863, %v11859
        %v11865 = vlaneseq
        %v11866 = vshrl.u32 %v11865, 7
        %v11867 = vsub.s32 %v9564, %v11866
        %v11868 = vrot.slane %v8833, %v11867
        %v11869 = vsel %vm9569, %v11868, %v11864
        %v11870 = vlaneseq
        %v11871 = vshrl.u32 %v11870, 7
        %v11872 = vsub.s32 %v9571, %v11871
        %v11873 = vrot.slane %v8836, %v11872
        %v11874 = vsel %vm9576, %v11873, %v11869
        %v11875 = vlaneseq
        %v11876 = vshrl.u32 %v11875, 7
        %v11877 = vsub.s32 %v9578, %v11876
        %v11878 = vrot.slane %v8839, %v11877
        %v11879 = vsel %vm9583, %v11878, %v11874
        %v11880 = vlaneseq
        %v11881 = vshrl.u32 %v11880, 7
        %v11882 = vsub.s32 %v9585, %v11881
        %v11883 = vrot.slane %v8842, %v11882
        %v11884 = vsel %vm9590, %v11883, %v11879
        %v11885 = vlaneseq
        %v11886 = vshrl.u32 %v11885, 7
        %v11887 = vsub.s32 %v9592, %v11886
        %v11888 = vrot.slane %v8845, %v11887
        %v11889 = vsel %vm9597, %v11888, %v11884
        %v11890 = vlaneseq
        %v11891 = vshrl.u32 %v11890, 7
        %v11892 = vsub.s32 %v9489, %v11891
        %v11893 = vrot.slane %v8848, %v11892
        %v11894 = vlaneseq
        %v11895 = vshrl.u32 %v11894, 7
        %v11896 = vsub.s32 %v9494, %v11895
        %v11897 = vrot.slane %v8851, %v11896
        %v11898 = vsel %vm9499, %v11897, %v11893
        %v11899 = vlaneseq
        %v11900 = vshrl.u32 %v11899, 7
        %v11901 = vsub.s32 %v9501, %v11900
        %v11902 = vrot.slane %v8854, %v11901
        %v11903 = vsel %vm9506, %v11902, %v11898
        %v11904 = vlaneseq
        %v11905 = vshrl.u32 %v11904, 7
        %v11906 = vsub.s32 %v9508, %v11905
        %v11907 = vrot.slane %v8857, %v11906
        %v11908 = vsel %vm9513, %v11907, %v11903
        %v11909 = vlaneseq
        %v11910 = vshrl.u32 %v11909, 7
        %v11911 = vsub.s32 %v9515, %v11910
        %v11912 = vrot.slane %v8860, %v11911
        %v11913 = vsel %vm9520, %v11912, %v11908
        %v11914 = vlaneseq
        %v11915 = vshrl.u32 %v11914, 7
        %v11916 = vsub.s32 %v9522, %v11915
        %v11917 = vrot.slane %v8863, %v11916
        %v11918 = vsel %vm9527, %v11917, %v11913
        %v11919 = vlaneseq
        %v11920 = vshrl.u32 %v11919, 7
        %v11921 = vsub.s32 %v9529, %v11920
        %v11922 = vrot.slane %v8866, %v11921
        %v11923 = vsel %vm9534, %v11922, %v11918
        %v11924 = vlaneseq
        %v11925 = vshrl.u32 %v11924, 7
        %v11926 = vsub.s32 %v9536, %v11925
        %v11927 = vrot.slane %v8869, %v11926
        %v11928 = vsel %vm9541, %v11927, %v11923
        %v11929 = vlaneseq
        %v11930 = vshrl.u32 %v11929, 7
        %v11931 = vsub.s32 %v9543, %v11930
        %v11932 = vrot.slane %v8872, %v11931
        %v11933 = vsel %vm9548, %v11932, %v11928
        %v11934 = vlaneseq
        %v11935 = vshrl.u32 %v11934, 7
        %v11936 = vsub.s32 %v9550, %v11935
        %v11937 = vrot.slane %v8875, %v11936
        %v11938 = vsel %vm9555, %v11937, %v11933
        %v11939 = vlaneseq
        %v11940 = vshrl.u32 %v11939, 7
        %v11941 = vsub.s32 %v9557, %v11940
        %v11942 = vrot.slane %v8878, %v11941
        %v11943 = vsel %vm9562, %v11942, %v11938
        %v11944 = vlaneseq
        %v11945 = vshrl.u32 %v11944, 7
        %v11946 = vsub.s32 %v9564, %v11945
        %v11947 = vrot.slane %v8881, %v11946
        %v11948 = vsel %vm9569, %v11947, %v11943
        %v11949 = vlaneseq
        %v11950 = vshrl.u32 %v11949, 7
        %v11951 = vsub.s32 %v9571, %v11950
        %v11952 = vrot.slane %v8884, %v11951
        %v11953 = vsel %vm9576, %v11952, %v11948
        %v11954 = vlaneseq
        %v11955 = vshrl.u32 %v11954, 7
        %v11956 = vsub.s32 %v9578, %v11955
        %v11957 = vrot.slane %v8887, %v11956
        %v11958 = vsel %vm9583, %v11957, %v11953
        %v11959 = vlaneseq
        %v11960 = vshrl.u32 %v11959, 7
        %v11961 = vsub.s32 %v9585, %v11960
        %v11962 = vrot.slane %v8890, %v11961
        %v11963 = vsel %vm9590, %v11962, %v11958
        %v11964 = vlaneseq
        %v11965 = vshrl.u32 %v11964, 7
        %v11966 = vsub.s32 %v9592, %v11965
        %v11967 = vrot.slane %v8893, %v11966
        %v11968 = vsel %vm9597, %v11967, %v11963
        %v11969 = vlaneseq
        %v11970 = vshrl.u32 %v11969, 7
        %v11971 = vsub.s32 %v9489, %v11970
        %v11972 = vrot.slane %v8896, %v11971
        %v11973 = vlaneseq
        %v11974 = vshrl.u32 %v11973, 7
        %v11975 = vsub.s32 %v9494, %v11974
        %v11976 = vrot.slane %v8899, %v11975
        %v11977 = vsel %vm9499, %v11976, %v11972
        %v11978 = vlaneseq
        %v11979 = vshrl.u32 %v11978, 7
        %v11980 = vsub.s32 %v9501, %v11979
        %v11981 = vrot.slane %v8902, %v11980
        %v11982 = vsel %vm9506, %v11981, %v11977
        %v11983 = vlaneseq
        %v11984 = vshrl.u32 %v11983, 7
        %v11985 = vsub.s32 %v9508, %v11984
        %v11986 = vrot.slane %v8905, %v11985
        %v11987 = vsel %vm9513, %v11986, %v11982
        %v11988 = vlaneseq
        %v11989 = vshrl.u32 %v11988, 7
        %v11990 = vsub.s32 %v9515, %v11989
        %v11991 = vrot.slane %v8908, %v11990
        %v11992 = vsel %vm9520, %v11991, %v11987
        %v11993 = vlaneseq
        %v11994 = vshrl.u32 %v11993, 7
        %v11995 = vsub.s32 %v9522, %v11994
        %v11996 = vrot.slane %v8911, %v11995
        %v11997 = vsel %vm9527, %v11996, %v11992
        %v11998 = vlaneseq
        %v11999 = vshrl.u32 %v11998, 7
        %v12000 = vsub.s32 %v9529, %v11999
        %v12001 = vrot.slane %v8914, %v12000
        %v12002 = vsel %vm9534, %v12001, %v11997
        %v12003 = vlaneseq
        %v12004 = vshrl.u32 %v12003, 7
        %v12005 = vsub.s32 %v9536, %v12004
        %v12006 = vrot.slane %v8917, %v12005
        %v12007 = vsel %vm9541, %v12006, %v12002
        %v12008 = vlaneseq
        %v12009 = vshrl.u32 %v12008, 7
        %v12010 = vsub.s32 %v9543, %v12009
        %v12011 = vrot.slane %v8920, %v12010
        %v12012 = vsel %vm9548, %v12011, %v12007
        %v12013 = vlaneseq
        %v12014 = vshrl.u32 %v12013, 7
        %v12015 = vsub.s32 %v9550, %v12014
        %v12016 = vrot.slane %v8923, %v12015
        %v12017 = vsel %vm9555, %v12016, %v12012
        %v12018 = vlaneseq
        %v12019 = vshrl.u32 %v12018, 7
        %v12020 = vsub.s32 %v9557, %v12019
        %v12021 = vrot.slane %v8926, %v12020
        %v12022 = vsel %vm9562, %v12021, %v12017
        %v12023 = vlaneseq
        %v12024 = vshrl.u32 %v12023, 7
        %v12025 = vsub.s32 %v9564, %v12024
        %v12026 = vrot.slane %v8929, %v12025
        %v12027 = vsel %vm9569, %v12026, %v12022
        %v12028 = vlaneseq
        %v12029 = vshrl.u32 %v12028, 7
        %v12030 = vsub.s32 %v9571, %v12029
        %v12031 = vrot.slane %v8932, %v12030
        %v12032 = vsel %vm9576, %v12031, %v12027
        %v12033 = vlaneseq
        %v12034 = vshrl.u32 %v12033, 7
        %v12035 = vsub.s32 %v9578, %v12034
        %v12036 = vrot.slane %v8935, %v12035
        %v12037 = vsel %vm9583, %v12036, %v12032
        %v12038 = vlaneseq
        %v12039 = vshrl.u32 %v12038, 7
        %v12040 = vsub.s32 %v9585, %v12039
        %v12041 = vrot.slane %v8938, %v12040
        %v12042 = vsel %vm9590, %v12041, %v12037
        %v12043 = vlaneseq
        %v12044 = vshrl.u32 %v12043, 7
        %v12045 = vsub.s32 %v9592, %v12044
        %v12046 = vrot.slane %v8941, %v12045
        %v12047 = vsel %vm9597, %v12046, %v12042
        %vm12048 = vcmask 1041409
        %v12049 = vsel %vm12048, %v9756, %v9598
        %vm12050 = vcmask 1042434
        %v12051 = vsel %vm12050, %v9914, %v12049
        %vm12052 = vcmask 1043459
        %v12053 = vsel %vm12052, %v10072, %v12051
        %vm12054 = vcmask 1044484
        %v12055 = vsel %vm12054, %v10230, %v12053
        %vm12056 = vcmask 1045509
        %v12057 = vsel %vm12056, %v10388, %v12055
        %vm12058 = vcmask 1046534
        %v12059 = vsel %vm12058, %v10546, %v12057
        %vm12060 = vcmask 1047559
        %v12061 = vsel %vm12060, %v10704, %v12059
        %v12062 = vsel %vm12048, %v9835, %v9677
        %v12063 = vsel %vm12050, %v9993, %v12062
        %v12064 = vsel %vm12052, %v10151, %v12063
        %v12065 = vsel %vm12054, %v10309, %v12064
        %v12066 = vsel %vm12056, %v10467, %v12065
        %v12067 = vsel %vm12058, %v10625, %v12066
        %v12068 = vsel %vm12060, %v10783, %v12067
        %v12069 = vsel %vm12048, %v11020, %v10862
        %v12070 = vsel %vm12050, %v11178, %v12069
        %v12071 = vsel %vm12052, %v11336, %v12070
        %v12072 = vsel %vm12054, %v11494, %v12071
        %v12073 = vsel %vm12056, %v11652, %v12072
        %v12074 = vsel %vm12058, %v11810, %v12073
        %v12075 = vsel %vm12060, %v11968, %v12074
        %v12076 = vsel %vm12048, %v11099, %v10941
        %v12077 = vsel %vm12050, %v11257, %v12076
        %v12078 = vsel %vm12052, %v11415, %v12077
        %v12079 = vsel %vm12054, %v11573, %v12078
        %v12080 = vsel %vm12056, %v11731, %v12079
        %v12081 = vsel %vm12058, %v11889, %v12080
        %v12082 = vsel %vm12060, %v12047, %v12081
        %12087 = vmatprep.subr.mxu0 0.0
        %12088 = vmatpush1.msra.mxu0 %v8944
        %12089 = vmatprep.subr.mxu0 0.0
        %12090 = vmatpush1.msra.mxu0 %v8945
        %12091 = vmatprep.subr.mxu0 0.0
        %12092 = vmatpush1.msra.mxu0 %v8946
        %12093 = vmatprep.subr.mxu0 0.0
        %12094 = vmatpush1.msra.mxu0 %v8947
        %12095 = vmatprep.subr.mxu0 0.0
        %12096 = vmatpush1.msra.mxu0 %v8948
        %12097 = vmatprep.subr.mxu0 0.0
        %12098 = vmatpush1.msra.mxu0 %v8949
        %12099 = vmatprep.subr.mxu0 0.0
        %12100 = vmatpush1.msra.mxu0 %v8950
        %12101 = vmatprep.subr.mxu0 0.0
        %12102 = vmatpush1.msra.mxu0 %v8951
        %12103 = vmatprep.subr.mxu0 0.0
        %12104 = vmatpush1.msra.mxu0 %v8952
        %12105 = vmatprep.subr.mxu0 0.0
        %12106 = vmatpush1.msra.mxu0 %v8953
        %12107 = vmatprep.subr.mxu0 0.0
        %12108 = vmatpush1.msra.mxu0 %v8954
        %12109 = vmatprep.subr.mxu0 0.0
        %12110 = vmatpush1.msra.mxu0 %v8955
        %12111 = vmatprep.subr.mxu0 0.0
        %12112 = vmatpush1.msra.mxu0 %v8956
        %12113 = vmatprep.subr.mxu0 0.0
        %12114 = vmatpush1.msra.mxu0 %v8957
        %12115 = vmatprep.subr.mxu0 0.0
        %12116 = vmatpush1.msra.mxu0 %v8958
        %12117 = vmatprep.subr.mxu0 0.0
        %12118 = vmatpush1.msra.mxu0 %v8959
        %12119 = vmatprep.subr.mxu0 0.0
        %12120 = vmatpush1.msra.mxu0 %v8960
        %12121 = vmatprep.subr.mxu0 0.0
        %12122 = vmatpush1.msra.mxu0 %v8961
        %12123 = vmatprep.subr.mxu0 0.0
        %12124 = vmatpush1.msra.mxu0 %v8962
        %12125 = vmatprep.subr.mxu0 0.0
        %12126 = vmatpush1.msra.mxu0 %v8963
        %12127 = vmatprep.subr.mxu0 0.0
        %12128 = vmatpush1.msra.mxu0 %v8964
        %12129 = vmatprep.subr.mxu0 0.0
        %12130 = vmatpush1.msra.mxu0 %v8965
        %12131 = vmatprep.subr.mxu0 0.0
        %12132 = vmatpush1.msra.mxu0 %v8966
        %12133 = vmatprep.subr.mxu0 0.0
        %12134 = vmatpush1.msra.mxu0 %v8967
        %12135 = vmatprep.subr.mxu0 0.0
        %12136 = vmatpush1.msra.mxu0 %v8968
        %12137 = vmatprep.subr.mxu0 0.0
        %12138 = vmatpush1.msra.mxu0 %v8969
        %12139 = vmatprep.subr.mxu0 0.0
        %12140 = vmatpush1.msra.mxu0 %v8970
        %12141 = vmatprep.subr.mxu0 0.0
        %12142 = vmatpush1.msra.mxu0 %v8971
        %12143 = vmatprep.subr.mxu0 0.0
        %12144 = vmatpush1.msra.mxu0 %v8972
        %12145 = vmatprep.subr.mxu0 0.0
        %12146 = vmatpush1.msra.mxu0 %v8973
        %12147 = vmatprep.subr.mxu0 0.0
        %12148 = vmatpush1.msra.mxu0 %v8974
        %12149 = vmatprep.subr.mxu0 0.0
        %12150 = vmatpush1.msra.mxu0 %v8975
        %12151 = vmatprep.mubr.f32.mxu0 %v12068
        %12152 = vmatmul.mubr.f32.gmra.mrb[0].mxu0 %v12061
        %v12153 = vpop.f32.mrb[0].mxu0
        %v12154 = vadd.f32 0.0, %v12153
        %v12155 = vpop.f32.mrb[0].mxu0
        %12156 = vmatprep.mubr.f32.mxu0 %v12082
        %12157 = vmatmul.mubr.f32.gmra.mrb[0].mxu0 %v12075
        %v12158 = vpop.f32.mrb[0].mxu0
        %v12159 = vadd.f32 0.0, %v12158
        %v12160 = vpop.f32.mrb[0].mxu0
        %12161 = vdwg.mxu0
        %p12162 = scmp.eq.s32.totalorder %s26, 0
        // Predicated region
        $region45: #{tpu_custom_call.1} parent=31 // pred_check
          %p12163 = pneg %p12162
        $region46: #{tpu_custom_call.1} parent=31 // pred_check_branch
          %12165 = sbr.rel (%p12163) target = $region48
        $region47: #{tpu_custom_call.1} parent=31 // pred_region
          %v12166 = vld [vmem:[#allocation7] sm:$0x1]
          %v12168 = vlaneseq
          %v12169 = vshrl.u32 %v12168, 7
          %v12170 = vsub.s32 0, %v12169
          %v12171 = vrot.slane %v12166, %v12170
          %12173 = vst [vmem:[%s233] sm:$0xff] %v12171
          %12174 = vst [vmem:[%s233 + $0x8] sm:$0xff] %v12171
        $region48: #{tpu_custom_call.1} parent=31 // pred_fallthru
          _
        %v12175 = vld [vmem:[%s233] sm:$0xff]
        %v12176 = vld [vmem:[%s233 + $0x8] sm:$0xff]
        %v12177 = vadd.f32 %v12175, %v12154
        %v12178 = vadd.f32 %v12176, %v12159
        %12179 = vst [vmem:[%s233] sm:$0xff] %v12177
        %12180 = vst [vmem:[%s233 + $0x8] sm:$0xff] %v12178
        %s12181 = sand.u32 %s111, 1
        %s12182 = scalar_lea.sflag [#allocation4], %s12181
        %s12183 = sand.u32 %s111, 1
        %s12184 = smul.addr %s12183, 16
        %s12185 = scalar_lea.vmem [#allocation8], %s12184
        // Predicated region
        $region49: #{tpu_custom_call.1} parent=31 // pred_check
          %p12186 = pneg %p121
        $region50: #{tpu_custom_call.1} parent=31 // pred_check_branch
          %12188 = sbr.rel (%p12186) target = $region52
        $region51: #{tpu_custom_call.1} parent=31 // pred_region
          %s12189 = smul.u32 2, %s25
          %s12191 = ssub.s32 256, 256
          %12192 = vsyncadd %s12182, %s12191
          %s12193 = smul.addr %s12189, 128
          %s12194 = scalar_lea.hbm %s3, %s12193
          %s12195 = sshll.u32 %s12185, 4
          %s12196 = int_to_ptr.vmem [resolvable:$true] %s12195
          %12201 = dma.vmem_to_hbm [thread:$0]  %s12196, 256, %s12194, %s12182, 128, 128, 8
        $region52: #{tpu_custom_call.1} parent=31 // pred_fallthru
          _
      $region32: #{tpu_custom_call.1} parent=5 // pred_fallthru
        _
      %p12202 = scmp.le.s32.totalorder 2, %s16
      // Predicated region
      $region53: #{tpu_custom_call.1} parent=5 // pred_check
        %p12203 = pneg %p12202
      $region54: #{tpu_custom_call.1} parent=5 // pred_check_branch
        %12205 = sbr.rel (%p12203) target = $region56
      $region55: #{tpu_custom_call.1} parent=5 // pred_region
        %s12206 = ssub.s32 %s16, 2
        // Predicated region
        $region57: #{tpu_custom_call.1} parent=55 // pred_check
          %p12207 = pneg %p127
        $region58: #{tpu_custom_call.1} parent=55 // pred_check_branch
          %12209 = sbr.rel (%p12207) target = $region60
        $region59: #{tpu_custom_call.1} parent=55 // pred_region
          %s12210 = sand.u32 %s112, 1
          %s12211 = scalar_lea.sflag [#allocation4], %s12210
          %s12212 = sand.u32 %s112, 1
          %s12213 = smul.addr %s12212, 16
          %s12214 = scalar_lea.vmem [#allocation8], %s12213
          %12215 = dma.done %s12211, 256
        $region60: #{tpu_custom_call.1} parent=55 // pred_fallthru
          _
      $region56: #{tpu_custom_call.1} parent=5 // pred_fallthru
        _
    $region6: #{tpu_custom_call.1} parent=1 // loop_footer
      %s20 = sadd.s32 1, %s16
    $region7: #{tpu_custom_call.1} parent=1 // loop_footer_branch
      %15 = sbr.rel target = $region3
    $region8: #{tpu_custom_call.1} parent=1 // loop_exit
      _
    %12216 = vsyncpa [#allocation3], 1
    %s12217 = scalar_lea.sflag [#allocation3], 1
    %12218 = vsyncpa %s12217, 1
    %12219 = vsyncpa [#allocation6], 1
    %12220 = vsyncpa [#allocation4], 1
    %s12221 = scalar_lea.sflag [#allocation4], 1
    %12222 = vsyncpa %s12221, 1

</llo_original>
